<compile_context>
chip_gen: v7x
topology: tpu7x:2x2x1
jax: 0.10.0
libtpu: 0.0.40
codegen_flags: <defaults>
</compile_context>

<pallas_src>
import functools

import numpy as np
import jax
import jax.numpy as jnp
from jax.experimental import pallas as pl
from jax.experimental.pallas import tpu as pltpu


# Matmul operand dtype fed to the MXU.  float32 preserves reference numerics;
# flip to jnp.bfloat16 on v6e/v7x for the fast MXU path (accumulation stays
# f32 via preferred_element_type; GroupNorm/GELU math always stays f32).
_MXU_DTYPE = jnp.float32
_EPS = 1e-5
_SQRT1_2 = 0.7071067811865476


# ----------------------------------------------------------------------------
# In-kernel math helpers
# ----------------------------------------------------------------------------
def _erf(x):
    # Abramowitz & Stegun 7.1.26 polynomial (|err| < 1.5e-7); the divide runs
    # on the EUP via pl.reciprocal(approx=True) + one Newton refinement step.
    a1, a2, a3, a4, a5 = (0.254829592, -0.284496736, 1.421413741,
                          -1.453152027, 1.061405429)
    sgn = jnp.where(x >= 0.0, 1.0, -1.0)
    ax = jnp.abs(x)
    den = 1.0 + 0.3275911 * ax
    t = pl.reciprocal(den, approx=True)
    t = t * (2.0 - den * t)                      # Newton step -> f32 accuracy
    poly = ((((a5 * t + a4) * t + a3) * t + a2) * t + a1) * t
    return sgn * (1.0 - poly * jnp.exp(-ax * ax))


def _gelu(x):
    # exact (erf-based) GELU, matching torch.nn.GELU() default
    return 0.5 * x * (1.0 + _erf(x * _SQRT1_2))


def _dot(a, b):
    return jnp.dot(a, b, preferred_element_type=jnp.float32)


def _gn_apply(v_list, rr, gamma, beta, inv_n):
    # GroupNorm over the channels of one sample whose spatial positions are
    # split across the per-residue arrays in v_list.
    #   rr: (C, C) 0/1 block matrix (ones within each group) -> group pooling
    s1 = None
    s2 = None
    for v in v_list:
        a = jnp.sum(v, axis=1, keepdims=True)          # (C, 1) lane reduce
        b = jnp.sum(v * v, axis=1, keepdims=True)
        s1 = a if s1 is None else s1 + a
        s2 = b if s2 is None else s2 + b
    mean = _dot(rr, s1) * inv_n                        # per-channel group mean
    ex2 = _dot(rr, s2) * inv_n
    var = ex2 - mean * mean                            # biased var (PyTorch)
    scale = jax.lax.rsqrt(var + _EPS) * gamma
    shift = beta - mean * scale
    return [v * scale + shift for v in v_list]


# ----------------------------------------------------------------------------
# Fused decoder-block kernel (one grid step == one batch sample)
#   x:    (1, Cin, N_pad)   channel-major, spatial lane-dense (zero padded
#                           along the conv axis for the polyphase shifts)
#   wenc: (K*Cout, Cin)     stacked per-tap transposed-conv weights
#   pipeline: transposed conv (polyphase) -> bias -> GroupNorm -> GELU ->
#             1x1 conv -> GroupNorm -> GLU
# ----------------------------------------------------------------------------
def _block_kernel(*refs, cout, stride, taps_rd, pre, w, n_out,
                  use_norm, has_skip, inv_n1, inv_n2):
    it = iter(refs)
    x_ref = next(it)
    skip_ref = next(it) if has_skip else None
    wenc_ref = next(it)
    benc_ref = next(it)
    wdec_ref = next(it)
    bdec_ref = next(it)
    if use_norm:
        rr1_ref = next(it)
        g1_ref = next(it)
        b1_ref = next(it)
        rr2_ref = next(it)
        g2_ref = next(it)
        b2_ref = next(it)
    o_ref = next(it)

    x = x_ref[0]
    if has_skip:
        x = x + skip_ref[0]                            # fused skip add (VPU)
    x = x.astype(_MXU_DTYPE)

    # merged K-tap channel matmul: (K*Cout, Cin) @ (Cin, N_pad)
    taps = _dot(wenc_ref[...].astype(_MXU_DTYPE), x)

    # polyphase overlap-add: residue r of the stride-S output collects the
    # taps j = r + P + S*d, shifted by d conv positions (static lane slices
    # of the zero-padded tap array -> no scatter, no dense 0/1 matrix).
    benc = benc_ref[...]
    h_list = []
    for r in range(stride):
        acc = None
        for (j, d) in taps_rd[r]:
            start = (pre - d) * w
            part = taps[j * cout:(j + 1) * cout, start:start + n_out]
            acc = part if acc is None else acc + part
        if acc is None:
            acc = jnp.zeros((cout, n_out), jnp.float32)
        h_list.append(acc + benc)

    if use_norm:
        h_list = _gn_apply(h_list, rr1_ref[...], g1_ref[...], b1_ref[...],
                           inv_n1)
    h_list = [_gelu(h) for h in h_list]

    # 1x1 (pointwise) conv -> GroupNorm -> GLU (static row slices, no sel)
    wdec = wdec_ref[...].astype(_MXU_DTYPE)
    bdec = bdec_ref[...]
    d_list = [_dot(wdec, h.astype(_MXU_DTYPE)) + bdec for h in h_list]
    if use_norm:
        d_list = _gn_apply(d_list, rr2_ref[...], g2_ref[...], b2_ref[...],
                           inv_n2)

    for r in range(stride):
        dv = d_list[r]
        o_ref[0, r, :, :] = dv[:cout, :] * jax.nn.sigmoid(dv[cout:, :])


# ----------------------------------------------------------------------------
# ISTFT kernel: windowed irDFT matmul + polyphase overlap-add + 1/env
#   z:     (1, 2F, T_pad)   rows ordered (ri, f), frames zero-padded by pre
#   basis: (n_fft, 2F)      window * irDFT basis (column order matches z rows)
#   out:   (1, hop, Q)      residue-major overlap-added samples / env
# ----------------------------------------------------------------------------
def _istft_kernel(z_ref, basis_ref, inv_env_ref, o_ref, *, hop, n_taps, pre,
                  q_len):
    z = z_ref[0].astype(_MXU_DTYPE)
    wf = _dot(basis_ref[...].astype(_MXU_DTYPE), z)    # (n_fft, T_pad)
    acc = wf[0:hop, pre:pre + q_len]
    for d in range(1, n_taps):
        acc = acc + wf[d * hop:(d + 1) * hop, pre - d:pre - d + q_len]
    o_ref[0] = acc * inv_env_ref[...]


# ----------------------------------------------------------------------------
# Trace-time constant builders (numpy)
# ----------------------------------------------------------------------------
def _group_block(groups, channels):
    rr = np.zeros((channels, channels), np.float32)
    gs = channels // groups
    for g in range(groups):
        rr[g * gs:(g + 1) * gs, g * gs:(g + 1) * gs] = 1.0
    return rr


def _make_istft_constants(n_fft, hop, n_freq, n_frames):
    # TODO(synk): ISTFTLayer source not provided; implemented as torch.istft
    # semantics (onesided, periodic hann, center=True, zero-padded bins above
    # n_freq).  The (real, imag) channel order is folded into the basis
    # columns; 1/env is applied in-kernel.
    ff = n_fft // 2 + 1
    n = np.arange(n_fft)
    win = 0.5 * (1.0 - np.cos(2.0 * np.pi * n / n_fft))      # periodic hann
    nf = min(n_freq, ff)
    f = np.arange(nf)
    scale = np.where((f == 0) | (f == n_fft // 2), 1.0, 2.0)
    ang = 2.0 * np.pi * np.outer(f, n) / n_fft               # (nf, n_fft)
    cos_b = scale[:, None] * np.cos(ang) / n_fft
    sin_b = -scale[:, None] * np.sin(ang) / n_fft
    sin_b[f == 0] = 0.0            # irfft ignores imag part of DC ...
    sin_b[f == n_fft // 2] = 0.0   # ... and of Nyquist
    basis = np.zeros((n_fft, 2 * n_freq), np.float32)
    basis[:, :nf] = win[:, None] * cos_b.T
    basis[:, n_freq:n_freq + nf] = win[:, None] * sin_b.T

    l_full = (n_frames - 1) * hop + n_fft
    env = np.zeros((l_full,), np.float64)
    for t in range(n_frames):
        env[t * hop:t * hop + n_fft] += win * win
    inv_env = (1.0 / np.maximum(env, 1e-8)).astype(np.float32)
    q_len = l_full // hop
    inv_env = np.ascontiguousarray(inv_env.reshape(q_len, hop).T)  # (hop, Q)
    return jnp.asarray(basis), jnp.asarray(inv_env)


def _compiler_params(per_step_bytes):
    # scoped-VMEM cap sized to the real per-step footprint with headroom
    limit = int(max(32 * 1024 * 1024,
                    min(96 * 1024 * 1024, 4 * per_step_bytes + (2 << 20))))
    return pltpu.CompilerParams(dimension_semantics=("parallel",),
                                vmem_limit_bytes=limit)


# ----------------------------------------------------------------------------
# Fused decoder-block wrapper (temporal and spectral share this path)
#   x4:    (B, Cin, A, W)  -- conv axis is dim 2 (stride S, kernel K),
#                             dim 3 is passive (kernel 1, stride 1)
#   skip4: same shape or None (fused add)
#   returns (B, Cout, S*A, W)
# ----------------------------------------------------------------------------
def _decoder_block_apply(x4, skip4, p, k, s, ng):
    bsz, cin, a_in, w_dim = x4.shape
    pad = (k - s) // 2

    # polyphase tap table: residue r <- taps j = r + pad + s*d
    taps_rd = []
    d_all = []
    for r in range(s):
        lst = []
        for j in range(k):
            if (j - r - pad) % s == 0:
                d = (j - r - pad) // s
                lst.append((j, d))
                d_all.append(d)
        taps_rd.append(tuple(lst))
    pre = max(0, max(d_all)) if d_all else 0
    post = max(0, -min(d_all)) if d_all else 0

    n_pad = (a_in + pre + post) * w_dim
    n_out = a_in * w_dim

    x_p = jnp.pad(x4, ((0, 0), (0, 0), (pre, post), (0, 0)))
    inputs = [x_p.reshape(bsz, cin, n_pad)]
    if skip4 is not None:
        s_p = jnp.pad(skip4, ((0, 0), (0, 0), (pre, post), (0, 0)))
        inputs.append(s_p.reshape(bsz, cin, n_pad))
    n_batched = len(inputs)

    # weights (PyTorch ConvTranspose layouts)
    w_enc = p['enc_w']                                # (Cin, Cout, K[, 1])
    cout = w_enc.shape[1]
    wenc = jnp.transpose(w_enc.reshape(cin, cout, k),
                         (2, 1, 0)).reshape(k * cout, cin)
    benc = p['enc_b'].reshape(cout, 1)
    wdec = jnp.transpose(p['dec_w'].reshape(cout, 2 * cout), (1, 0))
    bdec = p['dec_b'].reshape(2 * cout, 1)
    inputs += [wenc, benc, wdec, bdec]

    use_norm = ng > 0
    inv_n1 = inv_n2 = 1.0
    if use_norm:
        inputs += [jnp.asarray(_group_block(ng, cout)),
                   p['enc_g'].reshape(cout, 1), p['enc_bb'].reshape(cout, 1),
                   jnp.asarray(_group_block(ng, 2 * cout)),
                   p['dec_g'].reshape(2 * cout, 1),
                   p['dec_bb'].reshape(2 * cout, 1)]
        inv_n1 = 1.0 / ((cout // ng) * s * n_out)
        inv_n2 = 1.0 / ((2 * cout // ng) * s * n_out)

    kern = functools.partial(_block_kernel, cout=cout, stride=s,
                             taps_rd=tuple(taps_rd), pre=pre, w=w_dim,
                             n_out=n_out, use_norm=use_norm,
                             has_skip=skip4 is not None,
                             inv_n1=inv_n1, inv_n2=inv_n2)

    in_specs = []
    for arr in inputs[:n_batched]:
        in_specs.append(pl.BlockSpec((1, arr.shape[1], arr.shape[2]),
                                     lambda b: (b, 0, 0)))
    for arr in inputs[n_batched:]:
        in_specs.append(pl.BlockSpec(arr.shape,
                                     lambda b, _n=arr.ndim: (0,) * _n))
    out_shape = (bsz, s, cout, n_out)
    out_spec = pl.BlockSpec((1, s, cout, n_out), lambda b: (b, 0, 0, 0))

    per_step = sum(int(np.prod(arr.shape[1:])) * 4
                   for arr in inputs[:n_batched])
    per_step += sum(int(np.prod(arr.shape)) * 4 for arr in inputs[n_batched:])
    per_step += s * cout * n_out * 4

    out = pl.pallas_call(
        kern,
        grid=(bsz,),
        in_specs=in_specs,
        out_specs=out_spec,
        out_shape=jax.ShapeDtypeStruct(out_shape, jnp.float32),
        compiler_params=_compiler_params(per_step),
    )(*inputs)

    # interleave stride residues back to natural conv-axis order (layout
    # plumbing in XLA; the kernel stays lane-dense and scatter-free)
    y = out.reshape(bsz, s, cout, a_in, w_dim)
    y = jnp.transpose(y, (0, 2, 3, 1, 4)).reshape(bsz, cout, a_in * s, w_dim)
    return y


def _tblock(x, skip, p, k, s, ng):
    y = _decoder_block_apply(x[..., None],
                             None if skip is None else skip[..., None],
                             p, k, s, ng)
    return y[..., 0]


def _zblock(x, skip, p, kf, sf, ng):
    return _decoder_block_apply(x, skip, p, kf, sf, ng)


# ----------------------------------------------------------------------------
# ISTFT wrapper
#   z: (B, 2*n_src, F, T) channels ordered (src, ri) -> (B, n_src, L_out)
# ----------------------------------------------------------------------------
def _istft_apply(z, n_fft, hop):
    bsz, cz, f_dim, t_frames = z.shape
    n_src = cz // 2
    assert n_fft % hop == 0, "ISTFT polyphase assumes hop | n_fft"
    n_taps = n_fft // hop
    pre = n_taps - 1
    l_full = (t_frames - 1) * hop + n_fft
    q_len = l_full // hop
    half = n_fft // 2
    l_out = l_full - 2 * half

    zz = z.reshape(bsz, n_src, 2 * f_dim, t_frames)
    zz = zz.reshape(bsz * n_src, 2 * f_dim, t_frames)
    zz = jnp.pad(zz, ((0, 0), (0, 0), (pre, pre)))
    t_pad = t_frames + 2 * pre

    basis, inv_env = _make_istft_constants(n_fft, hop, f_dim, t_frames)

    per_step = (2 * f_dim * t_pad + n_fft * 2 * f_dim
                + hop * q_len + hop * q_len) * 4
    kern = functools.partial(_istft_kernel, hop=hop, n_taps=n_taps, pre=pre,
                             q_len=q_len)
    out = pl.pallas_call(
        kern,
        grid=(bsz * n_src,),
        in_specs=[pl.BlockSpec((1, 2 * f_dim, t_pad), lambda i: (i, 0, 0)),
                  pl.BlockSpec(basis.shape, lambda i: (0, 0)),
                  pl.BlockSpec(inv_env.shape, lambda i: (0, 0))],
        out_specs=pl.BlockSpec((1, hop, q_len), lambda i: (i, 0, 0)),
        out_shape=jax.ShapeDtypeStruct((bsz * n_src, hop, q_len), jnp.float32),
        compiler_params=_compiler_params(per_step),
    )(zz, basis, inv_env)

    y = jnp.transpose(out, (0, 2, 1)).reshape(bsz * n_src, l_full)
    y = y[:, half:half + l_out]
    return y.reshape(bsz, n_src, l_out)


# ----------------------------------------------------------------------------
# match_length
# ----------------------------------------------------------------------------
def match_length(x, length):
    # TODO(synk): echidna's match_length source not provided; assumed
    # center-crop / center-zero-pad along the last axis.
    cur = x.shape[-1]
    if cur == length:
        return x
    if cur > length:
        start = (cur - length) // 2
        return x[..., start:start + length]
    pad_l = (length - cur) // 2
    pad_r = length - cur - pad_l
    return jnp.pad(x, [(0, 0)] * (x.ndim - 1) + [(pad_l, pad_r)])


# ----------------------------------------------------------------------------
# Parameter construction (deterministic, synthetic; PyTorch weight layouts)
# ----------------------------------------------------------------------------
def init_block(key, cin, cout, enc_kshape, dec_kshape, ng):
    ks = jax.random.split(key, 8)
    fan_enc = cin * int(np.prod(enc_kshape))
    p = {
        'enc_w': jax.random.normal(ks[0], (cin, cout) + tuple(enc_kshape),
                                   jnp.float32) / np.sqrt(fan_enc),
        'enc_b': 0.05 * jax.random.normal(ks[1], (cout,), jnp.float32),
        'dec_w': jax.random.normal(ks[2], (cout, 2 * cout) + tuple(dec_kshape),
                                   jnp.float32) / np.sqrt(cout),
        'dec_b': 0.05 * jax.random.normal(ks[3], (2 * cout,), jnp.float32),
    }
    if ng > 0:
        p['enc_g'] = 1.0 + 0.05 * jax.random.normal(ks[4], (cout,), jnp.float32)
        p['enc_bb'] = 0.05 * jax.random.normal(ks[5], (cout,), jnp.float32)
        p['dec_g'] = 1.0 + 0.05 * jax.random.normal(ks[6], (2 * cout,),
                                                    jnp.float32)
        p['dec_bb'] = 0.05 * jax.random.normal(ks[7], (2 * cout,), jnp.float32)
    return p


def build_decoder(key, *, in_channel, out_channel, mid_channels, kernel_size,
                  stride, inner_kernel_size, inner_stride, groupnorm_layers=2,
                  groupnorm_groups=4, output_residual=False):
    n_levels = len(mid_channels)
    if not isinstance(kernel_size, (list, tuple)):
        kernel_size = [kernel_size] * (n_levels - 1)
    if not isinstance(stride, (list, tuple)):
        stride = [stride] * (n_levels - 1)
    n_fft = 2 * kernel_size[-1]
    for s in stride[:-1]:
        n_fft *= s
    hop = 1
    for s in stride:
        hop *= s
    src = (out_channel - 1) if output_residual else out_channel
    keys = iter(jax.random.split(key, 2 * n_levels + 1))

    dec_ng = 0 if groupnorm_layers <= 0 else groupnorm_groups
    decoder = (init_block(next(keys), mid_channels[-1], mid_channels[-2],
                          (inner_kernel_size,), (1,), dec_ng),
               (inner_kernel_size, inner_stride, dec_ng))

    tdecoder, zdecoder = [], []
    for ei in range(n_levels - 2, -1, -1):
        c_in = mid_channels[ei]
        c_out = src * in_channel if ei == 0 else mid_channels[ei - 1]
        ng = 0 if ei < n_levels - groupnorm_layers else groupnorm_groups
        tdecoder.append((init_block(next(keys), c_in, c_out,
                                    (kernel_size[ei],), (1,), ng),
                         (kernel_size[ei], stride[ei], ng)))
    for ei in range(n_levels - 2, -1, -1):
        c_in = mid_channels[ei]
        c_out = 2 * src * in_channel if ei == 0 else mid_channels[ei - 1]
        ng = 0 if ei < n_levels - groupnorm_layers else groupnorm_groups
        sf = stride[ei] if ei < n_levels - 2 else kernel_size[ei]
        zdecoder.append((init_block(next(keys), c_in, c_out,
                                    (kernel_size[ei], 1), (1, 1), ng),
                         (kernel_size[ei], sf, ng)))
    return dict(decoder=decoder, tdecoder=tdecoder, zdecoder=zdecoder,
                n_fft=n_fft, hop=hop, in_channel=in_channel,
                out_channel=out_channel, output_residual=output_residual)


# ----------------------------------------------------------------------------
# DemucsDecoder.forward
# ----------------------------------------------------------------------------
def demucs_decoder_forward(model, enc, t_encs, z_encs, x):
    batch = enc.shape[0]
    src = (model['out_channel'] - 1) if model['output_residual'] \
        else model['out_channel']
    in_ch = model['in_channel']

    # inner decoder block (temporal, no skip)
    p, (k, s, ng) = model['decoder']
    dec = _tblock(enc, None, p, k, s, ng)                 # (B, C, L)

    # temporal branch (skip add fused into each block kernel)
    t = dec
    for (p, (k, s, ng)), skip in zip(model['tdecoder'], t_encs[::-1]):
        skip_m = match_length(skip, t.shape[-1])
        t = _tblock(t, skip_m, p, k, s, ng)
    t_dec = t.reshape(batch, src, in_ch, -1)

    # spectral branch (dec viewed as (B, C, F=1, T))
    z = dec[:, :, None, :]
    for (p, (kf, sf, ng)), skip in zip(model['zdecoder'], z_encs[::-1]):
        skip_m = match_length(skip, z.shape[-1])
        z = _zblock(z, skip_m, p, kf, sf, ng)
    z_wav = _istft_apply(z, model['n_fft'], model['hop'])
    z_dec = z_wav.reshape(batch, src, in_ch, -1)

    x_len = min(t_dec.shape[-1], z_dec.shape[-1])
    waveform = match_length(t_dec, x_len) + match_length(z_dec, x_len)
    if model['output_residual']:
        other = match_length(x, waveform.shape[-1]) - jnp.sum(waveform, axis=-3)
        waveform = jnp.concatenate([waveform, other[..., None, :, :]], axis=-3)
    if waveform.shape[-3] == 1:
        waveform = jnp.squeeze(waveform, axis=-3)
    if waveform.shape[-2] == 1:
        waveform = jnp.squeeze(waveform, axis=-2)
    return waveform


# ----------------------------------------------------------------------------
# Demo
# ----------------------------------------------------------------------------
if __name__ == "__main__":
    root = jax.random.PRNGKey(0)
    k_model, k_enc, k_t0, k_t1, k_z0, k_z1, k_x = jax.random.split(root, 7)

    B = 2
    mid_channels = [4, 8, 16]
    model = build_decoder(k_model, in_channel=1, out_channel=2,
                          mid_channels=mid_channels, kernel_size=4, stride=2,
                          inner_kernel_size=4, inner_stride=2,
                          groupnorm_layers=2, groupnorm_groups=4,
                          output_residual=False)

    T_enc = 8
    enc = 0.5 * jax.random.normal(k_enc, (B, mid_channels[-1], T_enc),
                                  jnp.float32)
    # skip connections mirroring the encoder outputs at each level
    t_encs = [0.5 * jax.random.normal(k_t0, (B, 4, 32), jnp.float32),
              0.5 * jax.random.normal(k_t1, (B, 8, 16), jnp.float32)]
    z_encs = [0.5 * jax.random.normal(k_z0, (B, 4, 4, 16), jnp.float32),
              0.5 * jax.random.normal(k_z1, (B, 8, 1, 16), jnp.float32)]
    x_mix = 0.5 * jax.random.normal(k_x, (B, 1, 64), jnp.float32)

    fwd = jax.jit(functools.partial(demucs_decoder_forward, model))
    out = jax.block_until_ready(fwd(enc, t_encs, z_encs, x_mix))
    assert out.shape == (B, 2, 60), out.shape
    assert bool(jnp.all(jnp.isfinite(out)))
    print("KERNEL_OK")
</pallas_src>

<mosaic_0001>
module attributes {stable_mosaic.version = 11 : i64} {
  func.func @_block_kernel(%arg0: i32, %arg1: memref<1x16x10xf32, #tpu.memory_space<vmem>>, %arg2: memref<32x16xf32, #tpu.memory_space<vmem>>, %arg3: memref<8x1xf32, #tpu.memory_space<vmem>>, %arg4: memref<16x8xf32, #tpu.memory_space<vmem>>, %arg5: memref<16x1xf32, #tpu.memory_space<vmem>>, %arg6: memref<8x8xf32, #tpu.memory_space<vmem>>, %arg7: memref<8x1xf32, #tpu.memory_space<vmem>>, %arg8: memref<8x1xf32, #tpu.memory_space<vmem>>, %arg9: memref<16x16xf32, #tpu.memory_space<vmem>>, %arg10: memref<16x1xf32, #tpu.memory_space<vmem>>, %arg11: memref<16x1xf32, #tpu.memory_space<vmem>>, %arg12: memref<1x2x8x8xf32, #tpu.memory_space<vmem>>) attributes {dimension_semantics = [#tpu.dimension_semantics<parallel>], iteration_bounds = array<i64: 2>, scalar_prefetch = 0 : i64, scratch_operands = 0 : i64, tpu.core_type = #tpu.core_type<tc>, window_params = [{transform_indices = @transform_0, window_bounds = array<i64: 1, 16, 10>}, {pipeline_mode = #tpu.pipeline_mode<synchronous>, transform_indices = @transform_1, window_bounds = array<i64: 32, 16>}, {pipeline_mode = #tpu.pipeline_mode<synchronous>, transform_indices = @transform_2, window_bounds = array<i64: 8, 1>}, {pipeline_mode = #tpu.pipeline_mode<synchronous>, transform_indices = @transform_3, window_bounds = array<i64: 16, 8>}, {pipeline_mode = #tpu.pipeline_mode<synchronous>, transform_indices = @transform_4, window_bounds = array<i64: 16, 1>}, {pipeline_mode = #tpu.pipeline_mode<synchronous>, transform_indices = @transform_5, window_bounds = array<i64: 8, 8>}, {pipeline_mode = #tpu.pipeline_mode<synchronous>, transform_indices = @transform_6, window_bounds = array<i64: 8, 1>}, {pipeline_mode = #tpu.pipeline_mode<synchronous>, transform_indices = @transform_7, window_bounds = array<i64: 8, 1>}, {pipeline_mode = #tpu.pipeline_mode<synchronous>, transform_indices = @transform_8, window_bounds = array<i64: 16, 16>}, {pipeline_mode = #tpu.pipeline_mode<synchronous>, transform_indices = @transform_9, window_bounds = array<i64: 16, 1>}, {pipeline_mode = #tpu.pipeline_mode<synchronous>, transform_indices = @transform_10, window_bounds = array<i64: 16, 1>}, {transform_indices = @transform_11, window_bounds = array<i64: 1, 2, 8, 8>}]} {
    %c0 = arith.constant 0 : index
    %c0_0 = arith.constant 0 : index
    %c0_1 = arith.constant 0 : index
    %0 = vector.load %arg1[%c0, %c0_0, %c0_1] : memref<1x16x10xf32, #tpu.memory_space<vmem>>, vector<1x16x10xf32>
    %1 = vector.shape_cast %0 : vector<1x16x10xf32> to vector<16x10xf32>
    %c0_2 = arith.constant 0 : index
    %c0_3 = arith.constant 0 : index
    %2 = vector.load %arg2[%c0_2, %c0_3] : memref<32x16xf32, #tpu.memory_space<vmem>>, vector<32x16xf32>
    %cst = arith.constant dense<0.000000e+00> : vector<32x10xf32>
    %3 = tpu.matmul %2, %1, %cst {dimension_numbers = #tpu.dot_dimension_numbers<[1], [0], [0], [1], [0, 0, 1, 1], [], []>} : vector<32x16xf32>, vector<16x10xf32>, vector<32x10xf32> -> vector<32x10xf32>
    %c0_4 = arith.constant 0 : index
    %c0_5 = arith.constant 0 : index
    %4 = vector.load %arg3[%c0_4, %c0_5] : memref<8x1xf32, #tpu.memory_space<vmem>>, vector<8x1xf32>
    %5 = vector.extract_strided_slice %3 {offsets = [8, 1], sizes = [8, 8], strides = [1, 1]} : vector<32x10xf32> to vector<8x8xf32>
    %6 = vector.extract_strided_slice %3 {offsets = [24, 0], sizes = [8, 8], strides = [1, 1]} : vector<32x10xf32> to vector<8x8xf32>
    %7 = arith.addf %5, %6 : vector<8x8xf32>
    %8 = vector.broadcast %4 : vector<8x1xf32> to vector<8x8xf32>
    %9 = arith.addf %7, %8 : vector<8x8xf32>
    %10 = vector.extract_strided_slice %3 {offsets = [0, 2], sizes = [8, 8], strides = [1, 1]} : vector<32x10xf32> to vector<8x8xf32>
    %11 = vector.extract_strided_slice %3 {offsets = [16, 1], sizes = [8, 8], strides = [1, 1]} : vector<32x10xf32> to vector<8x8xf32>
    %12 = arith.addf %10, %11 : vector<8x8xf32>
    %13 = vector.broadcast %4 : vector<8x1xf32> to vector<8x8xf32>
    %14 = arith.addf %12, %13 : vector<8x8xf32>
    %c0_6 = arith.constant 0 : index
    %c0_7 = arith.constant 0 : index
    %15 = vector.load %arg6[%c0_6, %c0_7] : memref<8x8xf32, #tpu.memory_space<vmem>>, vector<8x8xf32>
    %c0_8 = arith.constant 0 : index
    %c0_9 = arith.constant 0 : index
    %16 = vector.load %arg7[%c0_8, %c0_9] : memref<8x1xf32, #tpu.memory_space<vmem>>, vector<8x1xf32>
    %c0_10 = arith.constant 0 : index
    %c0_11 = arith.constant 0 : index
    %17 = vector.load %arg8[%c0_10, %c0_11] : memref<8x1xf32, #tpu.memory_space<vmem>>, vector<8x1xf32>
    %cst_12 = arith.constant dense<0.000000e+00> : vector<8xf32>
    %18 = vector.multi_reduction <add>, %9, %cst_12 [1] : vector<8x8xf32> to vector<8xf32>
    %19 = vector.shape_cast %18 : vector<8xf32> to vector<8x1xf32>
    %20 = arith.mulf %9, %9 : vector<8x8xf32>
    %cst_13 = arith.constant dense<0.000000e+00> : vector<8xf32>
    %21 = vector.multi_reduction <add>, %20, %cst_13 [1] : vector<8x8xf32> to vector<8xf32>
    %22 = vector.shape_cast %21 : vector<8xf32> to vector<8x1xf32>
    %cst_14 = arith.constant dense<0.000000e+00> : vector<8xf32>
    %23 = vector.multi_reduction <add>, %14, %cst_14 [1] : vector<8x8xf32> to vector<8xf32>
    %24 = vector.shape_cast %23 : vector<8xf32> to vector<8x1xf32>
    %25 = arith.mulf %14, %14 : vector<8x8xf32>
    %cst_15 = arith.constant dense<0.000000e+00> : vector<8xf32>
    %26 = vector.multi_reduction <add>, %25, %cst_15 [1] : vector<8x8xf32> to vector<8xf32>
    %27 = vector.shape_cast %26 : vector<8xf32> to vector<8x1xf32>
    %28 = arith.addf %19, %24 : vector<8x1xf32>
    %29 = arith.addf %22, %27 : vector<8x1xf32>
    %cst_16 = arith.constant dense<0.000000e+00> : vector<8x1xf32>
    %30 = tpu.matmul %15, %28, %cst_16 {dimension_numbers = #tpu.dot_dimension_numbers<[1], [0], [0], [1], [0, 0, 1, 1], [], []>} : vector<8x8xf32>, vector<8x1xf32>, vector<8x1xf32> -> vector<8x1xf32>
    %cst_17 = arith.constant 3.125000e-02 : f32
    %31 = vector.broadcast %cst_17 : f32 to vector<8x1xf32>
    %32 = arith.mulf %30, %31 : vector<8x1xf32>
    %cst_18 = arith.constant dense<0.000000e+00> : vector<8x1xf32>
    %33 = tpu.matmul %15, %29, %cst_18 {dimension_numbers = #tpu.dot_dimension_numbers<[1], [0], [0], [1], [0, 0, 1, 1], [], []>} : vector<8x8xf32>, vector<8x1xf32>, vector<8x1xf32> -> vector<8x1xf32>
    %cst_19 = arith.constant 3.125000e-02 : f32
    %34 = vector.broadcast %cst_19 : f32 to vector<8x1xf32>
    %35 = arith.mulf %33, %34 : vector<8x1xf32>
    %36 = arith.mulf %32, %32 : vector<8x1xf32>
    %37 = arith.subf %35, %36 : vector<8x1xf32>
    %cst_20 = arith.constant 9.99999974E-6 : f32
    %38 = vector.broadcast %cst_20 : f32 to vector<8x1xf32>
    %39 = arith.addf %37, %38 : vector<8x1xf32>
    %40 = math.rsqrt %39 : vector<8x1xf32>
    %41 = arith.mulf %40, %16 : vector<8x1xf32>
    %42 = arith.mulf %32, %41 : vector<8x1xf32>
    %43 = arith.subf %17, %42 : vector<8x1xf32>
    %44 = vector.broadcast %41 : vector<8x1xf32> to vector<8x8xf32>
    %45 = arith.mulf %9, %44 : vector<8x8xf32>
    %46 = vector.broadcast %43 : vector<8x1xf32> to vector<8x8xf32>
    %47 = arith.addf %45, %46 : vector<8x8xf32>
    %48 = vector.broadcast %41 : vector<8x1xf32> to vector<8x8xf32>
    %49 = arith.mulf %14, %48 : vector<8x8xf32>
    %50 = vector.broadcast %43 : vector<8x1xf32> to vector<8x8xf32>
    %51 = arith.addf %49, %50 : vector<8x8xf32>
    %cst_21 = arith.constant 5.000000e-01 : f32
    %52 = vector.broadcast %cst_21 : f32 to vector<8x8xf32>
    %53 = arith.mulf %52, %47 : vector<8x8xf32>
    %cst_22 = arith.constant 0.707106769 : f32
    %54 = vector.broadcast %cst_22 : f32 to vector<8x8xf32>
    %55 = arith.mulf %47, %54 : vector<8x8xf32>
    %cst_23 = arith.constant 0.000000e+00 : f32
    %56 = vector.broadcast %cst_23 : f32 to vector<8x8xf32>
    %57 = arith.cmpf oge, %55, %56 : vector<8x8xf32>
    %cst_24 = arith.constant 1.000000e+00 : f32
    %cst_25 = arith.constant -1.000000e+00 : f32
    %58 = vector.broadcast %cst_24 : f32 to vector<8x8xf32>
    %59 = vector.broadcast %cst_25 : f32 to vector<8x8xf32>
    %60 = arith.select %57, %58, %59 : vector<8x8xi1>, vector<8x8xf32>
    %61 = math.absf %55 : vector<8x8xf32>
    %cst_26 = arith.constant 0.327591091 : f32
    %62 = vector.broadcast %cst_26 : f32 to vector<8x8xf32>
    %63 = arith.mulf %62, %61 : vector<8x8xf32>
    %cst_27 = arith.constant 1.000000e+00 : f32
    %64 = vector.broadcast %cst_27 : f32 to vector<8x8xf32>
    %65 = arith.addf %64, %63 : vector<8x8xf32>
    %66 = tpu.reciprocal %65 {approx = true} : vector<8x8xf32> -> vector<8x8xf32>
    %67 = arith.mulf %65, %66 : vector<8x8xf32>
    %cst_28 = arith.constant 2.000000e+00 : f32
    %68 = vector.broadcast %cst_28 : f32 to vector<8x8xf32>
    %69 = arith.subf %68, %67 : vector<8x8xf32>
    %70 = arith.mulf %66, %69 : vector<8x8xf32>
    %cst_29 = arith.constant 1.06140542 : f32
    %71 = vector.broadcast %cst_29 : f32 to vector<8x8xf32>
    %72 = arith.mulf %71, %70 : vector<8x8xf32>
    %cst_30 = arith.constant -1.45315206 : f32
    %73 = vector.broadcast %cst_30 : f32 to vector<8x8xf32>
    %74 = arith.addf %72, %73 : vector<8x8xf32>
    %75 = arith.mulf %74, %70 : vector<8x8xf32>
    %cst_31 = arith.constant 1.42141378 : f32
    %76 = vector.broadcast %cst_31 : f32 to vector<8x8xf32>
    %77 = arith.addf %75, %76 : vector<8x8xf32>
    %78 = arith.mulf %77, %70 : vector<8x8xf32>
    %cst_32 = arith.constant -0.284496725 : f32
    %79 = vector.broadcast %cst_32 : f32 to vector<8x8xf32>
    %80 = arith.addf %78, %79 : vector<8x8xf32>
    %81 = arith.mulf %80, %70 : vector<8x8xf32>
    %cst_33 = arith.constant 0.254829586 : f32
    %82 = vector.broadcast %cst_33 : f32 to vector<8x8xf32>
    %83 = arith.addf %81, %82 : vector<8x8xf32>
    %84 = arith.mulf %83, %70 : vector<8x8xf32>
    %cst_34 = arith.constant 0.000000e+00 : f32
    %85 = vector.broadcast %cst_34 : f32 to vector<8x8xf32>
    %86 = arith.subf %85, %61 : vector<8x8xf32>
    %87 = arith.mulf %86, %61 : vector<8x8xf32>
    %88 = math.exp %87 : vector<8x8xf32>
    %89 = arith.mulf %84, %88 : vector<8x8xf32>
    %cst_35 = arith.constant 1.000000e+00 : f32
    %90 = vector.broadcast %cst_35 : f32 to vector<8x8xf32>
    %91 = arith.subf %90, %89 : vector<8x8xf32>
    %92 = arith.mulf %60, %91 : vector<8x8xf32>
    %cst_36 = arith.constant 1.000000e+00 : f32
    %93 = vector.broadcast %cst_36 : f32 to vector<8x8xf32>
    %94 = arith.addf %93, %92 : vector<8x8xf32>
    %95 = arith.mulf %53, %94 : vector<8x8xf32>
    %cst_37 = arith.constant 5.000000e-01 : f32
    %96 = vector.broadcast %cst_37 : f32 to vector<8x8xf32>
    %97 = arith.mulf %96, %51 : vector<8x8xf32>
    %cst_38 = arith.constant 0.707106769 : f32
    %98 = vector.broadcast %cst_38 : f32 to vector<8x8xf32>
    %99 = arith.mulf %51, %98 : vector<8x8xf32>
    %cst_39 = arith.constant 0.000000e+00 : f32
    %100 = vector.broadcast %cst_39 : f32 to vector<8x8xf32>
    %101 = arith.cmpf oge, %99, %100 : vector<8x8xf32>
    %cst_40 = arith.constant 1.000000e+00 : f32
    %cst_41 = arith.constant -1.000000e+00 : f32
    %102 = vector.broadcast %cst_40 : f32 to vector<8x8xf32>
    %103 = vector.broadcast %cst_41 : f32 to vector<8x8xf32>
    %104 = arith.select %101, %102, %103 : vector<8x8xi1>, vector<8x8xf32>
    %105 = math.absf %99 : vector<8x8xf32>
    %cst_42 = arith.constant 0.327591091 : f32
    %106 = vector.broadcast %cst_42 : f32 to vector<8x8xf32>
    %107 = arith.mulf %106, %105 : vector<8x8xf32>
    %cst_43 = arith.constant 1.000000e+00 : f32
    %108 = vector.broadcast %cst_43 : f32 to vector<8x8xf32>
    %109 = arith.addf %108, %107 : vector<8x8xf32>
    %110 = tpu.reciprocal %109 {approx = true} : vector<8x8xf32> -> vector<8x8xf32>
    %111 = arith.mulf %109, %110 : vector<8x8xf32>
    %cst_44 = arith.constant 2.000000e+00 : f32
    %112 = vector.broadcast %cst_44 : f32 to vector<8x8xf32>
    %113 = arith.subf %112, %111 : vector<8x8xf32>
    %114 = arith.mulf %110, %113 : vector<8x8xf32>
    %cst_45 = arith.constant 1.06140542 : f32
    %115 = vector.broadcast %cst_45 : f32 to vector<8x8xf32>
    %116 = arith.mulf %115, %114 : vector<8x8xf32>
    %cst_46 = arith.constant -1.45315206 : f32
    %117 = vector.broadcast %cst_46 : f32 to vector<8x8xf32>
    %118 = arith.addf %116, %117 : vector<8x8xf32>
    %119 = arith.mulf %118, %114 : vector<8x8xf32>
    %cst_47 = arith.constant 1.42141378 : f32
    %120 = vector.broadcast %cst_47 : f32 to vector<8x8xf32>
    %121 = arith.addf %119, %120 : vector<8x8xf32>
    %122 = arith.mulf %121, %114 : vector<8x8xf32>
    %cst_48 = arith.constant -0.284496725 : f32
    %123 = vector.broadcast %cst_48 : f32 to vector<8x8xf32>
    %124 = arith.addf %122, %123 : vector<8x8xf32>
    %125 = arith.mulf %124, %114 : vector<8x8xf32>
    %cst_49 = arith.constant 0.254829586 : f32
    %126 = vector.broadcast %cst_49 : f32 to vector<8x8xf32>
    %127 = arith.addf %125, %126 : vector<8x8xf32>
    %128 = arith.mulf %127, %114 : vector<8x8xf32>
    %cst_50 = arith.constant 0.000000e+00 : f32
    %129 = vector.broadcast %cst_50 : f32 to vector<8x8xf32>
    %130 = arith.subf %129, %105 : vector<8x8xf32>
    %131 = arith.mulf %130, %105 : vector<8x8xf32>
    %132 = math.exp %131 : vector<8x8xf32>
    %133 = arith.mulf %128, %132 : vector<8x8xf32>
    %cst_51 = arith.constant 1.000000e+00 : f32
    %134 = vector.broadcast %cst_51 : f32 to vector<8x8xf32>
    %135 = arith.subf %134, %133 : vector<8x8xf32>
    %136 = arith.mulf %104, %135 : vector<8x8xf32>
    %cst_52 = arith.constant 1.000000e+00 : f32
    %137 = vector.broadcast %cst_52 : f32 to vector<8x8xf32>
    %138 = arith.addf %137, %136 : vector<8x8xf32>
    %139 = arith.mulf %97, %138 : vector<8x8xf32>
    %c0_53 = arith.constant 0 : index
    %c0_54 = arith.constant 0 : index
    %140 = vector.load %arg4[%c0_53, %c0_54] : memref<16x8xf32, #tpu.memory_space<vmem>>, vector<16x8xf32>
    %c0_55 = arith.constant 0 : index
    %c0_56 = arith.constant 0 : index
    %141 = vector.load %arg5[%c0_55, %c0_56] : memref<16x1xf32, #tpu.memory_space<vmem>>, vector<16x1xf32>
    %cst_57 = arith.constant dense<0.000000e+00> : vector<16x8xf32>
    %142 = tpu.matmul %140, %95, %cst_57 {dimension_numbers = #tpu.dot_dimension_numbers<[1], [0], [0], [1], [0, 0, 1, 1], [], []>} : vector<16x8xf32>, vector<8x8xf32>, vector<16x8xf32> -> vector<16x8xf32>
    %143 = vector.broadcast %141 : vector<16x1xf32> to vector<16x8xf32>
    %144 = arith.addf %142, %143 : vector<16x8xf32>
    %cst_58 = arith.constant dense<0.000000e+00> : vector<16x8xf32>
    %145 = tpu.matmul %140, %139, %cst_58 {dimension_numbers = #tpu.dot_dimension_numbers<[1], [0], [0], [1], [0, 0, 1, 1], [], []>} : vector<16x8xf32>, vector<8x8xf32>, vector<16x8xf32> -> vector<16x8xf32>
    %146 = vector.broadcast %141 : vector<16x1xf32> to vector<16x8xf32>
    %147 = arith.addf %145, %146 : vector<16x8xf32>
    %c0_59 = arith.constant 0 : index
    %c0_60 = arith.constant 0 : index
    %148 = vector.load %arg9[%c0_59, %c0_60] : memref<16x16xf32, #tpu.memory_space<vmem>>, vector<16x16xf32>
    %c0_61 = arith.constant 0 : index
    %c0_62 = arith.constant 0 : index
    %149 = vector.load %arg10[%c0_61, %c0_62] : memref<16x1xf32, #tpu.memory_space<vmem>>, vector<16x1xf32>
    %c0_63 = arith.constant 0 : index
    %c0_64 = arith.constant 0 : index
    %150 = vector.load %arg11[%c0_63, %c0_64] : memref<16x1xf32, #tpu.memory_space<vmem>>, vector<16x1xf32>
    %cst_65 = arith.constant dense<0.000000e+00> : vector<16xf32>
    %151 = vector.multi_reduction <add>, %144, %cst_65 [1] : vector<16x8xf32> to vector<16xf32>
    %152 = vector.shape_cast %151 : vector<16xf32> to vector<16x1xf32>
    %153 = arith.mulf %144, %144 : vector<16x8xf32>
    %cst_66 = arith.constant dense<0.000000e+00> : vector<16xf32>
    %154 = vector.multi_reduction <add>, %153, %cst_66 [1] : vector<16x8xf32> to vector<16xf32>
    %155 = vector.shape_cast %154 : vector<16xf32> to vector<16x1xf32>
    %cst_67 = arith.constant dense<0.000000e+00> : vector<16xf32>
    %156 = vector.multi_reduction <add>, %147, %cst_67 [1] : vector<16x8xf32> to vector<16xf32>
    %157 = vector.shape_cast %156 : vector<16xf32> to vector<16x1xf32>
    %158 = arith.mulf %147, %147 : vector<16x8xf32>
    %cst_68 = arith.constant dense<0.000000e+00> : vector<16xf32>
    %159 = vector.multi_reduction <add>, %158, %cst_68 [1] : vector<16x8xf32> to vector<16xf32>
    %160 = vector.shape_cast %159 : vector<16xf32> to vector<16x1xf32>
    %161 = arith.addf %152, %157 : vector<16x1xf32>
    %162 = arith.addf %155, %160 : vector<16x1xf32>
    %cst_69 = arith.constant dense<0.000000e+00> : vector<16x1xf32>
    %163 = tpu.matmul %148, %161, %cst_69 {dimension_numbers = #tpu.dot_dimension_numbers<[1], [0], [0], [1], [0, 0, 1, 1], [], []>} : vector<16x16xf32>, vector<16x1xf32>, vector<16x1xf32> -> vector<16x1xf32>
    %cst_70 = arith.constant 1.562500e-02 : f32
    %164 = vector.broadcast %cst_70 : f32 to vector<16x1xf32>
    %165 = arith.mulf %163, %164 : vector<16x1xf32>
    %cst_71 = arith.constant dense<0.000000e+00> : vector<16x1xf32>
    %166 = tpu.matmul %148, %162, %cst_71 {dimension_numbers = #tpu.dot_dimension_numbers<[1], [0], [0], [1], [0, 0, 1, 1], [], []>} : vector<16x16xf32>, vector<16x1xf32>, vector<16x1xf32> -> vector<16x1xf32>
    %cst_72 = arith.constant 1.562500e-02 : f32
    %167 = vector.broadcast %cst_72 : f32 to vector<16x1xf32>
    %168 = arith.mulf %166, %167 : vector<16x1xf32>
    %169 = arith.mulf %165, %165 : vector<16x1xf32>
    %170 = arith.subf %168, %169 : vector<16x1xf32>
    %cst_73 = arith.constant 9.99999974E-6 : f32
    %171 = vector.broadcast %cst_73 : f32 to vector<16x1xf32>
    %172 = arith.addf %170, %171 : vector<16x1xf32>
    %173 = math.rsqrt %172 : vector<16x1xf32>
    %174 = arith.mulf %173, %149 : vector<16x1xf32>
    %175 = arith.mulf %165, %174 : vector<16x1xf32>
    %176 = arith.subf %150, %175 : vector<16x1xf32>
    %177 = vector.broadcast %174 : vector<16x1xf32> to vector<16x8xf32>
    %178 = arith.mulf %144, %177 : vector<16x8xf32>
    %179 = vector.broadcast %176 : vector<16x1xf32> to vector<16x8xf32>
    %180 = arith.addf %178, %179 : vector<16x8xf32>
    %181 = vector.broadcast %174 : vector<16x1xf32> to vector<16x8xf32>
    %182 = arith.mulf %147, %181 : vector<16x8xf32>
    %183 = vector.broadcast %176 : vector<16x1xf32> to vector<16x8xf32>
    %184 = arith.addf %182, %183 : vector<16x8xf32>
    %185 = vector.extract_strided_slice %180 {offsets = [0, 0], sizes = [8, 8], strides = [1, 1]} : vector<16x8xf32> to vector<8x8xf32>
    %186 = vector.extract_strided_slice %180 {offsets = [8, 0], sizes = [8, 8], strides = [1, 1]} : vector<16x8xf32> to vector<8x8xf32>
    %187 = arith.negf %186 : vector<8x8xf32>
    %188 = math.exp %187 : vector<8x8xf32>
    %cst_74 = arith.constant 1.000000e+00 : f32
    %189 = vector.broadcast %cst_74 : f32 to vector<8x8xf32>
    %190 = arith.addf %189, %188 : vector<8x8xf32>
    %191 = arith.divf %189, %190 : vector<8x8xf32>
    %192 = arith.mulf %185, %191 : vector<8x8xf32>
    %c0_75 = arith.constant 0 : index
    %c0_76 = arith.constant 0 : index
    %c0_77 = arith.constant 0 : index
    %c0_78 = arith.constant 0 : index
    %193 = vector.load %arg12[%c0_75, %c0_76, %c0_77, %c0_78] : memref<1x2x8x8xf32, #tpu.memory_space<vmem>>, vector<1x1x8x8xf32>
    %194 = vector.shape_cast %193 : vector<1x1x8x8xf32> to vector<8x8xf32>
    %195 = vector.shape_cast %192 : vector<8x8xf32> to vector<1x1x8x8xf32>
    tpu.vector_store %arg12[%c0_75, %c0_76, %c0_77, %c0_78], %195 {strides = array<i32>} : memref<1x2x8x8xf32, #tpu.memory_space<vmem>>, vector<1x1x8x8xf32>,
    %196 = vector.extract_strided_slice %184 {offsets = [0, 0], sizes = [8, 8], strides = [1, 1]} : vector<16x8xf32> to vector<8x8xf32>
    %197 = vector.extract_strided_slice %184 {offsets = [8, 0], sizes = [8, 8], strides = [1, 1]} : vector<16x8xf32> to vector<8x8xf32>
    %198 = arith.negf %197 : vector<8x8xf32>
    %199 = math.exp %198 : vector<8x8xf32>
    %cst_79 = arith.constant 1.000000e+00 : f32
    %200 = vector.broadcast %cst_79 : f32 to vector<8x8xf32>
    %201 = arith.addf %200, %199 : vector<8x8xf32>
    %202 = arith.divf %200, %201 : vector<8x8xf32>
    %203 = arith.mulf %196, %202 : vector<8x8xf32>
    %c0_80 = arith.constant 0 : index
    %c1 = arith.constant 1 : index
    %c0_81 = arith.constant 0 : index
    %c0_82 = arith.constant 0 : index
    %204 = vector.load %arg12[%c0_80, %c1, %c0_81, %c0_82] : memref<1x2x8x8xf32, #tpu.memory_space<vmem>>, vector<1x1x8x8xf32>
    %205 = vector.shape_cast %204 : vector<1x1x8x8xf32> to vector<8x8xf32>
    %206 = vector.shape_cast %203 : vector<8x8xf32> to vector<1x1x8x8xf32>
    tpu.vector_store %arg12[%c0_80, %c1, %c0_81, %c0_82], %206 {strides = array<i32>} : memref<1x2x8x8xf32, #tpu.memory_space<vmem>>, vector<1x1x8x8xf32>,
    return
  }
  func.func @transform_0(%arg0: i32) -> (i32, i32, i32) {
    %c0_i32 = arith.constant 0 : i32
    %c0_i32_0 = arith.constant 0 : i32
    %c0_i32_1 = arith.constant 0 : i32
    return %arg0, %c0_i32, %c0_i32_0 : i32, i32, i32
  }
  func.func @transform_1(%arg0: i32) -> (i32, i32) {
    %c0_i32 = arith.constant 0 : i32
    %c0_i32_0 = arith.constant 0 : i32
    %c0_i32_1 = arith.constant 0 : i32
    return %c0_i32, %c0_i32_0 : i32, i32
  }
  func.func @transform_2(%arg0: i32) -> (i32, i32) {
    %c0_i32 = arith.constant 0 : i32
    %c0_i32_0 = arith.constant 0 : i32
    %c0_i32_1 = arith.constant 0 : i32
    return %c0_i32, %c0_i32_0 : i32, i32
  }
  func.func @transform_3(%arg0: i32) -> (i32, i32) {
    %c0_i32 = arith.constant 0 : i32
    %c0_i32_0 = arith.constant 0 : i32
    %c0_i32_1 = arith.constant 0 : i32
    return %c0_i32, %c0_i32_0 : i32, i32
  }
  func.func @transform_4(%arg0: i32) -> (i32, i32) {
    %c0_i32 = arith.constant 0 : i32
    %c0_i32_0 = arith.constant 0 : i32
    %c0_i32_1 = arith.constant 0 : i32
    return %c0_i32, %c0_i32_0 : i32, i32
  }
  func.func @transform_5(%arg0: i32) -> (i32, i32) {
    %c0_i32 = arith.constant 0 : i32
    %c0_i32_0 = arith.constant 0 : i32
    %c0_i32_1 = arith.constant 0 : i32
    return %c0_i32, %c0_i32_0 : i32, i32
  }
  func.func @transform_6(%arg0: i32) -> (i32, i32) {
    %c0_i32 = arith.constant 0 : i32
    %c0_i32_0 = arith.constant 0 : i32
    %c0_i32_1 = arith.constant 0 : i32
    return %c0_i32, %c0_i32_0 : i32, i32
  }
  func.func @transform_7(%arg0: i32) -> (i32, i32) {
    %c0_i32 = arith.constant 0 : i32
    %c0_i32_0 = arith.constant 0 : i32
    %c0_i32_1 = arith.constant 0 : i32
    return %c0_i32, %c0_i32_0 : i32, i32
  }
  func.func @transform_8(%arg0: i32) -> (i32, i32) {
    %c0_i32 = arith.constant 0 : i32
    %c0_i32_0 = arith.constant 0 : i32
    %c0_i32_1 = arith.constant 0 : i32
    return %c0_i32, %c0_i32_0 : i32, i32
  }
  func.func @transform_9(%arg0: i32) -> (i32, i32) {
    %c0_i32 = arith.constant 0 : i32
    %c0_i32_0 = arith.constant 0 : i32
    %c0_i32_1 = arith.constant 0 : i32
    return %c0_i32, %c0_i32_0 : i32, i32
  }
  func.func @transform_10(%arg0: i32) -> (i32, i32) {
    %c0_i32 = arith.constant 0 : i32
    %c0_i32_0 = arith.constant 0 : i32
    %c0_i32_1 = arith.constant 0 : i32
    return %c0_i32, %c0_i32_0 : i32, i32
  }
  func.func @transform_11(%arg0: i32) -> (i32, i32, i32, i32) {
    %c0_i32 = arith.constant 0 : i32
    %c0_i32_0 = arith.constant 0 : i32
    %c0_i32_1 = arith.constant 0 : i32
    %c0_i32_2 = arith.constant 0 : i32
    return %arg0, %c0_i32, %c0_i32_0, %c0_i32_1 : i32, i32, i32, i32
  }
}

module attributes {stable_mosaic.version = 11 : i64} {
  func.func @_block_kernel(%arg0: i32, %arg1: memref<1x8x16xf32, #tpu.memory_space<vmem>>, %arg2: memref<1x8x16xf32, #tpu.memory_space<vmem>>, %arg3: memref<16x8xf32, #tpu.memory_space<vmem>>, %arg4: memref<4x1xf32, #tpu.memory_space<vmem>>, %arg5: memref<8x4xf32, #tpu.memory_space<vmem>>, %arg6: memref<8x1xf32, #tpu.memory_space<vmem>>, %arg7: memref<4x4xf32, #tpu.memory_space<vmem>>, %arg8: memref<4x1xf32, #tpu.memory_space<vmem>>, %arg9: memref<4x1xf32, #tpu.memory_space<vmem>>, %arg10: memref<8x8xf32, #tpu.memory_space<vmem>>, %arg11: memref<8x1xf32, #tpu.memory_space<vmem>>, %arg12: memref<8x1xf32, #tpu.memory_space<vmem>>, %arg13: memref<1x4x4x16xf32, #tpu.memory_space<vmem>>) attributes {dimension_semantics = [#tpu.dimension_semantics<parallel>], iteration_bounds = array<i64: 2>, scalar_prefetch = 0 : i64, scratch_operands = 0 : i64, tpu.core_type = #tpu.core_type<tc>, window_params = [{transform_indices = @transform_0, window_bounds = array<i64: 1, 8, 16>}, {transform_indices = @transform_1, window_bounds = array<i64: 1, 8, 16>}, {pipeline_mode = #tpu.pipeline_mode<synchronous>, transform_indices = @transform_2, window_bounds = array<i64: 16, 8>}, {pipeline_mode = #tpu.pipeline_mode<synchronous>, transform_indices = @transform_3, window_bounds = array<i64: 4, 1>}, {pipeline_mode = #tpu.pipeline_mode<synchronous>, transform_indices = @transform_4, window_bounds = array<i64: 8, 4>}, {pipeline_mode = #tpu.pipeline_mode<synchronous>, transform_indices = @transform_5, window_bounds = array<i64: 8, 1>}, {pipeline_mode = #tpu.pipeline_mode<synchronous>, transform_indices = @transform_6, window_bounds = array<i64: 4, 4>}, {pipeline_mode = #tpu.pipeline_mode<synchronous>, transform_indices = @transform_7, window_bounds = array<i64: 4, 1>}, {pipeline_mode = #tpu.pipeline_mode<synchronous>, transform_indices = @transform_8, window_bounds = array<i64: 4, 1>}, {pipeline_mode = #tpu.pipeline_mode<synchronous>, transform_indices = @transform_9, window_bounds = array<i64: 8, 8>}, {pipeline_mode = #tpu.pipeline_mode<synchronous>, transform_indices = @transform_10, window_bounds = array<i64: 8, 1>}, {pipeline_mode = #tpu.pipeline_mode<synchronous>, transform_indices = @transform_11, window_bounds = array<i64: 8, 1>}, {transform_indices = @transform_12, window_bounds = array<i64: 1, 4, 4, 16>}]} {
    %c0 = arith.constant 0 : index
    %c0_0 = arith.constant 0 : index
    %c0_1 = arith.constant 0 : index
    %0 = vector.load %arg1[%c0, %c0_0, %c0_1] : memref<1x8x16xf32, #tpu.memory_space<vmem>>, vector<1x8x16xf32>
    %1 = vector.shape_cast %0 : vector<1x8x16xf32> to vector<8x16xf32>
    %c0_2 = arith.constant 0 : index
    %c0_3 = arith.constant 0 : index
    %c0_4 = arith.constant 0 : index
    %2 = vector.load %arg2[%c0_2, %c0_3, %c0_4] : memref<1x8x16xf32, #tpu.memory_space<vmem>>, vector<1x8x16xf32>
    %3 = vector.shape_cast %2 : vector<1x8x16xf32> to vector<8x16xf32>
    %4 = arith.addf %1, %3 : vector<8x16xf32>
    %c0_5 = arith.constant 0 : index
    %c0_6 = arith.constant 0 : index
    %5 = vector.load %arg3[%c0_5, %c0_6] : memref<16x8xf32, #tpu.memory_space<vmem>>, vector<16x8xf32>
    %cst = arith.constant dense<0.000000e+00> : vector<16x16xf32>
    %6 = tpu.matmul %5, %4, %cst {dimension_numbers = #tpu.dot_dimension_numbers<[1], [0], [0], [1], [0, 0, 1, 1], [], []>} : vector<16x8xf32>, vector<8x16xf32>, vector<16x16xf32> -> vector<16x16xf32>
    %c0_7 = arith.constant 0 : index
    %c0_8 = arith.constant 0 : index
    %7 = vector.load %arg4[%c0_7, %c0_8] : memref<4x1xf32, #tpu.memory_space<vmem>>, vector<4x1xf32>
    %8 = vector.extract_strided_slice %6 {offsets = [0, 0], sizes = [4, 16], strides = [1, 1]} : vector<16x16xf32> to vector<4x16xf32>
    %9 = vector.broadcast %7 : vector<4x1xf32> to vector<4x16xf32>
    %10 = arith.addf %8, %9 : vector<4x16xf32>
    %11 = vector.extract_strided_slice %6 {offsets = [4, 0], sizes = [4, 16], strides = [1, 1]} : vector<16x16xf32> to vector<4x16xf32>
    %12 = vector.broadcast %7 : vector<4x1xf32> to vector<4x16xf32>
    %13 = arith.addf %11, %12 : vector<4x16xf32>
    %14 = vector.extract_strided_slice %6 {offsets = [8, 0], sizes = [4, 16], strides = [1, 1]} : vector<16x16xf32> to vector<4x16xf32>
    %15 = vector.broadcast %7 : vector<4x1xf32> to vector<4x16xf32>
    %16 = arith.addf %14, %15 : vector<4x16xf32>
    %17 = vector.extract_strided_slice %6 {offsets = [12, 0], sizes = [4, 16], strides = [1, 1]} : vector<16x16xf32> to vector<4x16xf32>
    %18 = vector.broadcast %7 : vector<4x1xf32> to vector<4x16xf32>
    %19 = arith.addf %17, %18 : vector<4x16xf32>
    %c0_9 = arith.constant 0 : index
    %c0_10 = arith.constant 0 : index
    %20 = vector.load %arg7[%c0_9, %c0_10] : memref<4x4xf32, #tpu.memory_space<vmem>>, vector<4x4xf32>
    %c0_11 = arith.constant 0 : index
    %c0_12 = arith.constant 0 : index
    %21 = vector.load %arg8[%c0_11, %c0_12] : memref<4x1xf32, #tpu.memory_space<vmem>>, vector<4x1xf32>
    %c0_13 = arith.constant 0 : index
    %c0_14 = arith.constant 0 : index
    %22 = vector.load %arg9[%c0_13, %c0_14] : memref<4x1xf32, #tpu.memory_space<vmem>>, vector<4x1xf32>
    %cst_15 = arith.constant dense<0.000000e+00> : vector<4xf32>
    %23 = vector.multi_reduction <add>, %10, %cst_15 [1] : vector<4x16xf32> to vector<4xf32>
    %24 = vector.shape_cast %23 : vector<4xf32> to vector<4x1xf32>
    %25 = arith.mulf %10, %10 : vector<4x16xf32>
    %cst_16 = arith.constant dense<0.000000e+00> : vector<4xf32>
    %26 = vector.multi_reduction <add>, %25, %cst_16 [1] : vector<4x16xf32> to vector<4xf32>
    %27 = vector.shape_cast %26 : vector<4xf32> to vector<4x1xf32>
    %cst_17 = arith.constant dense<0.000000e+00> : vector<4xf32>
    %28 = vector.multi_reduction <add>, %13, %cst_17 [1] : vector<4x16xf32> to vector<4xf32>
    %29 = vector.shape_cast %28 : vector<4xf32> to vector<4x1xf32>
    %30 = arith.mulf %13, %13 : vector<4x16xf32>
    %cst_18 = arith.constant dense<0.000000e+00> : vector<4xf32>
    %31 = vector.multi_reduction <add>, %30, %cst_18 [1] : vector<4x16xf32> to vector<4xf32>
    %32 = vector.shape_cast %31 : vector<4xf32> to vector<4x1xf32>
    %33 = arith.addf %24, %29 : vector<4x1xf32>
    %34 = arith.addf %27, %32 : vector<4x1xf32>
    %cst_19 = arith.constant dense<0.000000e+00> : vector<4xf32>
    %35 = vector.multi_reduction <add>, %16, %cst_19 [1] : vector<4x16xf32> to vector<4xf32>
    %36 = vector.shape_cast %35 : vector<4xf32> to vector<4x1xf32>
    %37 = arith.mulf %16, %16 : vector<4x16xf32>
    %cst_20 = arith.constant dense<0.000000e+00> : vector<4xf32>
    %38 = vector.multi_reduction <add>, %37, %cst_20 [1] : vector<4x16xf32> to vector<4xf32>
    %39 = vector.shape_cast %38 : vector<4xf32> to vector<4x1xf32>
    %40 = arith.addf %33, %36 : vector<4x1xf32>
    %41 = arith.addf %34, %39 : vector<4x1xf32>
    %cst_21 = arith.constant dense<0.000000e+00> : vector<4xf32>
    %42 = vector.multi_reduction <add>, %19, %cst_21 [1] : vector<4x16xf32> to vector<4xf32>
    %43 = vector.shape_cast %42 : vector<4xf32> to vector<4x1xf32>
    %44 = arith.mulf %19, %19 : vector<4x16xf32>
    %cst_22 = arith.constant dense<0.000000e+00> : vector<4xf32>
    %45 = vector.multi_reduction <add>, %44, %cst_22 [1] : vector<4x16xf32> to vector<4xf32>
    %46 = vector.shape_cast %45 : vector<4xf32> to vector<4x1xf32>
    %47 = arith.addf %40, %43 : vector<4x1xf32>
    %48 = arith.addf %41, %46 : vector<4x1xf32>
    %cst_23 = arith.constant dense<0.000000e+00> : vector<4x1xf32>
    %49 = tpu.matmul %20, %47, %cst_23 {dimension_numbers = #tpu.dot_dimension_numbers<[1], [0], [0], [1], [0, 0, 1, 1], [], []>} : vector<4x4xf32>, vector<4x1xf32>, vector<4x1xf32> -> vector<4x1xf32>
    %cst_24 = arith.constant 1.562500e-02 : f32
    %50 = vector.broadcast %cst_24 : f32 to vector<4x1xf32>
    %51 = arith.mulf %49, %50 : vector<4x1xf32>
    %cst_25 = arith.constant dense<0.000000e+00> : vector<4x1xf32>
    %52 = tpu.matmul %20, %48, %cst_25 {dimension_numbers = #tpu.dot_dimension_numbers<[1], [0], [0], [1], [0, 0, 1, 1], [], []>} : vector<4x4xf32>, vector<4x1xf32>, vector<4x1xf32> -> vector<4x1xf32>
    %cst_26 = arith.constant 1.562500e-02 : f32
    %53 = vector.broadcast %cst_26 : f32 to vector<4x1xf32>
    %54 = arith.mulf %52, %53 : vector<4x1xf32>
    %55 = arith.mulf %51, %51 : vector<4x1xf32>
    %56 = arith.subf %54, %55 : vector<4x1xf32>
    %cst_27 = arith.constant 9.99999974E-6 : f32
    %57 = vector.broadcast %cst_27 : f32 to vector<4x1xf32>
    %58 = arith.addf %56, %57 : vector<4x1xf32>
    %59 = math.rsqrt %58 : vector<4x1xf32>
    %60 = arith.mulf %59, %21 : vector<4x1xf32>
    %61 = arith.mulf %51, %60 : vector<4x1xf32>
    %62 = arith.subf %22, %61 : vector<4x1xf32>
    %63 = vector.broadcast %60 : vector<4x1xf32> to vector<4x16xf32>
    %64 = arith.mulf %10, %63 : vector<4x16xf32>
    %65 = vector.broadcast %62 : vector<4x1xf32> to vector<4x16xf32>
    %66 = arith.addf %64, %65 : vector<4x16xf32>
    %67 = vector.broadcast %60 : vector<4x1xf32> to vector<4x16xf32>
    %68 = arith.mulf %13, %67 : vector<4x16xf32>
    %69 = vector.broadcast %62 : vector<4x1xf32> to vector<4x16xf32>
    %70 = arith.addf %68, %69 : vector<4x16xf32>
    %71 = vector.broadcast %60 : vector<4x1xf32> to vector<4x16xf32>
    %72 = arith.mulf %16, %71 : vector<4x16xf32>
    %73 = vector.broadcast %62 : vector<4x1xf32> to vector<4x16xf32>
    %74 = arith.addf %72, %73 : vector<4x16xf32>
    %75 = vector.broadcast %60 : vector<4x1xf32> to vector<4x16xf32>
    %76 = arith.mulf %19, %75 : vector<4x16xf32>
    %77 = vector.broadcast %62 : vector<4x1xf32> to vector<4x16xf32>
    %78 = arith.addf %76, %77 : vector<4x16xf32>
    %cst_28 = arith.constant 5.000000e-01 : f32
    %79 = vector.broadcast %cst_28 : f32 to vector<4x16xf32>
    %80 = arith.mulf %79, %66 : vector<4x16xf32>
    %cst_29 = arith.constant 0.707106769 : f32
    %81 = vector.broadcast %cst_29 : f32 to vector<4x16xf32>
    %82 = arith.mulf %66, %81 : vector<4x16xf32>
    %cst_30 = arith.constant 0.000000e+00 : f32
    %83 = vector.broadcast %cst_30 : f32 to vector<4x16xf32>
    %84 = arith.cmpf oge, %82, %83 : vector<4x16xf32>
    %cst_31 = arith.constant 1.000000e+00 : f32
    %cst_32 = arith.constant -1.000000e+00 : f32
    %85 = vector.broadcast %cst_31 : f32 to vector<4x16xf32>
    %86 = vector.broadcast %cst_32 : f32 to vector<4x16xf32>
    %87 = arith.select %84, %85, %86 : vector<4x16xi1>, vector<4x16xf32>
    %88 = math.absf %82 : vector<4x16xf32>
    %cst_33 = arith.constant 0.327591091 : f32
    %89 = vector.broadcast %cst_33 : f32 to vector<4x16xf32>
    %90 = arith.mulf %89, %88 : vector<4x16xf32>
    %cst_34 = arith.constant 1.000000e+00 : f32
    %91 = vector.broadcast %cst_34 : f32 to vector<4x16xf32>
    %92 = arith.addf %91, %90 : vector<4x16xf32>
    %93 = tpu.reciprocal %92 {approx = true} : vector<4x16xf32> -> vector<4x16xf32>
    %94 = arith.mulf %92, %93 : vector<4x16xf32>
    %cst_35 = arith.constant 2.000000e+00 : f32
    %95 = vector.broadcast %cst_35 : f32 to vector<4x16xf32>
    %96 = arith.subf %95, %94 : vector<4x16xf32>
    %97 = arith.mulf %93, %96 : vector<4x16xf32>
    %cst_36 = arith.constant 1.06140542 : f32
    %98 = vector.broadcast %cst_36 : f32 to vector<4x16xf32>
    %99 = arith.mulf %98, %97 : vector<4x16xf32>
    %cst_37 = arith.constant -1.45315206 : f32
    %100 = vector.broadcast %cst_37 : f32 to vector<4x16xf32>
    %101 = arith.addf %99, %100 : vector<4x16xf32>
    %102 = arith.mulf %101, %97 : vector<4x16xf32>
    %cst_38 = arith.constant 1.42141378 : f32
    %103 = vector.broadcast %cst_38 : f32 to vector<4x16xf32>
    %104 = arith.addf %102, %103 : vector<4x16xf32>
    %105 = arith.mulf %104, %97 : vector<4x16xf32>
    %cst_39 = arith.constant -0.284496725 : f32
    %106 = vector.broadcast %cst_39 : f32 to vector<4x16xf32>
    %107 = arith.addf %105, %106 : vector<4x16xf32>
    %108 = arith.mulf %107, %97 : vector<4x16xf32>
    %cst_40 = arith.constant 0.254829586 : f32
    %109 = vector.broadcast %cst_40 : f32 to vector<4x16xf32>
    %110 = arith.addf %108, %109 : vector<4x16xf32>
    %111 = arith.mulf %110, %97 : vector<4x16xf32>
    %cst_41 = arith.constant 0.000000e+00 : f32
    %112 = vector.broadcast %cst_41 : f32 to vector<4x16xf32>
    %113 = arith.subf %112, %88 : vector<4x16xf32>
    %114 = arith.mulf %113, %88 : vector<4x16xf32>
    %115 = math.exp %114 : vector<4x16xf32>
    %116 = arith.mulf %111, %115 : vector<4x16xf32>
    %cst_42 = arith.constant 1.000000e+00 : f32
    %117 = vector.broadcast %cst_42 : f32 to vector<4x16xf32>
    %118 = arith.subf %117, %116 : vector<4x16xf32>
    %119 = arith.mulf %87, %118 : vector<4x16xf32>
    %cst_43 = arith.constant 1.000000e+00 : f32
    %120 = vector.broadcast %cst_43 : f32 to vector<4x16xf32>
    %121 = arith.addf %120, %119 : vector<4x16xf32>
    %122 = arith.mulf %80, %121 : vector<4x16xf32>
    %cst_44 = arith.constant 5.000000e-01 : f32
    %123 = vector.broadcast %cst_44 : f32 to vector<4x16xf32>
    %124 = arith.mulf %123, %70 : vector<4x16xf32>
    %cst_45 = arith.constant 0.707106769 : f32
    %125 = vector.broadcast %cst_45 : f32 to vector<4x16xf32>
    %126 = arith.mulf %70, %125 : vector<4x16xf32>
    %cst_46 = arith.constant 0.000000e+00 : f32
    %127 = vector.broadcast %cst_46 : f32 to vector<4x16xf32>
    %128 = arith.cmpf oge, %126, %127 : vector<4x16xf32>
    %cst_47 = arith.constant 1.000000e+00 : f32
    %cst_48 = arith.constant -1.000000e+00 : f32
    %129 = vector.broadcast %cst_47 : f32 to vector<4x16xf32>
    %130 = vector.broadcast %cst_48 : f32 to vector<4x16xf32>
    %131 = arith.select %128, %129, %130 : vector<4x16xi1>, vector<4x16xf32>
    %132 = math.absf %126 : vector<4x16xf32>
    %cst_49 = arith.constant 0.327591091 : f32
    %133 = vector.broadcast %cst_49 : f32 to vector<4x16xf32>
    %134 = arith.mulf %133, %132 : vector<4x16xf32>
    %cst_50 = arith.constant 1.000000e+00 : f32
    %135 = vector.broadcast %cst_50 : f32 to vector<4x16xf32>
    %136 = arith.addf %135, %134 : vector<4x16xf32>
    %137 = tpu.reciprocal %136 {approx = true} : vector<4x16xf32> -> vector<4x16xf32>
    %138 = arith.mulf %136, %137 : vector<4x16xf32>
    %cst_51 = arith.constant 2.000000e+00 : f32
    %139 = vector.broadcast %cst_51 : f32 to vector<4x16xf32>
    %140 = arith.subf %139, %138 : vector<4x16xf32>
    %141 = arith.mulf %137, %140 : vector<4x16xf32>
    %cst_52 = arith.constant 1.06140542 : f32
    %142 = vector.broadcast %cst_52 : f32 to vector<4x16xf32>
    %143 = arith.mulf %142, %141 : vector<4x16xf32>
    %cst_53 = arith.constant -1.45315206 : f32
    %144 = vector.broadcast %cst_53 : f32 to vector<4x16xf32>
    %145 = arith.addf %143, %144 : vector<4x16xf32>
    %146 = arith.mulf %145, %141 : vector<4x16xf32>
    %cst_54 = arith.constant 1.42141378 : f32
    %147 = vector.broadcast %cst_54 : f32 to vector<4x16xf32>
    %148 = arith.addf %146, %147 : vector<4x16xf32>
    %149 = arith.mulf %148, %141 : vector<4x16xf32>
    %cst_55 = arith.constant -0.284496725 : f32
    %150 = vector.broadcast %cst_55 : f32 to vector<4x16xf32>
    %151 = arith.addf %149, %150 : vector<4x16xf32>
    %152 = arith.mulf %151, %141 : vector<4x16xf32>
    %cst_56 = arith.constant 0.254829586 : f32
    %153 = vector.broadcast %cst_56 : f32 to vector<4x16xf32>
    %154 = arith.addf %152, %153 : vector<4x16xf32>
    %155 = arith.mulf %154, %141 : vector<4x16xf32>
    %cst_57 = arith.constant 0.000000e+00 : f32
    %156 = vector.broadcast %cst_57 : f32 to vector<4x16xf32>
    %157 = arith.subf %156, %132 : vector<4x16xf32>
    %158 = arith.mulf %157, %132 : vector<4x16xf32>
    %159 = math.exp %158 : vector<4x16xf32>
    %160 = arith.mulf %155, %159 : vector<4x16xf32>
    %cst_58 = arith.constant 1.000000e+00 : f32
    %161 = vector.broadcast %cst_58 : f32 to vector<4x16xf32>
    %162 = arith.subf %161, %160 : vector<4x16xf32>
    %163 = arith.mulf %131, %162 : vector<4x16xf32>
    %cst_59 = arith.constant 1.000000e+00 : f32
    %164 = vector.broadcast %cst_59 : f32 to vector<4x16xf32>
    %165 = arith.addf %164, %163 : vector<4x16xf32>
    %166 = arith.mulf %124, %165 : vector<4x16xf32>
    %cst_60 = arith.constant 5.000000e-01 : f32
    %167 = vector.broadcast %cst_60 : f32 to vector<4x16xf32>
    %168 = arith.mulf %167, %74 : vector<4x16xf32>
    %cst_61 = arith.constant 0.707106769 : f32
    %169 = vector.broadcast %cst_61 : f32 to vector<4x16xf32>
    %170 = arith.mulf %74, %169 : vector<4x16xf32>
    %cst_62 = arith.constant 0.000000e+00 : f32
    %171 = vector.broadcast %cst_62 : f32 to vector<4x16xf32>
    %172 = arith.cmpf oge, %170, %171 : vector<4x16xf32>
    %cst_63 = arith.constant 1.000000e+00 : f32
    %cst_64 = arith.constant -1.000000e+00 : f32
    %173 = vector.broadcast %cst_63 : f32 to vector<4x16xf32>
    %174 = vector.broadcast %cst_64 : f32 to vector<4x16xf32>
    %175 = arith.select %172, %173, %174 : vector<4x16xi1>, vector<4x16xf32>
    %176 = math.absf %170 : vector<4x16xf32>
    %cst_65 = arith.constant 0.327591091 : f32
    %177 = vector.broadcast %cst_65 : f32 to vector<4x16xf32>
    %178 = arith.mulf %177, %176 : vector<4x16xf32>
    %cst_66 = arith.constant 1.000000e+00 : f32
    %179 = vector.broadcast %cst_66 : f32 to vector<4x16xf32>
    %180 = arith.addf %179, %178 : vector<4x16xf32>
    %181 = tpu.reciprocal %180 {approx = true} : vector<4x16xf32> -> vector<4x16xf32>
    %182 = arith.mulf %180, %181 : vector<4x16xf32>
    %cst_67 = arith.constant 2.000000e+00 : f32
    %183 = vector.broadcast %cst_67 : f32 to vector<4x16xf32>
    %184 = arith.subf %183, %182 : vector<4x16xf32>
    %185 = arith.mulf %181, %184 : vector<4x16xf32>
    %cst_68 = arith.constant 1.06140542 : f32
    %186 = vector.broadcast %cst_68 : f32 to vector<4x16xf32>
    %187 = arith.mulf %186, %185 : vector<4x16xf32>
    %cst_69 = arith.constant -1.45315206 : f32
    %188 = vector.broadcast %cst_69 : f32 to vector<4x16xf32>
    %189 = arith.addf %187, %188 : vector<4x16xf32>
    %190 = arith.mulf %189, %185 : vector<4x16xf32>
    %cst_70 = arith.constant 1.42141378 : f32
    %191 = vector.broadcast %cst_70 : f32 to vector<4x16xf32>
    %192 = arith.addf %190, %191 : vector<4x16xf32>
    %193 = arith.mulf %192, %185 : vector<4x16xf32>
    %cst_71 = arith.constant -0.284496725 : f32
    %194 = vector.broadcast %cst_71 : f32 to vector<4x16xf32>
    %195 = arith.addf %193, %194 : vector<4x16xf32>
    %196 = arith.mulf %195, %185 : vector<4x16xf32>
    %cst_72 = arith.constant 0.254829586 : f32
    %197 = vector.broadcast %cst_72 : f32 to vector<4x16xf32>
    %198 = arith.addf %196, %197 : vector<4x16xf32>
    %199 = arith.mulf %198, %185 : vector<4x16xf32>
    %cst_73 = arith.constant 0.000000e+00 : f32
    %200 = vector.broadcast %cst_73 : f32 to vector<4x16xf32>
    %201 = arith.subf %200, %176 : vector<4x16xf32>
    %202 = arith.mulf %201, %176 : vector<4x16xf32>
    %203 = math.exp %202 : vector<4x16xf32>
    %204 = arith.mulf %199, %203 : vector<4x16xf32>
    %cst_74 = arith.constant 1.000000e+00 : f32
    %205 = vector.broadcast %cst_74 : f32 to vector<4x16xf32>
    %206 = arith.subf %205, %204 : vector<4x16xf32>
    %207 = arith.mulf %175, %206 : vector<4x16xf32>
    %cst_75 = arith.constant 1.000000e+00 : f32
    %208 = vector.broadcast %cst_75 : f32 to vector<4x16xf32>
    %209 = arith.addf %208, %207 : vector<4x16xf32>
    %210 = arith.mulf %168, %209 : vector<4x16xf32>
    %cst_76 = arith.constant 5.000000e-01 : f32
    %211 = vector.broadcast %cst_76 : f32 to vector<4x16xf32>
    %212 = arith.mulf %211, %78 : vector<4x16xf32>
    %cst_77 = arith.constant 0.707106769 : f32
    %213 = vector.broadcast %cst_77 : f32 to vector<4x16xf32>
    %214 = arith.mulf %78, %213 : vector<4x16xf32>
    %cst_78 = arith.constant 0.000000e+00 : f32
    %215 = vector.broadcast %cst_78 : f32 to vector<4x16xf32>
    %216 = arith.cmpf oge, %214, %215 : vector<4x16xf32>
    %cst_79 = arith.constant 1.000000e+00 : f32
    %cst_80 = arith.constant -1.000000e+00 : f32
    %217 = vector.broadcast %cst_79 : f32 to vector<4x16xf32>
    %218 = vector.broadcast %cst_80 : f32 to vector<4x16xf32>
    %219 = arith.select %216, %217, %218 : vector<4x16xi1>, vector<4x16xf32>
    %220 = math.absf %214 : vector<4x16xf32>
    %cst_81 = arith.constant 0.327591091 : f32
    %221 = vector.broadcast %cst_81 : f32 to vector<4x16xf32>
    %222 = arith.mulf %221, %220 : vector<4x16xf32>
    %cst_82 = arith.constant 1.000000e+00 : f32
    %223 = vector.broadcast %cst_82 : f32 to vector<4x16xf32>
    %224 = arith.addf %223, %222 : vector<4x16xf32>
    %225 = tpu.reciprocal %224 {approx = true} : vector<4x16xf32> -> vector<4x16xf32>
    %226 = arith.mulf %224, %225 : vector<4x16xf32>
    %cst_83 = arith.constant 2.000000e+00 : f32
    %227 = vector.broadcast %cst_83 : f32 to vector<4x16xf32>
    %228 = arith.subf %227, %226 : vector<4x16xf32>
    %229 = arith.mulf %225, %228 : vector<4x16xf32>
    %cst_84 = arith.constant 1.06140542 : f32
    %230 = vector.broadcast %cst_84 : f32 to vector<4x16xf32>
    %231 = arith.mulf %230, %229 : vector<4x16xf32>
    %cst_85 = arith.constant -1.45315206 : f32
    %232 = vector.broadcast %cst_85 : f32 to vector<4x16xf32>
    %233 = arith.addf %231, %232 : vector<4x16xf32>
    %234 = arith.mulf %233, %229 : vector<4x16xf32>
    %cst_86 = arith.constant 1.42141378 : f32
    %235 = vector.broadcast %cst_86 : f32 to vector<4x16xf32>
    %236 = arith.addf %234, %235 : vector<4x16xf32>
    %237 = arith.mulf %236, %229 : vector<4x16xf32>
    %cst_87 = arith.constant -0.284496725 : f32
    %238 = vector.broadcast %cst_87 : f32 to vector<4x16xf32>
    %239 = arith.addf %237, %238 : vector<4x16xf32>
    %240 = arith.mulf %239, %229 : vector<4x16xf32>
    %cst_88 = arith.constant 0.254829586 : f32
    %241 = vector.broadcast %cst_88 : f32 to vector<4x16xf32>
    %242 = arith.addf %240, %241 : vector<4x16xf32>
    %243 = arith.mulf %242, %229 : vector<4x16xf32>
    %cst_89 = arith.constant 0.000000e+00 : f32
    %244 = vector.broadcast %cst_89 : f32 to vector<4x16xf32>
    %245 = arith.subf %244, %220 : vector<4x16xf32>
    %246 = arith.mulf %245, %220 : vector<4x16xf32>
    %247 = math.exp %246 : vector<4x16xf32>
    %248 = arith.mulf %243, %247 : vector<4x16xf32>
    %cst_90 = arith.constant 1.000000e+00 : f32
    %249 = vector.broadcast %cst_90 : f32 to vector<4x16xf32>
    %250 = arith.subf %249, %248 : vector<4x16xf32>
    %251 = arith.mulf %219, %250 : vector<4x16xf32>
    %cst_91 = arith.constant 1.000000e+00 : f32
    %252 = vector.broadcast %cst_91 : f32 to vector<4x16xf32>
    %253 = arith.addf %252, %251 : vector<4x16xf32>
    %254 = arith.mulf %212, %253 : vector<4x16xf32>
    %c0_92 = arith.constant 0 : index
    %c0_93 = arith.constant 0 : index
    %255 = vector.load %arg5[%c0_92, %c0_93] : memref<8x4xf32, #tpu.memory_space<vmem>>, vector<8x4xf32>
    %c0_94 = arith.constant 0 : index
    %c0_95 = arith.constant 0 : index
    %256 = vector.load %arg6[%c0_94, %c0_95] : memref<8x1xf32, #tpu.memory_space<vmem>>, vector<8x1xf32>
    %cst_96 = arith.constant dense<0.000000e+00> : vector<8x16xf32>
    %257 = tpu.matmul %255, %122, %cst_96 {dimension_numbers = #tpu.dot_dimension_numbers<[1], [0], [0], [1], [0, 0, 1, 1], [], []>} : vector<8x4xf32>, vector<4x16xf32>, vector<8x16xf32> -> vector<8x16xf32>
    %258 = vector.broadcast %256 : vector<8x1xf32> to vector<8x16xf32>
    %259 = arith.addf %257, %258 : vector<8x16xf32>
    %cst_97 = arith.constant dense<0.000000e+00> : vector<8x16xf32>
    %260 = tpu.matmul %255, %166, %cst_97 {dimension_numbers = #tpu.dot_dimension_numbers<[1], [0], [0], [1], [0, 0, 1, 1], [], []>} : vector<8x4xf32>, vector<4x16xf32>, vector<8x16xf32> -> vector<8x16xf32>
    %261 = vector.broadcast %256 : vector<8x1xf32> to vector<8x16xf32>
    %262 = arith.addf %260, %261 : vector<8x16xf32>
    %cst_98 = arith.constant dense<0.000000e+00> : vector<8x16xf32>
    %263 = tpu.matmul %255, %210, %cst_98 {dimension_numbers = #tpu.dot_dimension_numbers<[1], [0], [0], [1], [0, 0, 1, 1], [], []>} : vector<8x4xf32>, vector<4x16xf32>, vector<8x16xf32> -> vector<8x16xf32>
    %264 = vector.broadcast %256 : vector<8x1xf32> to vector<8x16xf32>
    %265 = arith.addf %263, %264 : vector<8x16xf32>
    %cst_99 = arith.constant dense<0.000000e+00> : vector<8x16xf32>
    %266 = tpu.matmul %255, %254, %cst_99 {dimension_numbers = #tpu.dot_dimension_numbers<[1], [0], [0], [1], [0, 0, 1, 1], [], []>} : vector<8x4xf32>, vector<4x16xf32>, vector<8x16xf32> -> vector<8x16xf32>
    %267 = vector.broadcast %256 : vector<8x1xf32> to vector<8x16xf32>
    %268 = arith.addf %266, %267 : vector<8x16xf32>
    %c0_100 = arith.constant 0 : index
    %c0_101 = arith.constant 0 : index
    %269 = vector.load %arg10[%c0_100, %c0_101] : memref<8x8xf32, #tpu.memory_space<vmem>>, vector<8x8xf32>
    %c0_102 = arith.constant 0 : index
    %c0_103 = arith.constant 0 : index
    %270 = vector.load %arg11[%c0_102, %c0_103] : memref<8x1xf32, #tpu.memory_space<vmem>>, vector<8x1xf32>
    %c0_104 = arith.constant 0 : index
    %c0_105 = arith.constant 0 : index
    %271 = vector.load %arg12[%c0_104, %c0_105] : memref<8x1xf32, #tpu.memory_space<vmem>>, vector<8x1xf32>
    %cst_106 = arith.constant dense<0.000000e+00> : vector<8xf32>
    %272 = vector.multi_reduction <add>, %259, %cst_106 [1] : vector<8x16xf32> to vector<8xf32>
    %273 = vector.shape_cast %272 : vector<8xf32> to vector<8x1xf32>
    %274 = arith.mulf %259, %259 : vector<8x16xf32>
    %cst_107 = arith.constant dense<0.000000e+00> : vector<8xf32>
    %275 = vector.multi_reduction <add>, %274, %cst_107 [1] : vector<8x16xf32> to vector<8xf32>
    %276 = vector.shape_cast %275 : vector<8xf32> to vector<8x1xf32>
    %cst_108 = arith.constant dense<0.000000e+00> : vector<8xf32>
    %277 = vector.multi_reduction <add>, %262, %cst_108 [1] : vector<8x16xf32> to vector<8xf32>
    %278 = vector.shape_cast %277 : vector<8xf32> to vector<8x1xf32>
    %279 = arith.mulf %262, %262 : vector<8x16xf32>
    %cst_109 = arith.constant dense<0.000000e+00> : vector<8xf32>
    %280 = vector.multi_reduction <add>, %279, %cst_109 [1] : vector<8x16xf32> to vector<8xf32>
    %281 = vector.shape_cast %280 : vector<8xf32> to vector<8x1xf32>
    %282 = arith.addf %273, %278 : vector<8x1xf32>
    %283 = arith.addf %276, %281 : vector<8x1xf32>
    %cst_110 = arith.constant dense<0.000000e+00> : vector<8xf32>
    %284 = vector.multi_reduction <add>, %265, %cst_110 [1] : vector<8x16xf32> to vector<8xf32>
    %285 = vector.shape_cast %284 : vector<8xf32> to vector<8x1xf32>
    %286 = arith.mulf %265, %265 : vector<8x16xf32>
    %cst_111 = arith.constant dense<0.000000e+00> : vector<8xf32>
    %287 = vector.multi_reduction <add>, %286, %cst_111 [1] : vector<8x16xf32> to vector<8xf32>
    %288 = vector.shape_cast %287 : vector<8xf32> to vector<8x1xf32>
    %289 = arith.addf %282, %285 : vector<8x1xf32>
    %290 = arith.addf %283, %288 : vector<8x1xf32>
    %cst_112 = arith.constant dense<0.000000e+00> : vector<8xf32>
    %291 = vector.multi_reduction <add>, %268, %cst_112 [1] : vector<8x16xf32> to vector<8xf32>
    %292 = vector.shape_cast %291 : vector<8xf32> to vector<8x1xf32>
    %293 = arith.mulf %268, %268 : vector<8x16xf32>
    %cst_113 = arith.constant dense<0.000000e+00> : vector<8xf32>
    %294 = vector.multi_reduction <add>, %293, %cst_113 [1] : vector<8x16xf32> to vector<8xf32>
    %295 = vector.shape_cast %294 : vector<8xf32> to vector<8x1xf32>
    %296 = arith.addf %289, %292 : vector<8x1xf32>
    %297 = arith.addf %290, %295 : vector<8x1xf32>
    %cst_114 = arith.constant dense<0.000000e+00> : vector<8x1xf32>
    %298 = tpu.matmul %269, %296, %cst_114 {dimension_numbers = #tpu.dot_dimension_numbers<[1], [0], [0], [1], [0, 0, 1, 1], [], []>} : vector<8x8xf32>, vector<8x1xf32>, vector<8x1xf32> -> vector<8x1xf32>
    %cst_115 = arith.constant 7.812500e-03 : f32
    %299 = vector.broadcast %cst_115 : f32 to vector<8x1xf32>
    %300 = arith.mulf %298, %299 : vector<8x1xf32>
    %cst_116 = arith.constant dense<0.000000e+00> : vector<8x1xf32>
    %301 = tpu.matmul %269, %297, %cst_116 {dimension_numbers = #tpu.dot_dimension_numbers<[1], [0], [0], [1], [0, 0, 1, 1], [], []>} : vector<8x8xf32>, vector<8x1xf32>, vector<8x1xf32> -> vector<8x1xf32>
    %cst_117 = arith.constant 7.812500e-03 : f32
    %302 = vector.broadcast %cst_117 : f32 to vector<8x1xf32>
    %303 = arith.mulf %301, %302 : vector<8x1xf32>
    %304 = arith.mulf %300, %300 : vector<8x1xf32>
    %305 = arith.subf %303, %304 : vector<8x1xf32>
    %cst_118 = arith.constant 9.99999974E-6 : f32
    %306 = vector.broadcast %cst_118 : f32 to vector<8x1xf32>
    %307 = arith.addf %305, %306 : vector<8x1xf32>
    %308 = math.rsqrt %307 : vector<8x1xf32>
    %309 = arith.mulf %308, %270 : vector<8x1xf32>
    %310 = arith.mulf %300, %309 : vector<8x1xf32>
    %311 = arith.subf %271, %310 : vector<8x1xf32>
    %312 = vector.broadcast %309 : vector<8x1xf32> to vector<8x16xf32>
    %313 = arith.mulf %259, %312 : vector<8x16xf32>
    %314 = vector.broadcast %311 : vector<8x1xf32> to vector<8x16xf32>
    %315 = arith.addf %313, %314 : vector<8x16xf32>
    %316 = vector.broadcast %309 : vector<8x1xf32> to vector<8x16xf32>
    %317 = arith.mulf %262, %316 : vector<8x16xf32>
    %318 = vector.broadcast %311 : vector<8x1xf32> to vector<8x16xf32>
    %319 = arith.addf %317, %318 : vector<8x16xf32>
    %320 = vector.broadcast %309 : vector<8x1xf32> to vector<8x16xf32>
    %321 = arith.mulf %265, %320 : vector<8x16xf32>
    %322 = vector.broadcast %311 : vector<8x1xf32> to vector<8x16xf32>
    %323 = arith.addf %321, %322 : vector<8x16xf32>
    %324 = vector.broadcast %309 : vector<8x1xf32> to vector<8x16xf32>
    %325 = arith.mulf %268, %324 : vector<8x16xf32>
    %326 = vector.broadcast %311 : vector<8x1xf32> to vector<8x16xf32>
    %327 = arith.addf %325, %326 : vector<8x16xf32>
    %328 = vector.extract_strided_slice %315 {offsets = [0, 0], sizes = [4, 16], strides = [1, 1]} : vector<8x16xf32> to vector<4x16xf32>
    %329 = vector.extract_strided_slice %315 {offsets = [4, 0], sizes = [4, 16], strides = [1, 1]} : vector<8x16xf32> to vector<4x16xf32>
    %330 = arith.negf %329 : vector<4x16xf32>
    %331 = math.exp %330 : vector<4x16xf32>
    %cst_119 = arith.constant 1.000000e+00 : f32
    %332 = vector.broadcast %cst_119 : f32 to vector<4x16xf32>
    %333 = arith.addf %332, %331 : vector<4x16xf32>
    %334 = arith.divf %332, %333 : vector<4x16xf32>
    %335 = arith.mulf %328, %334 : vector<4x16xf32>
    %c0_120 = arith.constant 0 : index
    %c0_121 = arith.constant 0 : index
    %c0_122 = arith.constant 0 : index
    %c0_123 = arith.constant 0 : index
    %336 = vector.load %arg13[%c0_120, %c0_121, %c0_122, %c0_123] : memref<1x4x4x16xf32, #tpu.memory_space<vmem>>, vector<1x1x4x16xf32>
    %337 = vector.shape_cast %336 : vector<1x1x4x16xf32> to vector<4x16xf32>
    %338 = vector.shape_cast %335 : vector<4x16xf32> to vector<1x1x4x16xf32>
    tpu.vector_store %arg13[%c0_120, %c0_121, %c0_122, %c0_123], %338 {strides = array<i32>} : memref<1x4x4x16xf32, #tpu.memory_space<vmem>>, vector<1x1x4x16xf32>,
    %339 = vector.extract_strided_slice %319 {offsets = [0, 0], sizes = [4, 16], strides = [1, 1]} : vector<8x16xf32> to vector<4x16xf32>
    %340 = vector.extract_strided_slice %319 {offsets = [4, 0], sizes = [4, 16], strides = [1, 1]} : vector<8x16xf32> to vector<4x16xf32>
    %341 = arith.negf %340 : vector<4x16xf32>
    %342 = math.exp %341 : vector<4x16xf32>
    %cst_124 = arith.constant 1.000000e+00 : f32
    %343 = vector.broadcast %cst_124 : f32 to vector<4x16xf32>
    %344 = arith.addf %343, %342 : vector<4x16xf32>
    %345 = arith.divf %343, %344 : vector<4x16xf32>
    %346 = arith.mulf %339, %345 : vector<4x16xf32>
    %c0_125 = arith.constant 0 : index
    %c1 = arith.constant 1 : index
    %c0_126 = arith.constant 0 : index
    %c0_127 = arith.constant 0 : index
    %347 = vector.load %arg13[%c0_125, %c1, %c0_126, %c0_127] : memref<1x4x4x16xf32, #tpu.memory_space<vmem>>, vector<1x1x4x16xf32>
    %348 = vector.shape_cast %347 : vector<1x1x4x16xf32> to vector<4x16xf32>
    %349 = vector.shape_cast %346 : vector<4x16xf32> to vector<1x1x4x16xf32>
    tpu.vector_store %arg13[%c0_125, %c1, %c0_126, %c0_127], %349 {strides = array<i32>} : memref<1x4x4x16xf32, #tpu.memory_space<vmem>>, vector<1x1x4x16xf32>,
    %350 = vector.extract_strided_slice %323 {offsets = [0, 0], sizes = [4, 16], strides = [1, 1]} : vector<8x16xf32> to vector<4x16xf32>
    %351 = vector.extract_strided_slice %323 {offsets = [4, 0], sizes = [4, 16], strides = [1, 1]} : vector<8x16xf32> to vector<4x16xf32>
    %352 = arith.negf %351 : vector<4x16xf32>
    %353 = math.exp %352 : vector<4x16xf32>
    %cst_128 = arith.constant 1.000000e+00 : f32
    %354 = vector.broadcast %cst_128 : f32 to vector<4x16xf32>
    %355 = arith.addf %354, %353 : vector<4x16xf32>
    %356 = arith.divf %354, %355 : vector<4x16xf32>
    %357 = arith.mulf %350, %356 : vector<4x16xf32>
    %c0_129 = arith.constant 0 : index
    %c2 = arith.constant 2 : index
    %c0_130 = arith.constant 0 : index
    %c0_131 = arith.constant 0 : index
    %358 = vector.load %arg13[%c0_129, %c2, %c0_130, %c0_131] : memref<1x4x4x16xf32, #tpu.memory_space<vmem>>, vector<1x1x4x16xf32>
    %359 = vector.shape_cast %358 : vector<1x1x4x16xf32> to vector<4x16xf32>
    %360 = vector.shape_cast %357 : vector<4x16xf32> to vector<1x1x4x16xf32>
    tpu.vector_store %arg13[%c0_129, %c2, %c0_130, %c0_131], %360 {strides = array<i32>} : memref<1x4x4x16xf32, #tpu.memory_space<vmem>>, vector<1x1x4x16xf32>,
    %361 = vector.extract_strided_slice %327 {offsets = [0, 0], sizes = [4, 16], strides = [1, 1]} : vector<8x16xf32> to vector<4x16xf32>
    %362 = vector.extract_strided_slice %327 {offsets = [4, 0], sizes = [4, 16], strides = [1, 1]} : vector<8x16xf32> to vector<4x16xf32>
    %363 = arith.negf %362 : vector<4x16xf32>
    %364 = math.exp %363 : vector<4x16xf32>
    %cst_132 = arith.constant 1.000000e+00 : f32
    %365 = vector.broadcast %cst_132 : f32 to vector<4x16xf32>
    %366 = arith.addf %365, %364 : vector<4x16xf32>
    %367 = arith.divf %365, %366 : vector<4x16xf32>
    %368 = arith.mulf %361, %367 : vector<4x16xf32>
    %c0_133 = arith.constant 0 : index
    %c3 = arith.constant 3 : index
    %c0_134 = arith.constant 0 : index
    %c0_135 = arith.constant 0 : index
    %369 = vector.load %arg13[%c0_133, %c3, %c0_134, %c0_135] : memref<1x4x4x16xf32, #tpu.memory_space<vmem>>, vector<1x1x4x16xf32>
    %370 = vector.shape_cast %369 : vector<1x1x4x16xf32> to vector<4x16xf32>
    %371 = vector.shape_cast %368 : vector<4x16xf32> to vector<1x1x4x16xf32>
    tpu.vector_store %arg13[%c0_133, %c3, %c0_134, %c0_135], %371 {strides = array<i32>} : memref<1x4x4x16xf32, #tpu.memory_space<vmem>>, vector<1x1x4x16xf32>,
    return
  }
  func.func @transform_0(%arg0: i32) -> (i32, i32, i32) {
    %c0_i32 = arith.constant 0 : i32
    %c0_i32_0 = arith.constant 0 : i32
    %c0_i32_1 = arith.constant 0 : i32
    return %arg0, %c0_i32, %c0_i32_0 : i32, i32, i32
  }
  func.func @transform_1(%arg0: i32) -> (i32, i32, i32) {
    %c0_i32 = arith.constant 0 : i32
    %c0_i32_0 = arith.constant 0 : i32
    %c0_i32_1 = arith.constant 0 : i32
    return %arg0, %c0_i32, %c0_i32_0 : i32, i32, i32
  }
  func.func @transform_2(%arg0: i32) -> (i32, i32) {
    %c0_i32 = arith.constant 0 : i32
    %c0_i32_0 = arith.constant 0 : i32
    %c0_i32_1 = arith.constant 0 : i32
    return %c0_i32, %c0_i32_0 : i32, i32
  }
  func.func @transform_3(%arg0: i32) -> (i32, i32) {
    %c0_i32 = arith.constant 0 : i32
    %c0_i32_0 = arith.constant 0 : i32
    %c0_i32_1 = arith.constant 0 : i32
    return %c0_i32, %c0_i32_0 : i32, i32
  }
  func.func @transform_4(%arg0: i32) -> (i32, i32) {
    %c0_i32 = arith.constant 0 : i32
    %c0_i32_0 = arith.constant 0 : i32
    %c0_i32_1 = arith.constant 0 : i32
    return %c0_i32, %c0_i32_0 : i32, i32
  }
  func.func @transform_5(%arg0: i32) -> (i32, i32) {
    %c0_i32 = arith.constant 0 : i32
    %c0_i32_0 = arith.constant 0 : i32
    %c0_i32_1 = arith.constant 0 : i32
    return %c0_i32, %c0_i32_0 : i32, i32
  }
  func.func @transform_6(%arg0: i32) -> (i32, i32) {
    %c0_i32 = arith.constant 0 : i32
    %c0_i32_0 = arith.constant 0 : i32
    %c0_i32_1 = arith.constant 0 : i32
    return %c0_i32, %c0_i32_0 : i32, i32
  }
  func.func @transform_7(%arg0: i32) -> (i32, i32) {
    %c0_i32 = arith.constant 0 : i32
    %c0_i32_0 = arith.constant 0 : i32
    %c0_i32_1 = arith.constant 0 : i32
    return %c0_i32, %c0_i32_0 : i32, i32
  }
  func.func @transform_8(%arg0: i32) -> (i32, i32) {
    %c0_i32 = arith.constant 0 : i32
    %c0_i32_0 = arith.constant 0 : i32
    %c0_i32_1 = arith.constant 0 : i32
    return %c0_i32, %c0_i32_0 : i32, i32
  }
  func.func @transform_9(%arg0: i32) -> (i32, i32) {
    %c0_i32 = arith.constant 0 : i32
    %c0_i32_0 = arith.constant 0 : i32
    %c0_i32_1 = arith.constant 0 : i32
    return %c0_i32, %c0_i32_0 : i32, i32
  }
  func.func @transform_10(%arg0: i32) -> (i32, i32) {
    %c0_i32 = arith.constant 0 : i32
    %c0_i32_0 = arith.constant 0 : i32
    %c0_i32_1 = arith.constant 0 : i32
    return %c0_i32, %c0_i32_0 : i32, i32
  }
  func.func @transform_11(%arg0: i32) -> (i32, i32) {
    %c0_i32 = arith.constant 0 : i32
    %c0_i32_0 = arith.constant 0 : i32
    %c0_i32_1 = arith.constant 0 : i32
    return %c0_i32, %c0_i32_0 : i32, i32
  }
  func.func @transform_12(%arg0: i32) -> (i32, i32, i32, i32) {
    %c0_i32 = arith.constant 0 : i32
    %c0_i32_0 = arith.constant 0 : i32
    %c0_i32_1 = arith.constant 0 : i32
    %c0_i32_2 = arith.constant 0 : i32
    return %arg0, %c0_i32, %c0_i32_0, %c0_i32_1 : i32, i32, i32, i32
  }
}

module attributes {stable_mosaic.version = 11 : i64} {
  func.func @_block_kernel(%arg0: i32, %arg1: memref<1x8x18xf32, #tpu.memory_space<vmem>>, %arg2: memref<1x8x18xf32, #tpu.memory_space<vmem>>, %arg3: memref<16x8xf32, #tpu.memory_space<vmem>>, %arg4: memref<4x1xf32, #tpu.memory_space<vmem>>, %arg5: memref<8x4xf32, #tpu.memory_space<vmem>>, %arg6: memref<8x1xf32, #tpu.memory_space<vmem>>, %arg7: memref<4x4xf32, #tpu.memory_space<vmem>>, %arg8: memref<4x1xf32, #tpu.memory_space<vmem>>, %arg9: memref<4x1xf32, #tpu.memory_space<vmem>>, %arg10: memref<8x8xf32, #tpu.memory_space<vmem>>, %arg11: memref<8x1xf32, #tpu.memory_space<vmem>>, %arg12: memref<8x1xf32, #tpu.memory_space<vmem>>, %arg13: memref<1x2x4x16xf32, #tpu.memory_space<vmem>>) attributes {dimension_semantics = [#tpu.dimension_semantics<parallel>], iteration_bounds = array<i64: 2>, scalar_prefetch = 0 : i64, scratch_operands = 0 : i64, tpu.core_type = #tpu.core_type<tc>, window_params = [{transform_indices = @transform_0, window_bounds = array<i64: 1, 8, 18>}, {transform_indices = @transform_1, window_bounds = array<i64: 1, 8, 18>}, {pipeline_mode = #tpu.pipeline_mode<synchronous>, transform_indices = @transform_2, window_bounds = array<i64: 16, 8>}, {pipeline_mode = #tpu.pipeline_mode<synchronous>, transform_indices = @transform_3, window_bounds = array<i64: 4, 1>}, {pipeline_mode = #tpu.pipeline_mode<synchronous>, transform_indices = @transform_4, window_bounds = array<i64: 8, 4>}, {pipeline_mode = #tpu.pipeline_mode<synchronous>, transform_indices = @transform_5, window_bounds = array<i64: 8, 1>}, {pipeline_mode = #tpu.pipeline_mode<synchronous>, transform_indices = @transform_6, window_bounds = array<i64: 4, 4>}, {pipeline_mode = #tpu.pipeline_mode<synchronous>, transform_indices = @transform_7, window_bounds = array<i64: 4, 1>}, {pipeline_mode = #tpu.pipeline_mode<synchronous>, transform_indices = @transform_8, window_bounds = array<i64: 4, 1>}, {pipeline_mode = #tpu.pipeline_mode<synchronous>, transform_indices = @transform_9, window_bounds = array<i64: 8, 8>}, {pipeline_mode = #tpu.pipeline_mode<synchronous>, transform_indices = @transform_10, window_bounds = array<i64: 8, 1>}, {pipeline_mode = #tpu.pipeline_mode<synchronous>, transform_indices = @transform_11, window_bounds = array<i64: 8, 1>}, {transform_indices = @transform_12, window_bounds = array<i64: 1, 2, 4, 16>}]} {
    %c0 = arith.constant 0 : index
    %c0_0 = arith.constant 0 : index
    %c0_1 = arith.constant 0 : index
    %0 = vector.load %arg1[%c0, %c0_0, %c0_1] : memref<1x8x18xf32, #tpu.memory_space<vmem>>, vector<1x8x18xf32>
    %1 = vector.shape_cast %0 : vector<1x8x18xf32> to vector<8x18xf32>
    %c0_2 = arith.constant 0 : index
    %c0_3 = arith.constant 0 : index
    %c0_4 = arith.constant 0 : index
    %2 = vector.load %arg2[%c0_2, %c0_3, %c0_4] : memref<1x8x18xf32, #tpu.memory_space<vmem>>, vector<1x8x18xf32>
    %3 = vector.shape_cast %2 : vector<1x8x18xf32> to vector<8x18xf32>
    %4 = arith.addf %1, %3 : vector<8x18xf32>
    %c0_5 = arith.constant 0 : index
    %c0_6 = arith.constant 0 : index
    %5 = vector.load %arg3[%c0_5, %c0_6] : memref<16x8xf32, #tpu.memory_space<vmem>>, vector<16x8xf32>
    %cst = arith.constant dense<0.000000e+00> : vector<16x18xf32>
    %6 = tpu.matmul %5, %4, %cst {dimension_numbers = #tpu.dot_dimension_numbers<[1], [0], [0], [1], [0, 0, 1, 1], [], []>} : vector<16x8xf32>, vector<8x18xf32>, vector<16x18xf32> -> vector<16x18xf32>
    %c0_7 = arith.constant 0 : index
    %c0_8 = arith.constant 0 : index
    %7 = vector.load %arg4[%c0_7, %c0_8] : memref<4x1xf32, #tpu.memory_space<vmem>>, vector<4x1xf32>
    %8 = vector.extract_strided_slice %6 {offsets = [4, 1], sizes = [4, 16], strides = [1, 1]} : vector<16x18xf32> to vector<4x16xf32>
    %9 = vector.extract_strided_slice %6 {offsets = [12, 0], sizes = [4, 16], strides = [1, 1]} : vector<16x18xf32> to vector<4x16xf32>
    %10 = arith.addf %8, %9 : vector<4x16xf32>
    %11 = vector.broadcast %7 : vector<4x1xf32> to vector<4x16xf32>
    %12 = arith.addf %10, %11 : vector<4x16xf32>
    %13 = vector.extract_strided_slice %6 {offsets = [0, 2], sizes = [4, 16], strides = [1, 1]} : vector<16x18xf32> to vector<4x16xf32>
    %14 = vector.extract_strided_slice %6 {offsets = [8, 1], sizes = [4, 16], strides = [1, 1]} : vector<16x18xf32> to vector<4x16xf32>
    %15 = arith.addf %13, %14 : vector<4x16xf32>
    %16 = vector.broadcast %7 : vector<4x1xf32> to vector<4x16xf32>
    %17 = arith.addf %15, %16 : vector<4x16xf32>
    %c0_9 = arith.constant 0 : index
    %c0_10 = arith.constant 0 : index
    %18 = vector.load %arg7[%c0_9, %c0_10] : memref<4x4xf32, #tpu.memory_space<vmem>>, vector<4x4xf32>
    %c0_11 = arith.constant 0 : index
    %c0_12 = arith.constant 0 : index
    %19 = vector.load %arg8[%c0_11, %c0_12] : memref<4x1xf32, #tpu.memory_space<vmem>>, vector<4x1xf32>
    %c0_13 = arith.constant 0 : index
    %c0_14 = arith.constant 0 : index
    %20 = vector.load %arg9[%c0_13, %c0_14] : memref<4x1xf32, #tpu.memory_space<vmem>>, vector<4x1xf32>
    %cst_15 = arith.constant dense<0.000000e+00> : vector<4xf32>
    %21 = vector.multi_reduction <add>, %12, %cst_15 [1] : vector<4x16xf32> to vector<4xf32>
    %22 = vector.shape_cast %21 : vector<4xf32> to vector<4x1xf32>
    %23 = arith.mulf %12, %12 : vector<4x16xf32>
    %cst_16 = arith.constant dense<0.000000e+00> : vector<4xf32>
    %24 = vector.multi_reduction <add>, %23, %cst_16 [1] : vector<4x16xf32> to vector<4xf32>
    %25 = vector.shape_cast %24 : vector<4xf32> to vector<4x1xf32>
    %cst_17 = arith.constant dense<0.000000e+00> : vector<4xf32>
    %26 = vector.multi_reduction <add>, %17, %cst_17 [1] : vector<4x16xf32> to vector<4xf32>
    %27 = vector.shape_cast %26 : vector<4xf32> to vector<4x1xf32>
    %28 = arith.mulf %17, %17 : vector<4x16xf32>
    %cst_18 = arith.constant dense<0.000000e+00> : vector<4xf32>
    %29 = vector.multi_reduction <add>, %28, %cst_18 [1] : vector<4x16xf32> to vector<4xf32>
    %30 = vector.shape_cast %29 : vector<4xf32> to vector<4x1xf32>
    %31 = arith.addf %22, %27 : vector<4x1xf32>
    %32 = arith.addf %25, %30 : vector<4x1xf32>
    %cst_19 = arith.constant dense<0.000000e+00> : vector<4x1xf32>
    %33 = tpu.matmul %18, %31, %cst_19 {dimension_numbers = #tpu.dot_dimension_numbers<[1], [0], [0], [1], [0, 0, 1, 1], [], []>} : vector<4x4xf32>, vector<4x1xf32>, vector<4x1xf32> -> vector<4x1xf32>
    %cst_20 = arith.constant 3.125000e-02 : f32
    %34 = vector.broadcast %cst_20 : f32 to vector<4x1xf32>
    %35 = arith.mulf %33, %34 : vector<4x1xf32>
    %cst_21 = arith.constant dense<0.000000e+00> : vector<4x1xf32>
    %36 = tpu.matmul %18, %32, %cst_21 {dimension_numbers = #tpu.dot_dimension_numbers<[1], [0], [0], [1], [0, 0, 1, 1], [], []>} : vector<4x4xf32>, vector<4x1xf32>, vector<4x1xf32> -> vector<4x1xf32>
    %cst_22 = arith.constant 3.125000e-02 : f32
    %37 = vector.broadcast %cst_22 : f32 to vector<4x1xf32>
    %38 = arith.mulf %36, %37 : vector<4x1xf32>
    %39 = arith.mulf %35, %35 : vector<4x1xf32>
    %40 = arith.subf %38, %39 : vector<4x1xf32>
    %cst_23 = arith.constant 9.99999974E-6 : f32
    %41 = vector.broadcast %cst_23 : f32 to vector<4x1xf32>
    %42 = arith.addf %40, %41 : vector<4x1xf32>
    %43 = math.rsqrt %42 : vector<4x1xf32>
    %44 = arith.mulf %43, %19 : vector<4x1xf32>
    %45 = arith.mulf %35, %44 : vector<4x1xf32>
    %46 = arith.subf %20, %45 : vector<4x1xf32>
    %47 = vector.broadcast %44 : vector<4x1xf32> to vector<4x16xf32>
    %48 = arith.mulf %12, %47 : vector<4x16xf32>
    %49 = vector.broadcast %46 : vector<4x1xf32> to vector<4x16xf32>
    %50 = arith.addf %48, %49 : vector<4x16xf32>
    %51 = vector.broadcast %44 : vector<4x1xf32> to vector<4x16xf32>
    %52 = arith.mulf %17, %51 : vector<4x16xf32>
    %53 = vector.broadcast %46 : vector<4x1xf32> to vector<4x16xf32>
    %54 = arith.addf %52, %53 : vector<4x16xf32>
    %cst_24 = arith.constant 5.000000e-01 : f32
    %55 = vector.broadcast %cst_24 : f32 to vector<4x16xf32>
    %56 = arith.mulf %55, %50 : vector<4x16xf32>
    %cst_25 = arith.constant 0.707106769 : f32
    %57 = vector.broadcast %cst_25 : f32 to vector<4x16xf32>
    %58 = arith.mulf %50, %57 : vector<4x16xf32>
    %cst_26 = arith.constant 0.000000e+00 : f32
    %59 = vector.broadcast %cst_26 : f32 to vector<4x16xf32>
    %60 = arith.cmpf oge, %58, %59 : vector<4x16xf32>
    %cst_27 = arith.constant 1.000000e+00 : f32
    %cst_28 = arith.constant -1.000000e+00 : f32
    %61 = vector.broadcast %cst_27 : f32 to vector<4x16xf32>
    %62 = vector.broadcast %cst_28 : f32 to vector<4x16xf32>
    %63 = arith.select %60, %61, %62 : vector<4x16xi1>, vector<4x16xf32>
    %64 = math.absf %58 : vector<4x16xf32>
    %cst_29 = arith.constant 0.327591091 : f32
    %65 = vector.broadcast %cst_29 : f32 to vector<4x16xf32>
    %66 = arith.mulf %65, %64 : vector<4x16xf32>
    %cst_30 = arith.constant 1.000000e+00 : f32
    %67 = vector.broadcast %cst_30 : f32 to vector<4x16xf32>
    %68 = arith.addf %67, %66 : vector<4x16xf32>
    %69 = tpu.reciprocal %68 {approx = true} : vector<4x16xf32> -> vector<4x16xf32>
    %70 = arith.mulf %68, %69 : vector<4x16xf32>
    %cst_31 = arith.constant 2.000000e+00 : f32
    %71 = vector.broadcast %cst_31 : f32 to vector<4x16xf32>
    %72 = arith.subf %71, %70 : vector<4x16xf32>
    %73 = arith.mulf %69, %72 : vector<4x16xf32>
    %cst_32 = arith.constant 1.06140542 : f32
    %74 = vector.broadcast %cst_32 : f32 to vector<4x16xf32>
    %75 = arith.mulf %74, %73 : vector<4x16xf32>
    %cst_33 = arith.constant -1.45315206 : f32
    %76 = vector.broadcast %cst_33 : f32 to vector<4x16xf32>
    %77 = arith.addf %75, %76 : vector<4x16xf32>
    %78 = arith.mulf %77, %73 : vector<4x16xf32>
    %cst_34 = arith.constant 1.42141378 : f32
    %79 = vector.broadcast %cst_34 : f32 to vector<4x16xf32>
    %80 = arith.addf %78, %79 : vector<4x16xf32>
    %81 = arith.mulf %80, %73 : vector<4x16xf32>
    %cst_35 = arith.constant -0.284496725 : f32
    %82 = vector.broadcast %cst_35 : f32 to vector<4x16xf32>
    %83 = arith.addf %81, %82 : vector<4x16xf32>
    %84 = arith.mulf %83, %73 : vector<4x16xf32>
    %cst_36 = arith.constant 0.254829586 : f32
    %85 = vector.broadcast %cst_36 : f32 to vector<4x16xf32>
    %86 = arith.addf %84, %85 : vector<4x16xf32>
    %87 = arith.mulf %86, %73 : vector<4x16xf32>
    %cst_37 = arith.constant 0.000000e+00 : f32
    %88 = vector.broadcast %cst_37 : f32 to vector<4x16xf32>
    %89 = arith.subf %88, %64 : vector<4x16xf32>
    %90 = arith.mulf %89, %64 : vector<4x16xf32>
    %91 = math.exp %90 : vector<4x16xf32>
    %92 = arith.mulf %87, %91 : vector<4x16xf32>
    %cst_38 = arith.constant 1.000000e+00 : f32
    %93 = vector.broadcast %cst_38 : f32 to vector<4x16xf32>
    %94 = arith.subf %93, %92 : vector<4x16xf32>
    %95 = arith.mulf %63, %94 : vector<4x16xf32>
    %cst_39 = arith.constant 1.000000e+00 : f32
    %96 = vector.broadcast %cst_39 : f32 to vector<4x16xf32>
    %97 = arith.addf %96, %95 : vector<4x16xf32>
    %98 = arith.mulf %56, %97 : vector<4x16xf32>
    %cst_40 = arith.constant 5.000000e-01 : f32
    %99 = vector.broadcast %cst_40 : f32 to vector<4x16xf32>
    %100 = arith.mulf %99, %54 : vector<4x16xf32>
    %cst_41 = arith.constant 0.707106769 : f32
    %101 = vector.broadcast %cst_41 : f32 to vector<4x16xf32>
    %102 = arith.mulf %54, %101 : vector<4x16xf32>
    %cst_42 = arith.constant 0.000000e+00 : f32
    %103 = vector.broadcast %cst_42 : f32 to vector<4x16xf32>
    %104 = arith.cmpf oge, %102, %103 : vector<4x16xf32>
    %cst_43 = arith.constant 1.000000e+00 : f32
    %cst_44 = arith.constant -1.000000e+00 : f32
    %105 = vector.broadcast %cst_43 : f32 to vector<4x16xf32>
    %106 = vector.broadcast %cst_44 : f32 to vector<4x16xf32>
    %107 = arith.select %104, %105, %106 : vector<4x16xi1>, vector<4x16xf32>
    %108 = math.absf %102 : vector<4x16xf32>
    %cst_45 = arith.constant 0.327591091 : f32
    %109 = vector.broadcast %cst_45 : f32 to vector<4x16xf32>
    %110 = arith.mulf %109, %108 : vector<4x16xf32>
    %cst_46 = arith.constant 1.000000e+00 : f32
    %111 = vector.broadcast %cst_46 : f32 to vector<4x16xf32>
    %112 = arith.addf %111, %110 : vector<4x16xf32>
    %113 = tpu.reciprocal %112 {approx = true} : vector<4x16xf32> -> vector<4x16xf32>
    %114 = arith.mulf %112, %113 : vector<4x16xf32>
    %cst_47 = arith.constant 2.000000e+00 : f32
    %115 = vector.broadcast %cst_47 : f32 to vector<4x16xf32>
    %116 = arith.subf %115, %114 : vector<4x16xf32>
    %117 = arith.mulf %113, %116 : vector<4x16xf32>
    %cst_48 = arith.constant 1.06140542 : f32
    %118 = vector.broadcast %cst_48 : f32 to vector<4x16xf32>
    %119 = arith.mulf %118, %117 : vector<4x16xf32>
    %cst_49 = arith.constant -1.45315206 : f32
    %120 = vector.broadcast %cst_49 : f32 to vector<4x16xf32>
    %121 = arith.addf %119, %120 : vector<4x16xf32>
    %122 = arith.mulf %121, %117 : vector<4x16xf32>
    %cst_50 = arith.constant 1.42141378 : f32
    %123 = vector.broadcast %cst_50 : f32 to vector<4x16xf32>
    %124 = arith.addf %122, %123 : vector<4x16xf32>
    %125 = arith.mulf %124, %117 : vector<4x16xf32>
    %cst_51 = arith.constant -0.284496725 : f32
    %126 = vector.broadcast %cst_51 : f32 to vector<4x16xf32>
    %127 = arith.addf %125, %126 : vector<4x16xf32>
    %128 = arith.mulf %127, %117 : vector<4x16xf32>
    %cst_52 = arith.constant 0.254829586 : f32
    %129 = vector.broadcast %cst_52 : f32 to vector<4x16xf32>
    %130 = arith.addf %128, %129 : vector<4x16xf32>
    %131 = arith.mulf %130, %117 : vector<4x16xf32>
    %cst_53 = arith.constant 0.000000e+00 : f32
    %132 = vector.broadcast %cst_53 : f32 to vector<4x16xf32>
    %133 = arith.subf %132, %108 : vector<4x16xf32>
    %134 = arith.mulf %133, %108 : vector<4x16xf32>
    %135 = math.exp %134 : vector<4x16xf32>
    %136 = arith.mulf %131, %135 : vector<4x16xf32>
    %cst_54 = arith.constant 1.000000e+00 : f32
    %137 = vector.broadcast %cst_54 : f32 to vector<4x16xf32>
    %138 = arith.subf %137, %136 : vector<4x16xf32>
    %139 = arith.mulf %107, %138 : vector<4x16xf32>
    %cst_55 = arith.constant 1.000000e+00 : f32
    %140 = vector.broadcast %cst_55 : f32 to vector<4x16xf32>
    %141 = arith.addf %140, %139 : vector<4x16xf32>
    %142 = arith.mulf %100, %141 : vector<4x16xf32>
    %c0_56 = arith.constant 0 : index
    %c0_57 = arith.constant 0 : index
    %143 = vector.load %arg5[%c0_56, %c0_57] : memref<8x4xf32, #tpu.memory_space<vmem>>, vector<8x4xf32>
    %c0_58 = arith.constant 0 : index
    %c0_59 = arith.constant 0 : index
    %144 = vector.load %arg6[%c0_58, %c0_59] : memref<8x1xf32, #tpu.memory_space<vmem>>, vector<8x1xf32>
    %cst_60 = arith.constant dense<0.000000e+00> : vector<8x16xf32>
    %145 = tpu.matmul %143, %98, %cst_60 {dimension_numbers = #tpu.dot_dimension_numbers<[1], [0], [0], [1], [0, 0, 1, 1], [], []>} : vector<8x4xf32>, vector<4x16xf32>, vector<8x16xf32> -> vector<8x16xf32>
    %146 = vector.broadcast %144 : vector<8x1xf32> to vector<8x16xf32>
    %147 = arith.addf %145, %146 : vector<8x16xf32>
    %cst_61 = arith.constant dense<0.000000e+00> : vector<8x16xf32>
    %148 = tpu.matmul %143, %142, %cst_61 {dimension_numbers = #tpu.dot_dimension_numbers<[1], [0], [0], [1], [0, 0, 1, 1], [], []>} : vector<8x4xf32>, vector<4x16xf32>, vector<8x16xf32> -> vector<8x16xf32>
    %149 = vector.broadcast %144 : vector<8x1xf32> to vector<8x16xf32>
    %150 = arith.addf %148, %149 : vector<8x16xf32>
    %c0_62 = arith.constant 0 : index
    %c0_63 = arith.constant 0 : index
    %151 = vector.load %arg10[%c0_62, %c0_63] : memref<8x8xf32, #tpu.memory_space<vmem>>, vector<8x8xf32>
    %c0_64 = arith.constant 0 : index
    %c0_65 = arith.constant 0 : index
    %152 = vector.load %arg11[%c0_64, %c0_65] : memref<8x1xf32, #tpu.memory_space<vmem>>, vector<8x1xf32>
    %c0_66 = arith.constant 0 : index
    %c0_67 = arith.constant 0 : index
    %153 = vector.load %arg12[%c0_66, %c0_67] : memref<8x1xf32, #tpu.memory_space<vmem>>, vector<8x1xf32>
    %cst_68 = arith.constant dense<0.000000e+00> : vector<8xf32>
    %154 = vector.multi_reduction <add>, %147, %cst_68 [1] : vector<8x16xf32> to vector<8xf32>
    %155 = vector.shape_cast %154 : vector<8xf32> to vector<8x1xf32>
    %156 = arith.mulf %147, %147 : vector<8x16xf32>
    %cst_69 = arith.constant dense<0.000000e+00> : vector<8xf32>
    %157 = vector.multi_reduction <add>, %156, %cst_69 [1] : vector<8x16xf32> to vector<8xf32>
    %158 = vector.shape_cast %157 : vector<8xf32> to vector<8x1xf32>
    %cst_70 = arith.constant dense<0.000000e+00> : vector<8xf32>
    %159 = vector.multi_reduction <add>, %150, %cst_70 [1] : vector<8x16xf32> to vector<8xf32>
    %160 = vector.shape_cast %159 : vector<8xf32> to vector<8x1xf32>
    %161 = arith.mulf %150, %150 : vector<8x16xf32>
    %cst_71 = arith.constant dense<0.000000e+00> : vector<8xf32>
    %162 = vector.multi_reduction <add>, %161, %cst_71 [1] : vector<8x16xf32> to vector<8xf32>
    %163 = vector.shape_cast %162 : vector<8xf32> to vector<8x1xf32>
    %164 = arith.addf %155, %160 : vector<8x1xf32>
    %165 = arith.addf %158, %163 : vector<8x1xf32>
    %cst_72 = arith.constant dense<0.000000e+00> : vector<8x1xf32>
    %166 = tpu.matmul %151, %164, %cst_72 {dimension_numbers = #tpu.dot_dimension_numbers<[1], [0], [0], [1], [0, 0, 1, 1], [], []>} : vector<8x8xf32>, vector<8x1xf32>, vector<8x1xf32> -> vector<8x1xf32>
    %cst_73 = arith.constant 1.562500e-02 : f32
    %167 = vector.broadcast %cst_73 : f32 to vector<8x1xf32>
    %168 = arith.mulf %166, %167 : vector<8x1xf32>
    %cst_74 = arith.constant dense<0.000000e+00> : vector<8x1xf32>
    %169 = tpu.matmul %151, %165, %cst_74 {dimension_numbers = #tpu.dot_dimension_numbers<[1], [0], [0], [1], [0, 0, 1, 1], [], []>} : vector<8x8xf32>, vector<8x1xf32>, vector<8x1xf32> -> vector<8x1xf32>
    %cst_75 = arith.constant 1.562500e-02 : f32
    %170 = vector.broadcast %cst_75 : f32 to vector<8x1xf32>
    %171 = arith.mulf %169, %170 : vector<8x1xf32>
    %172 = arith.mulf %168, %168 : vector<8x1xf32>
    %173 = arith.subf %171, %172 : vector<8x1xf32>
    %cst_76 = arith.constant 9.99999974E-6 : f32
    %174 = vector.broadcast %cst_76 : f32 to vector<8x1xf32>
    %175 = arith.addf %173, %174 : vector<8x1xf32>
    %176 = math.rsqrt %175 : vector<8x1xf32>
    %177 = arith.mulf %176, %152 : vector<8x1xf32>
    %178 = arith.mulf %168, %177 : vector<8x1xf32>
    %179 = arith.subf %153, %178 : vector<8x1xf32>
    %180 = vector.broadcast %177 : vector<8x1xf32> to vector<8x16xf32>
    %181 = arith.mulf %147, %180 : vector<8x16xf32>
    %182 = vector.broadcast %179 : vector<8x1xf32> to vector<8x16xf32>
    %183 = arith.addf %181, %182 : vector<8x16xf32>
    %184 = vector.broadcast %177 : vector<8x1xf32> to vector<8x16xf32>
    %185 = arith.mulf %150, %184 : vector<8x16xf32>
    %186 = vector.broadcast %179 : vector<8x1xf32> to vector<8x16xf32>
    %187 = arith.addf %185, %186 : vector<8x16xf32>
    %188 = vector.extract_strided_slice %183 {offsets = [0, 0], sizes = [4, 16], strides = [1, 1]} : vector<8x16xf32> to vector<4x16xf32>
    %189 = vector.extract_strided_slice %183 {offsets = [4, 0], sizes = [4, 16], strides = [1, 1]} : vector<8x16xf32> to vector<4x16xf32>
    %190 = arith.negf %189 : vector<4x16xf32>
    %191 = math.exp %190 : vector<4x16xf32>
    %cst_77 = arith.constant 1.000000e+00 : f32
    %192 = vector.broadcast %cst_77 : f32 to vector<4x16xf32>
    %193 = arith.addf %192, %191 : vector<4x16xf32>
    %194 = arith.divf %192, %193 : vector<4x16xf32>
    %195 = arith.mulf %188, %194 : vector<4x16xf32>
    %c0_78 = arith.constant 0 : index
    %c0_79 = arith.constant 0 : index
    %c0_80 = arith.constant 0 : index
    %c0_81 = arith.constant 0 : index
    %196 = vector.load %arg13[%c0_78, %c0_79, %c0_80, %c0_81] : memref<1x2x4x16xf32, #tpu.memory_space<vmem>>, vector<1x1x4x16xf32>
    %197 = vector.shape_cast %196 : vector<1x1x4x16xf32> to vector<4x16xf32>
    %198 = vector.shape_cast %195 : vector<4x16xf32> to vector<1x1x4x16xf32>
    tpu.vector_store %arg13[%c0_78, %c0_79, %c0_80, %c0_81], %198 {strides = array<i32>} : memref<1x2x4x16xf32, #tpu.memory_space<vmem>>, vector<1x1x4x16xf32>,
    %199 = vector.extract_strided_slice %187 {offsets = [0, 0], sizes = [4, 16], strides = [1, 1]} : vector<8x16xf32> to vector<4x16xf32>
    %200 = vector.extract_strided_slice %187 {offsets = [4, 0], sizes = [4, 16], strides = [1, 1]} : vector<8x16xf32> to vector<4x16xf32>
    %201 = arith.negf %200 : vector<4x16xf32>
    %202 = math.exp %201 : vector<4x16xf32>
    %cst_82 = arith.constant 1.000000e+00 : f32
    %203 = vector.broadcast %cst_82 : f32 to vector<4x16xf32>
    %204 = arith.addf %203, %202 : vector<4x16xf32>
    %205 = arith.divf %203, %204 : vector<4x16xf32>
    %206 = arith.mulf %199, %205 : vector<4x16xf32>
    %c0_83 = arith.constant 0 : index
    %c1 = arith.constant 1 : index
    %c0_84 = arith.constant 0 : index
    %c0_85 = arith.constant 0 : index
    %207 = vector.load %arg13[%c0_83, %c1, %c0_84, %c0_85] : memref<1x2x4x16xf32, #tpu.memory_space<vmem>>, vector<1x1x4x16xf32>
    %208 = vector.shape_cast %207 : vector<1x1x4x16xf32> to vector<4x16xf32>
    %209 = vector.shape_cast %206 : vector<4x16xf32> to vector<1x1x4x16xf32>
    tpu.vector_store %arg13[%c0_83, %c1, %c0_84, %c0_85], %209 {strides = array<i32>} : memref<1x2x4x16xf32, #tpu.memory_space<vmem>>, vector<1x1x4x16xf32>,
    return
  }
  func.func @transform_0(%arg0: i32) -> (i32, i32, i32) {
    %c0_i32 = arith.constant 0 : i32
    %c0_i32_0 = arith.constant 0 : i32
    %c0_i32_1 = arith.constant 0 : i32
    return %arg0, %c0_i32, %c0_i32_0 : i32, i32, i32
  }
  func.func @transform_1(%arg0: i32) -> (i32, i32, i32) {
    %c0_i32 = arith.constant 0 : i32
    %c0_i32_0 = arith.constant 0 : i32
    %c0_i32_1 = arith.constant 0 : i32
    return %arg0, %c0_i32, %c0_i32_0 : i32, i32, i32
  }
  func.func @transform_2(%arg0: i32) -> (i32, i32) {
    %c0_i32 = arith.constant 0 : i32
    %c0_i32_0 = arith.constant 0 : i32
    %c0_i32_1 = arith.constant 0 : i32
    return %c0_i32, %c0_i32_0 : i32, i32
  }
  func.func @transform_3(%arg0: i32) -> (i32, i32) {
    %c0_i32 = arith.constant 0 : i32
    %c0_i32_0 = arith.constant 0 : i32
    %c0_i32_1 = arith.constant 0 : i32
    return %c0_i32, %c0_i32_0 : i32, i32
  }
  func.func @transform_4(%arg0: i32) -> (i32, i32) {
    %c0_i32 = arith.constant 0 : i32
    %c0_i32_0 = arith.constant 0 : i32
    %c0_i32_1 = arith.constant 0 : i32
    return %c0_i32, %c0_i32_0 : i32, i32
  }
  func.func @transform_5(%arg0: i32) -> (i32, i32) {
    %c0_i32 = arith.constant 0 : i32
    %c0_i32_0 = arith.constant 0 : i32
    %c0_i32_1 = arith.constant 0 : i32
    return %c0_i32, %c0_i32_0 : i32, i32
  }
  func.func @transform_6(%arg0: i32) -> (i32, i32) {
    %c0_i32 = arith.constant 0 : i32
    %c0_i32_0 = arith.constant 0 : i32
    %c0_i32_1 = arith.constant 0 : i32
    return %c0_i32, %c0_i32_0 : i32, i32
  }
  func.func @transform_7(%arg0: i32) -> (i32, i32) {
    %c0_i32 = arith.constant 0 : i32
    %c0_i32_0 = arith.constant 0 : i32
    %c0_i32_1 = arith.constant 0 : i32
    return %c0_i32, %c0_i32_0 : i32, i32
  }
  func.func @transform_8(%arg0: i32) -> (i32, i32) {
    %c0_i32 = arith.constant 0 : i32
    %c0_i32_0 = arith.constant 0 : i32
    %c0_i32_1 = arith.constant 0 : i32
    return %c0_i32, %c0_i32_0 : i32, i32
  }
  func.func @transform_9(%arg0: i32) -> (i32, i32) {
    %c0_i32 = arith.constant 0 : i32
    %c0_i32_0 = arith.constant 0 : i32
    %c0_i32_1 = arith.constant 0 : i32
    return %c0_i32, %c0_i32_0 : i32, i32
  }
  func.func @transform_10(%arg0: i32) -> (i32, i32) {
    %c0_i32 = arith.constant 0 : i32
    %c0_i32_0 = arith.constant 0 : i32
    %c0_i32_1 = arith.constant 0 : i32
    return %c0_i32, %c0_i32_0 : i32, i32
  }
  func.func @transform_11(%arg0: i32) -> (i32, i32) {
    %c0_i32 = arith.constant 0 : i32
    %c0_i32_0 = arith.constant 0 : i32
    %c0_i32_1 = arith.constant 0 : i32
    return %c0_i32, %c0_i32_0 : i32, i32
  }
  func.func @transform_12(%arg0: i32) -> (i32, i32, i32, i32) {
    %c0_i32 = arith.constant 0 : i32
    %c0_i32_0 = arith.constant 0 : i32
    %c0_i32_1 = arith.constant 0 : i32
    %c0_i32_2 = arith.constant 0 : i32
    return %arg0, %c0_i32, %c0_i32_0, %c0_i32_1 : i32, i32, i32, i32
  }
}

module attributes {stable_mosaic.version = 11 : i64} {
  func.func @_block_kernel(%arg0: i32, %arg1: memref<1x4x34xf32, #tpu.memory_space<vmem>>, %arg2: memref<1x4x34xf32, #tpu.memory_space<vmem>>, %arg3: memref<8x4xf32, #tpu.memory_space<vmem>>, %arg4: memref<2x1xf32, #tpu.memory_space<vmem>>, %arg5: memref<4x2xf32, #tpu.memory_space<vmem>>, %arg6: memref<4x1xf32, #tpu.memory_space<vmem>>, %arg7: memref<1x2x2x32xf32, #tpu.memory_space<vmem>>) attributes {dimension_semantics = [#tpu.dimension_semantics<parallel>], iteration_bounds = array<i64: 2>, scalar_prefetch = 0 : i64, scratch_operands = 0 : i64, tpu.core_type = #tpu.core_type<tc>, window_params = [{transform_indices = @transform_0, window_bounds = array<i64: 1, 4, 34>}, {transform_indices = @transform_1, window_bounds = array<i64: 1, 4, 34>}, {pipeline_mode = #tpu.pipeline_mode<synchronous>, transform_indices = @transform_2, window_bounds = array<i64: 8, 4>}, {pipeline_mode = #tpu.pipeline_mode<synchronous>, transform_indices = @transform_3, window_bounds = array<i64: 2, 1>}, {pipeline_mode = #tpu.pipeline_mode<synchronous>, transform_indices = @transform_4, window_bounds = array<i64: 4, 2>}, {pipeline_mode = #tpu.pipeline_mode<synchronous>, transform_indices = @transform_5, window_bounds = array<i64: 4, 1>}, {transform_indices = @transform_6, window_bounds = array<i64: 1, 2, 2, 32>}]} {
    %c0 = arith.constant 0 : index
    %c0_0 = arith.constant 0 : index
    %c0_1 = arith.constant 0 : index
    %0 = vector.load %arg1[%c0, %c0_0, %c0_1] : memref<1x4x34xf32, #tpu.memory_space<vmem>>, vector<1x4x34xf32>
    %1 = vector.shape_cast %0 : vector<1x4x34xf32> to vector<4x34xf32>
    %c0_2 = arith.constant 0 : index
    %c0_3 = arith.constant 0 : index
    %c0_4 = arith.constant 0 : index
    %2 = vector.load %arg2[%c0_2, %c0_3, %c0_4] : memref<1x4x34xf32, #tpu.memory_space<vmem>>, vector<1x4x34xf32>
    %3 = vector.shape_cast %2 : vector<1x4x34xf32> to vector<4x34xf32>
    %4 = arith.addf %1, %3 : vector<4x34xf32>
    %c0_5 = arith.constant 0 : index
    %c0_6 = arith.constant 0 : index
    %5 = vector.load %arg3[%c0_5, %c0_6] : memref<8x4xf32, #tpu.memory_space<vmem>>, vector<8x4xf32>
    %cst = arith.constant dense<0.000000e+00> : vector<8x34xf32>
    %6 = tpu.matmul %5, %4, %cst {dimension_numbers = #tpu.dot_dimension_numbers<[1], [0], [0], [1], [0, 0, 1, 1], [], []>} : vector<8x4xf32>, vector<4x34xf32>, vector<8x34xf32> -> vector<8x34xf32>
    %c0_7 = arith.constant 0 : index
    %c0_8 = arith.constant 0 : index
    %7 = vector.load %arg4[%c0_7, %c0_8] : memref<2x1xf32, #tpu.memory_space<vmem>>, vector<2x1xf32>
    %8 = vector.extract_strided_slice %6 {offsets = [2, 1], sizes = [2, 32], strides = [1, 1]} : vector<8x34xf32> to vector<2x32xf32>
    %9 = vector.extract_strided_slice %6 {offsets = [6, 0], sizes = [2, 32], strides = [1, 1]} : vector<8x34xf32> to vector<2x32xf32>
    %10 = arith.addf %8, %9 : vector<2x32xf32>
    %11 = vector.broadcast %7 : vector<2x1xf32> to vector<2x32xf32>
    %12 = arith.addf %10, %11 : vector<2x32xf32>
    %13 = vector.extract_strided_slice %6 {offsets = [0, 2], sizes = [2, 32], strides = [1, 1]} : vector<8x34xf32> to vector<2x32xf32>
    %14 = vector.extract_strided_slice %6 {offsets = [4, 1], sizes = [2, 32], strides = [1, 1]} : vector<8x34xf32> to vector<2x32xf32>
    %15 = arith.addf %13, %14 : vector<2x32xf32>
    %16 = vector.broadcast %7 : vector<2x1xf32> to vector<2x32xf32>
    %17 = arith.addf %15, %16 : vector<2x32xf32>
    %cst_9 = arith.constant 5.000000e-01 : f32
    %18 = vector.broadcast %cst_9 : f32 to vector<2x32xf32>
    %19 = arith.mulf %18, %12 : vector<2x32xf32>
    %cst_10 = arith.constant 0.707106769 : f32
    %20 = vector.broadcast %cst_10 : f32 to vector<2x32xf32>
    %21 = arith.mulf %12, %20 : vector<2x32xf32>
    %cst_11 = arith.constant 0.000000e+00 : f32
    %22 = vector.broadcast %cst_11 : f32 to vector<2x32xf32>
    %23 = arith.cmpf oge, %21, %22 : vector<2x32xf32>
    %cst_12 = arith.constant 1.000000e+00 : f32
    %cst_13 = arith.constant -1.000000e+00 : f32
    %24 = vector.broadcast %cst_12 : f32 to vector<2x32xf32>
    %25 = vector.broadcast %cst_13 : f32 to vector<2x32xf32>
    %26 = arith.select %23, %24, %25 : vector<2x32xi1>, vector<2x32xf32>
    %27 = math.absf %21 : vector<2x32xf32>
    %cst_14 = arith.constant 0.327591091 : f32
    %28 = vector.broadcast %cst_14 : f32 to vector<2x32xf32>
    %29 = arith.mulf %28, %27 : vector<2x32xf32>
    %cst_15 = arith.constant 1.000000e+00 : f32
    %30 = vector.broadcast %cst_15 : f32 to vector<2x32xf32>
    %31 = arith.addf %30, %29 : vector<2x32xf32>
    %32 = tpu.reciprocal %31 {approx = true} : vector<2x32xf32> -> vector<2x32xf32>
    %33 = arith.mulf %31, %32 : vector<2x32xf32>
    %cst_16 = arith.constant 2.000000e+00 : f32
    %34 = vector.broadcast %cst_16 : f32 to vector<2x32xf32>
    %35 = arith.subf %34, %33 : vector<2x32xf32>
    %36 = arith.mulf %32, %35 : vector<2x32xf32>
    %cst_17 = arith.constant 1.06140542 : f32
    %37 = vector.broadcast %cst_17 : f32 to vector<2x32xf32>
    %38 = arith.mulf %37, %36 : vector<2x32xf32>
    %cst_18 = arith.constant -1.45315206 : f32
    %39 = vector.broadcast %cst_18 : f32 to vector<2x32xf32>
    %40 = arith.addf %38, %39 : vector<2x32xf32>
    %41 = arith.mulf %40, %36 : vector<2x32xf32>
    %cst_19 = arith.constant 1.42141378 : f32
    %42 = vector.broadcast %cst_19 : f32 to vector<2x32xf32>
    %43 = arith.addf %41, %42 : vector<2x32xf32>
    %44 = arith.mulf %43, %36 : vector<2x32xf32>
    %cst_20 = arith.constant -0.284496725 : f32
    %45 = vector.broadcast %cst_20 : f32 to vector<2x32xf32>
    %46 = arith.addf %44, %45 : vector<2x32xf32>
    %47 = arith.mulf %46, %36 : vector<2x32xf32>
    %cst_21 = arith.constant 0.254829586 : f32
    %48 = vector.broadcast %cst_21 : f32 to vector<2x32xf32>
    %49 = arith.addf %47, %48 : vector<2x32xf32>
    %50 = arith.mulf %49, %36 : vector<2x32xf32>
    %cst_22 = arith.constant 0.000000e+00 : f32
    %51 = vector.broadcast %cst_22 : f32 to vector<2x32xf32>
    %52 = arith.subf %51, %27 : vector<2x32xf32>
    %53 = arith.mulf %52, %27 : vector<2x32xf32>
    %54 = math.exp %53 : vector<2x32xf32>
    %55 = arith.mulf %50, %54 : vector<2x32xf32>
    %cst_23 = arith.constant 1.000000e+00 : f32
    %56 = vector.broadcast %cst_23 : f32 to vector<2x32xf32>
    %57 = arith.subf %56, %55 : vector<2x32xf32>
    %58 = arith.mulf %26, %57 : vector<2x32xf32>
    %cst_24 = arith.constant 1.000000e+00 : f32
    %59 = vector.broadcast %cst_24 : f32 to vector<2x32xf32>
    %60 = arith.addf %59, %58 : vector<2x32xf32>
    %61 = arith.mulf %19, %60 : vector<2x32xf32>
    %cst_25 = arith.constant 5.000000e-01 : f32
    %62 = vector.broadcast %cst_25 : f32 to vector<2x32xf32>
    %63 = arith.mulf %62, %17 : vector<2x32xf32>
    %cst_26 = arith.constant 0.707106769 : f32
    %64 = vector.broadcast %cst_26 : f32 to vector<2x32xf32>
    %65 = arith.mulf %17, %64 : vector<2x32xf32>
    %cst_27 = arith.constant 0.000000e+00 : f32
    %66 = vector.broadcast %cst_27 : f32 to vector<2x32xf32>
    %67 = arith.cmpf oge, %65, %66 : vector<2x32xf32>
    %cst_28 = arith.constant 1.000000e+00 : f32
    %cst_29 = arith.constant -1.000000e+00 : f32
    %68 = vector.broadcast %cst_28 : f32 to vector<2x32xf32>
    %69 = vector.broadcast %cst_29 : f32 to vector<2x32xf32>
    %70 = arith.select %67, %68, %69 : vector<2x32xi1>, vector<2x32xf32>
    %71 = math.absf %65 : vector<2x32xf32>
    %cst_30 = arith.constant 0.327591091 : f32
    %72 = vector.broadcast %cst_30 : f32 to vector<2x32xf32>
    %73 = arith.mulf %72, %71 : vector<2x32xf32>
    %cst_31 = arith.constant 1.000000e+00 : f32
    %74 = vector.broadcast %cst_31 : f32 to vector<2x32xf32>
    %75 = arith.addf %74, %73 : vector<2x32xf32>
    %76 = tpu.reciprocal %75 {approx = true} : vector<2x32xf32> -> vector<2x32xf32>
    %77 = arith.mulf %75, %76 : vector<2x32xf32>
    %cst_32 = arith.constant 2.000000e+00 : f32
    %78 = vector.broadcast %cst_32 : f32 to vector<2x32xf32>
    %79 = arith.subf %78, %77 : vector<2x32xf32>
    %80 = arith.mulf %76, %79 : vector<2x32xf32>
    %cst_33 = arith.constant 1.06140542 : f32
    %81 = vector.broadcast %cst_33 : f32 to vector<2x32xf32>
    %82 = arith.mulf %81, %80 : vector<2x32xf32>
    %cst_34 = arith.constant -1.45315206 : f32
    %83 = vector.broadcast %cst_34 : f32 to vector<2x32xf32>
    %84 = arith.addf %82, %83 : vector<2x32xf32>
    %85 = arith.mulf %84, %80 : vector<2x32xf32>
    %cst_35 = arith.constant 1.42141378 : f32
    %86 = vector.broadcast %cst_35 : f32 to vector<2x32xf32>
    %87 = arith.addf %85, %86 : vector<2x32xf32>
    %88 = arith.mulf %87, %80 : vector<2x32xf32>
    %cst_36 = arith.constant -0.284496725 : f32
    %89 = vector.broadcast %cst_36 : f32 to vector<2x32xf32>
    %90 = arith.addf %88, %89 : vector<2x32xf32>
    %91 = arith.mulf %90, %80 : vector<2x32xf32>
    %cst_37 = arith.constant 0.254829586 : f32
    %92 = vector.broadcast %cst_37 : f32 to vector<2x32xf32>
    %93 = arith.addf %91, %92 : vector<2x32xf32>
    %94 = arith.mulf %93, %80 : vector<2x32xf32>
    %cst_38 = arith.constant 0.000000e+00 : f32
    %95 = vector.broadcast %cst_38 : f32 to vector<2x32xf32>
    %96 = arith.subf %95, %71 : vector<2x32xf32>
    %97 = arith.mulf %96, %71 : vector<2x32xf32>
    %98 = math.exp %97 : vector<2x32xf32>
    %99 = arith.mulf %94, %98 : vector<2x32xf32>
    %cst_39 = arith.constant 1.000000e+00 : f32
    %100 = vector.broadcast %cst_39 : f32 to vector<2x32xf32>
    %101 = arith.subf %100, %99 : vector<2x32xf32>
    %102 = arith.mulf %70, %101 : vector<2x32xf32>
    %cst_40 = arith.constant 1.000000e+00 : f32
    %103 = vector.broadcast %cst_40 : f32 to vector<2x32xf32>
    %104 = arith.addf %103, %102 : vector<2x32xf32>
    %105 = arith.mulf %63, %104 : vector<2x32xf32>
    %c0_41 = arith.constant 0 : index
    %c0_42 = arith.constant 0 : index
    %106 = vector.load %arg5[%c0_41, %c0_42] : memref<4x2xf32, #tpu.memory_space<vmem>>, vector<4x2xf32>
    %c0_43 = arith.constant 0 : index
    %c0_44 = arith.constant 0 : index
    %107 = vector.load %arg6[%c0_43, %c0_44] : memref<4x1xf32, #tpu.memory_space<vmem>>, vector<4x1xf32>
    %cst_45 = arith.constant dense<0.000000e+00> : vector<4x32xf32>
    %108 = tpu.matmul %106, %61, %cst_45 {dimension_numbers = #tpu.dot_dimension_numbers<[1], [0], [0], [1], [0, 0, 1, 1], [], []>} : vector<4x2xf32>, vector<2x32xf32>, vector<4x32xf32> -> vector<4x32xf32>
    %109 = vector.broadcast %107 : vector<4x1xf32> to vector<4x32xf32>
    %110 = arith.addf %108, %109 : vector<4x32xf32>
    %cst_46 = arith.constant dense<0.000000e+00> : vector<4x32xf32>
    %111 = tpu.matmul %106, %105, %cst_46 {dimension_numbers = #tpu.dot_dimension_numbers<[1], [0], [0], [1], [0, 0, 1, 1], [], []>} : vector<4x2xf32>, vector<2x32xf32>, vector<4x32xf32> -> vector<4x32xf32>
    %112 = vector.broadcast %107 : vector<4x1xf32> to vector<4x32xf32>
    %113 = arith.addf %111, %112 : vector<4x32xf32>
    %114 = vector.extract_strided_slice %110 {offsets = [0, 0], sizes = [2, 32], strides = [1, 1]} : vector<4x32xf32> to vector<2x32xf32>
    %115 = vector.extract_strided_slice %110 {offsets = [2, 0], sizes = [2, 32], strides = [1, 1]} : vector<4x32xf32> to vector<2x32xf32>
    %116 = arith.negf %115 : vector<2x32xf32>
    %117 = math.exp %116 : vector<2x32xf32>
    %cst_47 = arith.constant 1.000000e+00 : f32
    %118 = vector.broadcast %cst_47 : f32 to vector<2x32xf32>
    %119 = arith.addf %118, %117 : vector<2x32xf32>
    %120 = arith.divf %118, %119 : vector<2x32xf32>
    %121 = arith.mulf %114, %120 : vector<2x32xf32>
    %c0_48 = arith.constant 0 : index
    %c0_49 = arith.constant 0 : index
    %c0_50 = arith.constant 0 : index
    %c0_51 = arith.constant 0 : index
    %122 = vector.load %arg7[%c0_48, %c0_49, %c0_50, %c0_51] : memref<1x2x2x32xf32, #tpu.memory_space<vmem>>, vector<1x1x2x32xf32>
    %123 = vector.shape_cast %122 : vector<1x1x2x32xf32> to vector<2x32xf32>
    %124 = vector.shape_cast %121 : vector<2x32xf32> to vector<1x1x2x32xf32>
    tpu.vector_store %arg7[%c0_48, %c0_49, %c0_50, %c0_51], %124 {strides = array<i32>} : memref<1x2x2x32xf32, #tpu.memory_space<vmem>>, vector<1x1x2x32xf32>,
    %125 = vector.extract_strided_slice %113 {offsets = [0, 0], sizes = [2, 32], strides = [1, 1]} : vector<4x32xf32> to vector<2x32xf32>
    %126 = vector.extract_strided_slice %113 {offsets = [2, 0], sizes = [2, 32], strides = [1, 1]} : vector<4x32xf32> to vector<2x32xf32>
    %127 = arith.negf %126 : vector<2x32xf32>
    %128 = math.exp %127 : vector<2x32xf32>
    %cst_52 = arith.constant 1.000000e+00 : f32
    %129 = vector.broadcast %cst_52 : f32 to vector<2x32xf32>
    %130 = arith.addf %129, %128 : vector<2x32xf32>
    %131 = arith.divf %129, %130 : vector<2x32xf32>
    %132 = arith.mulf %125, %131 : vector<2x32xf32>
    %c0_53 = arith.constant 0 : index
    %c1 = arith.constant 1 : index
    %c0_54 = arith.constant 0 : index
    %c0_55 = arith.constant 0 : index
    %133 = vector.load %arg7[%c0_53, %c1, %c0_54, %c0_55] : memref<1x2x2x32xf32, #tpu.memory_space<vmem>>, vector<1x1x2x32xf32>
    %134 = vector.shape_cast %133 : vector<1x1x2x32xf32> to vector<2x32xf32>
    %135 = vector.shape_cast %132 : vector<2x32xf32> to vector<1x1x2x32xf32>
    tpu.vector_store %arg7[%c0_53, %c1, %c0_54, %c0_55], %135 {strides = array<i32>} : memref<1x2x2x32xf32, #tpu.memory_space<vmem>>, vector<1x1x2x32xf32>,
    return
  }
  func.func @transform_0(%arg0: i32) -> (i32, i32, i32) {
    %c0_i32 = arith.constant 0 : i32
    %c0_i32_0 = arith.constant 0 : i32
    %c0_i32_1 = arith.constant 0 : i32
    return %arg0, %c0_i32, %c0_i32_0 : i32, i32, i32
  }
  func.func @transform_1(%arg0: i32) -> (i32, i32, i32) {
    %c0_i32 = arith.constant 0 : i32
    %c0_i32_0 = arith.constant 0 : i32
    %c0_i32_1 = arith.constant 0 : i32
    return %arg0, %c0_i32, %c0_i32_0 : i32, i32, i32
  }
  func.func @transform_2(%arg0: i32) -> (i32, i32) {
    %c0_i32 = arith.constant 0 : i32
    %c0_i32_0 = arith.constant 0 : i32
    %c0_i32_1 = arith.constant 0 : i32
    return %c0_i32, %c0_i32_0 : i32, i32
  }
  func.func @transform_3(%arg0: i32) -> (i32, i32) {
    %c0_i32 = arith.constant 0 : i32
    %c0_i32_0 = arith.constant 0 : i32
    %c0_i32_1 = arith.constant 0 : i32
    return %c0_i32, %c0_i32_0 : i32, i32
  }
  func.func @transform_4(%arg0: i32) -> (i32, i32) {
    %c0_i32 = arith.constant 0 : i32
    %c0_i32_0 = arith.constant 0 : i32
    %c0_i32_1 = arith.constant 0 : i32
    return %c0_i32, %c0_i32_0 : i32, i32
  }
  func.func @transform_5(%arg0: i32) -> (i32, i32) {
    %c0_i32 = arith.constant 0 : i32
    %c0_i32_0 = arith.constant 0 : i32
    %c0_i32_1 = arith.constant 0 : i32
    return %c0_i32, %c0_i32_0 : i32, i32
  }
  func.func @transform_6(%arg0: i32) -> (i32, i32, i32, i32) {
    %c0_i32 = arith.constant 0 : i32
    %c0_i32_0 = arith.constant 0 : i32
    %c0_i32_1 = arith.constant 0 : i32
    %c0_i32_2 = arith.constant 0 : i32
    return %arg0, %c0_i32, %c0_i32_0, %c0_i32_1 : i32, i32, i32, i32
  }
}

module attributes {stable_mosaic.version = 11 : i64} {
  func.func @_block_kernel(%arg0: i32, %arg1: memref<1x4x96xf32, #tpu.memory_space<vmem>>, %arg2: memref<1x4x96xf32, #tpu.memory_space<vmem>>, %arg3: memref<16x4xf32, #tpu.memory_space<vmem>>, %arg4: memref<4x1xf32, #tpu.memory_space<vmem>>, %arg5: memref<8x4xf32, #tpu.memory_space<vmem>>, %arg6: memref<8x1xf32, #tpu.memory_space<vmem>>, %arg7: memref<1x2x4x64xf32, #tpu.memory_space<vmem>>) attributes {dimension_semantics = [#tpu.dimension_semantics<parallel>], iteration_bounds = array<i64: 2>, scalar_prefetch = 0 : i64, scratch_operands = 0 : i64, tpu.core_type = #tpu.core_type<tc>, window_params = [{transform_indices = @transform_0, window_bounds = array<i64: 1, 4, 96>}, {transform_indices = @transform_1, window_bounds = array<i64: 1, 4, 96>}, {pipeline_mode = #tpu.pipeline_mode<synchronous>, transform_indices = @transform_2, window_bounds = array<i64: 16, 4>}, {pipeline_mode = #tpu.pipeline_mode<synchronous>, transform_indices = @transform_3, window_bounds = array<i64: 4, 1>}, {pipeline_mode = #tpu.pipeline_mode<synchronous>, transform_indices = @transform_4, window_bounds = array<i64: 8, 4>}, {pipeline_mode = #tpu.pipeline_mode<synchronous>, transform_indices = @transform_5, window_bounds = array<i64: 8, 1>}, {transform_indices = @transform_6, window_bounds = array<i64: 1, 2, 4, 64>}]} {
    %c0 = arith.constant 0 : index
    %c0_0 = arith.constant 0 : index
    %c0_1 = arith.constant 0 : index
    %0 = vector.load %arg1[%c0, %c0_0, %c0_1] : memref<1x4x96xf32, #tpu.memory_space<vmem>>, vector<1x4x96xf32>
    %1 = vector.shape_cast %0 : vector<1x4x96xf32> to vector<4x96xf32>
    %c0_2 = arith.constant 0 : index
    %c0_3 = arith.constant 0 : index
    %c0_4 = arith.constant 0 : index
    %2 = vector.load %arg2[%c0_2, %c0_3, %c0_4] : memref<1x4x96xf32, #tpu.memory_space<vmem>>, vector<1x4x96xf32>
    %3 = vector.shape_cast %2 : vector<1x4x96xf32> to vector<4x96xf32>
    %4 = arith.addf %1, %3 : vector<4x96xf32>
    %c0_5 = arith.constant 0 : index
    %c0_6 = arith.constant 0 : index
    %5 = vector.load %arg3[%c0_5, %c0_6] : memref<16x4xf32, #tpu.memory_space<vmem>>, vector<16x4xf32>
    %cst = arith.constant dense<0.000000e+00> : vector<16x96xf32>
    %6 = tpu.matmul %5, %4, %cst {dimension_numbers = #tpu.dot_dimension_numbers<[1], [0], [0], [1], [0, 0, 1, 1], [], []>} : vector<16x4xf32>, vector<4x96xf32>, vector<16x96xf32> -> vector<16x96xf32>
    %c0_7 = arith.constant 0 : index
    %c0_8 = arith.constant 0 : index
    %7 = vector.load %arg4[%c0_7, %c0_8] : memref<4x1xf32, #tpu.memory_space<vmem>>, vector<4x1xf32>
    %8 = vector.extract_strided_slice %6 {offsets = [4, 16], sizes = [4, 64], strides = [1, 1]} : vector<16x96xf32> to vector<4x64xf32>
    %9 = vector.extract_strided_slice %6 {offsets = [12, 0], sizes = [4, 64], strides = [1, 1]} : vector<16x96xf32> to vector<4x64xf32>
    %10 = arith.addf %8, %9 : vector<4x64xf32>
    %11 = vector.broadcast %7 : vector<4x1xf32> to vector<4x64xf32>
    %12 = arith.addf %10, %11 : vector<4x64xf32>
    %13 = vector.extract_strided_slice %6 {offsets = [0, 32], sizes = [4, 64], strides = [1, 1]} : vector<16x96xf32> to vector<4x64xf32>
    %14 = vector.extract_strided_slice %6 {offsets = [8, 16], sizes = [4, 64], strides = [1, 1]} : vector<16x96xf32> to vector<4x64xf32>
    %15 = arith.addf %13, %14 : vector<4x64xf32>
    %16 = vector.broadcast %7 : vector<4x1xf32> to vector<4x64xf32>
    %17 = arith.addf %15, %16 : vector<4x64xf32>
    %cst_9 = arith.constant 5.000000e-01 : f32
    %18 = vector.broadcast %cst_9 : f32 to vector<4x64xf32>
    %19 = arith.mulf %18, %12 : vector<4x64xf32>
    %cst_10 = arith.constant 0.707106769 : f32
    %20 = vector.broadcast %cst_10 : f32 to vector<4x64xf32>
    %21 = arith.mulf %12, %20 : vector<4x64xf32>
    %cst_11 = arith.constant 0.000000e+00 : f32
    %22 = vector.broadcast %cst_11 : f32 to vector<4x64xf32>
    %23 = arith.cmpf oge, %21, %22 : vector<4x64xf32>
    %cst_12 = arith.constant 1.000000e+00 : f32
    %cst_13 = arith.constant -1.000000e+00 : f32
    %24 = vector.broadcast %cst_12 : f32 to vector<4x64xf32>
    %25 = vector.broadcast %cst_13 : f32 to vector<4x64xf32>
    %26 = arith.select %23, %24, %25 : vector<4x64xi1>, vector<4x64xf32>
    %27 = math.absf %21 : vector<4x64xf32>
    %cst_14 = arith.constant 0.327591091 : f32
    %28 = vector.broadcast %cst_14 : f32 to vector<4x64xf32>
    %29 = arith.mulf %28, %27 : vector<4x64xf32>
    %cst_15 = arith.constant 1.000000e+00 : f32
    %30 = vector.broadcast %cst_15 : f32 to vector<4x64xf32>
    %31 = arith.addf %30, %29 : vector<4x64xf32>
    %32 = tpu.reciprocal %31 {approx = true} : vector<4x64xf32> -> vector<4x64xf32>
    %33 = arith.mulf %31, %32 : vector<4x64xf32>
    %cst_16 = arith.constant 2.000000e+00 : f32
    %34 = vector.broadcast %cst_16 : f32 to vector<4x64xf32>
    %35 = arith.subf %34, %33 : vector<4x64xf32>
    %36 = arith.mulf %32, %35 : vector<4x64xf32>
    %cst_17 = arith.constant 1.06140542 : f32
    %37 = vector.broadcast %cst_17 : f32 to vector<4x64xf32>
    %38 = arith.mulf %37, %36 : vector<4x64xf32>
    %cst_18 = arith.constant -1.45315206 : f32
    %39 = vector.broadcast %cst_18 : f32 to vector<4x64xf32>
    %40 = arith.addf %38, %39 : vector<4x64xf32>
    %41 = arith.mulf %40, %36 : vector<4x64xf32>
    %cst_19 = arith.constant 1.42141378 : f32
    %42 = vector.broadcast %cst_19 : f32 to vector<4x64xf32>
    %43 = arith.addf %41, %42 : vector<4x64xf32>
    %44 = arith.mulf %43, %36 : vector<4x64xf32>
    %cst_20 = arith.constant -0.284496725 : f32
    %45 = vector.broadcast %cst_20 : f32 to vector<4x64xf32>
    %46 = arith.addf %44, %45 : vector<4x64xf32>
    %47 = arith.mulf %46, %36 : vector<4x64xf32>
    %cst_21 = arith.constant 0.254829586 : f32
    %48 = vector.broadcast %cst_21 : f32 to vector<4x64xf32>
    %49 = arith.addf %47, %48 : vector<4x64xf32>
    %50 = arith.mulf %49, %36 : vector<4x64xf32>
    %cst_22 = arith.constant 0.000000e+00 : f32
    %51 = vector.broadcast %cst_22 : f32 to vector<4x64xf32>
    %52 = arith.subf %51, %27 : vector<4x64xf32>
    %53 = arith.mulf %52, %27 : vector<4x64xf32>
    %54 = math.exp %53 : vector<4x64xf32>
    %55 = arith.mulf %50, %54 : vector<4x64xf32>
    %cst_23 = arith.constant 1.000000e+00 : f32
    %56 = vector.broadcast %cst_23 : f32 to vector<4x64xf32>
    %57 = arith.subf %56, %55 : vector<4x64xf32>
    %58 = arith.mulf %26, %57 : vector<4x64xf32>
    %cst_24 = arith.constant 1.000000e+00 : f32
    %59 = vector.broadcast %cst_24 : f32 to vector<4x64xf32>
    %60 = arith.addf %59, %58 : vector<4x64xf32>
    %61 = arith.mulf %19, %60 : vector<4x64xf32>
    %cst_25 = arith.constant 5.000000e-01 : f32
    %62 = vector.broadcast %cst_25 : f32 to vector<4x64xf32>
    %63 = arith.mulf %62, %17 : vector<4x64xf32>
    %cst_26 = arith.constant 0.707106769 : f32
    %64 = vector.broadcast %cst_26 : f32 to vector<4x64xf32>
    %65 = arith.mulf %17, %64 : vector<4x64xf32>
    %cst_27 = arith.constant 0.000000e+00 : f32
    %66 = vector.broadcast %cst_27 : f32 to vector<4x64xf32>
    %67 = arith.cmpf oge, %65, %66 : vector<4x64xf32>
    %cst_28 = arith.constant 1.000000e+00 : f32
    %cst_29 = arith.constant -1.000000e+00 : f32
    %68 = vector.broadcast %cst_28 : f32 to vector<4x64xf32>
    %69 = vector.broadcast %cst_29 : f32 to vector<4x64xf32>
    %70 = arith.select %67, %68, %69 : vector<4x64xi1>, vector<4x64xf32>
    %71 = math.absf %65 : vector<4x64xf32>
    %cst_30 = arith.constant 0.327591091 : f32
    %72 = vector.broadcast %cst_30 : f32 to vector<4x64xf32>
    %73 = arith.mulf %72, %71 : vector<4x64xf32>
    %cst_31 = arith.constant 1.000000e+00 : f32
    %74 = vector.broadcast %cst_31 : f32 to vector<4x64xf32>
    %75 = arith.addf %74, %73 : vector<4x64xf32>
    %76 = tpu.reciprocal %75 {approx = true} : vector<4x64xf32> -> vector<4x64xf32>
    %77 = arith.mulf %75, %76 : vector<4x64xf32>
    %cst_32 = arith.constant 2.000000e+00 : f32
    %78 = vector.broadcast %cst_32 : f32 to vector<4x64xf32>
    %79 = arith.subf %78, %77 : vector<4x64xf32>
    %80 = arith.mulf %76, %79 : vector<4x64xf32>
    %cst_33 = arith.constant 1.06140542 : f32
    %81 = vector.broadcast %cst_33 : f32 to vector<4x64xf32>
    %82 = arith.mulf %81, %80 : vector<4x64xf32>
    %cst_34 = arith.constant -1.45315206 : f32
    %83 = vector.broadcast %cst_34 : f32 to vector<4x64xf32>
    %84 = arith.addf %82, %83 : vector<4x64xf32>
    %85 = arith.mulf %84, %80 : vector<4x64xf32>
    %cst_35 = arith.constant 1.42141378 : f32
    %86 = vector.broadcast %cst_35 : f32 to vector<4x64xf32>
    %87 = arith.addf %85, %86 : vector<4x64xf32>
    %88 = arith.mulf %87, %80 : vector<4x64xf32>
    %cst_36 = arith.constant -0.284496725 : f32
    %89 = vector.broadcast %cst_36 : f32 to vector<4x64xf32>
    %90 = arith.addf %88, %89 : vector<4x64xf32>
    %91 = arith.mulf %90, %80 : vector<4x64xf32>
    %cst_37 = arith.constant 0.254829586 : f32
    %92 = vector.broadcast %cst_37 : f32 to vector<4x64xf32>
    %93 = arith.addf %91, %92 : vector<4x64xf32>
    %94 = arith.mulf %93, %80 : vector<4x64xf32>
    %cst_38 = arith.constant 0.000000e+00 : f32
    %95 = vector.broadcast %cst_38 : f32 to vector<4x64xf32>
    %96 = arith.subf %95, %71 : vector<4x64xf32>
    %97 = arith.mulf %96, %71 : vector<4x64xf32>
    %98 = math.exp %97 : vector<4x64xf32>
    %99 = arith.mulf %94, %98 : vector<4x64xf32>
    %cst_39 = arith.constant 1.000000e+00 : f32
    %100 = vector.broadcast %cst_39 : f32 to vector<4x64xf32>
    %101 = arith.subf %100, %99 : vector<4x64xf32>
    %102 = arith.mulf %70, %101 : vector<4x64xf32>
    %cst_40 = arith.constant 1.000000e+00 : f32
    %103 = vector.broadcast %cst_40 : f32 to vector<4x64xf32>
    %104 = arith.addf %103, %102 : vector<4x64xf32>
    %105 = arith.mulf %63, %104 : vector<4x64xf32>
    %c0_41 = arith.constant 0 : index
    %c0_42 = arith.constant 0 : index
    %106 = vector.load %arg5[%c0_41, %c0_42] : memref<8x4xf32, #tpu.memory_space<vmem>>, vector<8x4xf32>
    %c0_43 = arith.constant 0 : index
    %c0_44 = arith.constant 0 : index
    %107 = vector.load %arg6[%c0_43, %c0_44] : memref<8x1xf32, #tpu.memory_space<vmem>>, vector<8x1xf32>
    %cst_45 = arith.constant dense<0.000000e+00> : vector<8x64xf32>
    %108 = tpu.matmul %106, %61, %cst_45 {dimension_numbers = #tpu.dot_dimension_numbers<[1], [0], [0], [1], [0, 0, 1, 1], [], []>} : vector<8x4xf32>, vector<4x64xf32>, vector<8x64xf32> -> vector<8x64xf32>
    %109 = vector.broadcast %107 : vector<8x1xf32> to vector<8x64xf32>
    %110 = arith.addf %108, %109 : vector<8x64xf32>
    %cst_46 = arith.constant dense<0.000000e+00> : vector<8x64xf32>
    %111 = tpu.matmul %106, %105, %cst_46 {dimension_numbers = #tpu.dot_dimension_numbers<[1], [0], [0], [1], [0, 0, 1, 1], [], []>} : vector<8x4xf32>, vector<4x64xf32>, vector<8x64xf32> -> vector<8x64xf32>
    %112 = vector.broadcast %107 : vector<8x1xf32> to vector<8x64xf32>
    %113 = arith.addf %111, %112 : vector<8x64xf32>
    %114 = vector.extract_strided_slice %110 {offsets = [0, 0], sizes = [4, 64], strides = [1, 1]} : vector<8x64xf32> to vector<4x64xf32>
    %115 = vector.extract_strided_slice %110 {offsets = [4, 0], sizes = [4, 64], strides = [1, 1]} : vector<8x64xf32> to vector<4x64xf32>
    %116 = arith.negf %115 : vector<4x64xf32>
    %117 = math.exp %116 : vector<4x64xf32>
    %cst_47 = arith.constant 1.000000e+00 : f32
    %118 = vector.broadcast %cst_47 : f32 to vector<4x64xf32>
    %119 = arith.addf %118, %117 : vector<4x64xf32>
    %120 = arith.divf %118, %119 : vector<4x64xf32>
    %121 = arith.mulf %114, %120 : vector<4x64xf32>
    %c0_48 = arith.constant 0 : index
    %c0_49 = arith.constant 0 : index
    %c0_50 = arith.constant 0 : index
    %c0_51 = arith.constant 0 : index
    %122 = vector.load %arg7[%c0_48, %c0_49, %c0_50, %c0_51] : memref<1x2x4x64xf32, #tpu.memory_space<vmem>>, vector<1x1x4x64xf32>
    %123 = vector.shape_cast %122 : vector<1x1x4x64xf32> to vector<4x64xf32>
    %124 = vector.shape_cast %121 : vector<4x64xf32> to vector<1x1x4x64xf32>
    tpu.vector_store %arg7[%c0_48, %c0_49, %c0_50, %c0_51], %124 {strides = array<i32>} : memref<1x2x4x64xf32, #tpu.memory_space<vmem>>, vector<1x1x4x64xf32>,
    %125 = vector.extract_strided_slice %113 {offsets = [0, 0], sizes = [4, 64], strides = [1, 1]} : vector<8x64xf32> to vector<4x64xf32>
    %126 = vector.extract_strided_slice %113 {offsets = [4, 0], sizes = [4, 64], strides = [1, 1]} : vector<8x64xf32> to vector<4x64xf32>
    %127 = arith.negf %126 : vector<4x64xf32>
    %128 = math.exp %127 : vector<4x64xf32>
    %cst_52 = arith.constant 1.000000e+00 : f32
    %129 = vector.broadcast %cst_52 : f32 to vector<4x64xf32>
    %130 = arith.addf %129, %128 : vector<4x64xf32>
    %131 = arith.divf %129, %130 : vector<4x64xf32>
    %132 = arith.mulf %125, %131 : vector<4x64xf32>
    %c0_53 = arith.constant 0 : index
    %c1 = arith.constant 1 : index
    %c0_54 = arith.constant 0 : index
    %c0_55 = arith.constant 0 : index
    %133 = vector.load %arg7[%c0_53, %c1, %c0_54, %c0_55] : memref<1x2x4x64xf32, #tpu.memory_space<vmem>>, vector<1x1x4x64xf32>
    %134 = vector.shape_cast %133 : vector<1x1x4x64xf32> to vector<4x64xf32>
    %135 = vector.shape_cast %132 : vector<4x64xf32> to vector<1x1x4x64xf32>
    tpu.vector_store %arg7[%c0_53, %c1, %c0_54, %c0_55], %135 {strides = array<i32>} : memref<1x2x4x64xf32, #tpu.memory_space<vmem>>, vector<1x1x4x64xf32>,
    return
  }
  func.func @transform_0(%arg0: i32) -> (i32, i32, i32) {
    %c0_i32 = arith.constant 0 : i32
    %c0_i32_0 = arith.constant 0 : i32
    %c0_i32_1 = arith.constant 0 : i32
    return %arg0, %c0_i32, %c0_i32_0 : i32, i32, i32
  }
  func.func @transform_1(%arg0: i32) -> (i32, i32, i32) {
    %c0_i32 = arith.constant 0 : i32
    %c0_i32_0 = arith.constant 0 : i32
    %c0_i32_1 = arith.constant 0 : i32
    return %arg0, %c0_i32, %c0_i32_0 : i32, i32, i32
  }
  func.func @transform_2(%arg0: i32) -> (i32, i32) {
    %c0_i32 = arith.constant 0 : i32
    %c0_i32_0 = arith.constant 0 : i32
    %c0_i32_1 = arith.constant 0 : i32
    return %c0_i32, %c0_i32_0 : i32, i32
  }
  func.func @transform_3(%arg0: i32) -> (i32, i32) {
    %c0_i32 = arith.constant 0 : i32
    %c0_i32_0 = arith.constant 0 : i32
    %c0_i32_1 = arith.constant 0 : i32
    return %c0_i32, %c0_i32_0 : i32, i32
  }
  func.func @transform_4(%arg0: i32) -> (i32, i32) {
    %c0_i32 = arith.constant 0 : i32
    %c0_i32_0 = arith.constant 0 : i32
    %c0_i32_1 = arith.constant 0 : i32
    return %c0_i32, %c0_i32_0 : i32, i32
  }
  func.func @transform_5(%arg0: i32) -> (i32, i32) {
    %c0_i32 = arith.constant 0 : i32
    %c0_i32_0 = arith.constant 0 : i32
    %c0_i32_1 = arith.constant 0 : i32
    return %c0_i32, %c0_i32_0 : i32, i32
  }
  func.func @transform_6(%arg0: i32) -> (i32, i32, i32, i32) {
    %c0_i32 = arith.constant 0 : i32
    %c0_i32_0 = arith.constant 0 : i32
    %c0_i32_1 = arith.constant 0 : i32
    %c0_i32_2 = arith.constant 0 : i32
    return %arg0, %c0_i32, %c0_i32_0, %c0_i32_1 : i32, i32, i32, i32
  }
}

module attributes {stable_mosaic.version = 11 : i64} {
  func.func @_istft_kernel(%arg0: i32, %arg1: memref<1x16x22xf32, #tpu.memory_space<vmem>>, %arg2: memref<16x16xf32, #tpu.memory_space<vmem>>, %arg3: memref<4x19xf32, #tpu.memory_space<vmem>>, %arg4: memref<1x4x19xf32, #tpu.memory_space<vmem>>) attributes {dimension_semantics = [#tpu.dimension_semantics<parallel>], iteration_bounds = array<i64: 4>, scalar_prefetch = 0 : i64, scratch_operands = 0 : i64, tpu.core_type = #tpu.core_type<tc>, window_params = [{transform_indices = @transform_0, window_bounds = array<i64: 1, 16, 22>}, {pipeline_mode = #tpu.pipeline_mode<synchronous>, transform_indices = @transform_1, window_bounds = array<i64: 16, 16>}, {pipeline_mode = #tpu.pipeline_mode<synchronous>, transform_indices = @transform_2, window_bounds = array<i64: 4, 19>}, {transform_indices = @transform_3, window_bounds = array<i64: 1, 4, 19>}]} {
    %c0 = arith.constant 0 : index
    %c0_0 = arith.constant 0 : index
    %c0_1 = arith.constant 0 : index
    %0 = vector.load %arg1[%c0, %c0_0, %c0_1] : memref<1x16x22xf32, #tpu.memory_space<vmem>>, vector<1x16x22xf32>
    %1 = vector.shape_cast %0 : vector<1x16x22xf32> to vector<16x22xf32>
    %c0_2 = arith.constant 0 : index
    %c0_3 = arith.constant 0 : index
    %2 = vector.load %arg2[%c0_2, %c0_3] : memref<16x16xf32, #tpu.memory_space<vmem>>, vector<16x16xf32>
    %cst = arith.constant dense<0.000000e+00> : vector<16x22xf32>
    %3 = tpu.matmul %2, %1, %cst {dimension_numbers = #tpu.dot_dimension_numbers<[1], [0], [0], [1], [0, 0, 1, 1], [], []>} : vector<16x16xf32>, vector<16x22xf32>, vector<16x22xf32> -> vector<16x22xf32>
    %4 = vector.extract_strided_slice %3 {offsets = [0, 3], sizes = [4, 19], strides = [1, 1]} : vector<16x22xf32> to vector<4x19xf32>
    %5 = vector.extract_strided_slice %3 {offsets = [4, 2], sizes = [4, 19], strides = [1, 1]} : vector<16x22xf32> to vector<4x19xf32>
    %6 = arith.addf %4, %5 : vector<4x19xf32>
    %7 = vector.extract_strided_slice %3 {offsets = [8, 1], sizes = [4, 19], strides = [1, 1]} : vector<16x22xf32> to vector<4x19xf32>
    %8 = arith.addf %6, %7 : vector<4x19xf32>
    %9 = vector.extract_strided_slice %3 {offsets = [12, 0], sizes = [4, 19], strides = [1, 1]} : vector<16x22xf32> to vector<4x19xf32>
    %10 = arith.addf %8, %9 : vector<4x19xf32>
    %c0_4 = arith.constant 0 : index
    %c0_5 = arith.constant 0 : index
    %11 = vector.load %arg3[%c0_4, %c0_5] : memref<4x19xf32, #tpu.memory_space<vmem>>, vector<4x19xf32>
    %12 = arith.mulf %10, %11 : vector<4x19xf32>
    %c0_6 = arith.constant 0 : index
    %c0_7 = arith.constant 0 : index
    %c0_8 = arith.constant 0 : index
    %13 = vector.load %arg4[%c0_6, %c0_7, %c0_8] : memref<1x4x19xf32, #tpu.memory_space<vmem>>, vector<1x4x19xf32>
    %14 = vector.shape_cast %13 : vector<1x4x19xf32> to vector<4x19xf32>
    %15 = vector.shape_cast %12 : vector<4x19xf32> to vector<1x4x19xf32>
    tpu.vector_store %arg4[%c0_6, %c0_7, %c0_8], %15 {strides = array<i32>} : memref<1x4x19xf32, #tpu.memory_space<vmem>>, vector<1x4x19xf32>,
    return
  }
  func.func @transform_0(%arg0: i32) -> (i32, i32, i32) {
    %c0_i32 = arith.constant 0 : i32
    %c0_i32_0 = arith.constant 0 : i32
    %c0_i32_1 = arith.constant 0 : i32
    return %arg0, %c0_i32, %c0_i32_0 : i32, i32, i32
  }
  func.func @transform_1(%arg0: i32) -> (i32, i32) {
    %c0_i32 = arith.constant 0 : i32
    %c0_i32_0 = arith.constant 0 : i32
    %c0_i32_1 = arith.constant 0 : i32
    return %c0_i32, %c0_i32_0 : i32, i32
  }
  func.func @transform_2(%arg0: i32) -> (i32, i32) {
    %c0_i32 = arith.constant 0 : i32
    %c0_i32_0 = arith.constant 0 : i32
    %c0_i32_1 = arith.constant 0 : i32
    return %c0_i32, %c0_i32_0 : i32, i32
  }
  func.func @transform_3(%arg0: i32) -> (i32, i32, i32) {
    %c0_i32 = arith.constant 0 : i32
    %c0_i32_0 = arith.constant 0 : i32
    %c0_i32_1 = arith.constant 0 : i32
    return %arg0, %c0_i32, %c0_i32_0 : i32, i32, i32
  }
}

</mosaic_0001>

<llo_original>
// kernel: demucs_decoder_forward.6
$region0: #{demucs_decoder_forward.6}
  #allocation0 [shape = 'u32[]', space=smem, size = 0x4, offset = 0x4, fixed_abs, tag = 'smem constant byte address 0x4 - core index']
  #allocation1 [shape = 'u32[144,128]{1,0:T(1,128)}', space=vmem, size = 0x12000, scoped, tag = 'internal scratch']
  %s0 = inlined_call_operand.vmem [shape: f32[2,16,10], index: 0, kind: input, shape index: {}]
  %s1 = inlined_call_operand.vmem [shape: f32[32,16], index: 1, kind: input, shape index: {}]
  %s2 = inlined_call_operand.vmem [shape: f32[8,1], index: 2, kind: input, shape index: {}]
  %s3 = inlined_call_operand.vmem [shape: f32[16,8], index: 3, kind: input, shape index: {}]
  %s4 = inlined_call_operand.vmem [shape: f32[16,1], index: 4, kind: input, shape index: {}]
  %s5 = inlined_call_operand.vmem [shape: f32[8,8], index: 5, kind: input, shape index: {}]
  %s6 = inlined_call_operand.vmem [shape: f32[8,1], index: 6, kind: input, shape index: {}]
  %s7 = inlined_call_operand.vmem [shape: f32[8,1], index: 7, kind: input, shape index: {}]
  %s8 = inlined_call_operand.vmem [shape: f32[16,16], index: 8, kind: input, shape index: {}]
  %s9 = inlined_call_operand.vmem [shape: f32[16,1], index: 9, kind: input, shape index: {}]
  %s10 = inlined_call_operand.vmem [shape: f32[16,1], index: 10, kind: input, shape index: {}]
  %s11 = inlined_call_operand.vmem [shape: f32[2,2,8,8], index: 11, kind: output, shape index: {}]
  %s12 = sld [smem:[#allocation0]]
  $region77: #{demucs_decoder_forward.6} parent=0
    _
  %s14 = ssub.s32 1, %s12
  %s15 = scalar_select 0, %s14, %s12
  loop: start=0, step=1, limit=4
  $region2: #{demucs_decoder_forward.6} parent=0 // loop_pre_header
    _
  $region3: #{demucs_decoder_forward.6} parent=0 // loop_header
    %s17 = sphi 0, %s21
    %p18 = scmp.ge.s32.totalorder %s17, 4
    %s27 = sphi 0, %s29
    %s30 = sphi 0, %s27
    %s31 = sphi 0, %s30
    %s47 = sphi 0, %s31
    %s51 = sphi 0, %s51
    %s53 = sphi 0, %s51
    %s54 = sphi 0, %s53
    %s68 = sphi 0, %s54
    %s72 = sphi 0, %s72
    %s74 = sphi 0, %s72
    %s75 = sphi 0, %s74
    %s89 = sphi 0, %s75
    %s93 = sphi 0, %s93
    %s95 = sphi 0, %s93
    %s96 = sphi 0, %s95
    %s110 = sphi 0, %s96
    %s114 = sphi 0, %s114
    %s116 = sphi 0, %s114
    %s117 = sphi 0, %s116
    %s131 = sphi 0, %s117
    %s135 = sphi 0, %s135
    %s137 = sphi 0, %s135
    %s138 = sphi 0, %s137
    %s152 = sphi 0, %s138
    %s156 = sphi 0, %s156
    %s158 = sphi 0, %s156
    %s159 = sphi 0, %s158
    %s173 = sphi 0, %s159
    %s177 = sphi 0, %s177
    %s179 = sphi 0, %s177
    %s180 = sphi 0, %s179
    %s194 = sphi 0, %s180
    %s198 = sphi 0, %s198
    %s200 = sphi 0, %s198
    %s201 = sphi 0, %s200
    %s215 = sphi 0, %s201
    %s219 = sphi 0, %s219
    %s221 = sphi 0, %s219
    %s222 = sphi 0, %s221
    %s236 = sphi 0, %s222
    %s240 = sphi 0, %s240
    %s242 = sphi 0, %s240
    %s243 = sphi 0, %s242
    %s257 = sphi 0, %s243
    %s263 = sphi 0, %s265
    %s266 = sphi 0, %s263
    %s267 = sphi 0, %s266
    %s283 = sphi 0, %s267
  $region4: #{demucs_decoder_forward.6} parent=0 // loop_header_branch
    %20 = sbr.rel (%p18) target = $region8
  $region5: #{demucs_decoder_forward.6} parent=0 // loop_body
    %s22 = ssub.s32 %s17, 1
    %s23 = ssub.s32 %s17, 2
    %s24 = sadd.s32 %s17, 1
    %s25 = ssub.s32 %s17, %s24
    %p26 = scmp.eq.s32.totalorder %s25, 0
    %s28 = sadd.s32 %s27, 1
    %s29 = scalar_select %p26, %s27, %s28
    %p32 = pneg %p26
    %p33 = scmp.eq.s32.totalorder %s17, 1
    %p34 = por %p32, %p33
    %p35 = scmp.ne.s32.totalorder %s27, %s30
    %p36 = scmp.eq.s32.totalorder %s17, 0
    %p37 = por %p35, %p36
    %p38 = scmp.ne.s32.totalorder %s27, %s30
    %p39 = scmp.eq.s32.totalorder %s22, 1
    %p40 = por %p38, %p39
    %p41 = scmp.ne.s32.totalorder %s30, %s31
    %p42 = scmp.eq.s32.totalorder %s22, 0
    %p43 = por %p41, %p42
    %p44 = scmp.ne.s32.totalorder %s30, %s31
    %p45 = scmp.eq.s32.totalorder %s23, 1
    %p46 = por %p44, %p45
    %p48 = scmp.ne.s32.totalorder %s31, %s47
    %p49 = scmp.eq.s32.totalorder %s23, 0
    %p50 = por %p48, %p49
    %s52 = sadd.s32 %s51, 1
    %p55 = scmp.eq.s32.totalorder %s17, 1
    %p56 = scmp.ne.s32.totalorder %s51, %s53
    %p57 = scmp.eq.s32.totalorder %s17, 0
    %p58 = por %p56, %p57
    %p59 = scmp.ne.s32.totalorder %s51, %s53
    %p60 = scmp.eq.s32.totalorder %s22, 1
    %p61 = por %p59, %p60
    %p62 = scmp.ne.s32.totalorder %s53, %s54
    %p63 = scmp.eq.s32.totalorder %s22, 0
    %p64 = por %p62, %p63
    %p65 = scmp.ne.s32.totalorder %s53, %s54
    %p66 = scmp.eq.s32.totalorder %s23, 1
    %p67 = por %p65, %p66
    %p69 = scmp.ne.s32.totalorder %s54, %s68
    %p70 = scmp.eq.s32.totalorder %s23, 0
    %p71 = por %p69, %p70
    %s73 = sadd.s32 %s72, 1
    %p76 = scmp.eq.s32.totalorder %s17, 1
    %p77 = scmp.ne.s32.totalorder %s72, %s74
    %p78 = scmp.eq.s32.totalorder %s17, 0
    %p79 = por %p77, %p78
    %p80 = scmp.ne.s32.totalorder %s72, %s74
    %p81 = scmp.eq.s32.totalorder %s22, 1
    %p82 = por %p80, %p81
    %p83 = scmp.ne.s32.totalorder %s74, %s75
    %p84 = scmp.eq.s32.totalorder %s22, 0
    %p85 = por %p83, %p84
    %p86 = scmp.ne.s32.totalorder %s74, %s75
    %p87 = scmp.eq.s32.totalorder %s23, 1
    %p88 = por %p86, %p87
    %p90 = scmp.ne.s32.totalorder %s75, %s89
    %p91 = scmp.eq.s32.totalorder %s23, 0
    %p92 = por %p90, %p91
    %s94 = sadd.s32 %s93, 1
    %p97 = scmp.eq.s32.totalorder %s17, 1
    %p98 = scmp.ne.s32.totalorder %s93, %s95
    %p99 = scmp.eq.s32.totalorder %s17, 0
    %p100 = por %p98, %p99
    %p101 = scmp.ne.s32.totalorder %s93, %s95
    %p102 = scmp.eq.s32.totalorder %s22, 1
    %p103 = por %p101, %p102
    %p104 = scmp.ne.s32.totalorder %s95, %s96
    %p105 = scmp.eq.s32.totalorder %s22, 0
    %p106 = por %p104, %p105
    %p107 = scmp.ne.s32.totalorder %s95, %s96
    %p108 = scmp.eq.s32.totalorder %s23, 1
    %p109 = por %p107, %p108
    %p111 = scmp.ne.s32.totalorder %s96, %s110
    %p112 = scmp.eq.s32.totalorder %s23, 0
    %p113 = por %p111, %p112
    %s115 = sadd.s32 %s114, 1
    %p118 = scmp.eq.s32.totalorder %s17, 1
    %p119 = scmp.ne.s32.totalorder %s114, %s116
    %p120 = scmp.eq.s32.totalorder %s17, 0
    %p121 = por %p119, %p120
    %p122 = scmp.ne.s32.totalorder %s114, %s116
    %p123 = scmp.eq.s32.totalorder %s22, 1
    %p124 = por %p122, %p123
    %p125 = scmp.ne.s32.totalorder %s116, %s117
    %p126 = scmp.eq.s32.totalorder %s22, 0
    %p127 = por %p125, %p126
    %p128 = scmp.ne.s32.totalorder %s116, %s117
    %p129 = scmp.eq.s32.totalorder %s23, 1
    %p130 = por %p128, %p129
    %p132 = scmp.ne.s32.totalorder %s117, %s131
    %p133 = scmp.eq.s32.totalorder %s23, 0
    %p134 = por %p132, %p133
    %s136 = sadd.s32 %s135, 1
    %p139 = scmp.eq.s32.totalorder %s17, 1
    %p140 = scmp.ne.s32.totalorder %s135, %s137
    %p141 = scmp.eq.s32.totalorder %s17, 0
    %p142 = por %p140, %p141
    %p143 = scmp.ne.s32.totalorder %s135, %s137
    %p144 = scmp.eq.s32.totalorder %s22, 1
    %p145 = por %p143, %p144
    %p146 = scmp.ne.s32.totalorder %s137, %s138
    %p147 = scmp.eq.s32.totalorder %s22, 0
    %p148 = por %p146, %p147
    %p149 = scmp.ne.s32.totalorder %s137, %s138
    %p150 = scmp.eq.s32.totalorder %s23, 1
    %p151 = por %p149, %p150
    %p153 = scmp.ne.s32.totalorder %s138, %s152
    %p154 = scmp.eq.s32.totalorder %s23, 0
    %p155 = por %p153, %p154
    %s157 = sadd.s32 %s156, 1
    %p160 = scmp.eq.s32.totalorder %s17, 1
    %p161 = scmp.ne.s32.totalorder %s156, %s158
    %p162 = scmp.eq.s32.totalorder %s17, 0
    %p163 = por %p161, %p162
    %p164 = scmp.ne.s32.totalorder %s156, %s158
    %p165 = scmp.eq.s32.totalorder %s22, 1
    %p166 = por %p164, %p165
    %p167 = scmp.ne.s32.totalorder %s158, %s159
    %p168 = scmp.eq.s32.totalorder %s22, 0
    %p169 = por %p167, %p168
    %p170 = scmp.ne.s32.totalorder %s158, %s159
    %p171 = scmp.eq.s32.totalorder %s23, 1
    %p172 = por %p170, %p171
    %p174 = scmp.ne.s32.totalorder %s159, %s173
    %p175 = scmp.eq.s32.totalorder %s23, 0
    %p176 = por %p174, %p175
    %s178 = sadd.s32 %s177, 1
    %p181 = scmp.eq.s32.totalorder %s17, 1
    %p182 = scmp.ne.s32.totalorder %s177, %s179
    %p183 = scmp.eq.s32.totalorder %s17, 0
    %p184 = por %p182, %p183
    %p185 = scmp.ne.s32.totalorder %s177, %s179
    %p186 = scmp.eq.s32.totalorder %s22, 1
    %p187 = por %p185, %p186
    %p188 = scmp.ne.s32.totalorder %s179, %s180
    %p189 = scmp.eq.s32.totalorder %s22, 0
    %p190 = por %p188, %p189
    %p191 = scmp.ne.s32.totalorder %s179, %s180
    %p192 = scmp.eq.s32.totalorder %s23, 1
    %p193 = por %p191, %p192
    %p195 = scmp.ne.s32.totalorder %s180, %s194
    %p196 = scmp.eq.s32.totalorder %s23, 0
    %p197 = por %p195, %p196
    %s199 = sadd.s32 %s198, 1
    %p202 = scmp.eq.s32.totalorder %s17, 1
    %p203 = scmp.ne.s32.totalorder %s198, %s200
    %p204 = scmp.eq.s32.totalorder %s17, 0
    %p205 = por %p203, %p204
    %p206 = scmp.ne.s32.totalorder %s198, %s200
    %p207 = scmp.eq.s32.totalorder %s22, 1
    %p208 = por %p206, %p207
    %p209 = scmp.ne.s32.totalorder %s200, %s201
    %p210 = scmp.eq.s32.totalorder %s22, 0
    %p211 = por %p209, %p210
    %p212 = scmp.ne.s32.totalorder %s200, %s201
    %p213 = scmp.eq.s32.totalorder %s23, 1
    %p214 = por %p212, %p213
    %p216 = scmp.ne.s32.totalorder %s201, %s215
    %p217 = scmp.eq.s32.totalorder %s23, 0
    %p218 = por %p216, %p217
    %s220 = sadd.s32 %s219, 1
    %p223 = scmp.eq.s32.totalorder %s17, 1
    %p224 = scmp.ne.s32.totalorder %s219, %s221
    %p225 = scmp.eq.s32.totalorder %s17, 0
    %p226 = por %p224, %p225
    %p227 = scmp.ne.s32.totalorder %s219, %s221
    %p228 = scmp.eq.s32.totalorder %s22, 1
    %p229 = por %p227, %p228
    %p230 = scmp.ne.s32.totalorder %s221, %s222
    %p231 = scmp.eq.s32.totalorder %s22, 0
    %p232 = por %p230, %p231
    %p233 = scmp.ne.s32.totalorder %s221, %s222
    %p234 = scmp.eq.s32.totalorder %s23, 1
    %p235 = por %p233, %p234
    %p237 = scmp.ne.s32.totalorder %s222, %s236
    %p238 = scmp.eq.s32.totalorder %s23, 0
    %p239 = por %p237, %p238
    %s241 = sadd.s32 %s240, 1
    %p244 = scmp.eq.s32.totalorder %s17, 1
    %p245 = scmp.ne.s32.totalorder %s240, %s242
    %p246 = scmp.eq.s32.totalorder %s17, 0
    %p247 = por %p245, %p246
    %p248 = scmp.ne.s32.totalorder %s240, %s242
    %p249 = scmp.eq.s32.totalorder %s22, 1
    %p250 = por %p248, %p249
    %p251 = scmp.ne.s32.totalorder %s242, %s243
    %p252 = scmp.eq.s32.totalorder %s22, 0
    %p253 = por %p251, %p252
    %p254 = scmp.ne.s32.totalorder %s242, %s243
    %p255 = scmp.eq.s32.totalorder %s23, 1
    %p256 = por %p254, %p255
    %p258 = scmp.ne.s32.totalorder %s243, %s257
    %p259 = scmp.eq.s32.totalorder %s23, 0
    %p260 = por %p258, %p259
    %s261 = ssub.s32 %s17, %s24
    %p262 = scmp.eq.s32.totalorder %s261, 0
    %s264 = sadd.s32 %s263, 1
    %s265 = scalar_select %p262, %s263, %s264
    %p268 = pneg %p262
    %p269 = scmp.eq.s32.totalorder %s17, 1
    %p270 = por %p268, %p269
    %p271 = scmp.ne.s32.totalorder %s263, %s266
    %p272 = scmp.eq.s32.totalorder %s17, 0
    %p273 = por %p271, %p272
    %p274 = scmp.ne.s32.totalorder %s263, %s266
    %p275 = scmp.eq.s32.totalorder %s22, 1
    %p276 = por %p274, %p275
    %p277 = scmp.ne.s32.totalorder %s266, %s267
    %p278 = scmp.eq.s32.totalorder %s22, 0
    %p279 = por %p277, %p278
    %p280 = scmp.ne.s32.totalorder %s266, %s267
    %p281 = scmp.eq.s32.totalorder %s23, 1
    %p282 = por %p280, %p281
    %p284 = scmp.ne.s32.totalorder %s267, %s283
    %p285 = scmp.eq.s32.totalorder %s23, 0
    %p286 = por %p284, %p285
    %p287 = scmp.le.s32.totalorder 1, %s17
    %p288 = scmp.lt.s32.totalorder %s17, 3
    %p289 = pnand %p287, %p288
    %p290 = pneg %p289
    // Predicated region
    $region9: #{demucs_decoder_forward.6} parent=5 // pred_check
      _
    $region10: #{demucs_decoder_forward.6} parent=5 // pred_check_branch
      %292 = sbr.rel (%p289) target = $region12
    $region11: #{demucs_decoder_forward.6} parent=5 // pred_region
      %s293 = ssub.s32 %s17, 1
      // Predicated region
      $region13: #{demucs_decoder_forward.6} parent=11 // pred_check
        %p294 = pneg %p64
      $region14: #{demucs_decoder_forward.6} parent=11 // pred_check_branch
        %296 = sbr.rel (%p294) target = $region16
      $region15: #{demucs_decoder_forward.6} parent=11 // pred_region
        _
      $region16: #{demucs_decoder_forward.6} parent=11 // pred_fallthru
        _
      // Predicated region
      $region17: #{demucs_decoder_forward.6} parent=11 // pred_check
        %p297 = pneg %p85
      $region18: #{demucs_decoder_forward.6} parent=11 // pred_check_branch
        %299 = sbr.rel (%p297) target = $region20
      $region19: #{demucs_decoder_forward.6} parent=11 // pred_region
        _
      $region20: #{demucs_decoder_forward.6} parent=11 // pred_fallthru
        _
      // Predicated region
      $region21: #{demucs_decoder_forward.6} parent=11 // pred_check
        %p300 = pneg %p106
      $region22: #{demucs_decoder_forward.6} parent=11 // pred_check_branch
        %302 = sbr.rel (%p300) target = $region24
      $region23: #{demucs_decoder_forward.6} parent=11 // pred_region
        _
      $region24: #{demucs_decoder_forward.6} parent=11 // pred_fallthru
        _
      // Predicated region
      $region25: #{demucs_decoder_forward.6} parent=11 // pred_check
        %p303 = pneg %p127
      $region26: #{demucs_decoder_forward.6} parent=11 // pred_check_branch
        %305 = sbr.rel (%p303) target = $region28
      $region27: #{demucs_decoder_forward.6} parent=11 // pred_region
        _
      $region28: #{demucs_decoder_forward.6} parent=11 // pred_fallthru
        _
      // Predicated region
      $region29: #{demucs_decoder_forward.6} parent=11 // pred_check
        %p306 = pneg %p148
      $region30: #{demucs_decoder_forward.6} parent=11 // pred_check_branch
        %308 = sbr.rel (%p306) target = $region32
      $region31: #{demucs_decoder_forward.6} parent=11 // pred_region
        _
      $region32: #{demucs_decoder_forward.6} parent=11 // pred_fallthru
        _
      // Predicated region
      $region33: #{demucs_decoder_forward.6} parent=11 // pred_check
        %p309 = pneg %p169
      $region34: #{demucs_decoder_forward.6} parent=11 // pred_check_branch
        %311 = sbr.rel (%p309) target = $region36
      $region35: #{demucs_decoder_forward.6} parent=11 // pred_region
        _
      $region36: #{demucs_decoder_forward.6} parent=11 // pred_fallthru
        _
      // Predicated region
      $region37: #{demucs_decoder_forward.6} parent=11 // pred_check
        %p312 = pneg %p190
      $region38: #{demucs_decoder_forward.6} parent=11 // pred_check_branch
        %314 = sbr.rel (%p312) target = $region40
      $region39: #{demucs_decoder_forward.6} parent=11 // pred_region
        _
      $region40: #{demucs_decoder_forward.6} parent=11 // pred_fallthru
        _
      // Predicated region
      $region41: #{demucs_decoder_forward.6} parent=11 // pred_check
        %p315 = pneg %p211
      $region42: #{demucs_decoder_forward.6} parent=11 // pred_check_branch
        %317 = sbr.rel (%p315) target = $region44
      $region43: #{demucs_decoder_forward.6} parent=11 // pred_region
        _
      $region44: #{demucs_decoder_forward.6} parent=11 // pred_fallthru
        _
      // Predicated region
      $region45: #{demucs_decoder_forward.6} parent=11 // pred_check
        %p318 = pneg %p232
      $region46: #{demucs_decoder_forward.6} parent=11 // pred_check_branch
        %320 = sbr.rel (%p318) target = $region48
      $region47: #{demucs_decoder_forward.6} parent=11 // pred_region
        _
      $region48: #{demucs_decoder_forward.6} parent=11 // pred_fallthru
        _
      // Predicated region
      $region49: #{demucs_decoder_forward.6} parent=11 // pred_check
        %p321 = pneg %p253
      $region50: #{demucs_decoder_forward.6} parent=11 // pred_check_branch
        %323 = sbr.rel (%p321) target = $region52
      $region51: #{demucs_decoder_forward.6} parent=11 // pred_region
        _
      $region52: #{demucs_decoder_forward.6} parent=11 // pred_fallthru
        _
    $region12: #{demucs_decoder_forward.6} parent=5 // pred_fallthru
      _
    %p324 = scmp.lt.s32.totalorder %s17, 2
    // Predicated region
    $region53: #{demucs_decoder_forward.6} parent=5 // pred_check
      %p325 = pneg %p324
    $region54: #{demucs_decoder_forward.6} parent=5 // pred_check_branch
      %327 = sbr.rel (%p325) target = $region56
    $region55: #{demucs_decoder_forward.6} parent=5 // pred_region
      // Predicated region
      $region57: #{demucs_decoder_forward.6} parent=55 // pred_check
        %p328 = pneg %p37
      $region58: #{demucs_decoder_forward.6} parent=55 // pred_check_branch
        %330 = sbr.rel (%p328) target = $region60
      $region59: #{demucs_decoder_forward.6} parent=55 // pred_region
        %p331 = scmp.lt.s32.totalorder %s17, 1
        %s332 = scalar_select %p331, %s17, 1
        %s333 = smul.addr %s332, 2
        %s334 = smul.addr %s333, 8
        %s335 = scalar_lea.vmem %s0, %s334
      $region60: #{demucs_decoder_forward.6} parent=55 // pred_fallthru
        _
    $region56: #{demucs_decoder_forward.6} parent=5 // pred_fallthru
      _
    %p336 = scmp.le.s32.totalorder 1, %s17
    %p337 = scmp.lt.s32.totalorder %s17, 3
    %p338 = pnand %p336, %p337
    %p339 = pneg %p338
    // Predicated region
    $region61: #{demucs_decoder_forward.6} parent=5 // pred_check
      _
    $region62: #{demucs_decoder_forward.6} parent=5 // pred_check_branch
      %341 = sbr.rel (%p338) target = $region64
    $region63: #{demucs_decoder_forward.6} parent=5 // pred_region
      %s342 = ssub.s32 %s17, 1
      %p343 = scmp.lt.s32.totalorder %s22, 1
      %s344 = scalar_select %p343, %s22, 1
      %s345 = smul.addr %s344, 2
      %s346 = smul.addr %s345, 8
      %s347 = scalar_lea.vmem %s0, %s346
      %p348 = pneg %p43
      %p349 = pneg %p40
      %p350 = pneg %p64
      %p351 = pneg %p61
      %p352 = pneg %p85
      %p353 = pneg %p82
      %p354 = pneg %p106
      %p355 = pneg %p103
      %p356 = pneg %p127
      %p357 = pneg %p124
      %p358 = pneg %p148
      %p359 = pneg %p145
      %p360 = pneg %p169
      %p361 = pneg %p166
      %p362 = pneg %p190
      %p363 = pneg %p187
      %p364 = pneg %p211
      %p365 = pneg %p208
      %p366 = pneg %p232
      %p367 = pneg %p229
      %p368 = pneg %p253
      %p369 = pneg %p250
      %p370 = pneg %p279
      %p371 = pneg %p276
      %p372 = scmp.lt.s32.totalorder %s22, 1
      %s373 = scalar_select %p372, %s22, 1
      %s374 = smul.addr %s373, 2
      %s375 = smul.addr %s374, 8
      %s376 = scalar_lea.vmem %s11, %s375
      %p377 = scmp.lt.s32.totalorder %s22, 1
      %s378 = scalar_select %p377, %s22, 1
      %s379 = smul.addr %s378, 2
      %s380 = smul.addr %s379, 8
      %s381 = scalar_lea.vmem %s0, %s380
      %p382 = scmp.lt.s32.totalorder %s22, 1
      %s383 = scalar_select %p382, %s22, 1
      %s384 = smul.addr %s383, 2
      %s385 = smul.addr %s384, 8
      %s386 = scalar_lea.vmem %s11, %s385
      %v387 = vld [vmem:[%s381] sm:$0xff]
      %v388 = vld [vmem:[%s381 + $0x8] sm:$0xff]
      %v389 = vld [vmem:[%s1] sm:$0xff]
      %v390 = vld [vmem:[%s1 + $0x8] sm:$0xff]
      %v391 = vld [vmem:[%s1 + $0x10] sm:$0xff]
      %v392 = vld [vmem:[%s1 + $0x18] sm:$0xff]
      %vm393 = vcmask 130048
      %v395 = vsel %vm393, %v389, 0
      %v398 = vsel %vm393, %v390, 0
      %v401 = vsel %vm393, %v391, 0
      %v404 = vsel %vm393, %v392, 0
      %406 = vmatprep.subr.mxu0 0.0
      %407 = vmatpush1.msra.mxu0 %v387
      %408 = vmatprep.subr.mxu0 0.0
      %409 = vmatpush1.msra.mxu0 %v388
      %410 = vmatprep.subr.mxu0 0.0
      %411 = vmatpush1.msra.mxu0 0.0
      %412 = vmatprep.subr.mxu0 0.0
      %413 = vmatpush1.msra.mxu0 0.0
      %414 = vmatprep.subr.mxu0 0.0
      %415 = vmatpush1.msra.mxu0 0.0
      %416 = vmatprep.subr.mxu0 0.0
      %417 = vmatpush1.msra.mxu0 0.0
      %418 = vmatprep.subr.mxu0 0.0
      %419 = vmatpush1.msra.mxu0 0.0
      %420 = vmatprep.subr.mxu0 0.0
      %421 = vmatpush1.msra.mxu0 0.0
      %422 = vmatprep.subr.mxu0 0.0
      %423 = vmatpush1.msra.mxu0 0.0
      %424 = vmatprep.subr.mxu0 0.0
      %425 = vmatpush1.msra.mxu0 0.0
      %426 = vmatprep.subr.mxu0 0.0
      %427 = vmatpush1.msra.mxu0 0.0
      %428 = vmatprep.subr.mxu0 0.0
      %429 = vmatpush1.msra.mxu0 0.0
      %430 = vmatprep.subr.mxu0 0.0
      %431 = vmatpush1.msra.mxu0 0.0
      %432 = vmatprep.subr.mxu0 0.0
      %433 = vmatpush1.msra.mxu0 0.0
      %434 = vmatprep.subr.mxu0 0.0
      %435 = vmatpush1.msra.mxu0 0.0
      %436 = vmatprep.subr.mxu0 0.0
      %437 = vmatpush1.msra.mxu0 0.0
      %438 = vmatprep.subr.mxu0 0.0
      %439 = vmatpush1.msra.mxu0 0.0
      %440 = vmatprep.subr.mxu0 0.0
      %441 = vmatpush1.msra.mxu0 0.0
      %442 = vmatprep.subr.mxu0 0.0
      %443 = vmatpush1.msra.mxu0 0.0
      %444 = vmatprep.subr.mxu0 0.0
      %445 = vmatpush1.msra.mxu0 0.0
      %446 = vmatprep.subr.mxu0 0.0
      %447 = vmatpush1.msra.mxu0 0.0
      %448 = vmatprep.subr.mxu0 0.0
      %449 = vmatpush1.msra.mxu0 0.0
      %450 = vmatprep.subr.mxu0 0.0
      %451 = vmatpush1.msra.mxu0 0.0
      %452 = vmatprep.subr.mxu0 0.0
      %453 = vmatpush1.msra.mxu0 0.0
      %454 = vmatprep.subr.mxu0 0.0
      %455 = vmatpush1.msra.mxu0 0.0
      %456 = vmatprep.subr.mxu0 0.0
      %457 = vmatpush1.msra.mxu0 0.0
      %458 = vmatprep.subr.mxu0 0.0
      %459 = vmatpush1.msra.mxu0 0.0
      %460 = vmatprep.subr.mxu0 0.0
      %461 = vmatpush1.msra.mxu0 0.0
      %462 = vmatprep.subr.mxu0 0.0
      %463 = vmatpush1.msra.mxu0 0.0
      %464 = vmatprep.subr.mxu0 0.0
      %465 = vmatpush1.msra.mxu0 0.0
      %466 = vmatprep.subr.mxu0 0.0
      %467 = vmatpush1.msra.mxu0 0.0
      %468 = vmatprep.subr.mxu0 0.0
      %469 = vmatpush1.msra.mxu0 0.0
      %470 = vmatprep.mubr.f32.mxu0 0.0
      %471 = vmatmul.mubr.f32.gmra.mrb[0].mxu0 %v395
      %v472 = vpop.f32.mrb[0].mxu0
      %v473 = vadd.f32 0.0, %v472
      %v474 = vpop.f32.mrb[0].mxu0
      %475 = vmatprep.mubr.f32.mxu0 0.0
      %476 = vmatmul.mubr.f32.gmra.mrb[0].mxu0 %v398
      %v477 = vpop.f32.mrb[0].mxu0
      %v478 = vadd.f32 0.0, %v477
      %v479 = vpop.f32.mrb[0].mxu0
      %480 = vmatprep.mubr.f32.mxu0 0.0
      %481 = vmatmul.mubr.f32.gmra.mrb[0].mxu0 %v401
      %v482 = vpop.f32.mrb[0].mxu0
      %v483 = vadd.f32 0.0, %v482
      %v484 = vpop.f32.mrb[0].mxu0
      %485 = vmatprep.mubr.f32.mxu0 0.0
      %486 = vmatmul.mubr.f32.gmra.mrb[0].mxu0 %v404
      %v487 = vpop.f32.mrb[0].mxu0
      %v488 = vadd.f32 0.0, %v487
      %v489 = vpop.f32.mrb[0].mxu0
      %490 = vdwg.mxu0
      %v491 = vld [vmem:[%s2] sm:$0xff]
      %493 = vrot.lane.b32.xlu0 %v488, 1
      %v494 = vpop.permute.xlu0 %493
      %v496 = vadd.f32 %v478, %v494
      %498 = vset.pattern.permute.xlu0 0
      %499 = vperm.xlu0 %498, %v491
      %v500 = vpop.permute.xlu0 %499
      %v502 = vadd.f32 %v496, %v500
      %504 = vrot.lane.b32.xlu0 %v483, 1
      %v505 = vpop.permute.xlu0 %504
      %v507 = vadd.f32 %v473, %v505
      %v508 = vadd.f32 %v507, %v500
      %v509 = vld [vmem:[%s5] sm:$0xff]
      %v510 = vld [vmem:[%s6] sm:$0xff]
      %v511 = vld [vmem:[%s7] sm:$0xff]
      %513 = vrot.lane.b32.xlu0 %v502, 127
      %v514 = vpop.permute.xlu0 %513
      %vm516 = vcmask 64512
      %v517 = vsel %vm516, %v514, 0.0
      %518 = vadd.xlane.f32.xlu0 %v517
      %v519 = vpop.xlane.xlu0 %518
      %v520 = vmul.f32 %v502, %v502
      %522 = vrot.lane.b32.xlu0 %v520, 127
      %v523 = vpop.permute.xlu0 %522
      %v525 = vsel %vm516, %v523, 0.0
      %526 = vadd.xlane.f32.xlu0 %v525
      %v527 = vpop.xlane.xlu0 %526
      %529 = vrot.lane.b32.xlu0 %v508, 126
      %v530 = vpop.permute.xlu0 %529
      %v532 = vsel %vm516, %v530, 0.0
      %533 = vadd.xlane.f32.xlu0 %v532
      %v534 = vpop.xlane.xlu0 %533
      %v535 = vmul.f32 %v508, %v508
      %537 = vrot.lane.b32.xlu0 %v535, 126
      %v538 = vpop.permute.xlu0 %537
      %v540 = vsel %vm516, %v538, 0.0
      %541 = vadd.xlane.f32.xlu0 %v540
      %v542 = vpop.xlane.xlu0 %541
      %v543 = vadd.f32 %v519, %v534
      %v544 = vadd.f32 %v527, %v542
      %v546 = vsel %vm516, %v509, 0
      %548 = vmatprep.subr.mxu0 0.0
      %549 = vmatpush1.msra.mxu0 %v543
      %550 = vmatprep.subr.mxu0 0.0
      %551 = vmatpush1.msra.mxu0 0.0
      %552 = vmatprep.subr.mxu0 0.0
      %553 = vmatpush1.msra.mxu0 0.0
      %554 = vmatprep.subr.mxu0 0.0
      %555 = vmatpush1.msra.mxu0 0.0
      %556 = vmatprep.subr.mxu0 0.0
      %557 = vmatpush1.msra.mxu0 0.0
      %558 = vmatprep.subr.mxu0 0.0
      %559 = vmatpush1.msra.mxu0 0.0
      %560 = vmatprep.subr.mxu0 0.0
      %561 = vmatpush1.msra.mxu0 0.0
      %562 = vmatprep.subr.mxu0 0.0
      %563 = vmatpush1.msra.mxu0 0.0
      %564 = vmatprep.subr.mxu0 0.0
      %565 = vmatpush1.msra.mxu0 0.0
      %566 = vmatprep.subr.mxu0 0.0
      %567 = vmatpush1.msra.mxu0 0.0
      %568 = vmatprep.subr.mxu0 0.0
      %569 = vmatpush1.msra.mxu0 0.0
      %570 = vmatprep.subr.mxu0 0.0
      %571 = vmatpush1.msra.mxu0 0.0
      %572 = vmatprep.subr.mxu0 0.0
      %573 = vmatpush1.msra.mxu0 0.0
      %574 = vmatprep.subr.mxu0 0.0
      %575 = vmatpush1.msra.mxu0 0.0
      %576 = vmatprep.subr.mxu0 0.0
      %577 = vmatpush1.msra.mxu0 0.0
      %578 = vmatprep.subr.mxu0 0.0
      %579 = vmatpush1.msra.mxu0 0.0
      %580 = vmatprep.subr.mxu0 0.0
      %581 = vmatpush1.msra.mxu0 0.0
      %582 = vmatprep.subr.mxu0 0.0
      %583 = vmatpush1.msra.mxu0 0.0
      %584 = vmatprep.subr.mxu0 0.0
      %585 = vmatpush1.msra.mxu0 0.0
      %586 = vmatprep.subr.mxu0 0.0
      %587 = vmatpush1.msra.mxu0 0.0
      %588 = vmatprep.subr.mxu0 0.0
      %589 = vmatpush1.msra.mxu0 0.0
      %590 = vmatprep.subr.mxu0 0.0
      %591 = vmatpush1.msra.mxu0 0.0
      %592 = vmatprep.subr.mxu0 0.0
      %593 = vmatpush1.msra.mxu0 0.0
      %594 = vmatprep.subr.mxu0 0.0
      %595 = vmatpush1.msra.mxu0 0.0
      %596 = vmatprep.subr.mxu0 0.0
      %597 = vmatpush1.msra.mxu0 0.0
      %598 = vmatprep.subr.mxu0 0.0
      %599 = vmatpush1.msra.mxu0 0.0
      %600 = vmatprep.subr.mxu0 0.0
      %601 = vmatpush1.msra.mxu0 0.0
      %602 = vmatprep.subr.mxu0 0.0
      %603 = vmatpush1.msra.mxu0 0.0
      %604 = vmatprep.subr.mxu0 0.0
      %605 = vmatpush1.msra.mxu0 0.0
      %606 = vmatprep.subr.mxu0 0.0
      %607 = vmatpush1.msra.mxu0 0.0
      %608 = vmatprep.subr.mxu0 0.0
      %609 = vmatpush1.msra.mxu0 0.0
      %610 = vmatprep.subr.mxu0 0.0
      %611 = vmatpush1.msra.mxu0 0.0
      %612 = vmatprep.mubr.f32.mxu0 0.0
      %613 = vmatmul.mubr.f32.gmra.mrb[0].mxu0 %v546
      %v614 = vpop.f32.mrb[0].mxu0
      %v615 = vadd.f32 0.0, %v614
      %v616 = vpop.f32.mrb[0].mxu0
      %617 = vdwg.mxu0
      %v618 = vmul.f32 %v615, 0.03125
      %619 = vmatprep.subr.mxu0 0.0
      %620 = vmatpush1.msra.mxu0 %v544
      %621 = vmatprep.subr.mxu0 0.0
      %622 = vmatpush1.msra.mxu0 0.0
      %623 = vmatprep.subr.mxu0 0.0
      %624 = vmatpush1.msra.mxu0 0.0
      %625 = vmatprep.subr.mxu0 0.0
      %626 = vmatpush1.msra.mxu0 0.0
      %627 = vmatprep.subr.mxu0 0.0
      %628 = vmatpush1.msra.mxu0 0.0
      %629 = vmatprep.subr.mxu0 0.0
      %630 = vmatpush1.msra.mxu0 0.0
      %631 = vmatprep.subr.mxu0 0.0
      %632 = vmatpush1.msra.mxu0 0.0
      %633 = vmatprep.subr.mxu0 0.0
      %634 = vmatpush1.msra.mxu0 0.0
      %635 = vmatprep.subr.mxu0 0.0
      %636 = vmatpush1.msra.mxu0 0.0
      %637 = vmatprep.subr.mxu0 0.0
      %638 = vmatpush1.msra.mxu0 0.0
      %639 = vmatprep.subr.mxu0 0.0
      %640 = vmatpush1.msra.mxu0 0.0
      %641 = vmatprep.subr.mxu0 0.0
      %642 = vmatpush1.msra.mxu0 0.0
      %643 = vmatprep.subr.mxu0 0.0
      %644 = vmatpush1.msra.mxu0 0.0
      %645 = vmatprep.subr.mxu0 0.0
      %646 = vmatpush1.msra.mxu0 0.0
      %647 = vmatprep.subr.mxu0 0.0
      %648 = vmatpush1.msra.mxu0 0.0
      %649 = vmatprep.subr.mxu0 0.0
      %650 = vmatpush1.msra.mxu0 0.0
      %651 = vmatprep.subr.mxu0 0.0
      %652 = vmatpush1.msra.mxu0 0.0
      %653 = vmatprep.subr.mxu0 0.0
      %654 = vmatpush1.msra.mxu0 0.0
      %655 = vmatprep.subr.mxu0 0.0
      %656 = vmatpush1.msra.mxu0 0.0
      %657 = vmatprep.subr.mxu0 0.0
      %658 = vmatpush1.msra.mxu0 0.0
      %659 = vmatprep.subr.mxu0 0.0
      %660 = vmatpush1.msra.mxu0 0.0
      %661 = vmatprep.subr.mxu0 0.0
      %662 = vmatpush1.msra.mxu0 0.0
      %663 = vmatprep.subr.mxu0 0.0
      %664 = vmatpush1.msra.mxu0 0.0
      %665 = vmatprep.subr.mxu0 0.0
      %666 = vmatpush1.msra.mxu0 0.0
      %667 = vmatprep.subr.mxu0 0.0
      %668 = vmatpush1.msra.mxu0 0.0
      %669 = vmatprep.subr.mxu0 0.0
      %670 = vmatpush1.msra.mxu0 0.0
      %671 = vmatprep.subr.mxu0 0.0
      %672 = vmatpush1.msra.mxu0 0.0
      %673 = vmatprep.subr.mxu0 0.0
      %674 = vmatpush1.msra.mxu0 0.0
      %675 = vmatprep.subr.mxu0 0.0
      %676 = vmatpush1.msra.mxu0 0.0
      %677 = vmatprep.subr.mxu0 0.0
      %678 = vmatpush1.msra.mxu0 0.0
      %679 = vmatprep.subr.mxu0 0.0
      %680 = vmatpush1.msra.mxu0 0.0
      %681 = vmatprep.subr.mxu0 0.0
      %682 = vmatpush1.msra.mxu0 0.0
      %683 = vmatprep.mubr.f32.mxu0 0.0
      %684 = vmatmul.mubr.f32.gmra.mrb[0].mxu0 %v546
      %v685 = vpop.f32.mrb[0].mxu0
      %v686 = vadd.f32 0.0, %v685
      %v687 = vpop.f32.mrb[0].mxu0
      %688 = vdwg.mxu0
      %v689 = vmul.f32 %v686, 0.03125
      %v690 = vmul.f32 %v618, %v618
      %v691 = vsub.f32 %v689, %v690
      %v692 = vadd.f32 %v691, 1e-05
      %v693 = vrsqrt.pop %v692
      %v694 = vmul.f32 %v693, %v510
      %v695 = vmul.f32 %v618, %v694
      %v696 = vsub.f32 %v511, %v695
      %698 = vset.pattern.permute.xlu0 0
      %699 = vperm.xlu0 %698, %v694
      %v700 = vpop.permute.xlu0 %699
      %v702 = vmul.f32 %v502, %v700
      %704 = vset.pattern.permute.xlu0 0
      %705 = vperm.xlu0 %704, %v696
      %v706 = vpop.permute.xlu0 %705
      %v708 = vadd.f32 %v702, %v706
      %v709 = vmul.f32 %v508, %v700
      %v710 = vadd.f32 %v709, %v706
      %v711 = vmul.f32 %v708, 0.5
      %v712 = vmul.f32 %v708, 0.70710677
      %vm713 = vcmp.ge.f32.partialorder %v712, 0.0
      %v714 = vsel %vm713, 1.0, -1.0
      %v715 = vand.u32 2147483647, %v712
      %v716 = vmul.f32 %v715, 0.3275911
      %v717 = vadd.f32 %v716, 1.0
      %v718 = vrcp.pop %v717
      %v719 = vmul.f32 %v717, %v718
      %v720 = vsub.f32 2.0, %v719
      %v721 = vmul.f32 %v718, %v720
      %v722 = vmul.f32 %v721, 1.0614054
      %v723 = vadd.f32 %v722, -1.4531521
      %v724 = vmul.f32 %v723, %v721
      %v725 = vadd.f32 %v724, 1.4214138
      %v726 = vmul.f32 %v725, %v721
      %v727 = vadd.f32 %v726, -0.28449672
      %v728 = vmul.f32 %v727, %v721
      %v729 = vadd.f32 %v728, 0.2548296
      %v730 = vmul.f32 %v729, %v721
      %v731 = vsub.f32 0.0, %v715
      %v732 = vmul.f32 %v731, %v715
      %v733 = vmul.f32 %v732, 1.442695
      %v734 = vpow.pop %v733
      %v735 = vmul.f32 %v730, %v734
      %v736 = vsub.f32 1.0, %v735
      %v737 = vmul.f32 %v714, %v736
      %v738 = vadd.f32 %v737, 1.0
      %v739 = vmul.f32 %v711, %v738
      %v740 = vmul.f32 %v710, 0.5
      %v741 = vmul.f32 %v710, 0.70710677
      %vm742 = vcmp.ge.f32.partialorder %v741, 0.0
      %v743 = vsel %vm742, 1.0, -1.0
      %v744 = vand.u32 2147483647, %v741
      %v745 = vmul.f32 %v744, 0.3275911
      %v746 = vadd.f32 %v745, 1.0
      %v747 = vrcp.pop %v746
      %v748 = vmul.f32 %v746, %v747
      %v749 = vsub.f32 2.0, %v748
      %v750 = vmul.f32 %v747, %v749
      %v751 = vmul.f32 %v750, 1.0614054
      %v752 = vadd.f32 %v751, -1.4531521
      %v753 = vmul.f32 %v752, %v750
      %v754 = vadd.f32 %v753, 1.4214138
      %v755 = vmul.f32 %v754, %v750
      %v756 = vadd.f32 %v755, -0.28449672
      %v757 = vmul.f32 %v756, %v750
      %v758 = vadd.f32 %v757, 0.2548296
      %v759 = vmul.f32 %v758, %v750
      %v760 = vsub.f32 0.0, %v744
      %v761 = vmul.f32 %v760, %v744
      %v762 = vmul.f32 %v761, 1.442695
      %v763 = vpow.pop %v762
      %v764 = vmul.f32 %v759, %v763
      %v765 = vsub.f32 1.0, %v764
      %v766 = vmul.f32 %v743, %v765
      %v767 = vadd.f32 %v766, 1.0
      %v768 = vmul.f32 %v740, %v767
      %v769 = vld [vmem:[%s3] sm:$0xff]
      %v770 = vld [vmem:[%s3 + $0x8] sm:$0xff]
      %v771 = vld [vmem:[%s4] sm:$0xff]
      %v772 = vld [vmem:[%s4 + $0x8] sm:$0xff]
      %774 = vset.pattern.permute.xlu0 0
      %775 = vperm.xlu0 %774, %v771
      %v776 = vpop.permute.xlu0 %775
      %779 = vset.pattern.permute.xlu0 0
      %780 = vperm.xlu0 %779, %v772
      %v781 = vpop.permute.xlu0 %780
      %784 = vrot.lane.b32.xlu0 %v739, 127
      %v785 = vpop.permute.xlu0 %784
      %v788 = vsel %vm516, %v769, 0
      %v791 = vsel %vm516, %v770, 0
      %793 = vmatprep.subr.mxu0 0.0
      %794 = vmatpush1.msra.mxu0 %v785
      %795 = vmatprep.subr.mxu0 0.0
      %796 = vmatpush1.msra.mxu0 0.0
      %797 = vmatprep.subr.mxu0 0.0
      %798 = vmatpush1.msra.mxu0 0.0
      %799 = vmatprep.subr.mxu0 0.0
      %800 = vmatpush1.msra.mxu0 0.0
      %801 = vmatprep.subr.mxu0 0.0
      %802 = vmatpush1.msra.mxu0 0.0
      %803 = vmatprep.subr.mxu0 0.0
      %804 = vmatpush1.msra.mxu0 0.0
      %805 = vmatprep.subr.mxu0 0.0
      %806 = vmatpush1.msra.mxu0 0.0
      %807 = vmatprep.subr.mxu0 0.0
      %808 = vmatpush1.msra.mxu0 0.0
      %809 = vmatprep.subr.mxu0 0.0
      %810 = vmatpush1.msra.mxu0 0.0
      %811 = vmatprep.subr.mxu0 0.0
      %812 = vmatpush1.msra.mxu0 0.0
      %813 = vmatprep.subr.mxu0 0.0
      %814 = vmatpush1.msra.mxu0 0.0
      %815 = vmatprep.subr.mxu0 0.0
      %816 = vmatpush1.msra.mxu0 0.0
      %817 = vmatprep.subr.mxu0 0.0
      %818 = vmatpush1.msra.mxu0 0.0
      %819 = vmatprep.subr.mxu0 0.0
      %820 = vmatpush1.msra.mxu0 0.0
      %821 = vmatprep.subr.mxu0 0.0
      %822 = vmatpush1.msra.mxu0 0.0
      %823 = vmatprep.subr.mxu0 0.0
      %824 = vmatpush1.msra.mxu0 0.0
      %825 = vmatprep.subr.mxu0 0.0
      %826 = vmatpush1.msra.mxu0 0.0
      %827 = vmatprep.subr.mxu0 0.0
      %828 = vmatpush1.msra.mxu0 0.0
      %829 = vmatprep.subr.mxu0 0.0
      %830 = vmatpush1.msra.mxu0 0.0
      %831 = vmatprep.subr.mxu0 0.0
      %832 = vmatpush1.msra.mxu0 0.0
      %833 = vmatprep.subr.mxu0 0.0
      %834 = vmatpush1.msra.mxu0 0.0
      %835 = vmatprep.subr.mxu0 0.0
      %836 = vmatpush1.msra.mxu0 0.0
      %837 = vmatprep.subr.mxu0 0.0
      %838 = vmatpush1.msra.mxu0 0.0
      %839 = vmatprep.subr.mxu0 0.0
      %840 = vmatpush1.msra.mxu0 0.0
      %841 = vmatprep.subr.mxu0 0.0
      %842 = vmatpush1.msra.mxu0 0.0
      %843 = vmatprep.subr.mxu0 0.0
      %844 = vmatpush1.msra.mxu0 0.0
      %845 = vmatprep.subr.mxu0 0.0
      %846 = vmatpush1.msra.mxu0 0.0
      %847 = vmatprep.subr.mxu0 0.0
      %848 = vmatpush1.msra.mxu0 0.0
      %849 = vmatprep.subr.mxu0 0.0
      %850 = vmatpush1.msra.mxu0 0.0
      %851 = vmatprep.subr.mxu0 0.0
      %852 = vmatpush1.msra.mxu0 0.0
      %853 = vmatprep.subr.mxu0 0.0
      %854 = vmatpush1.msra.mxu0 0.0
      %855 = vmatprep.subr.mxu0 0.0
      %856 = vmatpush1.msra.mxu0 0.0
      %857 = vmatprep.mubr.f32.mxu0 0.0
      %858 = vmatmul.mubr.f32.gmra.mrb[0].mxu0 %v788
      %v859 = vpop.f32.mrb[0].mxu0
      %v860 = vadd.f32 %v776, %v859
      %v861 = vpop.f32.mrb[0].mxu0
      %862 = vmatprep.mubr.f32.mxu0 0.0
      %863 = vmatmul.mubr.f32.gmra.mrb[0].mxu0 %v791
      %v864 = vpop.f32.mrb[0].mxu0
      %v865 = vadd.f32 %v781, %v864
      %v866 = vpop.f32.mrb[0].mxu0
      %867 = vdwg.mxu0
      %869 = vrot.lane.b32.xlu0 %v768, 126
      %v870 = vpop.permute.xlu0 %869
      %872 = vmatprep.subr.mxu0 0.0
      %873 = vmatpush1.msra.mxu0 %v870
      %874 = vmatprep.subr.mxu0 0.0
      %875 = vmatpush1.msra.mxu0 0.0
      %876 = vmatprep.subr.mxu0 0.0
      %877 = vmatpush1.msra.mxu0 0.0
      %878 = vmatprep.subr.mxu0 0.0
      %879 = vmatpush1.msra.mxu0 0.0
      %880 = vmatprep.subr.mxu0 0.0
      %881 = vmatpush1.msra.mxu0 0.0
      %882 = vmatprep.subr.mxu0 0.0
      %883 = vmatpush1.msra.mxu0 0.0
      %884 = vmatprep.subr.mxu0 0.0
      %885 = vmatpush1.msra.mxu0 0.0
      %886 = vmatprep.subr.mxu0 0.0
      %887 = vmatpush1.msra.mxu0 0.0
      %888 = vmatprep.subr.mxu0 0.0
      %889 = vmatpush1.msra.mxu0 0.0
      %890 = vmatprep.subr.mxu0 0.0
      %891 = vmatpush1.msra.mxu0 0.0
      %892 = vmatprep.subr.mxu0 0.0
      %893 = vmatpush1.msra.mxu0 0.0
      %894 = vmatprep.subr.mxu0 0.0
      %895 = vmatpush1.msra.mxu0 0.0
      %896 = vmatprep.subr.mxu0 0.0
      %897 = vmatpush1.msra.mxu0 0.0
      %898 = vmatprep.subr.mxu0 0.0
      %899 = vmatpush1.msra.mxu0 0.0
      %900 = vmatprep.subr.mxu0 0.0
      %901 = vmatpush1.msra.mxu0 0.0
      %902 = vmatprep.subr.mxu0 0.0
      %903 = vmatpush1.msra.mxu0 0.0
      %904 = vmatprep.subr.mxu0 0.0
      %905 = vmatpush1.msra.mxu0 0.0
      %906 = vmatprep.subr.mxu0 0.0
      %907 = vmatpush1.msra.mxu0 0.0
      %908 = vmatprep.subr.mxu0 0.0
      %909 = vmatpush1.msra.mxu0 0.0
      %910 = vmatprep.subr.mxu0 0.0
      %911 = vmatpush1.msra.mxu0 0.0
      %912 = vmatprep.subr.mxu0 0.0
      %913 = vmatpush1.msra.mxu0 0.0
      %914 = vmatprep.subr.mxu0 0.0
      %915 = vmatpush1.msra.mxu0 0.0
      %916 = vmatprep.subr.mxu0 0.0
      %917 = vmatpush1.msra.mxu0 0.0
      %918 = vmatprep.subr.mxu0 0.0
      %919 = vmatpush1.msra.mxu0 0.0
      %920 = vmatprep.subr.mxu0 0.0
      %921 = vmatpush1.msra.mxu0 0.0
      %922 = vmatprep.subr.mxu0 0.0
      %923 = vmatpush1.msra.mxu0 0.0
      %924 = vmatprep.subr.mxu0 0.0
      %925 = vmatpush1.msra.mxu0 0.0
      %926 = vmatprep.subr.mxu0 0.0
      %927 = vmatpush1.msra.mxu0 0.0
      %928 = vmatprep.subr.mxu0 0.0
      %929 = vmatpush1.msra.mxu0 0.0
      %930 = vmatprep.subr.mxu0 0.0
      %931 = vmatpush1.msra.mxu0 0.0
      %932 = vmatprep.subr.mxu0 0.0
      %933 = vmatpush1.msra.mxu0 0.0
      %934 = vmatprep.subr.mxu0 0.0
      %935 = vmatpush1.msra.mxu0 0.0
      %936 = vmatprep.mubr.f32.mxu0 0.0
      %937 = vmatmul.mubr.f32.gmra.mrb[0].mxu0 %v788
      %v938 = vpop.f32.mrb[0].mxu0
      %v939 = vadd.f32 %v776, %v938
      %v940 = vpop.f32.mrb[0].mxu0
      %941 = vmatprep.mubr.f32.mxu0 0.0
      %942 = vmatmul.mubr.f32.gmra.mrb[0].mxu0 %v791
      %v943 = vpop.f32.mrb[0].mxu0
      %v944 = vadd.f32 %v781, %v943
      %v945 = vpop.f32.mrb[0].mxu0
      %946 = vdwg.mxu0
      %v947 = vld [vmem:[%s8] sm:$0xff]
      %v948 = vld [vmem:[%s8 + $0x8] sm:$0xff]
      %v949 = vld [vmem:[%s9] sm:$0xff]
      %v950 = vld [vmem:[%s9 + $0x8] sm:$0xff]
      %v951 = vld [vmem:[%s10] sm:$0xff]
      %v952 = vld [vmem:[%s10 + $0x8] sm:$0xff]
      %v953 = vsel %vm516, %v860, 0.0
      %954 = vadd.xlane.f32.xlu0 %v953
      %v955 = vpop.xlane.xlu0 %954
      %v956 = vsel %vm516, %v865, 0.0
      %957 = vadd.xlane.f32.xlu0 %v956
      %v958 = vpop.xlane.xlu0 %957
      %v959 = vmul.f32 %v860, %v860
      %v960 = vmul.f32 %v865, %v865
      %v961 = vsel %vm516, %v959, 0.0
      %962 = vadd.xlane.f32.xlu0 %v961
      %v963 = vpop.xlane.xlu0 %962
      %v964 = vsel %vm516, %v960, 0.0
      %965 = vadd.xlane.f32.xlu0 %v964
      %v966 = vpop.xlane.xlu0 %965
      %v967 = vsel %vm516, %v939, 0.0
      %968 = vadd.xlane.f32.xlu0 %v967
      %v969 = vpop.xlane.xlu0 %968
      %v970 = vsel %vm516, %v944, 0.0
      %971 = vadd.xlane.f32.xlu0 %v970
      %v972 = vpop.xlane.xlu0 %971
      %v973 = vmul.f32 %v939, %v939
      %v974 = vmul.f32 %v944, %v944
      %v975 = vsel %vm516, %v973, 0.0
      %976 = vadd.xlane.f32.xlu0 %v975
      %v977 = vpop.xlane.xlu0 %976
      %v978 = vsel %vm516, %v974, 0.0
      %979 = vadd.xlane.f32.xlu0 %v978
      %v980 = vpop.xlane.xlu0 %979
      %v981 = vadd.f32 %v955, %v969
      %v982 = vadd.f32 %v958, %v972
      %v983 = vadd.f32 %v963, %v977
      %v984 = vadd.f32 %v966, %v980
      %v986 = vsel %vm393, %v947, 0
      %v989 = vsel %vm393, %v948, 0
      %991 = vmatprep.subr.mxu0 0.0
      %992 = vmatpush1.msra.mxu0 %v981
      %993 = vmatprep.subr.mxu0 0.0
      %994 = vmatpush1.msra.mxu0 %v982
      %995 = vmatprep.subr.mxu0 0.0
      %996 = vmatpush1.msra.mxu0 0.0
      %997 = vmatprep.subr.mxu0 0.0
      %998 = vmatpush1.msra.mxu0 0.0
      %999 = vmatprep.subr.mxu0 0.0
      %1000 = vmatpush1.msra.mxu0 0.0
      %1001 = vmatprep.subr.mxu0 0.0
      %1002 = vmatpush1.msra.mxu0 0.0
      %1003 = vmatprep.subr.mxu0 0.0
      %1004 = vmatpush1.msra.mxu0 0.0
      %1005 = vmatprep.subr.mxu0 0.0
      %1006 = vmatpush1.msra.mxu0 0.0
      %1007 = vmatprep.subr.mxu0 0.0
      %1008 = vmatpush1.msra.mxu0 0.0
      %1009 = vmatprep.subr.mxu0 0.0
      %1010 = vmatpush1.msra.mxu0 0.0
      %1011 = vmatprep.subr.mxu0 0.0
      %1012 = vmatpush1.msra.mxu0 0.0
      %1013 = vmatprep.subr.mxu0 0.0
      %1014 = vmatpush1.msra.mxu0 0.0
      %1015 = vmatprep.subr.mxu0 0.0
      %1016 = vmatpush1.msra.mxu0 0.0
      %1017 = vmatprep.subr.mxu0 0.0
      %1018 = vmatpush1.msra.mxu0 0.0
      %1019 = vmatprep.subr.mxu0 0.0
      %1020 = vmatpush1.msra.mxu0 0.0
      %1021 = vmatprep.subr.mxu0 0.0
      %1022 = vmatpush1.msra.mxu0 0.0
      %1023 = vmatprep.subr.mxu0 0.0
      %1024 = vmatpush1.msra.mxu0 0.0
      %1025 = vmatprep.subr.mxu0 0.0
      %1026 = vmatpush1.msra.mxu0 0.0
      %1027 = vmatprep.subr.mxu0 0.0
      %1028 = vmatpush1.msra.mxu0 0.0
      %1029 = vmatprep.subr.mxu0 0.0
      %1030 = vmatpush1.msra.mxu0 0.0
      %1031 = vmatprep.subr.mxu0 0.0
      %1032 = vmatpush1.msra.mxu0 0.0
      %1033 = vmatprep.subr.mxu0 0.0
      %1034 = vmatpush1.msra.mxu0 0.0
      %1035 = vmatprep.subr.mxu0 0.0
      %1036 = vmatpush1.msra.mxu0 0.0
      %1037 = vmatprep.subr.mxu0 0.0
      %1038 = vmatpush1.msra.mxu0 0.0
      %1039 = vmatprep.subr.mxu0 0.0
      %1040 = vmatpush1.msra.mxu0 0.0
      %1041 = vmatprep.subr.mxu0 0.0
      %1042 = vmatpush1.msra.mxu0 0.0
      %1043 = vmatprep.subr.mxu0 0.0
      %1044 = vmatpush1.msra.mxu0 0.0
      %1045 = vmatprep.subr.mxu0 0.0
      %1046 = vmatpush1.msra.mxu0 0.0
      %1047 = vmatprep.subr.mxu0 0.0
      %1048 = vmatpush1.msra.mxu0 0.0
      %1049 = vmatprep.subr.mxu0 0.0
      %1050 = vmatpush1.msra.mxu0 0.0
      %1051 = vmatprep.subr.mxu0 0.0
      %1052 = vmatpush1.msra.mxu0 0.0
      %1053 = vmatprep.subr.mxu0 0.0
      %1054 = vmatpush1.msra.mxu0 0.0
      %1055 = vmatprep.mubr.f32.mxu0 0.0
      %1056 = vmatmul.mubr.f32.gmra.mrb[0].mxu0 %v986
      %v1057 = vpop.f32.mrb[0].mxu0
      %v1058 = vadd.f32 0.0, %v1057
      %v1059 = vpop.f32.mrb[0].mxu0
      %1060 = vmatprep.mubr.f32.mxu0 0.0
      %1061 = vmatmul.mubr.f32.gmra.mrb[0].mxu0 %v989
      %v1062 = vpop.f32.mrb[0].mxu0
      %v1063 = vadd.f32 0.0, %v1062
      %v1064 = vpop.f32.mrb[0].mxu0
      %1065 = vdwg.mxu0
      %v1066 = vmul.f32 %v1058, 0.015625
      %v1067 = vmul.f32 %v1063, 0.015625
      %1068 = vmatprep.subr.mxu0 0.0
      %1069 = vmatpush1.msra.mxu0 %v983
      %1070 = vmatprep.subr.mxu0 0.0
      %1071 = vmatpush1.msra.mxu0 %v984
      %1072 = vmatprep.subr.mxu0 0.0
      %1073 = vmatpush1.msra.mxu0 0.0
      %1074 = vmatprep.subr.mxu0 0.0
      %1075 = vmatpush1.msra.mxu0 0.0
      %1076 = vmatprep.subr.mxu0 0.0
      %1077 = vmatpush1.msra.mxu0 0.0
      %1078 = vmatprep.subr.mxu0 0.0
      %1079 = vmatpush1.msra.mxu0 0.0
      %1080 = vmatprep.subr.mxu0 0.0
      %1081 = vmatpush1.msra.mxu0 0.0
      %1082 = vmatprep.subr.mxu0 0.0
      %1083 = vmatpush1.msra.mxu0 0.0
      %1084 = vmatprep.subr.mxu0 0.0
      %1085 = vmatpush1.msra.mxu0 0.0
      %1086 = vmatprep.subr.mxu0 0.0
      %1087 = vmatpush1.msra.mxu0 0.0
      %1088 = vmatprep.subr.mxu0 0.0
      %1089 = vmatpush1.msra.mxu0 0.0
      %1090 = vmatprep.subr.mxu0 0.0
      %1091 = vmatpush1.msra.mxu0 0.0
      %1092 = vmatprep.subr.mxu0 0.0
      %1093 = vmatpush1.msra.mxu0 0.0
      %1094 = vmatprep.subr.mxu0 0.0
      %1095 = vmatpush1.msra.mxu0 0.0
      %1096 = vmatprep.subr.mxu0 0.0
      %1097 = vmatpush1.msra.mxu0 0.0
      %1098 = vmatprep.subr.mxu0 0.0
      %1099 = vmatpush1.msra.mxu0 0.0
      %1100 = vmatprep.subr.mxu0 0.0
      %1101 = vmatpush1.msra.mxu0 0.0
      %1102 = vmatprep.subr.mxu0 0.0
      %1103 = vmatpush1.msra.mxu0 0.0
      %1104 = vmatprep.subr.mxu0 0.0
      %1105 = vmatpush1.msra.mxu0 0.0
      %1106 = vmatprep.subr.mxu0 0.0
      %1107 = vmatpush1.msra.mxu0 0.0
      %1108 = vmatprep.subr.mxu0 0.0
      %1109 = vmatpush1.msra.mxu0 0.0
      %1110 = vmatprep.subr.mxu0 0.0
      %1111 = vmatpush1.msra.mxu0 0.0
      %1112 = vmatprep.subr.mxu0 0.0
      %1113 = vmatpush1.msra.mxu0 0.0
      %1114 = vmatprep.subr.mxu0 0.0
      %1115 = vmatpush1.msra.mxu0 0.0
      %1116 = vmatprep.subr.mxu0 0.0
      %1117 = vmatpush1.msra.mxu0 0.0
      %1118 = vmatprep.subr.mxu0 0.0
      %1119 = vmatpush1.msra.mxu0 0.0
      %1120 = vmatprep.subr.mxu0 0.0
      %1121 = vmatpush1.msra.mxu0 0.0
      %1122 = vmatprep.subr.mxu0 0.0
      %1123 = vmatpush1.msra.mxu0 0.0
      %1124 = vmatprep.subr.mxu0 0.0
      %1125 = vmatpush1.msra.mxu0 0.0
      %1126 = vmatprep.subr.mxu0 0.0
      %1127 = vmatpush1.msra.mxu0 0.0
      %1128 = vmatprep.subr.mxu0 0.0
      %1129 = vmatpush1.msra.mxu0 0.0
      %1130 = vmatprep.subr.mxu0 0.0
      %1131 = vmatpush1.msra.mxu0 0.0
      %1132 = vmatprep.mubr.f32.mxu0 0.0
      %1133 = vmatmul.mubr.f32.gmra.mrb[0].mxu0 %v986
      %v1134 = vpop.f32.mrb[0].mxu0
      %v1135 = vadd.f32 0.0, %v1134
      %v1136 = vpop.f32.mrb[0].mxu0
      %1137 = vmatprep.mubr.f32.mxu0 0.0
      %1138 = vmatmul.mubr.f32.gmra.mrb[0].mxu0 %v989
      %v1139 = vpop.f32.mrb[0].mxu0
      %v1140 = vadd.f32 0.0, %v1139
      %v1141 = vpop.f32.mrb[0].mxu0
      %1142 = vdwg.mxu0
      %v1143 = vmul.f32 %v1135, 0.015625
      %v1144 = vmul.f32 %v1140, 0.015625
      %v1145 = vmul.f32 %v1066, %v1066
      %v1146 = vmul.f32 %v1067, %v1067
      %v1147 = vsub.f32 %v1143, %v1145
      %v1148 = vsub.f32 %v1144, %v1146
      %v1149 = vadd.f32 %v1147, 1e-05
      %v1150 = vadd.f32 %v1148, 1e-05
      %v1151 = vrsqrt.pop %v1149
      %v1152 = vrsqrt.pop %v1150
      %v1153 = vmul.f32 %v1151, %v949
      %v1154 = vmul.f32 %v1152, %v950
      %v1155 = vmul.f32 %v1066, %v1153
      %v1156 = vmul.f32 %v1067, %v1154
      %v1157 = vsub.f32 %v951, %v1155
      %v1158 = vsub.f32 %v952, %v1156
      %1160 = vset.pattern.permute.xlu0 0
      %1161 = vperm.xlu0 %1160, %v1153
      %v1162 = vpop.permute.xlu0 %1161
      %1165 = vset.pattern.permute.xlu0 0
      %1166 = vperm.xlu0 %1165, %v1154
      %v1167 = vpop.permute.xlu0 %1166
      %v1169 = vmul.f32 %v860, %v1162
      %v1170 = vmul.f32 %v865, %v1167
      %1172 = vset.pattern.permute.xlu0 0
      %1173 = vperm.xlu0 %1172, %v1157
      %v1174 = vpop.permute.xlu0 %1173
      %1177 = vset.pattern.permute.xlu0 0
      %1178 = vperm.xlu0 %1177, %v1158
      %v1179 = vpop.permute.xlu0 %1178
      %v1181 = vadd.f32 %v1169, %v1174
      %v1182 = vadd.f32 %v1170, %v1179
      %v1183 = vmul.f32 %v939, %v1162
      %v1184 = vmul.f32 %v944, %v1167
      %v1185 = vadd.f32 %v1183, %v1174
      %v1186 = vadd.f32 %v1184, %v1179
      %v1187 = vxor.u32 %v1182, 2147483648
      %v1188 = vmul.f32 %v1187, 1.442695
      %v1189 = vpow.pop %v1188
      %v1190 = vadd.f32 %v1189, 1.0
      %v1191 = vrcp.pop %v1190
      %v1192 = vmul.f32 1.0, %v1191
      %v1193 = vmul.f32 %v1181, %v1192
      %1194 = vst.msk [vmem:[%s386] sm:$0xff] %vm516, %v1193
      %v1195 = vxor.u32 %v1186, 2147483648
      %v1196 = vmul.f32 %v1195, 1.442695
      %v1197 = vpow.pop %v1196
      %v1198 = vadd.f32 %v1197, 1.0
      %v1199 = vrcp.pop %v1198
      %v1200 = vmul.f32 1.0, %v1199
      %v1201 = vmul.f32 %v1185, %v1200
      %s1202 = scalar_lea.vmem %s386, 8
      %1203 = vst.msk [vmem:[%s1202] sm:$0xff] %vm516, %v1201
      %p1204 = scmp.lt.s32.totalorder %s22, 1
      %s1205 = scalar_select %p1204, %s22, 1
      %s1206 = smul.addr %s1205, 2
      %s1207 = smul.addr %s1206, 8
      %s1208 = scalar_lea.vmem %s11, %s1207
      // Predicated region
      $region65: #{demucs_decoder_forward.6} parent=63 // pred_check
        %p1209 = pneg %p276
      $region66: #{demucs_decoder_forward.6} parent=63 // pred_check_branch
        %1211 = sbr.rel (%p1209) target = $region68
      $region67: #{demucs_decoder_forward.6} parent=63 // pred_region
        _
      $region68: #{demucs_decoder_forward.6} parent=63 // pred_fallthru
        _
    $region64: #{demucs_decoder_forward.6} parent=5 // pred_fallthru
      _
    %p1212 = scmp.le.s32.totalorder 2, %s17
    // Predicated region
    $region69: #{demucs_decoder_forward.6} parent=5 // pred_check
      %p1213 = pneg %p1212
    $region70: #{demucs_decoder_forward.6} parent=5 // pred_check_branch
      %1215 = sbr.rel (%p1213) target = $region72
    $region71: #{demucs_decoder_forward.6} parent=5 // pred_region
      %s1216 = ssub.s32 %s17, 2
      // Predicated region
      $region73: #{demucs_decoder_forward.6} parent=71 // pred_check
        %p1217 = pneg %p282
      $region74: #{demucs_decoder_forward.6} parent=71 // pred_check_branch
        %1219 = sbr.rel (%p1217) target = $region76
      $region75: #{demucs_decoder_forward.6} parent=71 // pred_region
        %p1220 = scmp.lt.s32.totalorder %s23, 1
        %s1221 = scalar_select %p1220, %s23, 1
        %s1222 = smul.addr %s1221, 2
        %s1223 = smul.addr %s1222, 8
        %s1224 = scalar_lea.vmem %s11, %s1223
      $region76: #{demucs_decoder_forward.6} parent=71 // pred_fallthru
        _
    $region72: #{demucs_decoder_forward.6} parent=5 // pred_fallthru
      _
  $region6: #{demucs_decoder_forward.6} parent=0 // loop_footer
    %s21 = sadd.s32 1, %s17
  $region7: #{demucs_decoder_forward.6} parent=0 // loop_footer_branch
    %16 = sbr.rel target = $region3
  $region8: #{demucs_decoder_forward.6} parent=0 // loop_exit
    _

// kernel: demucs_decoder_forward.7
$region0: #{demucs_decoder_forward.7}
  #allocation0 [shape = 'u32[]', space=smem, size = 0x4, offset = 0x4, fixed_abs, tag = 'smem constant byte address 0x4 - core index']
  #allocation1 [shape = 'u32[144,128]{1,0:T(1,128)}', space=vmem, size = 0x12000, scoped, tag = 'internal scratch']
  %s0 = inlined_call_operand.vmem [shape: f32[2,8,18], index: 0, kind: input, shape index: {}]
  %s1 = inlined_call_operand.vmem [shape: f32[2,8,18], index: 1, kind: input, shape index: {}]
  %s2 = inlined_call_operand.vmem [shape: f32[16,8], index: 2, kind: input, shape index: {}]
  %s3 = inlined_call_operand.vmem [shape: f32[4,1], index: 3, kind: input, shape index: {}]
  %s4 = inlined_call_operand.vmem [shape: f32[8,4], index: 4, kind: input, shape index: {}]
  %s5 = inlined_call_operand.vmem [shape: f32[8,1], index: 5, kind: input, shape index: {}]
  %s6 = inlined_call_operand.vmem [shape: f32[4,4], index: 6, kind: input, shape index: {}]
  %s7 = inlined_call_operand.vmem [shape: f32[4,1], index: 7, kind: input, shape index: {}]
  %s8 = inlined_call_operand.vmem [shape: f32[4,1], index: 8, kind: input, shape index: {}]
  %s9 = inlined_call_operand.vmem [shape: f32[8,8], index: 9, kind: input, shape index: {}]
  %s10 = inlined_call_operand.vmem [shape: f32[8,1], index: 10, kind: input, shape index: {}]
  %s11 = inlined_call_operand.vmem [shape: f32[8,1], index: 11, kind: input, shape index: {}]
  %s12 = inlined_call_operand.vmem [shape: f32[2,2,4,16], index: 12, kind: output, shape index: {}]
  %s13 = sld [smem:[#allocation0]]
  $region81: #{demucs_decoder_forward.7} parent=0
    _
  %s15 = ssub.s32 1, %s13
  %s16 = scalar_select 0, %s15, %s13
  loop: start=0, step=1, limit=4
  $region2: #{demucs_decoder_forward.7} parent=0 // loop_pre_header
    _
  $region3: #{demucs_decoder_forward.7} parent=0 // loop_header
    %s18 = sphi 0, %s22
    %p19 = scmp.ge.s32.totalorder %s18, 4
    %s28 = sphi 0, %s30
    %s31 = sphi 0, %s28
    %s32 = sphi 0, %s31
    %s48 = sphi 0, %s32
    %s54 = sphi 0, %s56
    %s57 = sphi 0, %s54
    %s58 = sphi 0, %s57
    %s74 = sphi 0, %s58
    %s78 = sphi 0, %s78
    %s80 = sphi 0, %s78
    %s81 = sphi 0, %s80
    %s95 = sphi 0, %s81
    %s99 = sphi 0, %s99
    %s101 = sphi 0, %s99
    %s102 = sphi 0, %s101
    %s116 = sphi 0, %s102
    %s120 = sphi 0, %s120
    %s122 = sphi 0, %s120
    %s123 = sphi 0, %s122
    %s137 = sphi 0, %s123
    %s141 = sphi 0, %s141
    %s143 = sphi 0, %s141
    %s144 = sphi 0, %s143
    %s158 = sphi 0, %s144
    %s162 = sphi 0, %s162
    %s164 = sphi 0, %s162
    %s165 = sphi 0, %s164
    %s179 = sphi 0, %s165
    %s183 = sphi 0, %s183
    %s185 = sphi 0, %s183
    %s186 = sphi 0, %s185
    %s200 = sphi 0, %s186
    %s204 = sphi 0, %s204
    %s206 = sphi 0, %s204
    %s207 = sphi 0, %s206
    %s221 = sphi 0, %s207
    %s225 = sphi 0, %s225
    %s227 = sphi 0, %s225
    %s228 = sphi 0, %s227
    %s242 = sphi 0, %s228
    %s246 = sphi 0, %s246
    %s248 = sphi 0, %s246
    %s249 = sphi 0, %s248
    %s263 = sphi 0, %s249
    %s267 = sphi 0, %s267
    %s269 = sphi 0, %s267
    %s270 = sphi 0, %s269
    %s284 = sphi 0, %s270
    %s290 = sphi 0, %s292
    %s293 = sphi 0, %s290
    %s294 = sphi 0, %s293
    %s310 = sphi 0, %s294
  $region4: #{demucs_decoder_forward.7} parent=0 // loop_header_branch
    %21 = sbr.rel (%p19) target = $region8
  $region5: #{demucs_decoder_forward.7} parent=0 // loop_body
    %s23 = ssub.s32 %s18, 1
    %s24 = ssub.s32 %s18, 2
    %s25 = sadd.s32 %s18, 1
    %s26 = ssub.s32 %s18, %s25
    %p27 = scmp.eq.s32.totalorder %s26, 0
    %s29 = sadd.s32 %s28, 1
    %s30 = scalar_select %p27, %s28, %s29
    %p33 = pneg %p27
    %p34 = scmp.eq.s32.totalorder %s18, 1
    %p35 = por %p33, %p34
    %p36 = scmp.ne.s32.totalorder %s28, %s31
    %p37 = scmp.eq.s32.totalorder %s18, 0
    %p38 = por %p36, %p37
    %p39 = scmp.ne.s32.totalorder %s28, %s31
    %p40 = scmp.eq.s32.totalorder %s23, 1
    %p41 = por %p39, %p40
    %p42 = scmp.ne.s32.totalorder %s31, %s32
    %p43 = scmp.eq.s32.totalorder %s23, 0
    %p44 = por %p42, %p43
    %p45 = scmp.ne.s32.totalorder %s31, %s32
    %p46 = scmp.eq.s32.totalorder %s24, 1
    %p47 = por %p45, %p46
    %p49 = scmp.ne.s32.totalorder %s32, %s48
    %p50 = scmp.eq.s32.totalorder %s24, 0
    %p51 = por %p49, %p50
    %s52 = ssub.s32 %s18, %s25
    %p53 = scmp.eq.s32.totalorder %s52, 0
    %s55 = sadd.s32 %s54, 1
    %s56 = scalar_select %p53, %s54, %s55
    %p59 = pneg %p53
    %p60 = scmp.eq.s32.totalorder %s18, 1
    %p61 = por %p59, %p60
    %p62 = scmp.ne.s32.totalorder %s54, %s57
    %p63 = scmp.eq.s32.totalorder %s18, 0
    %p64 = por %p62, %p63
    %p65 = scmp.ne.s32.totalorder %s54, %s57
    %p66 = scmp.eq.s32.totalorder %s23, 1
    %p67 = por %p65, %p66
    %p68 = scmp.ne.s32.totalorder %s57, %s58
    %p69 = scmp.eq.s32.totalorder %s23, 0
    %p70 = por %p68, %p69
    %p71 = scmp.ne.s32.totalorder %s57, %s58
    %p72 = scmp.eq.s32.totalorder %s24, 1
    %p73 = por %p71, %p72
    %p75 = scmp.ne.s32.totalorder %s58, %s74
    %p76 = scmp.eq.s32.totalorder %s24, 0
    %p77 = por %p75, %p76
    %s79 = sadd.s32 %s78, 1
    %p82 = scmp.eq.s32.totalorder %s18, 1
    %p83 = scmp.ne.s32.totalorder %s78, %s80
    %p84 = scmp.eq.s32.totalorder %s18, 0
    %p85 = por %p83, %p84
    %p86 = scmp.ne.s32.totalorder %s78, %s80
    %p87 = scmp.eq.s32.totalorder %s23, 1
    %p88 = por %p86, %p87
    %p89 = scmp.ne.s32.totalorder %s80, %s81
    %p90 = scmp.eq.s32.totalorder %s23, 0
    %p91 = por %p89, %p90
    %p92 = scmp.ne.s32.totalorder %s80, %s81
    %p93 = scmp.eq.s32.totalorder %s24, 1
    %p94 = por %p92, %p93
    %p96 = scmp.ne.s32.totalorder %s81, %s95
    %p97 = scmp.eq.s32.totalorder %s24, 0
    %p98 = por %p96, %p97
    %s100 = sadd.s32 %s99, 1
    %p103 = scmp.eq.s32.totalorder %s18, 1
    %p104 = scmp.ne.s32.totalorder %s99, %s101
    %p105 = scmp.eq.s32.totalorder %s18, 0
    %p106 = por %p104, %p105
    %p107 = scmp.ne.s32.totalorder %s99, %s101
    %p108 = scmp.eq.s32.totalorder %s23, 1
    %p109 = por %p107, %p108
    %p110 = scmp.ne.s32.totalorder %s101, %s102
    %p111 = scmp.eq.s32.totalorder %s23, 0
    %p112 = por %p110, %p111
    %p113 = scmp.ne.s32.totalorder %s101, %s102
    %p114 = scmp.eq.s32.totalorder %s24, 1
    %p115 = por %p113, %p114
    %p117 = scmp.ne.s32.totalorder %s102, %s116
    %p118 = scmp.eq.s32.totalorder %s24, 0
    %p119 = por %p117, %p118
    %s121 = sadd.s32 %s120, 1
    %p124 = scmp.eq.s32.totalorder %s18, 1
    %p125 = scmp.ne.s32.totalorder %s120, %s122
    %p126 = scmp.eq.s32.totalorder %s18, 0
    %p127 = por %p125, %p126
    %p128 = scmp.ne.s32.totalorder %s120, %s122
    %p129 = scmp.eq.s32.totalorder %s23, 1
    %p130 = por %p128, %p129
    %p131 = scmp.ne.s32.totalorder %s122, %s123
    %p132 = scmp.eq.s32.totalorder %s23, 0
    %p133 = por %p131, %p132
    %p134 = scmp.ne.s32.totalorder %s122, %s123
    %p135 = scmp.eq.s32.totalorder %s24, 1
    %p136 = por %p134, %p135
    %p138 = scmp.ne.s32.totalorder %s123, %s137
    %p139 = scmp.eq.s32.totalorder %s24, 0
    %p140 = por %p138, %p139
    %s142 = sadd.s32 %s141, 1
    %p145 = scmp.eq.s32.totalorder %s18, 1
    %p146 = scmp.ne.s32.totalorder %s141, %s143
    %p147 = scmp.eq.s32.totalorder %s18, 0
    %p148 = por %p146, %p147
    %p149 = scmp.ne.s32.totalorder %s141, %s143
    %p150 = scmp.eq.s32.totalorder %s23, 1
    %p151 = por %p149, %p150
    %p152 = scmp.ne.s32.totalorder %s143, %s144
    %p153 = scmp.eq.s32.totalorder %s23, 0
    %p154 = por %p152, %p153
    %p155 = scmp.ne.s32.totalorder %s143, %s144
    %p156 = scmp.eq.s32.totalorder %s24, 1
    %p157 = por %p155, %p156
    %p159 = scmp.ne.s32.totalorder %s144, %s158
    %p160 = scmp.eq.s32.totalorder %s24, 0
    %p161 = por %p159, %p160
    %s163 = sadd.s32 %s162, 1
    %p166 = scmp.eq.s32.totalorder %s18, 1
    %p167 = scmp.ne.s32.totalorder %s162, %s164
    %p168 = scmp.eq.s32.totalorder %s18, 0
    %p169 = por %p167, %p168
    %p170 = scmp.ne.s32.totalorder %s162, %s164
    %p171 = scmp.eq.s32.totalorder %s23, 1
    %p172 = por %p170, %p171
    %p173 = scmp.ne.s32.totalorder %s164, %s165
    %p174 = scmp.eq.s32.totalorder %s23, 0
    %p175 = por %p173, %p174
    %p176 = scmp.ne.s32.totalorder %s164, %s165
    %p177 = scmp.eq.s32.totalorder %s24, 1
    %p178 = por %p176, %p177
    %p180 = scmp.ne.s32.totalorder %s165, %s179
    %p181 = scmp.eq.s32.totalorder %s24, 0
    %p182 = por %p180, %p181
    %s184 = sadd.s32 %s183, 1
    %p187 = scmp.eq.s32.totalorder %s18, 1
    %p188 = scmp.ne.s32.totalorder %s183, %s185
    %p189 = scmp.eq.s32.totalorder %s18, 0
    %p190 = por %p188, %p189
    %p191 = scmp.ne.s32.totalorder %s183, %s185
    %p192 = scmp.eq.s32.totalorder %s23, 1
    %p193 = por %p191, %p192
    %p194 = scmp.ne.s32.totalorder %s185, %s186
    %p195 = scmp.eq.s32.totalorder %s23, 0
    %p196 = por %p194, %p195
    %p197 = scmp.ne.s32.totalorder %s185, %s186
    %p198 = scmp.eq.s32.totalorder %s24, 1
    %p199 = por %p197, %p198
    %p201 = scmp.ne.s32.totalorder %s186, %s200
    %p202 = scmp.eq.s32.totalorder %s24, 0
    %p203 = por %p201, %p202
    %s205 = sadd.s32 %s204, 1
    %p208 = scmp.eq.s32.totalorder %s18, 1
    %p209 = scmp.ne.s32.totalorder %s204, %s206
    %p210 = scmp.eq.s32.totalorder %s18, 0
    %p211 = por %p209, %p210
    %p212 = scmp.ne.s32.totalorder %s204, %s206
    %p213 = scmp.eq.s32.totalorder %s23, 1
    %p214 = por %p212, %p213
    %p215 = scmp.ne.s32.totalorder %s206, %s207
    %p216 = scmp.eq.s32.totalorder %s23, 0
    %p217 = por %p215, %p216
    %p218 = scmp.ne.s32.totalorder %s206, %s207
    %p219 = scmp.eq.s32.totalorder %s24, 1
    %p220 = por %p218, %p219
    %p222 = scmp.ne.s32.totalorder %s207, %s221
    %p223 = scmp.eq.s32.totalorder %s24, 0
    %p224 = por %p222, %p223
    %s226 = sadd.s32 %s225, 1
    %p229 = scmp.eq.s32.totalorder %s18, 1
    %p230 = scmp.ne.s32.totalorder %s225, %s227
    %p231 = scmp.eq.s32.totalorder %s18, 0
    %p232 = por %p230, %p231
    %p233 = scmp.ne.s32.totalorder %s225, %s227
    %p234 = scmp.eq.s32.totalorder %s23, 1
    %p235 = por %p233, %p234
    %p236 = scmp.ne.s32.totalorder %s227, %s228
    %p237 = scmp.eq.s32.totalorder %s23, 0
    %p238 = por %p236, %p237
    %p239 = scmp.ne.s32.totalorder %s227, %s228
    %p240 = scmp.eq.s32.totalorder %s24, 1
    %p241 = por %p239, %p240
    %p243 = scmp.ne.s32.totalorder %s228, %s242
    %p244 = scmp.eq.s32.totalorder %s24, 0
    %p245 = por %p243, %p244
    %s247 = sadd.s32 %s246, 1
    %p250 = scmp.eq.s32.totalorder %s18, 1
    %p251 = scmp.ne.s32.totalorder %s246, %s248
    %p252 = scmp.eq.s32.totalorder %s18, 0
    %p253 = por %p251, %p252
    %p254 = scmp.ne.s32.totalorder %s246, %s248
    %p255 = scmp.eq.s32.totalorder %s23, 1
    %p256 = por %p254, %p255
    %p257 = scmp.ne.s32.totalorder %s248, %s249
    %p258 = scmp.eq.s32.totalorder %s23, 0
    %p259 = por %p257, %p258
    %p260 = scmp.ne.s32.totalorder %s248, %s249
    %p261 = scmp.eq.s32.totalorder %s24, 1
    %p262 = por %p260, %p261
    %p264 = scmp.ne.s32.totalorder %s249, %s263
    %p265 = scmp.eq.s32.totalorder %s24, 0
    %p266 = por %p264, %p265
    %s268 = sadd.s32 %s267, 1
    %p271 = scmp.eq.s32.totalorder %s18, 1
    %p272 = scmp.ne.s32.totalorder %s267, %s269
    %p273 = scmp.eq.s32.totalorder %s18, 0
    %p274 = por %p272, %p273
    %p275 = scmp.ne.s32.totalorder %s267, %s269
    %p276 = scmp.eq.s32.totalorder %s23, 1
    %p277 = por %p275, %p276
    %p278 = scmp.ne.s32.totalorder %s269, %s270
    %p279 = scmp.eq.s32.totalorder %s23, 0
    %p280 = por %p278, %p279
    %p281 = scmp.ne.s32.totalorder %s269, %s270
    %p282 = scmp.eq.s32.totalorder %s24, 1
    %p283 = por %p281, %p282
    %p285 = scmp.ne.s32.totalorder %s270, %s284
    %p286 = scmp.eq.s32.totalorder %s24, 0
    %p287 = por %p285, %p286
    %s288 = ssub.s32 %s18, %s25
    %p289 = scmp.eq.s32.totalorder %s288, 0
    %s291 = sadd.s32 %s290, 1
    %s292 = scalar_select %p289, %s290, %s291
    %p295 = pneg %p289
    %p296 = scmp.eq.s32.totalorder %s18, 1
    %p297 = por %p295, %p296
    %p298 = scmp.ne.s32.totalorder %s290, %s293
    %p299 = scmp.eq.s32.totalorder %s18, 0
    %p300 = por %p298, %p299
    %p301 = scmp.ne.s32.totalorder %s290, %s293
    %p302 = scmp.eq.s32.totalorder %s23, 1
    %p303 = por %p301, %p302
    %p304 = scmp.ne.s32.totalorder %s293, %s294
    %p305 = scmp.eq.s32.totalorder %s23, 0
    %p306 = por %p304, %p305
    %p307 = scmp.ne.s32.totalorder %s293, %s294
    %p308 = scmp.eq.s32.totalorder %s24, 1
    %p309 = por %p307, %p308
    %p311 = scmp.ne.s32.totalorder %s294, %s310
    %p312 = scmp.eq.s32.totalorder %s24, 0
    %p313 = por %p311, %p312
    %p314 = scmp.le.s32.totalorder 1, %s18
    %p315 = scmp.lt.s32.totalorder %s18, 3
    %p316 = pnand %p314, %p315
    %p317 = pneg %p316
    // Predicated region
    $region9: #{demucs_decoder_forward.7} parent=5 // pred_check
      _
    $region10: #{demucs_decoder_forward.7} parent=5 // pred_check_branch
      %319 = sbr.rel (%p316) target = $region12
    $region11: #{demucs_decoder_forward.7} parent=5 // pred_region
      %s320 = ssub.s32 %s18, 1
      // Predicated region
      $region13: #{demucs_decoder_forward.7} parent=11 // pred_check
        %p321 = pneg %p91
      $region14: #{demucs_decoder_forward.7} parent=11 // pred_check_branch
        %323 = sbr.rel (%p321) target = $region16
      $region15: #{demucs_decoder_forward.7} parent=11 // pred_region
        _
      $region16: #{demucs_decoder_forward.7} parent=11 // pred_fallthru
        _
      // Predicated region
      $region17: #{demucs_decoder_forward.7} parent=11 // pred_check
        %p324 = pneg %p112
      $region18: #{demucs_decoder_forward.7} parent=11 // pred_check_branch
        %326 = sbr.rel (%p324) target = $region20
      $region19: #{demucs_decoder_forward.7} parent=11 // pred_region
        _
      $region20: #{demucs_decoder_forward.7} parent=11 // pred_fallthru
        _
      // Predicated region
      $region21: #{demucs_decoder_forward.7} parent=11 // pred_check
        %p327 = pneg %p133
      $region22: #{demucs_decoder_forward.7} parent=11 // pred_check_branch
        %329 = sbr.rel (%p327) target = $region24
      $region23: #{demucs_decoder_forward.7} parent=11 // pred_region
        _
      $region24: #{demucs_decoder_forward.7} parent=11 // pred_fallthru
        _
      // Predicated region
      $region25: #{demucs_decoder_forward.7} parent=11 // pred_check
        %p330 = pneg %p154
      $region26: #{demucs_decoder_forward.7} parent=11 // pred_check_branch
        %332 = sbr.rel (%p330) target = $region28
      $region27: #{demucs_decoder_forward.7} parent=11 // pred_region
        _
      $region28: #{demucs_decoder_forward.7} parent=11 // pred_fallthru
        _
      // Predicated region
      $region29: #{demucs_decoder_forward.7} parent=11 // pred_check
        %p333 = pneg %p175
      $region30: #{demucs_decoder_forward.7} parent=11 // pred_check_branch
        %335 = sbr.rel (%p333) target = $region32
      $region31: #{demucs_decoder_forward.7} parent=11 // pred_region
        _
      $region32: #{demucs_decoder_forward.7} parent=11 // pred_fallthru
        _
      // Predicated region
      $region33: #{demucs_decoder_forward.7} parent=11 // pred_check
        %p336 = pneg %p196
      $region34: #{demucs_decoder_forward.7} parent=11 // pred_check_branch
        %338 = sbr.rel (%p336) target = $region36
      $region35: #{demucs_decoder_forward.7} parent=11 // pred_region
        _
      $region36: #{demucs_decoder_forward.7} parent=11 // pred_fallthru
        _
      // Predicated region
      $region37: #{demucs_decoder_forward.7} parent=11 // pred_check
        %p339 = pneg %p217
      $region38: #{demucs_decoder_forward.7} parent=11 // pred_check_branch
        %341 = sbr.rel (%p339) target = $region40
      $region39: #{demucs_decoder_forward.7} parent=11 // pred_region
        _
      $region40: #{demucs_decoder_forward.7} parent=11 // pred_fallthru
        _
      // Predicated region
      $region41: #{demucs_decoder_forward.7} parent=11 // pred_check
        %p342 = pneg %p238
      $region42: #{demucs_decoder_forward.7} parent=11 // pred_check_branch
        %344 = sbr.rel (%p342) target = $region44
      $region43: #{demucs_decoder_forward.7} parent=11 // pred_region
        _
      $region44: #{demucs_decoder_forward.7} parent=11 // pred_fallthru
        _
      // Predicated region
      $region45: #{demucs_decoder_forward.7} parent=11 // pred_check
        %p345 = pneg %p259
      $region46: #{demucs_decoder_forward.7} parent=11 // pred_check_branch
        %347 = sbr.rel (%p345) target = $region48
      $region47: #{demucs_decoder_forward.7} parent=11 // pred_region
        _
      $region48: #{demucs_decoder_forward.7} parent=11 // pred_fallthru
        _
      // Predicated region
      $region49: #{demucs_decoder_forward.7} parent=11 // pred_check
        %p348 = pneg %p280
      $region50: #{demucs_decoder_forward.7} parent=11 // pred_check_branch
        %350 = sbr.rel (%p348) target = $region52
      $region51: #{demucs_decoder_forward.7} parent=11 // pred_region
        _
      $region52: #{demucs_decoder_forward.7} parent=11 // pred_fallthru
        _
    $region12: #{demucs_decoder_forward.7} parent=5 // pred_fallthru
      _
    %p351 = scmp.lt.s32.totalorder %s18, 2
    // Predicated region
    $region53: #{demucs_decoder_forward.7} parent=5 // pred_check
      %p352 = pneg %p351
    $region54: #{demucs_decoder_forward.7} parent=5 // pred_check_branch
      %354 = sbr.rel (%p352) target = $region56
    $region55: #{demucs_decoder_forward.7} parent=5 // pred_region
      // Predicated region
      $region57: #{demucs_decoder_forward.7} parent=55 // pred_check
        %p355 = pneg %p38
      $region58: #{demucs_decoder_forward.7} parent=55 // pred_check_branch
        %357 = sbr.rel (%p355) target = $region60
      $region59: #{demucs_decoder_forward.7} parent=55 // pred_region
        %p358 = scmp.lt.s32.totalorder %s18, 1
        %s359 = scalar_select %p358, %s18, 1
        %s360 = smul.addr %s359, 8
        %s361 = scalar_lea.vmem %s0, %s360
      $region60: #{demucs_decoder_forward.7} parent=55 // pred_fallthru
        _
      // Predicated region
      $region61: #{demucs_decoder_forward.7} parent=55 // pred_check
        %p362 = pneg %p64
      $region62: #{demucs_decoder_forward.7} parent=55 // pred_check_branch
        %364 = sbr.rel (%p362) target = $region64
      $region63: #{demucs_decoder_forward.7} parent=55 // pred_region
        %p365 = scmp.lt.s32.totalorder %s18, 1
        %s366 = scalar_select %p365, %s18, 1
        %s367 = smul.addr %s366, 8
        %s368 = scalar_lea.vmem %s1, %s367
      $region64: #{demucs_decoder_forward.7} parent=55 // pred_fallthru
        _
    $region56: #{demucs_decoder_forward.7} parent=5 // pred_fallthru
      _
    %p369 = scmp.le.s32.totalorder 1, %s18
    %p370 = scmp.lt.s32.totalorder %s18, 3
    %p371 = pnand %p369, %p370
    %p372 = pneg %p371
    // Predicated region
    $region65: #{demucs_decoder_forward.7} parent=5 // pred_check
      _
    $region66: #{demucs_decoder_forward.7} parent=5 // pred_check_branch
      %374 = sbr.rel (%p371) target = $region68
    $region67: #{demucs_decoder_forward.7} parent=5 // pred_region
      %s375 = ssub.s32 %s18, 1
      %p376 = scmp.lt.s32.totalorder %s23, 1
      %s377 = scalar_select %p376, %s23, 1
      %s378 = smul.addr %s377, 8
      %s379 = scalar_lea.vmem %s0, %s378
      %p380 = pneg %p44
      %p381 = pneg %p41
      %p382 = scmp.lt.s32.totalorder %s23, 1
      %s383 = scalar_select %p382, %s23, 1
      %s384 = smul.addr %s383, 8
      %s385 = scalar_lea.vmem %s1, %s384
      %p386 = pneg %p70
      %p387 = pneg %p67
      %p388 = pneg %p91
      %p389 = pneg %p88
      %p390 = pneg %p112
      %p391 = pneg %p109
      %p392 = pneg %p133
      %p393 = pneg %p130
      %p394 = pneg %p154
      %p395 = pneg %p151
      %p396 = pneg %p175
      %p397 = pneg %p172
      %p398 = pneg %p196
      %p399 = pneg %p193
      %p400 = pneg %p217
      %p401 = pneg %p214
      %p402 = pneg %p238
      %p403 = pneg %p235
      %p404 = pneg %p259
      %p405 = pneg %p256
      %p406 = pneg %p280
      %p407 = pneg %p277
      %p408 = pneg %p306
      %p409 = pneg %p303
      %p410 = scmp.lt.s32.totalorder %s23, 1
      %s411 = scalar_select %p410, %s23, 1
      %s412 = smul.addr %s411, 2
      %s413 = smul.addr %s412, 4
      %s414 = scalar_lea.vmem %s12, %s413
      %p415 = scmp.lt.s32.totalorder %s23, 1
      %s416 = scalar_select %p415, %s23, 1
      %s417 = smul.addr %s416, 8
      %s418 = scalar_lea.vmem %s0, %s417
      %p419 = scmp.lt.s32.totalorder %s23, 1
      %s420 = scalar_select %p419, %s23, 1
      %s421 = smul.addr %s420, 8
      %s422 = scalar_lea.vmem %s1, %s421
      %p423 = scmp.lt.s32.totalorder %s23, 1
      %s424 = scalar_select %p423, %s23, 1
      %s425 = smul.addr %s424, 2
      %s426 = smul.addr %s425, 4
      %s427 = scalar_lea.vmem %s12, %s426
      %v428 = vld [vmem:[%s418] sm:$0xff]
      %v429 = vld [vmem:[%s422] sm:$0xff]
      %v430 = vadd.f32 %v428, %v429
      %v431 = vld [vmem:[%s2] sm:$0xff]
      %v432 = vld [vmem:[%s2 + $0x8] sm:$0xff]
      %vm433 = vcmask 64512
      %v435 = vsel %vm433, %v431, 0
      %v438 = vsel %vm433, %v432, 0
      %440 = vmatprep.subr.mxu0 0.0
      %441 = vmatpush1.msra.mxu0 %v430
      %442 = vmatprep.subr.mxu0 0.0
      %443 = vmatpush1.msra.mxu0 0.0
      %444 = vmatprep.subr.mxu0 0.0
      %445 = vmatpush1.msra.mxu0 0.0
      %446 = vmatprep.subr.mxu0 0.0
      %447 = vmatpush1.msra.mxu0 0.0
      %448 = vmatprep.subr.mxu0 0.0
      %449 = vmatpush1.msra.mxu0 0.0
      %450 = vmatprep.subr.mxu0 0.0
      %451 = vmatpush1.msra.mxu0 0.0
      %452 = vmatprep.subr.mxu0 0.0
      %453 = vmatpush1.msra.mxu0 0.0
      %454 = vmatprep.subr.mxu0 0.0
      %455 = vmatpush1.msra.mxu0 0.0
      %456 = vmatprep.subr.mxu0 0.0
      %457 = vmatpush1.msra.mxu0 0.0
      %458 = vmatprep.subr.mxu0 0.0
      %459 = vmatpush1.msra.mxu0 0.0
      %460 = vmatprep.subr.mxu0 0.0
      %461 = vmatpush1.msra.mxu0 0.0
      %462 = vmatprep.subr.mxu0 0.0
      %463 = vmatpush1.msra.mxu0 0.0
      %464 = vmatprep.subr.mxu0 0.0
      %465 = vmatpush1.msra.mxu0 0.0
      %466 = vmatprep.subr.mxu0 0.0
      %467 = vmatpush1.msra.mxu0 0.0
      %468 = vmatprep.subr.mxu0 0.0
      %469 = vmatpush1.msra.mxu0 0.0
      %470 = vmatprep.subr.mxu0 0.0
      %471 = vmatpush1.msra.mxu0 0.0
      %472 = vmatprep.subr.mxu0 0.0
      %473 = vmatpush1.msra.mxu0 0.0
      %474 = vmatprep.subr.mxu0 0.0
      %475 = vmatpush1.msra.mxu0 0.0
      %476 = vmatprep.subr.mxu0 0.0
      %477 = vmatpush1.msra.mxu0 0.0
      %478 = vmatprep.subr.mxu0 0.0
      %479 = vmatpush1.msra.mxu0 0.0
      %480 = vmatprep.subr.mxu0 0.0
      %481 = vmatpush1.msra.mxu0 0.0
      %482 = vmatprep.subr.mxu0 0.0
      %483 = vmatpush1.msra.mxu0 0.0
      %484 = vmatprep.subr.mxu0 0.0
      %485 = vmatpush1.msra.mxu0 0.0
      %486 = vmatprep.subr.mxu0 0.0
      %487 = vmatpush1.msra.mxu0 0.0
      %488 = vmatprep.subr.mxu0 0.0
      %489 = vmatpush1.msra.mxu0 0.0
      %490 = vmatprep.subr.mxu0 0.0
      %491 = vmatpush1.msra.mxu0 0.0
      %492 = vmatprep.subr.mxu0 0.0
      %493 = vmatpush1.msra.mxu0 0.0
      %494 = vmatprep.subr.mxu0 0.0
      %495 = vmatpush1.msra.mxu0 0.0
      %496 = vmatprep.subr.mxu0 0.0
      %497 = vmatpush1.msra.mxu0 0.0
      %498 = vmatprep.subr.mxu0 0.0
      %499 = vmatpush1.msra.mxu0 0.0
      %500 = vmatprep.subr.mxu0 0.0
      %501 = vmatpush1.msra.mxu0 0.0
      %502 = vmatprep.subr.mxu0 0.0
      %503 = vmatpush1.msra.mxu0 0.0
      %504 = vmatprep.mubr.f32.mxu0 0.0
      %505 = vmatmul.mubr.f32.gmra.mrb[0].mxu0 %v435
      %v506 = vpop.f32.mrb[0].mxu0
      %v507 = vadd.f32 0.0, %v506
      %v508 = vpop.f32.mrb[0].mxu0
      %509 = vmatprep.mubr.f32.mxu0 0.0
      %510 = vmatmul.mubr.f32.gmra.mrb[0].mxu0 %v438
      %v511 = vpop.f32.mrb[0].mxu0
      %v512 = vadd.f32 0.0, %v511
      %v513 = vpop.f32.mrb[0].mxu0
      %514 = vdwg.mxu0
      %v515 = vld [vmem:[%s3] sm:$0xf]
      %517 = vrot.lane.b32.xlu0 %v512, 1
      %v518 = vpop.permute.xlu0 %517
      %v520 = vadd.f32 %v507, %v518
      %522 = vset.pattern.permute.xlu0 0
      %523 = vperm.xlu0 %522, %v515
      %v524 = vpop.permute.xlu0 %523
      %v526 = vrot.slane %v524, 4
      %v528 = vadd.f32 %v520, %v526
      %v529 = vadd.f32 %v520, %v524
      %v530 = vld [vmem:[%s6] sm:$0xf]
      %v531 = vld [vmem:[%s7] sm:$0xf]
      %v532 = vld [vmem:[%s8] sm:$0xf]
      %534 = vrot.lane.b32.xlu0 %v528, 127
      %v535 = vpop.permute.xlu0 %534
      %vm537 = vcmask 130052
      %v538 = vsel %vm537, %v535, 0.0
      %539 = vadd.xlane.f32.xlu0 %v538
      %v540 = vpop.xlane.xlu0 %539
      %v541 = vmul.f32 %v528, %v528
      %543 = vrot.lane.b32.xlu0 %v541, 127
      %v544 = vpop.permute.xlu0 %543
      %v546 = vsel %vm537, %v544, 0.0
      %547 = vadd.xlane.f32.xlu0 %v546
      %v548 = vpop.xlane.xlu0 %547
      %550 = vrot.lane.b32.xlu0 %v529, 126
      %v551 = vpop.permute.xlu0 %550
      %vm553 = vcmask 125952
      %v554 = vsel %vm553, %v551, 0.0
      %555 = vadd.xlane.f32.xlu0 %v554
      %v556 = vpop.xlane.xlu0 %555
      %v557 = vmul.f32 %v529, %v529
      %559 = vrot.lane.b32.xlu0 %v557, 126
      %v560 = vpop.permute.xlu0 %559
      %v562 = vsel %vm553, %v560, 0.0
      %563 = vadd.xlane.f32.xlu0 %v562
      %v564 = vpop.xlane.xlu0 %563
      %v566 = vrot.slane %v556, 4
      %v568 = vadd.f32 %v540, %v566
      %v570 = vrot.slane %v564, 4
      %v572 = vadd.f32 %v548, %v570
      %v574 = vrot.slane %v568, 4
      %vm575 = vcmask 31744
      %v577 = vsel %vm575, %v530, 0
      %vm579 = vcmask 1043456
      %v580 = vsel %vm579, %v574, 0
      %582 = vmatprep.subr.mxu0 0.0
      %583 = vmatpush1.msra.mxu0 %v580
      %584 = vmatprep.subr.mxu0 0.0
      %585 = vmatpush1.msra.mxu0 0.0
      %586 = vmatprep.subr.mxu0 0.0
      %587 = vmatpush1.msra.mxu0 0.0
      %588 = vmatprep.subr.mxu0 0.0
      %589 = vmatpush1.msra.mxu0 0.0
      %590 = vmatprep.subr.mxu0 0.0
      %591 = vmatpush1.msra.mxu0 0.0
      %592 = vmatprep.subr.mxu0 0.0
      %593 = vmatpush1.msra.mxu0 0.0
      %594 = vmatprep.subr.mxu0 0.0
      %595 = vmatpush1.msra.mxu0 0.0
      %596 = vmatprep.subr.mxu0 0.0
      %597 = vmatpush1.msra.mxu0 0.0
      %598 = vmatprep.subr.mxu0 0.0
      %599 = vmatpush1.msra.mxu0 0.0
      %600 = vmatprep.subr.mxu0 0.0
      %601 = vmatpush1.msra.mxu0 0.0
      %602 = vmatprep.subr.mxu0 0.0
      %603 = vmatpush1.msra.mxu0 0.0
      %604 = vmatprep.subr.mxu0 0.0
      %605 = vmatpush1.msra.mxu0 0.0
      %606 = vmatprep.subr.mxu0 0.0
      %607 = vmatpush1.msra.mxu0 0.0
      %608 = vmatprep.subr.mxu0 0.0
      %609 = vmatpush1.msra.mxu0 0.0
      %610 = vmatprep.subr.mxu0 0.0
      %611 = vmatpush1.msra.mxu0 0.0
      %612 = vmatprep.subr.mxu0 0.0
      %613 = vmatpush1.msra.mxu0 0.0
      %614 = vmatprep.subr.mxu0 0.0
      %615 = vmatpush1.msra.mxu0 0.0
      %616 = vmatprep.subr.mxu0 0.0
      %617 = vmatpush1.msra.mxu0 0.0
      %618 = vmatprep.subr.mxu0 0.0
      %619 = vmatpush1.msra.mxu0 0.0
      %620 = vmatprep.subr.mxu0 0.0
      %621 = vmatpush1.msra.mxu0 0.0
      %622 = vmatprep.subr.mxu0 0.0
      %623 = vmatpush1.msra.mxu0 0.0
      %624 = vmatprep.subr.mxu0 0.0
      %625 = vmatpush1.msra.mxu0 0.0
      %626 = vmatprep.subr.mxu0 0.0
      %627 = vmatpush1.msra.mxu0 0.0
      %628 = vmatprep.subr.mxu0 0.0
      %629 = vmatpush1.msra.mxu0 0.0
      %630 = vmatprep.subr.mxu0 0.0
      %631 = vmatpush1.msra.mxu0 0.0
      %632 = vmatprep.subr.mxu0 0.0
      %633 = vmatpush1.msra.mxu0 0.0
      %634 = vmatprep.subr.mxu0 0.0
      %635 = vmatpush1.msra.mxu0 0.0
      %636 = vmatprep.subr.mxu0 0.0
      %637 = vmatpush1.msra.mxu0 0.0
      %638 = vmatprep.subr.mxu0 0.0
      %639 = vmatpush1.msra.mxu0 0.0
      %640 = vmatprep.subr.mxu0 0.0
      %641 = vmatpush1.msra.mxu0 0.0
      %642 = vmatprep.subr.mxu0 0.0
      %643 = vmatpush1.msra.mxu0 0.0
      %644 = vmatprep.subr.mxu0 0.0
      %645 = vmatpush1.msra.mxu0 0.0
      %646 = vmatprep.mubr.f32.mxu0 0.0
      %647 = vmatmul.mubr.f32.gmra.mrb[0].mxu0 %v577
      %v648 = vpop.f32.mrb[0].mxu0
      %v649 = vadd.f32 0.0, %v648
      %v650 = vpop.f32.mrb[0].mxu0
      %651 = vdwg.mxu0
      %v652 = vmul.f32 %v649, 0.03125
      %v654 = vrot.slane %v572, 4
      %v655 = vsel %vm579, %v654, 0
      %657 = vmatprep.subr.mxu0 0.0
      %658 = vmatpush1.msra.mxu0 %v655
      %659 = vmatprep.subr.mxu0 0.0
      %660 = vmatpush1.msra.mxu0 0.0
      %661 = vmatprep.subr.mxu0 0.0
      %662 = vmatpush1.msra.mxu0 0.0
      %663 = vmatprep.subr.mxu0 0.0
      %664 = vmatpush1.msra.mxu0 0.0
      %665 = vmatprep.subr.mxu0 0.0
      %666 = vmatpush1.msra.mxu0 0.0
      %667 = vmatprep.subr.mxu0 0.0
      %668 = vmatpush1.msra.mxu0 0.0
      %669 = vmatprep.subr.mxu0 0.0
      %670 = vmatpush1.msra.mxu0 0.0
      %671 = vmatprep.subr.mxu0 0.0
      %672 = vmatpush1.msra.mxu0 0.0
      %673 = vmatprep.subr.mxu0 0.0
      %674 = vmatpush1.msra.mxu0 0.0
      %675 = vmatprep.subr.mxu0 0.0
      %676 = vmatpush1.msra.mxu0 0.0
      %677 = vmatprep.subr.mxu0 0.0
      %678 = vmatpush1.msra.mxu0 0.0
      %679 = vmatprep.subr.mxu0 0.0
      %680 = vmatpush1.msra.mxu0 0.0
      %681 = vmatprep.subr.mxu0 0.0
      %682 = vmatpush1.msra.mxu0 0.0
      %683 = vmatprep.subr.mxu0 0.0
      %684 = vmatpush1.msra.mxu0 0.0
      %685 = vmatprep.subr.mxu0 0.0
      %686 = vmatpush1.msra.mxu0 0.0
      %687 = vmatprep.subr.mxu0 0.0
      %688 = vmatpush1.msra.mxu0 0.0
      %689 = vmatprep.subr.mxu0 0.0
      %690 = vmatpush1.msra.mxu0 0.0
      %691 = vmatprep.subr.mxu0 0.0
      %692 = vmatpush1.msra.mxu0 0.0
      %693 = vmatprep.subr.mxu0 0.0
      %694 = vmatpush1.msra.mxu0 0.0
      %695 = vmatprep.subr.mxu0 0.0
      %696 = vmatpush1.msra.mxu0 0.0
      %697 = vmatprep.subr.mxu0 0.0
      %698 = vmatpush1.msra.mxu0 0.0
      %699 = vmatprep.subr.mxu0 0.0
      %700 = vmatpush1.msra.mxu0 0.0
      %701 = vmatprep.subr.mxu0 0.0
      %702 = vmatpush1.msra.mxu0 0.0
      %703 = vmatprep.subr.mxu0 0.0
      %704 = vmatpush1.msra.mxu0 0.0
      %705 = vmatprep.subr.mxu0 0.0
      %706 = vmatpush1.msra.mxu0 0.0
      %707 = vmatprep.subr.mxu0 0.0
      %708 = vmatpush1.msra.mxu0 0.0
      %709 = vmatprep.subr.mxu0 0.0
      %710 = vmatpush1.msra.mxu0 0.0
      %711 = vmatprep.subr.mxu0 0.0
      %712 = vmatpush1.msra.mxu0 0.0
      %713 = vmatprep.subr.mxu0 0.0
      %714 = vmatpush1.msra.mxu0 0.0
      %715 = vmatprep.subr.mxu0 0.0
      %716 = vmatpush1.msra.mxu0 0.0
      %717 = vmatprep.subr.mxu0 0.0
      %718 = vmatpush1.msra.mxu0 0.0
      %719 = vmatprep.subr.mxu0 0.0
      %720 = vmatpush1.msra.mxu0 0.0
      %721 = vmatprep.mubr.f32.mxu0 0.0
      %722 = vmatmul.mubr.f32.gmra.mrb[0].mxu0 %v577
      %v723 = vpop.f32.mrb[0].mxu0
      %v724 = vadd.f32 0.0, %v723
      %v725 = vpop.f32.mrb[0].mxu0
      %726 = vdwg.mxu0
      %v727 = vmul.f32 %v724, 0.03125
      %v728 = vmul.f32 %v652, %v652
      %v729 = vsub.f32 %v727, %v728
      %v730 = vadd.f32 %v729, 1e-05
      %v731 = vrsqrt.pop %v730
      %v732 = vmul.f32 %v731, %v531
      %v733 = vmul.f32 %v652, %v732
      %v734 = vsub.f32 %v532, %v733
      %736 = vset.pattern.permute.xlu0 0
      %737 = vperm.xlu0 %736, %v732
      %v738 = vpop.permute.xlu0 %737
      %v740 = vrot.slane %v738, 4
      %v742 = vmul.f32 %v528, %v740
      %744 = vset.pattern.permute.xlu0 0
      %745 = vperm.xlu0 %744, %v734
      %v746 = vpop.permute.xlu0 %745
      %v748 = vrot.slane %v746, 4
      %v750 = vadd.f32 %v742, %v748
      %v751 = vmul.f32 %v529, %v738
      %v752 = vadd.f32 %v751, %v746
      %v753 = vmul.f32 %v750, 0.5
      %v754 = vmul.f32 %v750, 0.70710677
      %vm755 = vcmp.ge.f32.partialorder %v754, 0.0
      %v756 = vsel %vm755, 1.0, -1.0
      %v757 = vand.u32 2147483647, %v754
      %v758 = vmul.f32 %v757, 0.3275911
      %v759 = vadd.f32 %v758, 1.0
      %v760 = vrcp.pop %v759
      %v761 = vmul.f32 %v759, %v760
      %v762 = vsub.f32 2.0, %v761
      %v763 = vmul.f32 %v760, %v762
      %v764 = vmul.f32 %v763, 1.0614054
      %v765 = vadd.f32 %v764, -1.4531521
      %v766 = vmul.f32 %v765, %v763
      %v767 = vadd.f32 %v766, 1.4214138
      %v768 = vmul.f32 %v767, %v763
      %v769 = vadd.f32 %v768, -0.28449672
      %v770 = vmul.f32 %v769, %v763
      %v771 = vadd.f32 %v770, 0.2548296
      %v772 = vmul.f32 %v771, %v763
      %v773 = vsub.f32 0.0, %v757
      %v774 = vmul.f32 %v773, %v757
      %v775 = vmul.f32 %v774, 1.442695
      %v776 = vpow.pop %v775
      %v777 = vmul.f32 %v772, %v776
      %v778 = vsub.f32 1.0, %v777
      %v779 = vmul.f32 %v756, %v778
      %v780 = vadd.f32 %v779, 1.0
      %v781 = vmul.f32 %v753, %v780
      %v782 = vmul.f32 %v752, 0.5
      %v783 = vmul.f32 %v752, 0.70710677
      %vm784 = vcmp.ge.f32.partialorder %v783, 0.0
      %v785 = vsel %vm784, 1.0, -1.0
      %v786 = vand.u32 2147483647, %v783
      %v787 = vmul.f32 %v786, 0.3275911
      %v788 = vadd.f32 %v787, 1.0
      %v789 = vrcp.pop %v788
      %v790 = vmul.f32 %v788, %v789
      %v791 = vsub.f32 2.0, %v790
      %v792 = vmul.f32 %v789, %v791
      %v793 = vmul.f32 %v792, 1.0614054
      %v794 = vadd.f32 %v793, -1.4531521
      %v795 = vmul.f32 %v794, %v792
      %v796 = vadd.f32 %v795, 1.4214138
      %v797 = vmul.f32 %v796, %v792
      %v798 = vadd.f32 %v797, -0.28449672
      %v799 = vmul.f32 %v798, %v792
      %v800 = vadd.f32 %v799, 0.2548296
      %v801 = vmul.f32 %v800, %v792
      %v802 = vsub.f32 0.0, %v786
      %v803 = vmul.f32 %v802, %v786
      %v804 = vmul.f32 %v803, 1.442695
      %v805 = vpow.pop %v804
      %v806 = vmul.f32 %v801, %v805
      %v807 = vsub.f32 1.0, %v806
      %v808 = vmul.f32 %v785, %v807
      %v809 = vadd.f32 %v808, 1.0
      %v810 = vmul.f32 %v782, %v809
      %v811 = vld [vmem:[%s4] sm:$0xff]
      %v812 = vld [vmem:[%s5] sm:$0xff]
      %814 = vset.pattern.permute.xlu0 0
      %815 = vperm.xlu0 %814, %v812
      %v816 = vpop.permute.xlu0 %815
      %v819 = vrot.slane %v781, 4
      %820 = vrot.lane.b32.xlu0 %v819, 127
      %v821 = vpop.permute.xlu0 %820
      %v823 = vsel %vm575, %v811, 0
      %v825 = vsel %vm579, %v821, 0
      %827 = vmatprep.subr.mxu0 0.0
      %828 = vmatpush1.msra.mxu0 %v825
      %829 = vmatprep.subr.mxu0 0.0
      %830 = vmatpush1.msra.mxu0 0.0
      %831 = vmatprep.subr.mxu0 0.0
      %832 = vmatpush1.msra.mxu0 0.0
      %833 = vmatprep.subr.mxu0 0.0
      %834 = vmatpush1.msra.mxu0 0.0
      %835 = vmatprep.subr.mxu0 0.0
      %836 = vmatpush1.msra.mxu0 0.0
      %837 = vmatprep.subr.mxu0 0.0
      %838 = vmatpush1.msra.mxu0 0.0
      %839 = vmatprep.subr.mxu0 0.0
      %840 = vmatpush1.msra.mxu0 0.0
      %841 = vmatprep.subr.mxu0 0.0
      %842 = vmatpush1.msra.mxu0 0.0
      %843 = vmatprep.subr.mxu0 0.0
      %844 = vmatpush1.msra.mxu0 0.0
      %845 = vmatprep.subr.mxu0 0.0
      %846 = vmatpush1.msra.mxu0 0.0
      %847 = vmatprep.subr.mxu0 0.0
      %848 = vmatpush1.msra.mxu0 0.0
      %849 = vmatprep.subr.mxu0 0.0
      %850 = vmatpush1.msra.mxu0 0.0
      %851 = vmatprep.subr.mxu0 0.0
      %852 = vmatpush1.msra.mxu0 0.0
      %853 = vmatprep.subr.mxu0 0.0
      %854 = vmatpush1.msra.mxu0 0.0
      %855 = vmatprep.subr.mxu0 0.0
      %856 = vmatpush1.msra.mxu0 0.0
      %857 = vmatprep.subr.mxu0 0.0
      %858 = vmatpush1.msra.mxu0 0.0
      %859 = vmatprep.subr.mxu0 0.0
      %860 = vmatpush1.msra.mxu0 0.0
      %861 = vmatprep.subr.mxu0 0.0
      %862 = vmatpush1.msra.mxu0 0.0
      %863 = vmatprep.subr.mxu0 0.0
      %864 = vmatpush1.msra.mxu0 0.0
      %865 = vmatprep.subr.mxu0 0.0
      %866 = vmatpush1.msra.mxu0 0.0
      %867 = vmatprep.subr.mxu0 0.0
      %868 = vmatpush1.msra.mxu0 0.0
      %869 = vmatprep.subr.mxu0 0.0
      %870 = vmatpush1.msra.mxu0 0.0
      %871 = vmatprep.subr.mxu0 0.0
      %872 = vmatpush1.msra.mxu0 0.0
      %873 = vmatprep.subr.mxu0 0.0
      %874 = vmatpush1.msra.mxu0 0.0
      %875 = vmatprep.subr.mxu0 0.0
      %876 = vmatpush1.msra.mxu0 0.0
      %877 = vmatprep.subr.mxu0 0.0
      %878 = vmatpush1.msra.mxu0 0.0
      %879 = vmatprep.subr.mxu0 0.0
      %880 = vmatpush1.msra.mxu0 0.0
      %881 = vmatprep.subr.mxu0 0.0
      %882 = vmatpush1.msra.mxu0 0.0
      %883 = vmatprep.subr.mxu0 0.0
      %884 = vmatpush1.msra.mxu0 0.0
      %885 = vmatprep.subr.mxu0 0.0
      %886 = vmatpush1.msra.mxu0 0.0
      %887 = vmatprep.subr.mxu0 0.0
      %888 = vmatpush1.msra.mxu0 0.0
      %889 = vmatprep.subr.mxu0 0.0
      %890 = vmatpush1.msra.mxu0 0.0
      %891 = vmatprep.mubr.f32.mxu0 0.0
      %892 = vmatmul.mubr.f32.gmra.mrb[0].mxu0 %v823
      %v893 = vpop.f32.mrb[0].mxu0
      %v894 = vadd.f32 %v816, %v893
      %v895 = vpop.f32.mrb[0].mxu0
      %896 = vdwg.mxu0
      %898 = vrot.lane.b32.xlu0 %v810, 126
      %v899 = vpop.permute.xlu0 %898
      %v900 = vsel %vm579, %v899, 0
      %902 = vmatprep.subr.mxu0 0.0
      %903 = vmatpush1.msra.mxu0 %v900
      %904 = vmatprep.subr.mxu0 0.0
      %905 = vmatpush1.msra.mxu0 0.0
      %906 = vmatprep.subr.mxu0 0.0
      %907 = vmatpush1.msra.mxu0 0.0
      %908 = vmatprep.subr.mxu0 0.0
      %909 = vmatpush1.msra.mxu0 0.0
      %910 = vmatprep.subr.mxu0 0.0
      %911 = vmatpush1.msra.mxu0 0.0
      %912 = vmatprep.subr.mxu0 0.0
      %913 = vmatpush1.msra.mxu0 0.0
      %914 = vmatprep.subr.mxu0 0.0
      %915 = vmatpush1.msra.mxu0 0.0
      %916 = vmatprep.subr.mxu0 0.0
      %917 = vmatpush1.msra.mxu0 0.0
      %918 = vmatprep.subr.mxu0 0.0
      %919 = vmatpush1.msra.mxu0 0.0
      %920 = vmatprep.subr.mxu0 0.0
      %921 = vmatpush1.msra.mxu0 0.0
      %922 = vmatprep.subr.mxu0 0.0
      %923 = vmatpush1.msra.mxu0 0.0
      %924 = vmatprep.subr.mxu0 0.0
      %925 = vmatpush1.msra.mxu0 0.0
      %926 = vmatprep.subr.mxu0 0.0
      %927 = vmatpush1.msra.mxu0 0.0
      %928 = vmatprep.subr.mxu0 0.0
      %929 = vmatpush1.msra.mxu0 0.0
      %930 = vmatprep.subr.mxu0 0.0
      %931 = vmatpush1.msra.mxu0 0.0
      %932 = vmatprep.subr.mxu0 0.0
      %933 = vmatpush1.msra.mxu0 0.0
      %934 = vmatprep.subr.mxu0 0.0
      %935 = vmatpush1.msra.mxu0 0.0
      %936 = vmatprep.subr.mxu0 0.0
      %937 = vmatpush1.msra.mxu0 0.0
      %938 = vmatprep.subr.mxu0 0.0
      %939 = vmatpush1.msra.mxu0 0.0
      %940 = vmatprep.subr.mxu0 0.0
      %941 = vmatpush1.msra.mxu0 0.0
      %942 = vmatprep.subr.mxu0 0.0
      %943 = vmatpush1.msra.mxu0 0.0
      %944 = vmatprep.subr.mxu0 0.0
      %945 = vmatpush1.msra.mxu0 0.0
      %946 = vmatprep.subr.mxu0 0.0
      %947 = vmatpush1.msra.mxu0 0.0
      %948 = vmatprep.subr.mxu0 0.0
      %949 = vmatpush1.msra.mxu0 0.0
      %950 = vmatprep.subr.mxu0 0.0
      %951 = vmatpush1.msra.mxu0 0.0
      %952 = vmatprep.subr.mxu0 0.0
      %953 = vmatpush1.msra.mxu0 0.0
      %954 = vmatprep.subr.mxu0 0.0
      %955 = vmatpush1.msra.mxu0 0.0
      %956 = vmatprep.subr.mxu0 0.0
      %957 = vmatpush1.msra.mxu0 0.0
      %958 = vmatprep.subr.mxu0 0.0
      %959 = vmatpush1.msra.mxu0 0.0
      %960 = vmatprep.subr.mxu0 0.0
      %961 = vmatpush1.msra.mxu0 0.0
      %962 = vmatprep.subr.mxu0 0.0
      %963 = vmatpush1.msra.mxu0 0.0
      %964 = vmatprep.subr.mxu0 0.0
      %965 = vmatpush1.msra.mxu0 0.0
      %966 = vmatprep.mubr.f32.mxu0 0.0
      %967 = vmatmul.mubr.f32.gmra.mrb[0].mxu0 %v823
      %v968 = vpop.f32.mrb[0].mxu0
      %v969 = vadd.f32 %v816, %v968
      %v970 = vpop.f32.mrb[0].mxu0
      %971 = vdwg.mxu0
      %v972 = vld [vmem:[%s9] sm:$0xff]
      %v973 = vld [vmem:[%s10] sm:$0xff]
      %v974 = vld [vmem:[%s11] sm:$0xff]
      %vm975 = vcmask 130048
      %v976 = vsel %vm975, %v894, 0.0
      %977 = vadd.xlane.f32.xlu0 %v976
      %v978 = vpop.xlane.xlu0 %977
      %v979 = vmul.f32 %v894, %v894
      %v980 = vsel %vm975, %v979, 0.0
      %981 = vadd.xlane.f32.xlu0 %v980
      %v982 = vpop.xlane.xlu0 %981
      %v983 = vsel %vm975, %v969, 0.0
      %984 = vadd.xlane.f32.xlu0 %v983
      %v985 = vpop.xlane.xlu0 %984
      %v986 = vmul.f32 %v969, %v969
      %v987 = vsel %vm975, %v986, 0.0
      %988 = vadd.xlane.f32.xlu0 %v987
      %v989 = vpop.xlane.xlu0 %988
      %v990 = vadd.f32 %v978, %v985
      %v991 = vadd.f32 %v982, %v989
      %v993 = vsel %vm433, %v972, 0
      %995 = vmatprep.subr.mxu0 0.0
      %996 = vmatpush1.msra.mxu0 %v990
      %997 = vmatprep.subr.mxu0 0.0
      %998 = vmatpush1.msra.mxu0 0.0
      %999 = vmatprep.subr.mxu0 0.0
      %1000 = vmatpush1.msra.mxu0 0.0
      %1001 = vmatprep.subr.mxu0 0.0
      %1002 = vmatpush1.msra.mxu0 0.0
      %1003 = vmatprep.subr.mxu0 0.0
      %1004 = vmatpush1.msra.mxu0 0.0
      %1005 = vmatprep.subr.mxu0 0.0
      %1006 = vmatpush1.msra.mxu0 0.0
      %1007 = vmatprep.subr.mxu0 0.0
      %1008 = vmatpush1.msra.mxu0 0.0
      %1009 = vmatprep.subr.mxu0 0.0
      %1010 = vmatpush1.msra.mxu0 0.0
      %1011 = vmatprep.subr.mxu0 0.0
      %1012 = vmatpush1.msra.mxu0 0.0
      %1013 = vmatprep.subr.mxu0 0.0
      %1014 = vmatpush1.msra.mxu0 0.0
      %1015 = vmatprep.subr.mxu0 0.0
      %1016 = vmatpush1.msra.mxu0 0.0
      %1017 = vmatprep.subr.mxu0 0.0
      %1018 = vmatpush1.msra.mxu0 0.0
      %1019 = vmatprep.subr.mxu0 0.0
      %1020 = vmatpush1.msra.mxu0 0.0
      %1021 = vmatprep.subr.mxu0 0.0
      %1022 = vmatpush1.msra.mxu0 0.0
      %1023 = vmatprep.subr.mxu0 0.0
      %1024 = vmatpush1.msra.mxu0 0.0
      %1025 = vmatprep.subr.mxu0 0.0
      %1026 = vmatpush1.msra.mxu0 0.0
      %1027 = vmatprep.subr.mxu0 0.0
      %1028 = vmatpush1.msra.mxu0 0.0
      %1029 = vmatprep.subr.mxu0 0.0
      %1030 = vmatpush1.msra.mxu0 0.0
      %1031 = vmatprep.subr.mxu0 0.0
      %1032 = vmatpush1.msra.mxu0 0.0
      %1033 = vmatprep.subr.mxu0 0.0
      %1034 = vmatpush1.msra.mxu0 0.0
      %1035 = vmatprep.subr.mxu0 0.0
      %1036 = vmatpush1.msra.mxu0 0.0
      %1037 = vmatprep.subr.mxu0 0.0
      %1038 = vmatpush1.msra.mxu0 0.0
      %1039 = vmatprep.subr.mxu0 0.0
      %1040 = vmatpush1.msra.mxu0 0.0
      %1041 = vmatprep.subr.mxu0 0.0
      %1042 = vmatpush1.msra.mxu0 0.0
      %1043 = vmatprep.subr.mxu0 0.0
      %1044 = vmatpush1.msra.mxu0 0.0
      %1045 = vmatprep.subr.mxu0 0.0
      %1046 = vmatpush1.msra.mxu0 0.0
      %1047 = vmatprep.subr.mxu0 0.0
      %1048 = vmatpush1.msra.mxu0 0.0
      %1049 = vmatprep.subr.mxu0 0.0
      %1050 = vmatpush1.msra.mxu0 0.0
      %1051 = vmatprep.subr.mxu0 0.0
      %1052 = vmatpush1.msra.mxu0 0.0
      %1053 = vmatprep.subr.mxu0 0.0
      %1054 = vmatpush1.msra.mxu0 0.0
      %1055 = vmatprep.subr.mxu0 0.0
      %1056 = vmatpush1.msra.mxu0 0.0
      %1057 = vmatprep.subr.mxu0 0.0
      %1058 = vmatpush1.msra.mxu0 0.0
      %1059 = vmatprep.mubr.f32.mxu0 0.0
      %1060 = vmatmul.mubr.f32.gmra.mrb[0].mxu0 %v993
      %v1061 = vpop.f32.mrb[0].mxu0
      %v1062 = vadd.f32 0.0, %v1061
      %v1063 = vpop.f32.mrb[0].mxu0
      %1064 = vdwg.mxu0
      %v1065 = vmul.f32 %v1062, 0.015625
      %1066 = vmatprep.subr.mxu0 0.0
      %1067 = vmatpush1.msra.mxu0 %v991
      %1068 = vmatprep.subr.mxu0 0.0
      %1069 = vmatpush1.msra.mxu0 0.0
      %1070 = vmatprep.subr.mxu0 0.0
      %1071 = vmatpush1.msra.mxu0 0.0
      %1072 = vmatprep.subr.mxu0 0.0
      %1073 = vmatpush1.msra.mxu0 0.0
      %1074 = vmatprep.subr.mxu0 0.0
      %1075 = vmatpush1.msra.mxu0 0.0
      %1076 = vmatprep.subr.mxu0 0.0
      %1077 = vmatpush1.msra.mxu0 0.0
      %1078 = vmatprep.subr.mxu0 0.0
      %1079 = vmatpush1.msra.mxu0 0.0
      %1080 = vmatprep.subr.mxu0 0.0
      %1081 = vmatpush1.msra.mxu0 0.0
      %1082 = vmatprep.subr.mxu0 0.0
      %1083 = vmatpush1.msra.mxu0 0.0
      %1084 = vmatprep.subr.mxu0 0.0
      %1085 = vmatpush1.msra.mxu0 0.0
      %1086 = vmatprep.subr.mxu0 0.0
      %1087 = vmatpush1.msra.mxu0 0.0
      %1088 = vmatprep.subr.mxu0 0.0
      %1089 = vmatpush1.msra.mxu0 0.0
      %1090 = vmatprep.subr.mxu0 0.0
      %1091 = vmatpush1.msra.mxu0 0.0
      %1092 = vmatprep.subr.mxu0 0.0
      %1093 = vmatpush1.msra.mxu0 0.0
      %1094 = vmatprep.subr.mxu0 0.0
      %1095 = vmatpush1.msra.mxu0 0.0
      %1096 = vmatprep.subr.mxu0 0.0
      %1097 = vmatpush1.msra.mxu0 0.0
      %1098 = vmatprep.subr.mxu0 0.0
      %1099 = vmatpush1.msra.mxu0 0.0
      %1100 = vmatprep.subr.mxu0 0.0
      %1101 = vmatpush1.msra.mxu0 0.0
      %1102 = vmatprep.subr.mxu0 0.0
      %1103 = vmatpush1.msra.mxu0 0.0
      %1104 = vmatprep.subr.mxu0 0.0
      %1105 = vmatpush1.msra.mxu0 0.0
      %1106 = vmatprep.subr.mxu0 0.0
      %1107 = vmatpush1.msra.mxu0 0.0
      %1108 = vmatprep.subr.mxu0 0.0
      %1109 = vmatpush1.msra.mxu0 0.0
      %1110 = vmatprep.subr.mxu0 0.0
      %1111 = vmatpush1.msra.mxu0 0.0
      %1112 = vmatprep.subr.mxu0 0.0
      %1113 = vmatpush1.msra.mxu0 0.0
      %1114 = vmatprep.subr.mxu0 0.0
      %1115 = vmatpush1.msra.mxu0 0.0
      %1116 = vmatprep.subr.mxu0 0.0
      %1117 = vmatpush1.msra.mxu0 0.0
      %1118 = vmatprep.subr.mxu0 0.0
      %1119 = vmatpush1.msra.mxu0 0.0
      %1120 = vmatprep.subr.mxu0 0.0
      %1121 = vmatpush1.msra.mxu0 0.0
      %1122 = vmatprep.subr.mxu0 0.0
      %1123 = vmatpush1.msra.mxu0 0.0
      %1124 = vmatprep.subr.mxu0 0.0
      %1125 = vmatpush1.msra.mxu0 0.0
      %1126 = vmatprep.subr.mxu0 0.0
      %1127 = vmatpush1.msra.mxu0 0.0
      %1128 = vmatprep.subr.mxu0 0.0
      %1129 = vmatpush1.msra.mxu0 0.0
      %1130 = vmatprep.mubr.f32.mxu0 0.0
      %1131 = vmatmul.mubr.f32.gmra.mrb[0].mxu0 %v993
      %v1132 = vpop.f32.mrb[0].mxu0
      %v1133 = vadd.f32 0.0, %v1132
      %v1134 = vpop.f32.mrb[0].mxu0
      %1135 = vdwg.mxu0
      %v1136 = vmul.f32 %v1133, 0.015625
      %v1137 = vmul.f32 %v1065, %v1065
      %v1138 = vsub.f32 %v1136, %v1137
      %v1139 = vadd.f32 %v1138, 1e-05
      %v1140 = vrsqrt.pop %v1139
      %v1141 = vmul.f32 %v1140, %v973
      %v1142 = vmul.f32 %v1065, %v1141
      %v1143 = vsub.f32 %v974, %v1142
      %1145 = vset.pattern.permute.xlu0 0
      %1146 = vperm.xlu0 %1145, %v1141
      %v1147 = vpop.permute.xlu0 %1146
      %v1149 = vmul.f32 %v894, %v1147
      %1151 = vset.pattern.permute.xlu0 0
      %1152 = vperm.xlu0 %1151, %v1143
      %v1153 = vpop.permute.xlu0 %1152
      %v1155 = vadd.f32 %v1149, %v1153
      %v1156 = vmul.f32 %v969, %v1147
      %v1157 = vadd.f32 %v1156, %v1153
      %v1158 = vxor.u32 %v1155, 2147483648
      %v1159 = vmul.f32 %v1158, 1.442695
      %v1160 = vpow.pop %v1159
      %v1161 = vadd.f32 %v1160, 1.0
      %v1162 = vrcp.pop %v1161
      %v1163 = vmul.f32 1.0, %v1162
      %v1165 = vrot.slane %v1163, 4
      %v1167 = vmul.f32 %v1155, %v1165
      %1168 = vst.msk [vmem:[%s427] sm:$0xf] %vm553, %v1167
      %v1169 = vxor.u32 %v1157, 2147483648
      %v1170 = vmul.f32 %v1169, 1.442695
      %v1171 = vpow.pop %v1170
      %v1172 = vadd.f32 %v1171, 1.0
      %v1173 = vrcp.pop %v1172
      %v1174 = vmul.f32 1.0, %v1173
      %v1176 = vrot.slane %v1174, 4
      %v1178 = vmul.f32 %v1157, %v1176
      %s1179 = scalar_lea.vmem %s427, 4
      %1180 = vst.msk [vmem:[%s1179] sm:$0xf] %vm553, %v1178
      %p1181 = scmp.lt.s32.totalorder %s23, 1
      %s1182 = scalar_select %p1181, %s23, 1
      %s1183 = smul.addr %s1182, 2
      %s1184 = smul.addr %s1183, 4
      %s1185 = scalar_lea.vmem %s12, %s1184
      // Predicated region
      $region69: #{demucs_decoder_forward.7} parent=67 // pred_check
        %p1186 = pneg %p303
      $region70: #{demucs_decoder_forward.7} parent=67 // pred_check_branch
        %1188 = sbr.rel (%p1186) target = $region72
      $region71: #{demucs_decoder_forward.7} parent=67 // pred_region
        _
      $region72: #{demucs_decoder_forward.7} parent=67 // pred_fallthru
        _
    $region68: #{demucs_decoder_forward.7} parent=5 // pred_fallthru
      _
    %p1189 = scmp.le.s32.totalorder 2, %s18
    // Predicated region
    $region73: #{demucs_decoder_forward.7} parent=5 // pred_check
      %p1190 = pneg %p1189
    $region74: #{demucs_decoder_forward.7} parent=5 // pred_check_branch
      %1192 = sbr.rel (%p1190) target = $region76
    $region75: #{demucs_decoder_forward.7} parent=5 // pred_region
      %s1193 = ssub.s32 %s18, 2
      // Predicated region
      $region77: #{demucs_decoder_forward.7} parent=75 // pred_check
        %p1194 = pneg %p309
      $region78: #{demucs_decoder_forward.7} parent=75 // pred_check_branch
        %1196 = sbr.rel (%p1194) target = $region80
      $region79: #{demucs_decoder_forward.7} parent=75 // pred_region
        %p1197 = scmp.lt.s32.totalorder %s24, 1
        %s1198 = scalar_select %p1197, %s24, 1
        %s1199 = smul.addr %s1198, 2
        %s1200 = smul.addr %s1199, 4
        %s1201 = scalar_lea.vmem %s12, %s1200
      $region80: #{demucs_decoder_forward.7} parent=75 // pred_fallthru
        _
    $region76: #{demucs_decoder_forward.7} parent=5 // pred_fallthru
      _
  $region6: #{demucs_decoder_forward.7} parent=0 // loop_footer
    %s22 = sadd.s32 1, %s18
  $region7: #{demucs_decoder_forward.7} parent=0 // loop_footer_branch
    %17 = sbr.rel target = $region3
  $region8: #{demucs_decoder_forward.7} parent=0 // loop_exit
    _

// kernel: demucs_decoder_forward.9
$region0: #{demucs_decoder_forward.9}
  #allocation0 [shape = 'u32[]', space=smem, size = 0x4, offset = 0x4, fixed_abs, tag = 'smem constant byte address 0x4 - core index']
  #allocation1 [shape = 'u32[144,128]{1,0:T(1,128)}', space=vmem, size = 0x12000, scoped, tag = 'internal scratch']
  %s0 = inlined_call_operand.vmem [shape: f32[2,8,16], index: 0, kind: input, shape index: {}]
  %s1 = inlined_call_operand.vmem [shape: f32[2,8,16], index: 1, kind: input, shape index: {}]
  %s2 = inlined_call_operand.vmem [shape: f32[16,8], index: 2, kind: input, shape index: {}]
  %s3 = inlined_call_operand.vmem [shape: f32[4,1], index: 3, kind: input, shape index: {}]
  %s4 = inlined_call_operand.vmem [shape: f32[8,4], index: 4, kind: input, shape index: {}]
  %s5 = inlined_call_operand.vmem [shape: f32[8,1], index: 5, kind: input, shape index: {}]
  %s6 = inlined_call_operand.vmem [shape: f32[4,4], index: 6, kind: input, shape index: {}]
  %s7 = inlined_call_operand.vmem [shape: f32[4,1], index: 7, kind: input, shape index: {}]
  %s8 = inlined_call_operand.vmem [shape: f32[4,1], index: 8, kind: input, shape index: {}]
  %s9 = inlined_call_operand.vmem [shape: f32[8,8], index: 9, kind: input, shape index: {}]
  %s10 = inlined_call_operand.vmem [shape: f32[8,1], index: 10, kind: input, shape index: {}]
  %s11 = inlined_call_operand.vmem [shape: f32[8,1], index: 11, kind: input, shape index: {}]
  %s12 = inlined_call_operand.vmem [shape: f32[2,4,4,16], index: 12, kind: output, shape index: {}]
  %s13 = sld [smem:[#allocation0]]
  $region81: #{demucs_decoder_forward.9} parent=0
    _
  %s15 = ssub.s32 1, %s13
  %s16 = scalar_select 0, %s15, %s13
  loop: start=0, step=1, limit=4
  $region2: #{demucs_decoder_forward.9} parent=0 // loop_pre_header
    _
  $region3: #{demucs_decoder_forward.9} parent=0 // loop_header
    %s18 = sphi 0, %s22
    %p19 = scmp.ge.s32.totalorder %s18, 4
    %s28 = sphi 0, %s30
    %s31 = sphi 0, %s28
    %s32 = sphi 0, %s31
    %s48 = sphi 0, %s32
    %s54 = sphi 0, %s56
    %s57 = sphi 0, %s54
    %s58 = sphi 0, %s57
    %s74 = sphi 0, %s58
    %s78 = sphi 0, %s78
    %s80 = sphi 0, %s78
    %s81 = sphi 0, %s80
    %s95 = sphi 0, %s81
    %s99 = sphi 0, %s99
    %s101 = sphi 0, %s99
    %s102 = sphi 0, %s101
    %s116 = sphi 0, %s102
    %s120 = sphi 0, %s120
    %s122 = sphi 0, %s120
    %s123 = sphi 0, %s122
    %s137 = sphi 0, %s123
    %s141 = sphi 0, %s141
    %s143 = sphi 0, %s141
    %s144 = sphi 0, %s143
    %s158 = sphi 0, %s144
    %s162 = sphi 0, %s162
    %s164 = sphi 0, %s162
    %s165 = sphi 0, %s164
    %s179 = sphi 0, %s165
    %s183 = sphi 0, %s183
    %s185 = sphi 0, %s183
    %s186 = sphi 0, %s185
    %s200 = sphi 0, %s186
    %s204 = sphi 0, %s204
    %s206 = sphi 0, %s204
    %s207 = sphi 0, %s206
    %s221 = sphi 0, %s207
    %s225 = sphi 0, %s225
    %s227 = sphi 0, %s225
    %s228 = sphi 0, %s227
    %s242 = sphi 0, %s228
    %s246 = sphi 0, %s246
    %s248 = sphi 0, %s246
    %s249 = sphi 0, %s248
    %s263 = sphi 0, %s249
    %s267 = sphi 0, %s267
    %s269 = sphi 0, %s267
    %s270 = sphi 0, %s269
    %s284 = sphi 0, %s270
    %s290 = sphi 0, %s292
    %s293 = sphi 0, %s290
    %s294 = sphi 0, %s293
    %s310 = sphi 0, %s294
  $region4: #{demucs_decoder_forward.9} parent=0 // loop_header_branch
    %21 = sbr.rel (%p19) target = $region8
  $region5: #{demucs_decoder_forward.9} parent=0 // loop_body
    %s23 = ssub.s32 %s18, 1
    %s24 = ssub.s32 %s18, 2
    %s25 = sadd.s32 %s18, 1
    %s26 = ssub.s32 %s18, %s25
    %p27 = scmp.eq.s32.totalorder %s26, 0
    %s29 = sadd.s32 %s28, 1
    %s30 = scalar_select %p27, %s28, %s29
    %p33 = pneg %p27
    %p34 = scmp.eq.s32.totalorder %s18, 1
    %p35 = por %p33, %p34
    %p36 = scmp.ne.s32.totalorder %s28, %s31
    %p37 = scmp.eq.s32.totalorder %s18, 0
    %p38 = por %p36, %p37
    %p39 = scmp.ne.s32.totalorder %s28, %s31
    %p40 = scmp.eq.s32.totalorder %s23, 1
    %p41 = por %p39, %p40
    %p42 = scmp.ne.s32.totalorder %s31, %s32
    %p43 = scmp.eq.s32.totalorder %s23, 0
    %p44 = por %p42, %p43
    %p45 = scmp.ne.s32.totalorder %s31, %s32
    %p46 = scmp.eq.s32.totalorder %s24, 1
    %p47 = por %p45, %p46
    %p49 = scmp.ne.s32.totalorder %s32, %s48
    %p50 = scmp.eq.s32.totalorder %s24, 0
    %p51 = por %p49, %p50
    %s52 = ssub.s32 %s18, %s25
    %p53 = scmp.eq.s32.totalorder %s52, 0
    %s55 = sadd.s32 %s54, 1
    %s56 = scalar_select %p53, %s54, %s55
    %p59 = pneg %p53
    %p60 = scmp.eq.s32.totalorder %s18, 1
    %p61 = por %p59, %p60
    %p62 = scmp.ne.s32.totalorder %s54, %s57
    %p63 = scmp.eq.s32.totalorder %s18, 0
    %p64 = por %p62, %p63
    %p65 = scmp.ne.s32.totalorder %s54, %s57
    %p66 = scmp.eq.s32.totalorder %s23, 1
    %p67 = por %p65, %p66
    %p68 = scmp.ne.s32.totalorder %s57, %s58
    %p69 = scmp.eq.s32.totalorder %s23, 0
    %p70 = por %p68, %p69
    %p71 = scmp.ne.s32.totalorder %s57, %s58
    %p72 = scmp.eq.s32.totalorder %s24, 1
    %p73 = por %p71, %p72
    %p75 = scmp.ne.s32.totalorder %s58, %s74
    %p76 = scmp.eq.s32.totalorder %s24, 0
    %p77 = por %p75, %p76
    %s79 = sadd.s32 %s78, 1
    %p82 = scmp.eq.s32.totalorder %s18, 1
    %p83 = scmp.ne.s32.totalorder %s78, %s80
    %p84 = scmp.eq.s32.totalorder %s18, 0
    %p85 = por %p83, %p84
    %p86 = scmp.ne.s32.totalorder %s78, %s80
    %p87 = scmp.eq.s32.totalorder %s23, 1
    %p88 = por %p86, %p87
    %p89 = scmp.ne.s32.totalorder %s80, %s81
    %p90 = scmp.eq.s32.totalorder %s23, 0
    %p91 = por %p89, %p90
    %p92 = scmp.ne.s32.totalorder %s80, %s81
    %p93 = scmp.eq.s32.totalorder %s24, 1
    %p94 = por %p92, %p93
    %p96 = scmp.ne.s32.totalorder %s81, %s95
    %p97 = scmp.eq.s32.totalorder %s24, 0
    %p98 = por %p96, %p97
    %s100 = sadd.s32 %s99, 1
    %p103 = scmp.eq.s32.totalorder %s18, 1
    %p104 = scmp.ne.s32.totalorder %s99, %s101
    %p105 = scmp.eq.s32.totalorder %s18, 0
    %p106 = por %p104, %p105
    %p107 = scmp.ne.s32.totalorder %s99, %s101
    %p108 = scmp.eq.s32.totalorder %s23, 1
    %p109 = por %p107, %p108
    %p110 = scmp.ne.s32.totalorder %s101, %s102
    %p111 = scmp.eq.s32.totalorder %s23, 0
    %p112 = por %p110, %p111
    %p113 = scmp.ne.s32.totalorder %s101, %s102
    %p114 = scmp.eq.s32.totalorder %s24, 1
    %p115 = por %p113, %p114
    %p117 = scmp.ne.s32.totalorder %s102, %s116
    %p118 = scmp.eq.s32.totalorder %s24, 0
    %p119 = por %p117, %p118
    %s121 = sadd.s32 %s120, 1
    %p124 = scmp.eq.s32.totalorder %s18, 1
    %p125 = scmp.ne.s32.totalorder %s120, %s122
    %p126 = scmp.eq.s32.totalorder %s18, 0
    %p127 = por %p125, %p126
    %p128 = scmp.ne.s32.totalorder %s120, %s122
    %p129 = scmp.eq.s32.totalorder %s23, 1
    %p130 = por %p128, %p129
    %p131 = scmp.ne.s32.totalorder %s122, %s123
    %p132 = scmp.eq.s32.totalorder %s23, 0
    %p133 = por %p131, %p132
    %p134 = scmp.ne.s32.totalorder %s122, %s123
    %p135 = scmp.eq.s32.totalorder %s24, 1
    %p136 = por %p134, %p135
    %p138 = scmp.ne.s32.totalorder %s123, %s137
    %p139 = scmp.eq.s32.totalorder %s24, 0
    %p140 = por %p138, %p139
    %s142 = sadd.s32 %s141, 1
    %p145 = scmp.eq.s32.totalorder %s18, 1
    %p146 = scmp.ne.s32.totalorder %s141, %s143
    %p147 = scmp.eq.s32.totalorder %s18, 0
    %p148 = por %p146, %p147
    %p149 = scmp.ne.s32.totalorder %s141, %s143
    %p150 = scmp.eq.s32.totalorder %s23, 1
    %p151 = por %p149, %p150
    %p152 = scmp.ne.s32.totalorder %s143, %s144
    %p153 = scmp.eq.s32.totalorder %s23, 0
    %p154 = por %p152, %p153
    %p155 = scmp.ne.s32.totalorder %s143, %s144
    %p156 = scmp.eq.s32.totalorder %s24, 1
    %p157 = por %p155, %p156
    %p159 = scmp.ne.s32.totalorder %s144, %s158
    %p160 = scmp.eq.s32.totalorder %s24, 0
    %p161 = por %p159, %p160
    %s163 = sadd.s32 %s162, 1
    %p166 = scmp.eq.s32.totalorder %s18, 1
    %p167 = scmp.ne.s32.totalorder %s162, %s164
    %p168 = scmp.eq.s32.totalorder %s18, 0
    %p169 = por %p167, %p168
    %p170 = scmp.ne.s32.totalorder %s162, %s164
    %p171 = scmp.eq.s32.totalorder %s23, 1
    %p172 = por %p170, %p171
    %p173 = scmp.ne.s32.totalorder %s164, %s165
    %p174 = scmp.eq.s32.totalorder %s23, 0
    %p175 = por %p173, %p174
    %p176 = scmp.ne.s32.totalorder %s164, %s165
    %p177 = scmp.eq.s32.totalorder %s24, 1
    %p178 = por %p176, %p177
    %p180 = scmp.ne.s32.totalorder %s165, %s179
    %p181 = scmp.eq.s32.totalorder %s24, 0
    %p182 = por %p180, %p181
    %s184 = sadd.s32 %s183, 1
    %p187 = scmp.eq.s32.totalorder %s18, 1
    %p188 = scmp.ne.s32.totalorder %s183, %s185
    %p189 = scmp.eq.s32.totalorder %s18, 0
    %p190 = por %p188, %p189
    %p191 = scmp.ne.s32.totalorder %s183, %s185
    %p192 = scmp.eq.s32.totalorder %s23, 1
    %p193 = por %p191, %p192
    %p194 = scmp.ne.s32.totalorder %s185, %s186
    %p195 = scmp.eq.s32.totalorder %s23, 0
    %p196 = por %p194, %p195
    %p197 = scmp.ne.s32.totalorder %s185, %s186
    %p198 = scmp.eq.s32.totalorder %s24, 1
    %p199 = por %p197, %p198
    %p201 = scmp.ne.s32.totalorder %s186, %s200
    %p202 = scmp.eq.s32.totalorder %s24, 0
    %p203 = por %p201, %p202
    %s205 = sadd.s32 %s204, 1
    %p208 = scmp.eq.s32.totalorder %s18, 1
    %p209 = scmp.ne.s32.totalorder %s204, %s206
    %p210 = scmp.eq.s32.totalorder %s18, 0
    %p211 = por %p209, %p210
    %p212 = scmp.ne.s32.totalorder %s204, %s206
    %p213 = scmp.eq.s32.totalorder %s23, 1
    %p214 = por %p212, %p213
    %p215 = scmp.ne.s32.totalorder %s206, %s207
    %p216 = scmp.eq.s32.totalorder %s23, 0
    %p217 = por %p215, %p216
    %p218 = scmp.ne.s32.totalorder %s206, %s207
    %p219 = scmp.eq.s32.totalorder %s24, 1
    %p220 = por %p218, %p219
    %p222 = scmp.ne.s32.totalorder %s207, %s221
    %p223 = scmp.eq.s32.totalorder %s24, 0
    %p224 = por %p222, %p223
    %s226 = sadd.s32 %s225, 1
    %p229 = scmp.eq.s32.totalorder %s18, 1
    %p230 = scmp.ne.s32.totalorder %s225, %s227
    %p231 = scmp.eq.s32.totalorder %s18, 0
    %p232 = por %p230, %p231
    %p233 = scmp.ne.s32.totalorder %s225, %s227
    %p234 = scmp.eq.s32.totalorder %s23, 1
    %p235 = por %p233, %p234
    %p236 = scmp.ne.s32.totalorder %s227, %s228
    %p237 = scmp.eq.s32.totalorder %s23, 0
    %p238 = por %p236, %p237
    %p239 = scmp.ne.s32.totalorder %s227, %s228
    %p240 = scmp.eq.s32.totalorder %s24, 1
    %p241 = por %p239, %p240
    %p243 = scmp.ne.s32.totalorder %s228, %s242
    %p244 = scmp.eq.s32.totalorder %s24, 0
    %p245 = por %p243, %p244
    %s247 = sadd.s32 %s246, 1
    %p250 = scmp.eq.s32.totalorder %s18, 1
    %p251 = scmp.ne.s32.totalorder %s246, %s248
    %p252 = scmp.eq.s32.totalorder %s18, 0
    %p253 = por %p251, %p252
    %p254 = scmp.ne.s32.totalorder %s246, %s248
    %p255 = scmp.eq.s32.totalorder %s23, 1
    %p256 = por %p254, %p255
    %p257 = scmp.ne.s32.totalorder %s248, %s249
    %p258 = scmp.eq.s32.totalorder %s23, 0
    %p259 = por %p257, %p258
    %p260 = scmp.ne.s32.totalorder %s248, %s249
    %p261 = scmp.eq.s32.totalorder %s24, 1
    %p262 = por %p260, %p261
    %p264 = scmp.ne.s32.totalorder %s249, %s263
    %p265 = scmp.eq.s32.totalorder %s24, 0
    %p266 = por %p264, %p265
    %s268 = sadd.s32 %s267, 1
    %p271 = scmp.eq.s32.totalorder %s18, 1
    %p272 = scmp.ne.s32.totalorder %s267, %s269
    %p273 = scmp.eq.s32.totalorder %s18, 0
    %p274 = por %p272, %p273
    %p275 = scmp.ne.s32.totalorder %s267, %s269
    %p276 = scmp.eq.s32.totalorder %s23, 1
    %p277 = por %p275, %p276
    %p278 = scmp.ne.s32.totalorder %s269, %s270
    %p279 = scmp.eq.s32.totalorder %s23, 0
    %p280 = por %p278, %p279
    %p281 = scmp.ne.s32.totalorder %s269, %s270
    %p282 = scmp.eq.s32.totalorder %s24, 1
    %p283 = por %p281, %p282
    %p285 = scmp.ne.s32.totalorder %s270, %s284
    %p286 = scmp.eq.s32.totalorder %s24, 0
    %p287 = por %p285, %p286
    %s288 = ssub.s32 %s18, %s25
    %p289 = scmp.eq.s32.totalorder %s288, 0
    %s291 = sadd.s32 %s290, 1
    %s292 = scalar_select %p289, %s290, %s291
    %p295 = pneg %p289
    %p296 = scmp.eq.s32.totalorder %s18, 1
    %p297 = por %p295, %p296
    %p298 = scmp.ne.s32.totalorder %s290, %s293
    %p299 = scmp.eq.s32.totalorder %s18, 0
    %p300 = por %p298, %p299
    %p301 = scmp.ne.s32.totalorder %s290, %s293
    %p302 = scmp.eq.s32.totalorder %s23, 1
    %p303 = por %p301, %p302
    %p304 = scmp.ne.s32.totalorder %s293, %s294
    %p305 = scmp.eq.s32.totalorder %s23, 0
    %p306 = por %p304, %p305
    %p307 = scmp.ne.s32.totalorder %s293, %s294
    %p308 = scmp.eq.s32.totalorder %s24, 1
    %p309 = por %p307, %p308
    %p311 = scmp.ne.s32.totalorder %s294, %s310
    %p312 = scmp.eq.s32.totalorder %s24, 0
    %p313 = por %p311, %p312
    %p314 = scmp.le.s32.totalorder 1, %s18
    %p315 = scmp.lt.s32.totalorder %s18, 3
    %p316 = pnand %p314, %p315
    %p317 = pneg %p316
    // Predicated region
    $region9: #{demucs_decoder_forward.9} parent=5 // pred_check
      _
    $region10: #{demucs_decoder_forward.9} parent=5 // pred_check_branch
      %319 = sbr.rel (%p316) target = $region12
    $region11: #{demucs_decoder_forward.9} parent=5 // pred_region
      %s320 = ssub.s32 %s18, 1
      // Predicated region
      $region13: #{demucs_decoder_forward.9} parent=11 // pred_check
        %p321 = pneg %p91
      $region14: #{demucs_decoder_forward.9} parent=11 // pred_check_branch
        %323 = sbr.rel (%p321) target = $region16
      $region15: #{demucs_decoder_forward.9} parent=11 // pred_region
        _
      $region16: #{demucs_decoder_forward.9} parent=11 // pred_fallthru
        _
      // Predicated region
      $region17: #{demucs_decoder_forward.9} parent=11 // pred_check
        %p324 = pneg %p112
      $region18: #{demucs_decoder_forward.9} parent=11 // pred_check_branch
        %326 = sbr.rel (%p324) target = $region20
      $region19: #{demucs_decoder_forward.9} parent=11 // pred_region
        _
      $region20: #{demucs_decoder_forward.9} parent=11 // pred_fallthru
        _
      // Predicated region
      $region21: #{demucs_decoder_forward.9} parent=11 // pred_check
        %p327 = pneg %p133
      $region22: #{demucs_decoder_forward.9} parent=11 // pred_check_branch
        %329 = sbr.rel (%p327) target = $region24
      $region23: #{demucs_decoder_forward.9} parent=11 // pred_region
        _
      $region24: #{demucs_decoder_forward.9} parent=11 // pred_fallthru
        _
      // Predicated region
      $region25: #{demucs_decoder_forward.9} parent=11 // pred_check
        %p330 = pneg %p154
      $region26: #{demucs_decoder_forward.9} parent=11 // pred_check_branch
        %332 = sbr.rel (%p330) target = $region28
      $region27: #{demucs_decoder_forward.9} parent=11 // pred_region
        _
      $region28: #{demucs_decoder_forward.9} parent=11 // pred_fallthru
        _
      // Predicated region
      $region29: #{demucs_decoder_forward.9} parent=11 // pred_check
        %p333 = pneg %p175
      $region30: #{demucs_decoder_forward.9} parent=11 // pred_check_branch
        %335 = sbr.rel (%p333) target = $region32
      $region31: #{demucs_decoder_forward.9} parent=11 // pred_region
        _
      $region32: #{demucs_decoder_forward.9} parent=11 // pred_fallthru
        _
      // Predicated region
      $region33: #{demucs_decoder_forward.9} parent=11 // pred_check
        %p336 = pneg %p196
      $region34: #{demucs_decoder_forward.9} parent=11 // pred_check_branch
        %338 = sbr.rel (%p336) target = $region36
      $region35: #{demucs_decoder_forward.9} parent=11 // pred_region
        _
      $region36: #{demucs_decoder_forward.9} parent=11 // pred_fallthru
        _
      // Predicated region
      $region37: #{demucs_decoder_forward.9} parent=11 // pred_check
        %p339 = pneg %p217
      $region38: #{demucs_decoder_forward.9} parent=11 // pred_check_branch
        %341 = sbr.rel (%p339) target = $region40
      $region39: #{demucs_decoder_forward.9} parent=11 // pred_region
        _
      $region40: #{demucs_decoder_forward.9} parent=11 // pred_fallthru
        _
      // Predicated region
      $region41: #{demucs_decoder_forward.9} parent=11 // pred_check
        %p342 = pneg %p238
      $region42: #{demucs_decoder_forward.9} parent=11 // pred_check_branch
        %344 = sbr.rel (%p342) target = $region44
      $region43: #{demucs_decoder_forward.9} parent=11 // pred_region
        _
      $region44: #{demucs_decoder_forward.9} parent=11 // pred_fallthru
        _
      // Predicated region
      $region45: #{demucs_decoder_forward.9} parent=11 // pred_check
        %p345 = pneg %p259
      $region46: #{demucs_decoder_forward.9} parent=11 // pred_check_branch
        %347 = sbr.rel (%p345) target = $region48
      $region47: #{demucs_decoder_forward.9} parent=11 // pred_region
        _
      $region48: #{demucs_decoder_forward.9} parent=11 // pred_fallthru
        _
      // Predicated region
      $region49: #{demucs_decoder_forward.9} parent=11 // pred_check
        %p348 = pneg %p280
      $region50: #{demucs_decoder_forward.9} parent=11 // pred_check_branch
        %350 = sbr.rel (%p348) target = $region52
      $region51: #{demucs_decoder_forward.9} parent=11 // pred_region
        _
      $region52: #{demucs_decoder_forward.9} parent=11 // pred_fallthru
        _
    $region12: #{demucs_decoder_forward.9} parent=5 // pred_fallthru
      _
    %p351 = scmp.lt.s32.totalorder %s18, 2
    // Predicated region
    $region53: #{demucs_decoder_forward.9} parent=5 // pred_check
      %p352 = pneg %p351
    $region54: #{demucs_decoder_forward.9} parent=5 // pred_check_branch
      %354 = sbr.rel (%p352) target = $region56
    $region55: #{demucs_decoder_forward.9} parent=5 // pred_region
      // Predicated region
      $region57: #{demucs_decoder_forward.9} parent=55 // pred_check
        %p355 = pneg %p38
      $region58: #{demucs_decoder_forward.9} parent=55 // pred_check_branch
        %357 = sbr.rel (%p355) target = $region60
      $region59: #{demucs_decoder_forward.9} parent=55 // pred_region
        %p358 = scmp.lt.s32.totalorder %s18, 1
        %s359 = scalar_select %p358, %s18, 1
        %s360 = smul.addr %s359, 8
        %s361 = scalar_lea.vmem %s0, %s360
      $region60: #{demucs_decoder_forward.9} parent=55 // pred_fallthru
        _
      // Predicated region
      $region61: #{demucs_decoder_forward.9} parent=55 // pred_check
        %p362 = pneg %p64
      $region62: #{demucs_decoder_forward.9} parent=55 // pred_check_branch
        %364 = sbr.rel (%p362) target = $region64
      $region63: #{demucs_decoder_forward.9} parent=55 // pred_region
        %p365 = scmp.lt.s32.totalorder %s18, 1
        %s366 = scalar_select %p365, %s18, 1
        %s367 = smul.addr %s366, 8
        %s368 = scalar_lea.vmem %s1, %s367
      $region64: #{demucs_decoder_forward.9} parent=55 // pred_fallthru
        _
    $region56: #{demucs_decoder_forward.9} parent=5 // pred_fallthru
      _
    %p369 = scmp.le.s32.totalorder 1, %s18
    %p370 = scmp.lt.s32.totalorder %s18, 3
    %p371 = pnand %p369, %p370
    %p372 = pneg %p371
    // Predicated region
    $region65: #{demucs_decoder_forward.9} parent=5 // pred_check
      _
    $region66: #{demucs_decoder_forward.9} parent=5 // pred_check_branch
      %374 = sbr.rel (%p371) target = $region68
    $region67: #{demucs_decoder_forward.9} parent=5 // pred_region
      %s375 = ssub.s32 %s18, 1
      %p376 = scmp.lt.s32.totalorder %s23, 1
      %s377 = scalar_select %p376, %s23, 1
      %s378 = smul.addr %s377, 8
      %s379 = scalar_lea.vmem %s0, %s378
      %p380 = pneg %p44
      %p381 = pneg %p41
      %p382 = scmp.lt.s32.totalorder %s23, 1
      %s383 = scalar_select %p382, %s23, 1
      %s384 = smul.addr %s383, 8
      %s385 = scalar_lea.vmem %s1, %s384
      %p386 = pneg %p70
      %p387 = pneg %p67
      %p388 = pneg %p91
      %p389 = pneg %p88
      %p390 = pneg %p112
      %p391 = pneg %p109
      %p392 = pneg %p133
      %p393 = pneg %p130
      %p394 = pneg %p154
      %p395 = pneg %p151
      %p396 = pneg %p175
      %p397 = pneg %p172
      %p398 = pneg %p196
      %p399 = pneg %p193
      %p400 = pneg %p217
      %p401 = pneg %p214
      %p402 = pneg %p238
      %p403 = pneg %p235
      %p404 = pneg %p259
      %p405 = pneg %p256
      %p406 = pneg %p280
      %p407 = pneg %p277
      %p408 = pneg %p306
      %p409 = pneg %p303
      %p410 = scmp.lt.s32.totalorder %s23, 1
      %s411 = scalar_select %p410, %s23, 1
      %s412 = smul.addr %s411, 4
      %s413 = smul.addr %s412, 4
      %s414 = scalar_lea.vmem %s12, %s413
      %p415 = scmp.lt.s32.totalorder %s23, 1
      %s416 = scalar_select %p415, %s23, 1
      %s417 = smul.addr %s416, 8
      %s418 = scalar_lea.vmem %s0, %s417
      %p419 = scmp.lt.s32.totalorder %s23, 1
      %s420 = scalar_select %p419, %s23, 1
      %s421 = smul.addr %s420, 8
      %s422 = scalar_lea.vmem %s1, %s421
      %p423 = scmp.lt.s32.totalorder %s23, 1
      %s424 = scalar_select %p423, %s23, 1
      %s425 = smul.addr %s424, 4
      %s426 = smul.addr %s425, 4
      %s427 = scalar_lea.vmem %s12, %s426
      %v428 = vld [vmem:[%s418] sm:$0xff]
      %v429 = vld [vmem:[%s422] sm:$0xff]
      %v430 = vadd.f32 %v428, %v429
      %v431 = vld [vmem:[%s2] sm:$0xff]
      %v432 = vld [vmem:[%s2 + $0x8] sm:$0xff]
      %vm433 = vcmask 64512
      %v435 = vsel %vm433, %v431, 0
      %v438 = vsel %vm433, %v432, 0
      %440 = vmatprep.subr.mxu0 0.0
      %441 = vmatpush1.msra.mxu0 %v430
      %442 = vmatprep.subr.mxu0 0.0
      %443 = vmatpush1.msra.mxu0 0.0
      %444 = vmatprep.subr.mxu0 0.0
      %445 = vmatpush1.msra.mxu0 0.0
      %446 = vmatprep.subr.mxu0 0.0
      %447 = vmatpush1.msra.mxu0 0.0
      %448 = vmatprep.subr.mxu0 0.0
      %449 = vmatpush1.msra.mxu0 0.0
      %450 = vmatprep.subr.mxu0 0.0
      %451 = vmatpush1.msra.mxu0 0.0
      %452 = vmatprep.subr.mxu0 0.0
      %453 = vmatpush1.msra.mxu0 0.0
      %454 = vmatprep.subr.mxu0 0.0
      %455 = vmatpush1.msra.mxu0 0.0
      %456 = vmatprep.subr.mxu0 0.0
      %457 = vmatpush1.msra.mxu0 0.0
      %458 = vmatprep.subr.mxu0 0.0
      %459 = vmatpush1.msra.mxu0 0.0
      %460 = vmatprep.subr.mxu0 0.0
      %461 = vmatpush1.msra.mxu0 0.0
      %462 = vmatprep.subr.mxu0 0.0
      %463 = vmatpush1.msra.mxu0 0.0
      %464 = vmatprep.subr.mxu0 0.0
      %465 = vmatpush1.msra.mxu0 0.0
      %466 = vmatprep.subr.mxu0 0.0
      %467 = vmatpush1.msra.mxu0 0.0
      %468 = vmatprep.subr.mxu0 0.0
      %469 = vmatpush1.msra.mxu0 0.0
      %470 = vmatprep.subr.mxu0 0.0
      %471 = vmatpush1.msra.mxu0 0.0
      %472 = vmatprep.subr.mxu0 0.0
      %473 = vmatpush1.msra.mxu0 0.0
      %474 = vmatprep.subr.mxu0 0.0
      %475 = vmatpush1.msra.mxu0 0.0
      %476 = vmatprep.subr.mxu0 0.0
      %477 = vmatpush1.msra.mxu0 0.0
      %478 = vmatprep.subr.mxu0 0.0
      %479 = vmatpush1.msra.mxu0 0.0
      %480 = vmatprep.subr.mxu0 0.0
      %481 = vmatpush1.msra.mxu0 0.0
      %482 = vmatprep.subr.mxu0 0.0
      %483 = vmatpush1.msra.mxu0 0.0
      %484 = vmatprep.subr.mxu0 0.0
      %485 = vmatpush1.msra.mxu0 0.0
      %486 = vmatprep.subr.mxu0 0.0
      %487 = vmatpush1.msra.mxu0 0.0
      %488 = vmatprep.subr.mxu0 0.0
      %489 = vmatpush1.msra.mxu0 0.0
      %490 = vmatprep.subr.mxu0 0.0
      %491 = vmatpush1.msra.mxu0 0.0
      %492 = vmatprep.subr.mxu0 0.0
      %493 = vmatpush1.msra.mxu0 0.0
      %494 = vmatprep.subr.mxu0 0.0
      %495 = vmatpush1.msra.mxu0 0.0
      %496 = vmatprep.subr.mxu0 0.0
      %497 = vmatpush1.msra.mxu0 0.0
      %498 = vmatprep.subr.mxu0 0.0
      %499 = vmatpush1.msra.mxu0 0.0
      %500 = vmatprep.subr.mxu0 0.0
      %501 = vmatpush1.msra.mxu0 0.0
      %502 = vmatprep.subr.mxu0 0.0
      %503 = vmatpush1.msra.mxu0 0.0
      %504 = vmatprep.mubr.f32.mxu0 0.0
      %505 = vmatmul.mubr.f32.gmra.mrb[0].mxu0 %v435
      %v506 = vpop.f32.mrb[0].mxu0
      %v507 = vadd.f32 0.0, %v506
      %v508 = vpop.f32.mrb[0].mxu0
      %509 = vmatprep.mubr.f32.mxu0 0.0
      %510 = vmatmul.mubr.f32.gmra.mrb[0].mxu0 %v438
      %v511 = vpop.f32.mrb[0].mxu0
      %v512 = vadd.f32 0.0, %v511
      %v513 = vpop.f32.mrb[0].mxu0
      %514 = vdwg.mxu0
      %v515 = vld [vmem:[%s3] sm:$0xf]
      %517 = vset.pattern.permute.xlu0 0
      %518 = vperm.xlu0 %517, %v515
      %v519 = vpop.permute.xlu0 %518
      %v521 = vadd.f32 %v507, %v519
      %v522 = vrot.slane %v519, 4
      %v524 = vadd.f32 %v507, %v522
      %v525 = vadd.f32 %v512, %v519
      %v526 = vadd.f32 %v512, %v522
      %v527 = vld [vmem:[%s6] sm:$0xf]
      %v528 = vld [vmem:[%s7] sm:$0xf]
      %v529 = vld [vmem:[%s8] sm:$0xf]
      %vm530 = vcmask 125952
      %v531 = vsel %vm530, %v521, 0.0
      %532 = vadd.xlane.f32.xlu0 %v531
      %v533 = vpop.xlane.xlu0 %532
      %v534 = vmul.f32 %v521, %v521
      %v535 = vsel %vm530, %v534, 0.0
      %536 = vadd.xlane.f32.xlu0 %v535
      %v537 = vpop.xlane.xlu0 %536
      %vm538 = vcmask 130052
      %v539 = vsel %vm538, %v524, 0.0
      %540 = vadd.xlane.f32.xlu0 %v539
      %v541 = vpop.xlane.xlu0 %540
      %v542 = vmul.f32 %v524, %v524
      %v543 = vsel %vm538, %v542, 0.0
      %544 = vadd.xlane.f32.xlu0 %v543
      %v545 = vpop.xlane.xlu0 %544
      %v547 = vrot.slane %v541, 4
      %v549 = vadd.f32 %v533, %v547
      %v551 = vrot.slane %v545, 4
      %v553 = vadd.f32 %v537, %v551
      %v554 = vsel %vm530, %v525, 0.0
      %555 = vadd.xlane.f32.xlu0 %v554
      %v556 = vpop.xlane.xlu0 %555
      %v557 = vmul.f32 %v525, %v525
      %v558 = vsel %vm530, %v557, 0.0
      %559 = vadd.xlane.f32.xlu0 %v558
      %v560 = vpop.xlane.xlu0 %559
      %v561 = vadd.f32 %v549, %v556
      %v562 = vadd.f32 %v553, %v560
      %v563 = vsel %vm538, %v526, 0.0
      %564 = vadd.xlane.f32.xlu0 %v563
      %v565 = vpop.xlane.xlu0 %564
      %v566 = vmul.f32 %v526, %v526
      %v567 = vsel %vm538, %v566, 0.0
      %568 = vadd.xlane.f32.xlu0 %v567
      %v569 = vpop.xlane.xlu0 %568
      %v571 = vrot.slane %v565, 4
      %v573 = vadd.f32 %v561, %v571
      %v575 = vrot.slane %v569, 4
      %v577 = vadd.f32 %v562, %v575
      %vm578 = vcmask 31744
      %v580 = vsel %vm578, %v527, 0
      %vm582 = vcmask 1043456
      %v584 = vsel %vm582, %v573, 0
      %586 = vmatprep.subr.mxu0 0.0
      %587 = vmatpush1.msra.mxu0 %v584
      %588 = vmatprep.subr.mxu0 0.0
      %589 = vmatpush1.msra.mxu0 0.0
      %590 = vmatprep.subr.mxu0 0.0
      %591 = vmatpush1.msra.mxu0 0.0
      %592 = vmatprep.subr.mxu0 0.0
      %593 = vmatpush1.msra.mxu0 0.0
      %594 = vmatprep.subr.mxu0 0.0
      %595 = vmatpush1.msra.mxu0 0.0
      %596 = vmatprep.subr.mxu0 0.0
      %597 = vmatpush1.msra.mxu0 0.0
      %598 = vmatprep.subr.mxu0 0.0
      %599 = vmatpush1.msra.mxu0 0.0
      %600 = vmatprep.subr.mxu0 0.0
      %601 = vmatpush1.msra.mxu0 0.0
      %602 = vmatprep.subr.mxu0 0.0
      %603 = vmatpush1.msra.mxu0 0.0
      %604 = vmatprep.subr.mxu0 0.0
      %605 = vmatpush1.msra.mxu0 0.0
      %606 = vmatprep.subr.mxu0 0.0
      %607 = vmatpush1.msra.mxu0 0.0
      %608 = vmatprep.subr.mxu0 0.0
      %609 = vmatpush1.msra.mxu0 0.0
      %610 = vmatprep.subr.mxu0 0.0
      %611 = vmatpush1.msra.mxu0 0.0
      %612 = vmatprep.subr.mxu0 0.0
      %613 = vmatpush1.msra.mxu0 0.0
      %614 = vmatprep.subr.mxu0 0.0
      %615 = vmatpush1.msra.mxu0 0.0
      %616 = vmatprep.subr.mxu0 0.0
      %617 = vmatpush1.msra.mxu0 0.0
      %618 = vmatprep.subr.mxu0 0.0
      %619 = vmatpush1.msra.mxu0 0.0
      %620 = vmatprep.subr.mxu0 0.0
      %621 = vmatpush1.msra.mxu0 0.0
      %622 = vmatprep.subr.mxu0 0.0
      %623 = vmatpush1.msra.mxu0 0.0
      %624 = vmatprep.subr.mxu0 0.0
      %625 = vmatpush1.msra.mxu0 0.0
      %626 = vmatprep.subr.mxu0 0.0
      %627 = vmatpush1.msra.mxu0 0.0
      %628 = vmatprep.subr.mxu0 0.0
      %629 = vmatpush1.msra.mxu0 0.0
      %630 = vmatprep.subr.mxu0 0.0
      %631 = vmatpush1.msra.mxu0 0.0
      %632 = vmatprep.subr.mxu0 0.0
      %633 = vmatpush1.msra.mxu0 0.0
      %634 = vmatprep.subr.mxu0 0.0
      %635 = vmatpush1.msra.mxu0 0.0
      %636 = vmatprep.subr.mxu0 0.0
      %637 = vmatpush1.msra.mxu0 0.0
      %638 = vmatprep.subr.mxu0 0.0
      %639 = vmatpush1.msra.mxu0 0.0
      %640 = vmatprep.subr.mxu0 0.0
      %641 = vmatpush1.msra.mxu0 0.0
      %642 = vmatprep.subr.mxu0 0.0
      %643 = vmatpush1.msra.mxu0 0.0
      %644 = vmatprep.subr.mxu0 0.0
      %645 = vmatpush1.msra.mxu0 0.0
      %646 = vmatprep.subr.mxu0 0.0
      %647 = vmatpush1.msra.mxu0 0.0
      %648 = vmatprep.subr.mxu0 0.0
      %649 = vmatpush1.msra.mxu0 0.0
      %650 = vmatprep.mubr.f32.mxu0 0.0
      %651 = vmatmul.mubr.f32.gmra.mrb[0].mxu0 %v580
      %v652 = vpop.f32.mrb[0].mxu0
      %v653 = vadd.f32 0.0, %v652
      %v654 = vpop.f32.mrb[0].mxu0
      %655 = vdwg.mxu0
      %v656 = vmul.f32 %v653, 0.015625
      %v658 = vsel %vm582, %v577, 0
      %660 = vmatprep.subr.mxu0 0.0
      %661 = vmatpush1.msra.mxu0 %v658
      %662 = vmatprep.subr.mxu0 0.0
      %663 = vmatpush1.msra.mxu0 0.0
      %664 = vmatprep.subr.mxu0 0.0
      %665 = vmatpush1.msra.mxu0 0.0
      %666 = vmatprep.subr.mxu0 0.0
      %667 = vmatpush1.msra.mxu0 0.0
      %668 = vmatprep.subr.mxu0 0.0
      %669 = vmatpush1.msra.mxu0 0.0
      %670 = vmatprep.subr.mxu0 0.0
      %671 = vmatpush1.msra.mxu0 0.0
      %672 = vmatprep.subr.mxu0 0.0
      %673 = vmatpush1.msra.mxu0 0.0
      %674 = vmatprep.subr.mxu0 0.0
      %675 = vmatpush1.msra.mxu0 0.0
      %676 = vmatprep.subr.mxu0 0.0
      %677 = vmatpush1.msra.mxu0 0.0
      %678 = vmatprep.subr.mxu0 0.0
      %679 = vmatpush1.msra.mxu0 0.0
      %680 = vmatprep.subr.mxu0 0.0
      %681 = vmatpush1.msra.mxu0 0.0
      %682 = vmatprep.subr.mxu0 0.0
      %683 = vmatpush1.msra.mxu0 0.0
      %684 = vmatprep.subr.mxu0 0.0
      %685 = vmatpush1.msra.mxu0 0.0
      %686 = vmatprep.subr.mxu0 0.0
      %687 = vmatpush1.msra.mxu0 0.0
      %688 = vmatprep.subr.mxu0 0.0
      %689 = vmatpush1.msra.mxu0 0.0
      %690 = vmatprep.subr.mxu0 0.0
      %691 = vmatpush1.msra.mxu0 0.0
      %692 = vmatprep.subr.mxu0 0.0
      %693 = vmatpush1.msra.mxu0 0.0
      %694 = vmatprep.subr.mxu0 0.0
      %695 = vmatpush1.msra.mxu0 0.0
      %696 = vmatprep.subr.mxu0 0.0
      %697 = vmatpush1.msra.mxu0 0.0
      %698 = vmatprep.subr.mxu0 0.0
      %699 = vmatpush1.msra.mxu0 0.0
      %700 = vmatprep.subr.mxu0 0.0
      %701 = vmatpush1.msra.mxu0 0.0
      %702 = vmatprep.subr.mxu0 0.0
      %703 = vmatpush1.msra.mxu0 0.0
      %704 = vmatprep.subr.mxu0 0.0
      %705 = vmatpush1.msra.mxu0 0.0
      %706 = vmatprep.subr.mxu0 0.0
      %707 = vmatpush1.msra.mxu0 0.0
      %708 = vmatprep.subr.mxu0 0.0
      %709 = vmatpush1.msra.mxu0 0.0
      %710 = vmatprep.subr.mxu0 0.0
      %711 = vmatpush1.msra.mxu0 0.0
      %712 = vmatprep.subr.mxu0 0.0
      %713 = vmatpush1.msra.mxu0 0.0
      %714 = vmatprep.subr.mxu0 0.0
      %715 = vmatpush1.msra.mxu0 0.0
      %716 = vmatprep.subr.mxu0 0.0
      %717 = vmatpush1.msra.mxu0 0.0
      %718 = vmatprep.subr.mxu0 0.0
      %719 = vmatpush1.msra.mxu0 0.0
      %720 = vmatprep.subr.mxu0 0.0
      %721 = vmatpush1.msra.mxu0 0.0
      %722 = vmatprep.subr.mxu0 0.0
      %723 = vmatpush1.msra.mxu0 0.0
      %724 = vmatprep.mubr.f32.mxu0 0.0
      %725 = vmatmul.mubr.f32.gmra.mrb[0].mxu0 %v580
      %v726 = vpop.f32.mrb[0].mxu0
      %v727 = vadd.f32 0.0, %v726
      %v728 = vpop.f32.mrb[0].mxu0
      %729 = vdwg.mxu0
      %v730 = vmul.f32 %v727, 0.015625
      %v731 = vmul.f32 %v656, %v656
      %v732 = vsub.f32 %v730, %v731
      %v733 = vadd.f32 %v732, 1e-05
      %v734 = vrsqrt.pop %v733
      %v735 = vmul.f32 %v734, %v528
      %v736 = vmul.f32 %v656, %v735
      %v737 = vsub.f32 %v529, %v736
      %739 = vset.pattern.permute.xlu0 0
      %740 = vperm.xlu0 %739, %v735
      %v741 = vpop.permute.xlu0 %740
      %v743 = vmul.f32 %v521, %v741
      %745 = vset.pattern.permute.xlu0 0
      %746 = vperm.xlu0 %745, %v737
      %v747 = vpop.permute.xlu0 %746
      %v749 = vadd.f32 %v743, %v747
      %v750 = vrot.slane %v741, 4
      %v752 = vmul.f32 %v524, %v750
      %v753 = vrot.slane %v747, 4
      %v755 = vadd.f32 %v752, %v753
      %v756 = vmul.f32 %v525, %v741
      %v757 = vadd.f32 %v756, %v747
      %v758 = vmul.f32 %v526, %v750
      %v759 = vadd.f32 %v758, %v753
      %v760 = vmul.f32 %v749, 0.5
      %v761 = vmul.f32 %v749, 0.70710677
      %vm762 = vcmp.ge.f32.partialorder %v761, 0.0
      %v763 = vsel %vm762, 1.0, -1.0
      %v764 = vand.u32 2147483647, %v761
      %v765 = vmul.f32 %v764, 0.3275911
      %v766 = vadd.f32 %v765, 1.0
      %v767 = vrcp.pop %v766
      %v768 = vmul.f32 %v766, %v767
      %v769 = vsub.f32 2.0, %v768
      %v770 = vmul.f32 %v767, %v769
      %v771 = vmul.f32 %v770, 1.0614054
      %v772 = vadd.f32 %v771, -1.4531521
      %v773 = vmul.f32 %v772, %v770
      %v774 = vadd.f32 %v773, 1.4214138
      %v775 = vmul.f32 %v774, %v770
      %v776 = vadd.f32 %v775, -0.28449672
      %v777 = vmul.f32 %v776, %v770
      %v778 = vadd.f32 %v777, 0.2548296
      %v779 = vmul.f32 %v778, %v770
      %v780 = vsub.f32 0.0, %v764
      %v781 = vmul.f32 %v780, %v764
      %v782 = vmul.f32 %v781, 1.442695
      %v783 = vpow.pop %v782
      %v784 = vmul.f32 %v779, %v783
      %v785 = vsub.f32 1.0, %v784
      %v786 = vmul.f32 %v763, %v785
      %v787 = vadd.f32 %v786, 1.0
      %v788 = vmul.f32 %v760, %v787
      %v789 = vmul.f32 %v755, 0.5
      %v790 = vmul.f32 %v755, 0.70710677
      %vm791 = vcmp.ge.f32.partialorder %v790, 0.0
      %v792 = vsel %vm791, 1.0, -1.0
      %v793 = vand.u32 2147483647, %v790
      %v794 = vmul.f32 %v793, 0.3275911
      %v795 = vadd.f32 %v794, 1.0
      %v796 = vrcp.pop %v795
      %v797 = vmul.f32 %v795, %v796
      %v798 = vsub.f32 2.0, %v797
      %v799 = vmul.f32 %v796, %v798
      %v800 = vmul.f32 %v799, 1.0614054
      %v801 = vadd.f32 %v800, -1.4531521
      %v802 = vmul.f32 %v801, %v799
      %v803 = vadd.f32 %v802, 1.4214138
      %v804 = vmul.f32 %v803, %v799
      %v805 = vadd.f32 %v804, -0.28449672
      %v806 = vmul.f32 %v805, %v799
      %v807 = vadd.f32 %v806, 0.2548296
      %v808 = vmul.f32 %v807, %v799
      %v809 = vsub.f32 0.0, %v793
      %v810 = vmul.f32 %v809, %v793
      %v811 = vmul.f32 %v810, 1.442695
      %v812 = vpow.pop %v811
      %v813 = vmul.f32 %v808, %v812
      %v814 = vsub.f32 1.0, %v813
      %v815 = vmul.f32 %v792, %v814
      %v816 = vadd.f32 %v815, 1.0
      %v817 = vmul.f32 %v789, %v816
      %v818 = vmul.f32 %v757, 0.5
      %v819 = vmul.f32 %v757, 0.70710677
      %vm820 = vcmp.ge.f32.partialorder %v819, 0.0
      %v821 = vsel %vm820, 1.0, -1.0
      %v822 = vand.u32 2147483647, %v819
      %v823 = vmul.f32 %v822, 0.3275911
      %v824 = vadd.f32 %v823, 1.0
      %v825 = vrcp.pop %v824
      %v826 = vmul.f32 %v824, %v825
      %v827 = vsub.f32 2.0, %v826
      %v828 = vmul.f32 %v825, %v827
      %v829 = vmul.f32 %v828, 1.0614054
      %v830 = vadd.f32 %v829, -1.4531521
      %v831 = vmul.f32 %v830, %v828
      %v832 = vadd.f32 %v831, 1.4214138
      %v833 = vmul.f32 %v832, %v828
      %v834 = vadd.f32 %v833, -0.28449672
      %v835 = vmul.f32 %v834, %v828
      %v836 = vadd.f32 %v835, 0.2548296
      %v837 = vmul.f32 %v836, %v828
      %v838 = vsub.f32 0.0, %v822
      %v839 = vmul.f32 %v838, %v822
      %v840 = vmul.f32 %v839, 1.442695
      %v841 = vpow.pop %v840
      %v842 = vmul.f32 %v837, %v841
      %v843 = vsub.f32 1.0, %v842
      %v844 = vmul.f32 %v821, %v843
      %v845 = vadd.f32 %v844, 1.0
      %v846 = vmul.f32 %v818, %v845
      %v847 = vmul.f32 %v759, 0.5
      %v848 = vmul.f32 %v759, 0.70710677
      %vm849 = vcmp.ge.f32.partialorder %v848, 0.0
      %v850 = vsel %vm849, 1.0, -1.0
      %v851 = vand.u32 2147483647, %v848
      %v852 = vmul.f32 %v851, 0.3275911
      %v853 = vadd.f32 %v852, 1.0
      %v854 = vrcp.pop %v853
      %v855 = vmul.f32 %v853, %v854
      %v856 = vsub.f32 2.0, %v855
      %v857 = vmul.f32 %v854, %v856
      %v858 = vmul.f32 %v857, 1.0614054
      %v859 = vadd.f32 %v858, -1.4531521
      %v860 = vmul.f32 %v859, %v857
      %v861 = vadd.f32 %v860, 1.4214138
      %v862 = vmul.f32 %v861, %v857
      %v863 = vadd.f32 %v862, -0.28449672
      %v864 = vmul.f32 %v863, %v857
      %v865 = vadd.f32 %v864, 0.2548296
      %v866 = vmul.f32 %v865, %v857
      %v867 = vsub.f32 0.0, %v851
      %v868 = vmul.f32 %v867, %v851
      %v869 = vmul.f32 %v868, 1.442695
      %v870 = vpow.pop %v869
      %v871 = vmul.f32 %v866, %v870
      %v872 = vsub.f32 1.0, %v871
      %v873 = vmul.f32 %v850, %v872
      %v874 = vadd.f32 %v873, 1.0
      %v875 = vmul.f32 %v847, %v874
      %v876 = vld [vmem:[%s4] sm:$0xff]
      %v877 = vld [vmem:[%s5] sm:$0xff]
      %879 = vset.pattern.permute.xlu0 0
      %880 = vperm.xlu0 %879, %v877
      %v881 = vpop.permute.xlu0 %880
      %v884 = vsel %vm578, %v876, 0
      %v887 = vsel %vm582, %v788, 0
      %889 = vmatprep.subr.mxu0 0.0
      %890 = vmatpush1.msra.mxu0 %v887
      %891 = vmatprep.subr.mxu0 0.0
      %892 = vmatpush1.msra.mxu0 0.0
      %893 = vmatprep.subr.mxu0 0.0
      %894 = vmatpush1.msra.mxu0 0.0
      %895 = vmatprep.subr.mxu0 0.0
      %896 = vmatpush1.msra.mxu0 0.0
      %897 = vmatprep.subr.mxu0 0.0
      %898 = vmatpush1.msra.mxu0 0.0
      %899 = vmatprep.subr.mxu0 0.0
      %900 = vmatpush1.msra.mxu0 0.0
      %901 = vmatprep.subr.mxu0 0.0
      %902 = vmatpush1.msra.mxu0 0.0
      %903 = vmatprep.subr.mxu0 0.0
      %904 = vmatpush1.msra.mxu0 0.0
      %905 = vmatprep.subr.mxu0 0.0
      %906 = vmatpush1.msra.mxu0 0.0
      %907 = vmatprep.subr.mxu0 0.0
      %908 = vmatpush1.msra.mxu0 0.0
      %909 = vmatprep.subr.mxu0 0.0
      %910 = vmatpush1.msra.mxu0 0.0
      %911 = vmatprep.subr.mxu0 0.0
      %912 = vmatpush1.msra.mxu0 0.0
      %913 = vmatprep.subr.mxu0 0.0
      %914 = vmatpush1.msra.mxu0 0.0
      %915 = vmatprep.subr.mxu0 0.0
      %916 = vmatpush1.msra.mxu0 0.0
      %917 = vmatprep.subr.mxu0 0.0
      %918 = vmatpush1.msra.mxu0 0.0
      %919 = vmatprep.subr.mxu0 0.0
      %920 = vmatpush1.msra.mxu0 0.0
      %921 = vmatprep.subr.mxu0 0.0
      %922 = vmatpush1.msra.mxu0 0.0
      %923 = vmatprep.subr.mxu0 0.0
      %924 = vmatpush1.msra.mxu0 0.0
      %925 = vmatprep.subr.mxu0 0.0
      %926 = vmatpush1.msra.mxu0 0.0
      %927 = vmatprep.subr.mxu0 0.0
      %928 = vmatpush1.msra.mxu0 0.0
      %929 = vmatprep.subr.mxu0 0.0
      %930 = vmatpush1.msra.mxu0 0.0
      %931 = vmatprep.subr.mxu0 0.0
      %932 = vmatpush1.msra.mxu0 0.0
      %933 = vmatprep.subr.mxu0 0.0
      %934 = vmatpush1.msra.mxu0 0.0
      %935 = vmatprep.subr.mxu0 0.0
      %936 = vmatpush1.msra.mxu0 0.0
      %937 = vmatprep.subr.mxu0 0.0
      %938 = vmatpush1.msra.mxu0 0.0
      %939 = vmatprep.subr.mxu0 0.0
      %940 = vmatpush1.msra.mxu0 0.0
      %941 = vmatprep.subr.mxu0 0.0
      %942 = vmatpush1.msra.mxu0 0.0
      %943 = vmatprep.subr.mxu0 0.0
      %944 = vmatpush1.msra.mxu0 0.0
      %945 = vmatprep.subr.mxu0 0.0
      %946 = vmatpush1.msra.mxu0 0.0
      %947 = vmatprep.subr.mxu0 0.0
      %948 = vmatpush1.msra.mxu0 0.0
      %949 = vmatprep.subr.mxu0 0.0
      %950 = vmatpush1.msra.mxu0 0.0
      %951 = vmatprep.subr.mxu0 0.0
      %952 = vmatpush1.msra.mxu0 0.0
      %953 = vmatprep.mubr.f32.mxu0 0.0
      %954 = vmatmul.mubr.f32.gmra.mrb[0].mxu0 %v884
      %v955 = vpop.f32.mrb[0].mxu0
      %v956 = vadd.f32 %v881, %v955
      %v957 = vpop.f32.mrb[0].mxu0
      %958 = vdwg.mxu0
      %v960 = vrot.slane %v817, 4
      %v961 = vsel %vm582, %v960, 0
      %963 = vmatprep.subr.mxu0 0.0
      %964 = vmatpush1.msra.mxu0 %v961
      %965 = vmatprep.subr.mxu0 0.0
      %966 = vmatpush1.msra.mxu0 0.0
      %967 = vmatprep.subr.mxu0 0.0
      %968 = vmatpush1.msra.mxu0 0.0
      %969 = vmatprep.subr.mxu0 0.0
      %970 = vmatpush1.msra.mxu0 0.0
      %971 = vmatprep.subr.mxu0 0.0
      %972 = vmatpush1.msra.mxu0 0.0
      %973 = vmatprep.subr.mxu0 0.0
      %974 = vmatpush1.msra.mxu0 0.0
      %975 = vmatprep.subr.mxu0 0.0
      %976 = vmatpush1.msra.mxu0 0.0
      %977 = vmatprep.subr.mxu0 0.0
      %978 = vmatpush1.msra.mxu0 0.0
      %979 = vmatprep.subr.mxu0 0.0
      %980 = vmatpush1.msra.mxu0 0.0
      %981 = vmatprep.subr.mxu0 0.0
      %982 = vmatpush1.msra.mxu0 0.0
      %983 = vmatprep.subr.mxu0 0.0
      %984 = vmatpush1.msra.mxu0 0.0
      %985 = vmatprep.subr.mxu0 0.0
      %986 = vmatpush1.msra.mxu0 0.0
      %987 = vmatprep.subr.mxu0 0.0
      %988 = vmatpush1.msra.mxu0 0.0
      %989 = vmatprep.subr.mxu0 0.0
      %990 = vmatpush1.msra.mxu0 0.0
      %991 = vmatprep.subr.mxu0 0.0
      %992 = vmatpush1.msra.mxu0 0.0
      %993 = vmatprep.subr.mxu0 0.0
      %994 = vmatpush1.msra.mxu0 0.0
      %995 = vmatprep.subr.mxu0 0.0
      %996 = vmatpush1.msra.mxu0 0.0
      %997 = vmatprep.subr.mxu0 0.0
      %998 = vmatpush1.msra.mxu0 0.0
      %999 = vmatprep.subr.mxu0 0.0
      %1000 = vmatpush1.msra.mxu0 0.0
      %1001 = vmatprep.subr.mxu0 0.0
      %1002 = vmatpush1.msra.mxu0 0.0
      %1003 = vmatprep.subr.mxu0 0.0
      %1004 = vmatpush1.msra.mxu0 0.0
      %1005 = vmatprep.subr.mxu0 0.0
      %1006 = vmatpush1.msra.mxu0 0.0
      %1007 = vmatprep.subr.mxu0 0.0
      %1008 = vmatpush1.msra.mxu0 0.0
      %1009 = vmatprep.subr.mxu0 0.0
      %1010 = vmatpush1.msra.mxu0 0.0
      %1011 = vmatprep.subr.mxu0 0.0
      %1012 = vmatpush1.msra.mxu0 0.0
      %1013 = vmatprep.subr.mxu0 0.0
      %1014 = vmatpush1.msra.mxu0 0.0
      %1015 = vmatprep.subr.mxu0 0.0
      %1016 = vmatpush1.msra.mxu0 0.0
      %1017 = vmatprep.subr.mxu0 0.0
      %1018 = vmatpush1.msra.mxu0 0.0
      %1019 = vmatprep.subr.mxu0 0.0
      %1020 = vmatpush1.msra.mxu0 0.0
      %1021 = vmatprep.subr.mxu0 0.0
      %1022 = vmatpush1.msra.mxu0 0.0
      %1023 = vmatprep.subr.mxu0 0.0
      %1024 = vmatpush1.msra.mxu0 0.0
      %1025 = vmatprep.subr.mxu0 0.0
      %1026 = vmatpush1.msra.mxu0 0.0
      %1027 = vmatprep.mubr.f32.mxu0 0.0
      %1028 = vmatmul.mubr.f32.gmra.mrb[0].mxu0 %v884
      %v1029 = vpop.f32.mrb[0].mxu0
      %v1030 = vadd.f32 %v881, %v1029
      %v1031 = vpop.f32.mrb[0].mxu0
      %1032 = vdwg.mxu0
      %v1034 = vsel %vm582, %v846, 0
      %1036 = vmatprep.subr.mxu0 0.0
      %1037 = vmatpush1.msra.mxu0 %v1034
      %1038 = vmatprep.subr.mxu0 0.0
      %1039 = vmatpush1.msra.mxu0 0.0
      %1040 = vmatprep.subr.mxu0 0.0
      %1041 = vmatpush1.msra.mxu0 0.0
      %1042 = vmatprep.subr.mxu0 0.0
      %1043 = vmatpush1.msra.mxu0 0.0
      %1044 = vmatprep.subr.mxu0 0.0
      %1045 = vmatpush1.msra.mxu0 0.0
      %1046 = vmatprep.subr.mxu0 0.0
      %1047 = vmatpush1.msra.mxu0 0.0
      %1048 = vmatprep.subr.mxu0 0.0
      %1049 = vmatpush1.msra.mxu0 0.0
      %1050 = vmatprep.subr.mxu0 0.0
      %1051 = vmatpush1.msra.mxu0 0.0
      %1052 = vmatprep.subr.mxu0 0.0
      %1053 = vmatpush1.msra.mxu0 0.0
      %1054 = vmatprep.subr.mxu0 0.0
      %1055 = vmatpush1.msra.mxu0 0.0
      %1056 = vmatprep.subr.mxu0 0.0
      %1057 = vmatpush1.msra.mxu0 0.0
      %1058 = vmatprep.subr.mxu0 0.0
      %1059 = vmatpush1.msra.mxu0 0.0
      %1060 = vmatprep.subr.mxu0 0.0
      %1061 = vmatpush1.msra.mxu0 0.0
      %1062 = vmatprep.subr.mxu0 0.0
      %1063 = vmatpush1.msra.mxu0 0.0
      %1064 = vmatprep.subr.mxu0 0.0
      %1065 = vmatpush1.msra.mxu0 0.0
      %1066 = vmatprep.subr.mxu0 0.0
      %1067 = vmatpush1.msra.mxu0 0.0
      %1068 = vmatprep.subr.mxu0 0.0
      %1069 = vmatpush1.msra.mxu0 0.0
      %1070 = vmatprep.subr.mxu0 0.0
      %1071 = vmatpush1.msra.mxu0 0.0
      %1072 = vmatprep.subr.mxu0 0.0
      %1073 = vmatpush1.msra.mxu0 0.0
      %1074 = vmatprep.subr.mxu0 0.0
      %1075 = vmatpush1.msra.mxu0 0.0
      %1076 = vmatprep.subr.mxu0 0.0
      %1077 = vmatpush1.msra.mxu0 0.0
      %1078 = vmatprep.subr.mxu0 0.0
      %1079 = vmatpush1.msra.mxu0 0.0
      %1080 = vmatprep.subr.mxu0 0.0
      %1081 = vmatpush1.msra.mxu0 0.0
      %1082 = vmatprep.subr.mxu0 0.0
      %1083 = vmatpush1.msra.mxu0 0.0
      %1084 = vmatprep.subr.mxu0 0.0
      %1085 = vmatpush1.msra.mxu0 0.0
      %1086 = vmatprep.subr.mxu0 0.0
      %1087 = vmatpush1.msra.mxu0 0.0
      %1088 = vmatprep.subr.mxu0 0.0
      %1089 = vmatpush1.msra.mxu0 0.0
      %1090 = vmatprep.subr.mxu0 0.0
      %1091 = vmatpush1.msra.mxu0 0.0
      %1092 = vmatprep.subr.mxu0 0.0
      %1093 = vmatpush1.msra.mxu0 0.0
      %1094 = vmatprep.subr.mxu0 0.0
      %1095 = vmatpush1.msra.mxu0 0.0
      %1096 = vmatprep.subr.mxu0 0.0
      %1097 = vmatpush1.msra.mxu0 0.0
      %1098 = vmatprep.subr.mxu0 0.0
      %1099 = vmatpush1.msra.mxu0 0.0
      %1100 = vmatprep.mubr.f32.mxu0 0.0
      %1101 = vmatmul.mubr.f32.gmra.mrb[0].mxu0 %v884
      %v1102 = vpop.f32.mrb[0].mxu0
      %v1103 = vadd.f32 %v881, %v1102
      %v1104 = vpop.f32.mrb[0].mxu0
      %1105 = vdwg.mxu0
      %v1107 = vrot.slane %v875, 4
      %v1108 = vsel %vm582, %v1107, 0
      %1110 = vmatprep.subr.mxu0 0.0
      %1111 = vmatpush1.msra.mxu0 %v1108
      %1112 = vmatprep.subr.mxu0 0.0
      %1113 = vmatpush1.msra.mxu0 0.0
      %1114 = vmatprep.subr.mxu0 0.0
      %1115 = vmatpush1.msra.mxu0 0.0
      %1116 = vmatprep.subr.mxu0 0.0
      %1117 = vmatpush1.msra.mxu0 0.0
      %1118 = vmatprep.subr.mxu0 0.0
      %1119 = vmatpush1.msra.mxu0 0.0
      %1120 = vmatprep.subr.mxu0 0.0
      %1121 = vmatpush1.msra.mxu0 0.0
      %1122 = vmatprep.subr.mxu0 0.0
      %1123 = vmatpush1.msra.mxu0 0.0
      %1124 = vmatprep.subr.mxu0 0.0
      %1125 = vmatpush1.msra.mxu0 0.0
      %1126 = vmatprep.subr.mxu0 0.0
      %1127 = vmatpush1.msra.mxu0 0.0
      %1128 = vmatprep.subr.mxu0 0.0
      %1129 = vmatpush1.msra.mxu0 0.0
      %1130 = vmatprep.subr.mxu0 0.0
      %1131 = vmatpush1.msra.mxu0 0.0
      %1132 = vmatprep.subr.mxu0 0.0
      %1133 = vmatpush1.msra.mxu0 0.0
      %1134 = vmatprep.subr.mxu0 0.0
      %1135 = vmatpush1.msra.mxu0 0.0
      %1136 = vmatprep.subr.mxu0 0.0
      %1137 = vmatpush1.msra.mxu0 0.0
      %1138 = vmatprep.subr.mxu0 0.0
      %1139 = vmatpush1.msra.mxu0 0.0
      %1140 = vmatprep.subr.mxu0 0.0
      %1141 = vmatpush1.msra.mxu0 0.0
      %1142 = vmatprep.subr.mxu0 0.0
      %1143 = vmatpush1.msra.mxu0 0.0
      %1144 = vmatprep.subr.mxu0 0.0
      %1145 = vmatpush1.msra.mxu0 0.0
      %1146 = vmatprep.subr.mxu0 0.0
      %1147 = vmatpush1.msra.mxu0 0.0
      %1148 = vmatprep.subr.mxu0 0.0
      %1149 = vmatpush1.msra.mxu0 0.0
      %1150 = vmatprep.subr.mxu0 0.0
      %1151 = vmatpush1.msra.mxu0 0.0
      %1152 = vmatprep.subr.mxu0 0.0
      %1153 = vmatpush1.msra.mxu0 0.0
      %1154 = vmatprep.subr.mxu0 0.0
      %1155 = vmatpush1.msra.mxu0 0.0
      %1156 = vmatprep.subr.mxu0 0.0
      %1157 = vmatpush1.msra.mxu0 0.0
      %1158 = vmatprep.subr.mxu0 0.0
      %1159 = vmatpush1.msra.mxu0 0.0
      %1160 = vmatprep.subr.mxu0 0.0
      %1161 = vmatpush1.msra.mxu0 0.0
      %1162 = vmatprep.subr.mxu0 0.0
      %1163 = vmatpush1.msra.mxu0 0.0
      %1164 = vmatprep.subr.mxu0 0.0
      %1165 = vmatpush1.msra.mxu0 0.0
      %1166 = vmatprep.subr.mxu0 0.0
      %1167 = vmatpush1.msra.mxu0 0.0
      %1168 = vmatprep.subr.mxu0 0.0
      %1169 = vmatpush1.msra.mxu0 0.0
      %1170 = vmatprep.subr.mxu0 0.0
      %1171 = vmatpush1.msra.mxu0 0.0
      %1172 = vmatprep.subr.mxu0 0.0
      %1173 = vmatpush1.msra.mxu0 0.0
      %1174 = vmatprep.mubr.f32.mxu0 0.0
      %1175 = vmatmul.mubr.f32.gmra.mrb[0].mxu0 %v884
      %v1176 = vpop.f32.mrb[0].mxu0
      %v1177 = vadd.f32 %v881, %v1176
      %v1178 = vpop.f32.mrb[0].mxu0
      %1179 = vdwg.mxu0
      %v1180 = vld [vmem:[%s9] sm:$0xff]
      %v1181 = vld [vmem:[%s10] sm:$0xff]
      %v1182 = vld [vmem:[%s11] sm:$0xff]
      %vm1183 = vcmask 130048
      %v1184 = vsel %vm1183, %v956, 0.0
      %1185 = vadd.xlane.f32.xlu0 %v1184
      %v1186 = vpop.xlane.xlu0 %1185
      %v1187 = vmul.f32 %v956, %v956
      %v1188 = vsel %vm1183, %v1187, 0.0
      %1189 = vadd.xlane.f32.xlu0 %v1188
      %v1190 = vpop.xlane.xlu0 %1189
      %v1191 = vsel %vm1183, %v1030, 0.0
      %1192 = vadd.xlane.f32.xlu0 %v1191
      %v1193 = vpop.xlane.xlu0 %1192
      %v1194 = vmul.f32 %v1030, %v1030
      %v1195 = vsel %vm1183, %v1194, 0.0
      %1196 = vadd.xlane.f32.xlu0 %v1195
      %v1197 = vpop.xlane.xlu0 %1196
      %v1198 = vadd.f32 %v1186, %v1193
      %v1199 = vadd.f32 %v1190, %v1197
      %v1200 = vsel %vm1183, %v1103, 0.0
      %1201 = vadd.xlane.f32.xlu0 %v1200
      %v1202 = vpop.xlane.xlu0 %1201
      %v1203 = vmul.f32 %v1103, %v1103
      %v1204 = vsel %vm1183, %v1203, 0.0
      %1205 = vadd.xlane.f32.xlu0 %v1204
      %v1206 = vpop.xlane.xlu0 %1205
      %v1207 = vadd.f32 %v1198, %v1202
      %v1208 = vadd.f32 %v1199, %v1206
      %v1209 = vsel %vm1183, %v1177, 0.0
      %1210 = vadd.xlane.f32.xlu0 %v1209
      %v1211 = vpop.xlane.xlu0 %1210
      %v1212 = vmul.f32 %v1177, %v1177
      %v1213 = vsel %vm1183, %v1212, 0.0
      %1214 = vadd.xlane.f32.xlu0 %v1213
      %v1215 = vpop.xlane.xlu0 %1214
      %v1216 = vadd.f32 %v1207, %v1211
      %v1217 = vadd.f32 %v1208, %v1215
      %v1219 = vsel %vm433, %v1180, 0
      %1221 = vmatprep.subr.mxu0 0.0
      %1222 = vmatpush1.msra.mxu0 %v1216
      %1223 = vmatprep.subr.mxu0 0.0
      %1224 = vmatpush1.msra.mxu0 0.0
      %1225 = vmatprep.subr.mxu0 0.0
      %1226 = vmatpush1.msra.mxu0 0.0
      %1227 = vmatprep.subr.mxu0 0.0
      %1228 = vmatpush1.msra.mxu0 0.0
      %1229 = vmatprep.subr.mxu0 0.0
      %1230 = vmatpush1.msra.mxu0 0.0
      %1231 = vmatprep.subr.mxu0 0.0
      %1232 = vmatpush1.msra.mxu0 0.0
      %1233 = vmatprep.subr.mxu0 0.0
      %1234 = vmatpush1.msra.mxu0 0.0
      %1235 = vmatprep.subr.mxu0 0.0
      %1236 = vmatpush1.msra.mxu0 0.0
      %1237 = vmatprep.subr.mxu0 0.0
      %1238 = vmatpush1.msra.mxu0 0.0
      %1239 = vmatprep.subr.mxu0 0.0
      %1240 = vmatpush1.msra.mxu0 0.0
      %1241 = vmatprep.subr.mxu0 0.0
      %1242 = vmatpush1.msra.mxu0 0.0
      %1243 = vmatprep.subr.mxu0 0.0
      %1244 = vmatpush1.msra.mxu0 0.0
      %1245 = vmatprep.subr.mxu0 0.0
      %1246 = vmatpush1.msra.mxu0 0.0
      %1247 = vmatprep.subr.mxu0 0.0
      %1248 = vmatpush1.msra.mxu0 0.0
      %1249 = vmatprep.subr.mxu0 0.0
      %1250 = vmatpush1.msra.mxu0 0.0
      %1251 = vmatprep.subr.mxu0 0.0
      %1252 = vmatpush1.msra.mxu0 0.0
      %1253 = vmatprep.subr.mxu0 0.0
      %1254 = vmatpush1.msra.mxu0 0.0
      %1255 = vmatprep.subr.mxu0 0.0
      %1256 = vmatpush1.msra.mxu0 0.0
      %1257 = vmatprep.subr.mxu0 0.0
      %1258 = vmatpush1.msra.mxu0 0.0
      %1259 = vmatprep.subr.mxu0 0.0
      %1260 = vmatpush1.msra.mxu0 0.0
      %1261 = vmatprep.subr.mxu0 0.0
      %1262 = vmatpush1.msra.mxu0 0.0
      %1263 = vmatprep.subr.mxu0 0.0
      %1264 = vmatpush1.msra.mxu0 0.0
      %1265 = vmatprep.subr.mxu0 0.0
      %1266 = vmatpush1.msra.mxu0 0.0
      %1267 = vmatprep.subr.mxu0 0.0
      %1268 = vmatpush1.msra.mxu0 0.0
      %1269 = vmatprep.subr.mxu0 0.0
      %1270 = vmatpush1.msra.mxu0 0.0
      %1271 = vmatprep.subr.mxu0 0.0
      %1272 = vmatpush1.msra.mxu0 0.0
      %1273 = vmatprep.subr.mxu0 0.0
      %1274 = vmatpush1.msra.mxu0 0.0
      %1275 = vmatprep.subr.mxu0 0.0
      %1276 = vmatpush1.msra.mxu0 0.0
      %1277 = vmatprep.subr.mxu0 0.0
      %1278 = vmatpush1.msra.mxu0 0.0
      %1279 = vmatprep.subr.mxu0 0.0
      %1280 = vmatpush1.msra.mxu0 0.0
      %1281 = vmatprep.subr.mxu0 0.0
      %1282 = vmatpush1.msra.mxu0 0.0
      %1283 = vmatprep.subr.mxu0 0.0
      %1284 = vmatpush1.msra.mxu0 0.0
      %1285 = vmatprep.mubr.f32.mxu0 0.0
      %1286 = vmatmul.mubr.f32.gmra.mrb[0].mxu0 %v1219
      %v1287 = vpop.f32.mrb[0].mxu0
      %v1288 = vadd.f32 0.0, %v1287
      %v1289 = vpop.f32.mrb[0].mxu0
      %1290 = vdwg.mxu0
      %v1291 = vmul.f32 %v1288, 0.0078125
      %1292 = vmatprep.subr.mxu0 0.0
      %1293 = vmatpush1.msra.mxu0 %v1217
      %1294 = vmatprep.subr.mxu0 0.0
      %1295 = vmatpush1.msra.mxu0 0.0
      %1296 = vmatprep.subr.mxu0 0.0
      %1297 = vmatpush1.msra.mxu0 0.0
      %1298 = vmatprep.subr.mxu0 0.0
      %1299 = vmatpush1.msra.mxu0 0.0
      %1300 = vmatprep.subr.mxu0 0.0
      %1301 = vmatpush1.msra.mxu0 0.0
      %1302 = vmatprep.subr.mxu0 0.0
      %1303 = vmatpush1.msra.mxu0 0.0
      %1304 = vmatprep.subr.mxu0 0.0
      %1305 = vmatpush1.msra.mxu0 0.0
      %1306 = vmatprep.subr.mxu0 0.0
      %1307 = vmatpush1.msra.mxu0 0.0
      %1308 = vmatprep.subr.mxu0 0.0
      %1309 = vmatpush1.msra.mxu0 0.0
      %1310 = vmatprep.subr.mxu0 0.0
      %1311 = vmatpush1.msra.mxu0 0.0
      %1312 = vmatprep.subr.mxu0 0.0
      %1313 = vmatpush1.msra.mxu0 0.0
      %1314 = vmatprep.subr.mxu0 0.0
      %1315 = vmatpush1.msra.mxu0 0.0
      %1316 = vmatprep.subr.mxu0 0.0
      %1317 = vmatpush1.msra.mxu0 0.0
      %1318 = vmatprep.subr.mxu0 0.0
      %1319 = vmatpush1.msra.mxu0 0.0
      %1320 = vmatprep.subr.mxu0 0.0
      %1321 = vmatpush1.msra.mxu0 0.0
      %1322 = vmatprep.subr.mxu0 0.0
      %1323 = vmatpush1.msra.mxu0 0.0
      %1324 = vmatprep.subr.mxu0 0.0
      %1325 = vmatpush1.msra.mxu0 0.0
      %1326 = vmatprep.subr.mxu0 0.0
      %1327 = vmatpush1.msra.mxu0 0.0
      %1328 = vmatprep.subr.mxu0 0.0
      %1329 = vmatpush1.msra.mxu0 0.0
      %1330 = vmatprep.subr.mxu0 0.0
      %1331 = vmatpush1.msra.mxu0 0.0
      %1332 = vmatprep.subr.mxu0 0.0
      %1333 = vmatpush1.msra.mxu0 0.0
      %1334 = vmatprep.subr.mxu0 0.0
      %1335 = vmatpush1.msra.mxu0 0.0
      %1336 = vmatprep.subr.mxu0 0.0
      %1337 = vmatpush1.msra.mxu0 0.0
      %1338 = vmatprep.subr.mxu0 0.0
      %1339 = vmatpush1.msra.mxu0 0.0
      %1340 = vmatprep.subr.mxu0 0.0
      %1341 = vmatpush1.msra.mxu0 0.0
      %1342 = vmatprep.subr.mxu0 0.0
      %1343 = vmatpush1.msra.mxu0 0.0
      %1344 = vmatprep.subr.mxu0 0.0
      %1345 = vmatpush1.msra.mxu0 0.0
      %1346 = vmatprep.subr.mxu0 0.0
      %1347 = vmatpush1.msra.mxu0 0.0
      %1348 = vmatprep.subr.mxu0 0.0
      %1349 = vmatpush1.msra.mxu0 0.0
      %1350 = vmatprep.subr.mxu0 0.0
      %1351 = vmatpush1.msra.mxu0 0.0
      %1352 = vmatprep.subr.mxu0 0.0
      %1353 = vmatpush1.msra.mxu0 0.0
      %1354 = vmatprep.subr.mxu0 0.0
      %1355 = vmatpush1.msra.mxu0 0.0
      %1356 = vmatprep.mubr.f32.mxu0 0.0
      %1357 = vmatmul.mubr.f32.gmra.mrb[0].mxu0 %v1219
      %v1358 = vpop.f32.mrb[0].mxu0
      %v1359 = vadd.f32 0.0, %v1358
      %v1360 = vpop.f32.mrb[0].mxu0
      %1361 = vdwg.mxu0
      %v1362 = vmul.f32 %v1359, 0.0078125
      %v1363 = vmul.f32 %v1291, %v1291
      %v1364 = vsub.f32 %v1362, %v1363
      %v1365 = vadd.f32 %v1364, 1e-05
      %v1366 = vrsqrt.pop %v1365
      %v1367 = vmul.f32 %v1366, %v1181
      %v1368 = vmul.f32 %v1291, %v1367
      %v1369 = vsub.f32 %v1182, %v1368
      %1371 = vset.pattern.permute.xlu0 0
      %1372 = vperm.xlu0 %1371, %v1367
      %v1373 = vpop.permute.xlu0 %1372
      %v1375 = vmul.f32 %v956, %v1373
      %1377 = vset.pattern.permute.xlu0 0
      %1378 = vperm.xlu0 %1377, %v1369
      %v1379 = vpop.permute.xlu0 %1378
      %v1381 = vadd.f32 %v1375, %v1379
      %v1382 = vmul.f32 %v1030, %v1373
      %v1383 = vadd.f32 %v1382, %v1379
      %v1384 = vmul.f32 %v1103, %v1373
      %v1385 = vadd.f32 %v1384, %v1379
      %v1386 = vmul.f32 %v1177, %v1373
      %v1387 = vadd.f32 %v1386, %v1379
      %v1388 = vxor.u32 %v1381, 2147483648
      %v1389 = vmul.f32 %v1388, 1.442695
      %v1390 = vpow.pop %v1389
      %v1391 = vadd.f32 %v1390, 1.0
      %v1392 = vrcp.pop %v1391
      %v1393 = vmul.f32 1.0, %v1392
      %v1395 = vrot.slane %v1393, 4
      %v1397 = vmul.f32 %v1381, %v1395
      %1398 = vst.msk [vmem:[%s427] sm:$0xf] %vm530, %v1397
      %v1399 = vxor.u32 %v1383, 2147483648
      %v1400 = vmul.f32 %v1399, 1.442695
      %v1401 = vpow.pop %v1400
      %v1402 = vadd.f32 %v1401, 1.0
      %v1403 = vrcp.pop %v1402
      %v1404 = vmul.f32 1.0, %v1403
      %v1406 = vrot.slane %v1404, 4
      %v1408 = vmul.f32 %v1383, %v1406
      %s1409 = scalar_lea.vmem %s427, 4
      %1410 = vst.msk [vmem:[%s1409] sm:$0xf] %vm530, %v1408
      %v1411 = vxor.u32 %v1385, 2147483648
      %v1412 = vmul.f32 %v1411, 1.442695
      %v1413 = vpow.pop %v1412
      %v1414 = vadd.f32 %v1413, 1.0
      %v1415 = vrcp.pop %v1414
      %v1416 = vmul.f32 1.0, %v1415
      %v1418 = vrot.slane %v1416, 4
      %v1420 = vmul.f32 %v1385, %v1418
      %s1421 = scalar_lea.vmem %s427, 8
      %1422 = vst.msk [vmem:[%s1421] sm:$0xf] %vm530, %v1420
      %v1423 = vxor.u32 %v1387, 2147483648
      %v1424 = vmul.f32 %v1423, 1.442695
      %v1425 = vpow.pop %v1424
      %v1426 = vadd.f32 %v1425, 1.0
      %v1427 = vrcp.pop %v1426
      %v1428 = vmul.f32 1.0, %v1427
      %v1430 = vrot.slane %v1428, 4
      %v1432 = vmul.f32 %v1387, %v1430
      %s1433 = scalar_lea.vmem %s427, 12
      %1434 = vst.msk [vmem:[%s1433] sm:$0xf] %vm530, %v1432
      %p1435 = scmp.lt.s32.totalorder %s23, 1
      %s1436 = scalar_select %p1435, %s23, 1
      %s1437 = smul.addr %s1436, 4
      %s1438 = smul.addr %s1437, 4
      %s1439 = scalar_lea.vmem %s12, %s1438
      // Predicated region
      $region69: #{demucs_decoder_forward.9} parent=67 // pred_check
        %p1440 = pneg %p303
      $region70: #{demucs_decoder_forward.9} parent=67 // pred_check_branch
        %1442 = sbr.rel (%p1440) target = $region72
      $region71: #{demucs_decoder_forward.9} parent=67 // pred_region
        _
      $region72: #{demucs_decoder_forward.9} parent=67 // pred_fallthru
        _
    $region68: #{demucs_decoder_forward.9} parent=5 // pred_fallthru
      _
    %p1443 = scmp.le.s32.totalorder 2, %s18
    // Predicated region
    $region73: #{demucs_decoder_forward.9} parent=5 // pred_check
      %p1444 = pneg %p1443
    $region74: #{demucs_decoder_forward.9} parent=5 // pred_check_branch
      %1446 = sbr.rel (%p1444) target = $region76
    $region75: #{demucs_decoder_forward.9} parent=5 // pred_region
      %s1447 = ssub.s32 %s18, 2
      // Predicated region
      $region77: #{demucs_decoder_forward.9} parent=75 // pred_check
        %p1448 = pneg %p309
      $region78: #{demucs_decoder_forward.9} parent=75 // pred_check_branch
        %1450 = sbr.rel (%p1448) target = $region80
      $region79: #{demucs_decoder_forward.9} parent=75 // pred_region
        %p1451 = scmp.lt.s32.totalorder %s24, 1
        %s1452 = scalar_select %p1451, %s24, 1
        %s1453 = smul.addr %s1452, 4
        %s1454 = smul.addr %s1453, 4
        %s1455 = scalar_lea.vmem %s12, %s1454
      $region80: #{demucs_decoder_forward.9} parent=75 // pred_fallthru
        _
    $region76: #{demucs_decoder_forward.9} parent=5 // pred_fallthru
      _
  $region6: #{demucs_decoder_forward.9} parent=0 // loop_footer
    %s22 = sadd.s32 1, %s18
  $region7: #{demucs_decoder_forward.9} parent=0 // loop_footer_branch
    %17 = sbr.rel target = $region3
  $region8: #{demucs_decoder_forward.9} parent=0 // loop_exit
    _

// kernel: demucs_decoder_forward.8
$region0: #{demucs_decoder_forward.8}
  #allocation0 [shape = 'u32[]', space=smem, size = 0x4, offset = 0x4, fixed_abs, tag = 'smem constant byte address 0x4 - core index']
  #allocation1 [shape = 'u32[144,128]{1,0:T(1,128)}', space=vmem, size = 0x12000, scoped, tag = 'internal scratch']
  %s0 = inlined_call_operand.vmem [shape: f32[2,4,34], index: 0, kind: input, shape index: {}]
  %s1 = inlined_call_operand.vmem [shape: f32[2,4,34], index: 1, kind: input, shape index: {}]
  %s2 = inlined_call_operand.vmem [shape: f32[8,4], index: 2, kind: input, shape index: {}]
  %s3 = inlined_call_operand.vmem [shape: f32[2,1], index: 3, kind: input, shape index: {}]
  %s4 = inlined_call_operand.vmem [shape: f32[4,2], index: 4, kind: input, shape index: {}]
  %s5 = inlined_call_operand.vmem [shape: f32[4,1], index: 5, kind: input, shape index: {}]
  %s6 = inlined_call_operand.vmem [shape: f32[2,2,2,32], index: 6, kind: output, shape index: {}]
  %s7 = sld [smem:[#allocation0]]
  $region57: #{demucs_decoder_forward.8} parent=0
    _
  %s9 = ssub.s32 1, %s7
  %s10 = scalar_select 0, %s9, %s7
  loop: start=0, step=1, limit=4
  $region2: #{demucs_decoder_forward.8} parent=0 // loop_pre_header
    _
  $region3: #{demucs_decoder_forward.8} parent=0 // loop_header
    %s12 = sphi 0, %s16
    %p13 = scmp.ge.s32.totalorder %s12, 4
    %s22 = sphi 0, %s24
    %s25 = sphi 0, %s22
    %s26 = sphi 0, %s25
    %s42 = sphi 0, %s26
    %s48 = sphi 0, %s50
    %s51 = sphi 0, %s48
    %s52 = sphi 0, %s51
    %s68 = sphi 0, %s52
    %s72 = sphi 0, %s72
    %s74 = sphi 0, %s72
    %s75 = sphi 0, %s74
    %s89 = sphi 0, %s75
    %s93 = sphi 0, %s93
    %s95 = sphi 0, %s93
    %s96 = sphi 0, %s95
    %s110 = sphi 0, %s96
    %s114 = sphi 0, %s114
    %s116 = sphi 0, %s114
    %s117 = sphi 0, %s116
    %s131 = sphi 0, %s117
    %s135 = sphi 0, %s135
    %s137 = sphi 0, %s135
    %s138 = sphi 0, %s137
    %s152 = sphi 0, %s138
    %s158 = sphi 0, %s160
    %s161 = sphi 0, %s158
    %s162 = sphi 0, %s161
    %s178 = sphi 0, %s162
  $region4: #{demucs_decoder_forward.8} parent=0 // loop_header_branch
    %15 = sbr.rel (%p13) target = $region8
  $region5: #{demucs_decoder_forward.8} parent=0 // loop_body
    %s17 = ssub.s32 %s12, 1
    %s18 = ssub.s32 %s12, 2
    %s19 = sadd.s32 %s12, 1
    %s20 = ssub.s32 %s12, %s19
    %p21 = scmp.eq.s32.totalorder %s20, 0
    %s23 = sadd.s32 %s22, 1
    %s24 = scalar_select %p21, %s22, %s23
    %p27 = pneg %p21
    %p28 = scmp.eq.s32.totalorder %s12, 1
    %p29 = por %p27, %p28
    %p30 = scmp.ne.s32.totalorder %s22, %s25
    %p31 = scmp.eq.s32.totalorder %s12, 0
    %p32 = por %p30, %p31
    %p33 = scmp.ne.s32.totalorder %s22, %s25
    %p34 = scmp.eq.s32.totalorder %s17, 1
    %p35 = por %p33, %p34
    %p36 = scmp.ne.s32.totalorder %s25, %s26
    %p37 = scmp.eq.s32.totalorder %s17, 0
    %p38 = por %p36, %p37
    %p39 = scmp.ne.s32.totalorder %s25, %s26
    %p40 = scmp.eq.s32.totalorder %s18, 1
    %p41 = por %p39, %p40
    %p43 = scmp.ne.s32.totalorder %s26, %s42
    %p44 = scmp.eq.s32.totalorder %s18, 0
    %p45 = por %p43, %p44
    %s46 = ssub.s32 %s12, %s19
    %p47 = scmp.eq.s32.totalorder %s46, 0
    %s49 = sadd.s32 %s48, 1
    %s50 = scalar_select %p47, %s48, %s49
    %p53 = pneg %p47
    %p54 = scmp.eq.s32.totalorder %s12, 1
    %p55 = por %p53, %p54
    %p56 = scmp.ne.s32.totalorder %s48, %s51
    %p57 = scmp.eq.s32.totalorder %s12, 0
    %p58 = por %p56, %p57
    %p59 = scmp.ne.s32.totalorder %s48, %s51
    %p60 = scmp.eq.s32.totalorder %s17, 1
    %p61 = por %p59, %p60
    %p62 = scmp.ne.s32.totalorder %s51, %s52
    %p63 = scmp.eq.s32.totalorder %s17, 0
    %p64 = por %p62, %p63
    %p65 = scmp.ne.s32.totalorder %s51, %s52
    %p66 = scmp.eq.s32.totalorder %s18, 1
    %p67 = por %p65, %p66
    %p69 = scmp.ne.s32.totalorder %s52, %s68
    %p70 = scmp.eq.s32.totalorder %s18, 0
    %p71 = por %p69, %p70
    %s73 = sadd.s32 %s72, 1
    %p76 = scmp.eq.s32.totalorder %s12, 1
    %p77 = scmp.ne.s32.totalorder %s72, %s74
    %p78 = scmp.eq.s32.totalorder %s12, 0
    %p79 = por %p77, %p78
    %p80 = scmp.ne.s32.totalorder %s72, %s74
    %p81 = scmp.eq.s32.totalorder %s17, 1
    %p82 = por %p80, %p81
    %p83 = scmp.ne.s32.totalorder %s74, %s75
    %p84 = scmp.eq.s32.totalorder %s17, 0
    %p85 = por %p83, %p84
    %p86 = scmp.ne.s32.totalorder %s74, %s75
    %p87 = scmp.eq.s32.totalorder %s18, 1
    %p88 = por %p86, %p87
    %p90 = scmp.ne.s32.totalorder %s75, %s89
    %p91 = scmp.eq.s32.totalorder %s18, 0
    %p92 = por %p90, %p91
    %s94 = sadd.s32 %s93, 1
    %p97 = scmp.eq.s32.totalorder %s12, 1
    %p98 = scmp.ne.s32.totalorder %s93, %s95
    %p99 = scmp.eq.s32.totalorder %s12, 0
    %p100 = por %p98, %p99
    %p101 = scmp.ne.s32.totalorder %s93, %s95
    %p102 = scmp.eq.s32.totalorder %s17, 1
    %p103 = por %p101, %p102
    %p104 = scmp.ne.s32.totalorder %s95, %s96
    %p105 = scmp.eq.s32.totalorder %s17, 0
    %p106 = por %p104, %p105
    %p107 = scmp.ne.s32.totalorder %s95, %s96
    %p108 = scmp.eq.s32.totalorder %s18, 1
    %p109 = por %p107, %p108
    %p111 = scmp.ne.s32.totalorder %s96, %s110
    %p112 = scmp.eq.s32.totalorder %s18, 0
    %p113 = por %p111, %p112
    %s115 = sadd.s32 %s114, 1
    %p118 = scmp.eq.s32.totalorder %s12, 1
    %p119 = scmp.ne.s32.totalorder %s114, %s116
    %p120 = scmp.eq.s32.totalorder %s12, 0
    %p121 = por %p119, %p120
    %p122 = scmp.ne.s32.totalorder %s114, %s116
    %p123 = scmp.eq.s32.totalorder %s17, 1
    %p124 = por %p122, %p123
    %p125 = scmp.ne.s32.totalorder %s116, %s117
    %p126 = scmp.eq.s32.totalorder %s17, 0
    %p127 = por %p125, %p126
    %p128 = scmp.ne.s32.totalorder %s116, %s117
    %p129 = scmp.eq.s32.totalorder %s18, 1
    %p130 = por %p128, %p129
    %p132 = scmp.ne.s32.totalorder %s117, %s131
    %p133 = scmp.eq.s32.totalorder %s18, 0
    %p134 = por %p132, %p133
    %s136 = sadd.s32 %s135, 1
    %p139 = scmp.eq.s32.totalorder %s12, 1
    %p140 = scmp.ne.s32.totalorder %s135, %s137
    %p141 = scmp.eq.s32.totalorder %s12, 0
    %p142 = por %p140, %p141
    %p143 = scmp.ne.s32.totalorder %s135, %s137
    %p144 = scmp.eq.s32.totalorder %s17, 1
    %p145 = por %p143, %p144
    %p146 = scmp.ne.s32.totalorder %s137, %s138
    %p147 = scmp.eq.s32.totalorder %s17, 0
    %p148 = por %p146, %p147
    %p149 = scmp.ne.s32.totalorder %s137, %s138
    %p150 = scmp.eq.s32.totalorder %s18, 1
    %p151 = por %p149, %p150
    %p153 = scmp.ne.s32.totalorder %s138, %s152
    %p154 = scmp.eq.s32.totalorder %s18, 0
    %p155 = por %p153, %p154
    %s156 = ssub.s32 %s12, %s19
    %p157 = scmp.eq.s32.totalorder %s156, 0
    %s159 = sadd.s32 %s158, 1
    %s160 = scalar_select %p157, %s158, %s159
    %p163 = pneg %p157
    %p164 = scmp.eq.s32.totalorder %s12, 1
    %p165 = por %p163, %p164
    %p166 = scmp.ne.s32.totalorder %s158, %s161
    %p167 = scmp.eq.s32.totalorder %s12, 0
    %p168 = por %p166, %p167
    %p169 = scmp.ne.s32.totalorder %s158, %s161
    %p170 = scmp.eq.s32.totalorder %s17, 1
    %p171 = por %p169, %p170
    %p172 = scmp.ne.s32.totalorder %s161, %s162
    %p173 = scmp.eq.s32.totalorder %s17, 0
    %p174 = por %p172, %p173
    %p175 = scmp.ne.s32.totalorder %s161, %s162
    %p176 = scmp.eq.s32.totalorder %s18, 1
    %p177 = por %p175, %p176
    %p179 = scmp.ne.s32.totalorder %s162, %s178
    %p180 = scmp.eq.s32.totalorder %s18, 0
    %p181 = por %p179, %p180
    %p182 = scmp.le.s32.totalorder 1, %s12
    %p183 = scmp.lt.s32.totalorder %s12, 3
    %p184 = pnand %p182, %p183
    %p185 = pneg %p184
    // Predicated region
    $region9: #{demucs_decoder_forward.8} parent=5 // pred_check
      _
    $region10: #{demucs_decoder_forward.8} parent=5 // pred_check_branch
      %187 = sbr.rel (%p184) target = $region12
    $region11: #{demucs_decoder_forward.8} parent=5 // pred_region
      %s188 = ssub.s32 %s12, 1
      // Predicated region
      $region13: #{demucs_decoder_forward.8} parent=11 // pred_check
        %p189 = pneg %p85
      $region14: #{demucs_decoder_forward.8} parent=11 // pred_check_branch
        %191 = sbr.rel (%p189) target = $region16
      $region15: #{demucs_decoder_forward.8} parent=11 // pred_region
        _
      $region16: #{demucs_decoder_forward.8} parent=11 // pred_fallthru
        _
      // Predicated region
      $region17: #{demucs_decoder_forward.8} parent=11 // pred_check
        %p192 = pneg %p106
      $region18: #{demucs_decoder_forward.8} parent=11 // pred_check_branch
        %194 = sbr.rel (%p192) target = $region20
      $region19: #{demucs_decoder_forward.8} parent=11 // pred_region
        _
      $region20: #{demucs_decoder_forward.8} parent=11 // pred_fallthru
        _
      // Predicated region
      $region21: #{demucs_decoder_forward.8} parent=11 // pred_check
        %p195 = pneg %p127
      $region22: #{demucs_decoder_forward.8} parent=11 // pred_check_branch
        %197 = sbr.rel (%p195) target = $region24
      $region23: #{demucs_decoder_forward.8} parent=11 // pred_region
        _
      $region24: #{demucs_decoder_forward.8} parent=11 // pred_fallthru
        _
      // Predicated region
      $region25: #{demucs_decoder_forward.8} parent=11 // pred_check
        %p198 = pneg %p148
      $region26: #{demucs_decoder_forward.8} parent=11 // pred_check_branch
        %200 = sbr.rel (%p198) target = $region28
      $region27: #{demucs_decoder_forward.8} parent=11 // pred_region
        _
      $region28: #{demucs_decoder_forward.8} parent=11 // pred_fallthru
        _
    $region12: #{demucs_decoder_forward.8} parent=5 // pred_fallthru
      _
    %p201 = scmp.lt.s32.totalorder %s12, 2
    // Predicated region
    $region29: #{demucs_decoder_forward.8} parent=5 // pred_check
      %p202 = pneg %p201
    $region30: #{demucs_decoder_forward.8} parent=5 // pred_check_branch
      %204 = sbr.rel (%p202) target = $region32
    $region31: #{demucs_decoder_forward.8} parent=5 // pred_region
      // Predicated region
      $region33: #{demucs_decoder_forward.8} parent=31 // pred_check
        %p205 = pneg %p32
      $region34: #{demucs_decoder_forward.8} parent=31 // pred_check_branch
        %207 = sbr.rel (%p205) target = $region36
      $region35: #{demucs_decoder_forward.8} parent=31 // pred_region
        %p208 = scmp.lt.s32.totalorder %s12, 1
        %s209 = scalar_select %p208, %s12, 1
        %s210 = smul.addr %s209, 4
        %s211 = scalar_lea.vmem %s0, %s210
      $region36: #{demucs_decoder_forward.8} parent=31 // pred_fallthru
        _
      // Predicated region
      $region37: #{demucs_decoder_forward.8} parent=31 // pred_check
        %p212 = pneg %p58
      $region38: #{demucs_decoder_forward.8} parent=31 // pred_check_branch
        %214 = sbr.rel (%p212) target = $region40
      $region39: #{demucs_decoder_forward.8} parent=31 // pred_region
        %p215 = scmp.lt.s32.totalorder %s12, 1
        %s216 = scalar_select %p215, %s12, 1
        %s217 = smul.addr %s216, 4
        %s218 = scalar_lea.vmem %s1, %s217
      $region40: #{demucs_decoder_forward.8} parent=31 // pred_fallthru
        _
    $region32: #{demucs_decoder_forward.8} parent=5 // pred_fallthru
      _
    %p219 = scmp.le.s32.totalorder 1, %s12
    %p220 = scmp.lt.s32.totalorder %s12, 3
    %p221 = pnand %p219, %p220
    %p222 = pneg %p221
    // Predicated region
    $region41: #{demucs_decoder_forward.8} parent=5 // pred_check
      _
    $region42: #{demucs_decoder_forward.8} parent=5 // pred_check_branch
      %224 = sbr.rel (%p221) target = $region44
    $region43: #{demucs_decoder_forward.8} parent=5 // pred_region
      %s225 = ssub.s32 %s12, 1
      %p226 = scmp.lt.s32.totalorder %s17, 1
      %s227 = scalar_select %p226, %s17, 1
      %s228 = smul.addr %s227, 4
      %s229 = scalar_lea.vmem %s0, %s228
      %p230 = pneg %p38
      %p231 = pneg %p35
      %p232 = scmp.lt.s32.totalorder %s17, 1
      %s233 = scalar_select %p232, %s17, 1
      %s234 = smul.addr %s233, 4
      %s235 = scalar_lea.vmem %s1, %s234
      %p236 = pneg %p64
      %p237 = pneg %p61
      %p238 = pneg %p85
      %p239 = pneg %p82
      %p240 = pneg %p106
      %p241 = pneg %p103
      %p242 = pneg %p127
      %p243 = pneg %p124
      %p244 = pneg %p148
      %p245 = pneg %p145
      %p246 = pneg %p174
      %p247 = pneg %p171
      %p248 = scmp.lt.s32.totalorder %s17, 1
      %s249 = scalar_select %p248, %s17, 1
      %s250 = smul.addr %s249, 2
      %s251 = smul.addr %s250, 2
      %s252 = scalar_lea.vmem %s6, %s251
      %p253 = scmp.lt.s32.totalorder %s17, 1
      %s254 = scalar_select %p253, %s17, 1
      %s255 = smul.addr %s254, 4
      %s256 = scalar_lea.vmem %s0, %s255
      %p257 = scmp.lt.s32.totalorder %s17, 1
      %s258 = scalar_select %p257, %s17, 1
      %s259 = smul.addr %s258, 4
      %s260 = scalar_lea.vmem %s1, %s259
      %p261 = scmp.lt.s32.totalorder %s17, 1
      %s262 = scalar_select %p261, %s17, 1
      %s263 = smul.addr %s262, 2
      %s264 = smul.addr %s263, 2
      %s265 = scalar_lea.vmem %s6, %s264
      %v266 = vld [vmem:[%s256] sm:$0xf]
      %v267 = vld [vmem:[%s260] sm:$0xf]
      %v268 = vadd.f32 %v266, %v267
      %v269 = vld [vmem:[%s2] sm:$0xff]
      %vm270 = vcmask 31744
      %v272 = vsel %vm270, %v269, 0
      %vm274 = vcmask 1043456
      %v276 = vsel %vm274, %v268, 0
      %278 = vmatprep.subr.mxu0 0.0
      %279 = vmatpush1.msra.mxu0 %v276
      %280 = vmatprep.subr.mxu0 0.0
      %281 = vmatpush1.msra.mxu0 0.0
      %282 = vmatprep.subr.mxu0 0.0
      %283 = vmatpush1.msra.mxu0 0.0
      %284 = vmatprep.subr.mxu0 0.0
      %285 = vmatpush1.msra.mxu0 0.0
      %286 = vmatprep.subr.mxu0 0.0
      %287 = vmatpush1.msra.mxu0 0.0
      %288 = vmatprep.subr.mxu0 0.0
      %289 = vmatpush1.msra.mxu0 0.0
      %290 = vmatprep.subr.mxu0 0.0
      %291 = vmatpush1.msra.mxu0 0.0
      %292 = vmatprep.subr.mxu0 0.0
      %293 = vmatpush1.msra.mxu0 0.0
      %294 = vmatprep.subr.mxu0 0.0
      %295 = vmatpush1.msra.mxu0 0.0
      %296 = vmatprep.subr.mxu0 0.0
      %297 = vmatpush1.msra.mxu0 0.0
      %298 = vmatprep.subr.mxu0 0.0
      %299 = vmatpush1.msra.mxu0 0.0
      %300 = vmatprep.subr.mxu0 0.0
      %301 = vmatpush1.msra.mxu0 0.0
      %302 = vmatprep.subr.mxu0 0.0
      %303 = vmatpush1.msra.mxu0 0.0
      %304 = vmatprep.subr.mxu0 0.0
      %305 = vmatpush1.msra.mxu0 0.0
      %306 = vmatprep.subr.mxu0 0.0
      %307 = vmatpush1.msra.mxu0 0.0
      %308 = vmatprep.subr.mxu0 0.0
      %309 = vmatpush1.msra.mxu0 0.0
      %310 = vmatprep.subr.mxu0 0.0
      %311 = vmatpush1.msra.mxu0 0.0
      %312 = vmatprep.subr.mxu0 0.0
      %313 = vmatpush1.msra.mxu0 0.0
      %314 = vmatprep.subr.mxu0 0.0
      %315 = vmatpush1.msra.mxu0 0.0
      %316 = vmatprep.subr.mxu0 0.0
      %317 = vmatpush1.msra.mxu0 0.0
      %318 = vmatprep.subr.mxu0 0.0
      %319 = vmatpush1.msra.mxu0 0.0
      %320 = vmatprep.subr.mxu0 0.0
      %321 = vmatpush1.msra.mxu0 0.0
      %322 = vmatprep.subr.mxu0 0.0
      %323 = vmatpush1.msra.mxu0 0.0
      %324 = vmatprep.subr.mxu0 0.0
      %325 = vmatpush1.msra.mxu0 0.0
      %326 = vmatprep.subr.mxu0 0.0
      %327 = vmatpush1.msra.mxu0 0.0
      %328 = vmatprep.subr.mxu0 0.0
      %329 = vmatpush1.msra.mxu0 0.0
      %330 = vmatprep.subr.mxu0 0.0
      %331 = vmatpush1.msra.mxu0 0.0
      %332 = vmatprep.subr.mxu0 0.0
      %333 = vmatpush1.msra.mxu0 0.0
      %334 = vmatprep.subr.mxu0 0.0
      %335 = vmatpush1.msra.mxu0 0.0
      %336 = vmatprep.subr.mxu0 0.0
      %337 = vmatpush1.msra.mxu0 0.0
      %338 = vmatprep.subr.mxu0 0.0
      %339 = vmatpush1.msra.mxu0 0.0
      %340 = vmatprep.subr.mxu0 0.0
      %341 = vmatpush1.msra.mxu0 0.0
      %342 = vmatprep.mubr.f32.mxu0 0.0
      %343 = vmatmul.mubr.f32.gmra.mrb[0].mxu0 %v272
      %v344 = vpop.f32.mrb[0].mxu0
      %v345 = vadd.f32 0.0, %v344
      %v346 = vpop.f32.mrb[0].mxu0
      %347 = vdwg.mxu0
      %v348 = vld [vmem:[%s3] sm:$0x3]
      %v350 = vrot.slane %v345, 4
      %351 = vrot.lane.b32.xlu0 %v350, 1
      %v352 = vpop.permute.xlu0 %351
      %v354 = vadd.f32 %v345, %v352
      %356 = vset.pattern.permute.xlu0 0
      %357 = vperm.xlu0 %356, %v348
      %v358 = vpop.permute.xlu0 %357
      %v360 = vrot.slane %v358, 6
      %v362 = vadd.f32 %v354, %v360
      %v363 = vadd.f32 %v354, %v358
      %v364 = vmul.f32 %v362, 0.5
      %v365 = vmul.f32 %v362, 0.70710677
      %vm366 = vcmp.ge.f32.partialorder %v365, 0.0
      %v367 = vsel %vm366, 1.0, -1.0
      %v368 = vand.u32 2147483647, %v365
      %v369 = vmul.f32 %v368, 0.3275911
      %v370 = vadd.f32 %v369, 1.0
      %v371 = vrcp.pop %v370
      %v372 = vmul.f32 %v370, %v371
      %v373 = vsub.f32 2.0, %v372
      %v374 = vmul.f32 %v371, %v373
      %v375 = vmul.f32 %v374, 1.0614054
      %v376 = vadd.f32 %v375, -1.4531521
      %v377 = vmul.f32 %v376, %v374
      %v378 = vadd.f32 %v377, 1.4214138
      %v379 = vmul.f32 %v378, %v374
      %v380 = vadd.f32 %v379, -0.28449672
      %v381 = vmul.f32 %v380, %v374
      %v382 = vadd.f32 %v381, 0.2548296
      %v383 = vmul.f32 %v382, %v374
      %v384 = vsub.f32 0.0, %v368
      %v385 = vmul.f32 %v384, %v368
      %v386 = vmul.f32 %v385, 1.442695
      %v387 = vpow.pop %v386
      %v388 = vmul.f32 %v383, %v387
      %v389 = vsub.f32 1.0, %v388
      %v390 = vmul.f32 %v367, %v389
      %v391 = vadd.f32 %v390, 1.0
      %v392 = vmul.f32 %v364, %v391
      %v393 = vmul.f32 %v363, 0.5
      %v394 = vmul.f32 %v363, 0.70710677
      %vm395 = vcmp.ge.f32.partialorder %v394, 0.0
      %v396 = vsel %vm395, 1.0, -1.0
      %v397 = vand.u32 2147483647, %v394
      %v398 = vmul.f32 %v397, 0.3275911
      %v399 = vadd.f32 %v398, 1.0
      %v400 = vrcp.pop %v399
      %v401 = vmul.f32 %v399, %v400
      %v402 = vsub.f32 2.0, %v401
      %v403 = vmul.f32 %v400, %v402
      %v404 = vmul.f32 %v403, 1.0614054
      %v405 = vadd.f32 %v404, -1.4531521
      %v406 = vmul.f32 %v405, %v403
      %v407 = vadd.f32 %v406, 1.4214138
      %v408 = vmul.f32 %v407, %v403
      %v409 = vadd.f32 %v408, -0.28449672
      %v410 = vmul.f32 %v409, %v403
      %v411 = vadd.f32 %v410, 0.2548296
      %v412 = vmul.f32 %v411, %v403
      %v413 = vsub.f32 0.0, %v397
      %v414 = vmul.f32 %v413, %v397
      %v415 = vmul.f32 %v414, 1.442695
      %v416 = vpow.pop %v415
      %v417 = vmul.f32 %v412, %v416
      %v418 = vsub.f32 1.0, %v417
      %v419 = vmul.f32 %v396, %v418
      %v420 = vadd.f32 %v419, 1.0
      %v421 = vmul.f32 %v393, %v420
      %v422 = vld [vmem:[%s4] sm:$0xf]
      %v423 = vld [vmem:[%s5] sm:$0xf]
      %425 = vset.pattern.permute.xlu0 0
      %426 = vperm.xlu0 %425, %v423
      %v427 = vpop.permute.xlu0 %426
      %v430 = vrot.slane %v392, 2
      %431 = vrot.lane.b32.xlu0 %v430, 127
      %v432 = vpop.permute.xlu0 %431
      %vm433 = vcmask 15360
      %v435 = vsel %vm433, %v422, 0
      %vm437 = vcmask 1041408
      %v438 = vsel %vm437, %v432, 0
      %440 = vmatprep.subr.mxu0 0.0
      %441 = vmatpush1.msra.mxu0 %v438
      %442 = vmatprep.subr.mxu0 0.0
      %443 = vmatpush1.msra.mxu0 0.0
      %444 = vmatprep.subr.mxu0 0.0
      %445 = vmatpush1.msra.mxu0 0.0
      %446 = vmatprep.subr.mxu0 0.0
      %447 = vmatpush1.msra.mxu0 0.0
      %448 = vmatprep.subr.mxu0 0.0
      %449 = vmatpush1.msra.mxu0 0.0
      %450 = vmatprep.subr.mxu0 0.0
      %451 = vmatpush1.msra.mxu0 0.0
      %452 = vmatprep.subr.mxu0 0.0
      %453 = vmatpush1.msra.mxu0 0.0
      %454 = vmatprep.subr.mxu0 0.0
      %455 = vmatpush1.msra.mxu0 0.0
      %456 = vmatprep.subr.mxu0 0.0
      %457 = vmatpush1.msra.mxu0 0.0
      %458 = vmatprep.subr.mxu0 0.0
      %459 = vmatpush1.msra.mxu0 0.0
      %460 = vmatprep.subr.mxu0 0.0
      %461 = vmatpush1.msra.mxu0 0.0
      %462 = vmatprep.subr.mxu0 0.0
      %463 = vmatpush1.msra.mxu0 0.0
      %464 = vmatprep.subr.mxu0 0.0
      %465 = vmatpush1.msra.mxu0 0.0
      %466 = vmatprep.subr.mxu0 0.0
      %467 = vmatpush1.msra.mxu0 0.0
      %468 = vmatprep.subr.mxu0 0.0
      %469 = vmatpush1.msra.mxu0 0.0
      %470 = vmatprep.subr.mxu0 0.0
      %471 = vmatpush1.msra.mxu0 0.0
      %472 = vmatprep.subr.mxu0 0.0
      %473 = vmatpush1.msra.mxu0 0.0
      %474 = vmatprep.subr.mxu0 0.0
      %475 = vmatpush1.msra.mxu0 0.0
      %476 = vmatprep.subr.mxu0 0.0
      %477 = vmatpush1.msra.mxu0 0.0
      %478 = vmatprep.subr.mxu0 0.0
      %479 = vmatpush1.msra.mxu0 0.0
      %480 = vmatprep.subr.mxu0 0.0
      %481 = vmatpush1.msra.mxu0 0.0
      %482 = vmatprep.subr.mxu0 0.0
      %483 = vmatpush1.msra.mxu0 0.0
      %484 = vmatprep.subr.mxu0 0.0
      %485 = vmatpush1.msra.mxu0 0.0
      %486 = vmatprep.subr.mxu0 0.0
      %487 = vmatpush1.msra.mxu0 0.0
      %488 = vmatprep.subr.mxu0 0.0
      %489 = vmatpush1.msra.mxu0 0.0
      %490 = vmatprep.subr.mxu0 0.0
      %491 = vmatpush1.msra.mxu0 0.0
      %492 = vmatprep.subr.mxu0 0.0
      %493 = vmatpush1.msra.mxu0 0.0
      %494 = vmatprep.subr.mxu0 0.0
      %495 = vmatpush1.msra.mxu0 0.0
      %496 = vmatprep.subr.mxu0 0.0
      %497 = vmatpush1.msra.mxu0 0.0
      %498 = vmatprep.subr.mxu0 0.0
      %499 = vmatpush1.msra.mxu0 0.0
      %500 = vmatprep.subr.mxu0 0.0
      %501 = vmatpush1.msra.mxu0 0.0
      %502 = vmatprep.subr.mxu0 0.0
      %503 = vmatpush1.msra.mxu0 0.0
      %504 = vmatprep.mubr.f32.mxu0 0.0
      %505 = vmatmul.mubr.f32.gmra.mrb[0].mxu0 %v435
      %v506 = vpop.f32.mrb[0].mxu0
      %v507 = vadd.f32 %v427, %v506
      %v508 = vpop.f32.mrb[0].mxu0
      %509 = vdwg.mxu0
      %511 = vrot.lane.b32.xlu0 %v421, 126
      %v512 = vpop.permute.xlu0 %511
      %v513 = vsel %vm437, %v512, 0
      %515 = vmatprep.subr.mxu0 0.0
      %516 = vmatpush1.msra.mxu0 %v513
      %517 = vmatprep.subr.mxu0 0.0
      %518 = vmatpush1.msra.mxu0 0.0
      %519 = vmatprep.subr.mxu0 0.0
      %520 = vmatpush1.msra.mxu0 0.0
      %521 = vmatprep.subr.mxu0 0.0
      %522 = vmatpush1.msra.mxu0 0.0
      %523 = vmatprep.subr.mxu0 0.0
      %524 = vmatpush1.msra.mxu0 0.0
      %525 = vmatprep.subr.mxu0 0.0
      %526 = vmatpush1.msra.mxu0 0.0
      %527 = vmatprep.subr.mxu0 0.0
      %528 = vmatpush1.msra.mxu0 0.0
      %529 = vmatprep.subr.mxu0 0.0
      %530 = vmatpush1.msra.mxu0 0.0
      %531 = vmatprep.subr.mxu0 0.0
      %532 = vmatpush1.msra.mxu0 0.0
      %533 = vmatprep.subr.mxu0 0.0
      %534 = vmatpush1.msra.mxu0 0.0
      %535 = vmatprep.subr.mxu0 0.0
      %536 = vmatpush1.msra.mxu0 0.0
      %537 = vmatprep.subr.mxu0 0.0
      %538 = vmatpush1.msra.mxu0 0.0
      %539 = vmatprep.subr.mxu0 0.0
      %540 = vmatpush1.msra.mxu0 0.0
      %541 = vmatprep.subr.mxu0 0.0
      %542 = vmatpush1.msra.mxu0 0.0
      %543 = vmatprep.subr.mxu0 0.0
      %544 = vmatpush1.msra.mxu0 0.0
      %545 = vmatprep.subr.mxu0 0.0
      %546 = vmatpush1.msra.mxu0 0.0
      %547 = vmatprep.subr.mxu0 0.0
      %548 = vmatpush1.msra.mxu0 0.0
      %549 = vmatprep.subr.mxu0 0.0
      %550 = vmatpush1.msra.mxu0 0.0
      %551 = vmatprep.subr.mxu0 0.0
      %552 = vmatpush1.msra.mxu0 0.0
      %553 = vmatprep.subr.mxu0 0.0
      %554 = vmatpush1.msra.mxu0 0.0
      %555 = vmatprep.subr.mxu0 0.0
      %556 = vmatpush1.msra.mxu0 0.0
      %557 = vmatprep.subr.mxu0 0.0
      %558 = vmatpush1.msra.mxu0 0.0
      %559 = vmatprep.subr.mxu0 0.0
      %560 = vmatpush1.msra.mxu0 0.0
      %561 = vmatprep.subr.mxu0 0.0
      %562 = vmatpush1.msra.mxu0 0.0
      %563 = vmatprep.subr.mxu0 0.0
      %564 = vmatpush1.msra.mxu0 0.0
      %565 = vmatprep.subr.mxu0 0.0
      %566 = vmatpush1.msra.mxu0 0.0
      %567 = vmatprep.subr.mxu0 0.0
      %568 = vmatpush1.msra.mxu0 0.0
      %569 = vmatprep.subr.mxu0 0.0
      %570 = vmatpush1.msra.mxu0 0.0
      %571 = vmatprep.subr.mxu0 0.0
      %572 = vmatpush1.msra.mxu0 0.0
      %573 = vmatprep.subr.mxu0 0.0
      %574 = vmatpush1.msra.mxu0 0.0
      %575 = vmatprep.subr.mxu0 0.0
      %576 = vmatpush1.msra.mxu0 0.0
      %577 = vmatprep.subr.mxu0 0.0
      %578 = vmatpush1.msra.mxu0 0.0
      %579 = vmatprep.mubr.f32.mxu0 0.0
      %580 = vmatmul.mubr.f32.gmra.mrb[0].mxu0 %v435
      %v581 = vpop.f32.mrb[0].mxu0
      %v582 = vadd.f32 %v427, %v581
      %v583 = vpop.f32.mrb[0].mxu0
      %584 = vdwg.mxu0
      %v585 = vxor.u32 %v507, 2147483648
      %v586 = vmul.f32 %v585, 1.442695
      %v587 = vpow.pop %v586
      %v588 = vadd.f32 %v587, 1.0
      %v589 = vrcp.pop %v588
      %v590 = vmul.f32 1.0, %v589
      %v592 = vrot.slane %v590, 2
      %v594 = vmul.f32 %v507, %v592
      %vm595 = vcmask 254976
      %596 = vst.msk [vmem:[%s265] sm:$0x3] %vm595, %v594
      %v597 = vxor.u32 %v582, 2147483648
      %v598 = vmul.f32 %v597, 1.442695
      %v599 = vpow.pop %v598
      %v600 = vadd.f32 %v599, 1.0
      %v601 = vrcp.pop %v600
      %v602 = vmul.f32 1.0, %v601
      %v604 = vrot.slane %v602, 2
      %v606 = vmul.f32 %v582, %v604
      %s607 = scalar_lea.vmem %s265, 2
      %608 = vst.msk [vmem:[%s607] sm:$0x3] %vm595, %v606
      %p609 = scmp.lt.s32.totalorder %s17, 1
      %s610 = scalar_select %p609, %s17, 1
      %s611 = smul.addr %s610, 2
      %s612 = smul.addr %s611, 2
      %s613 = scalar_lea.vmem %s6, %s612
      // Predicated region
      $region45: #{demucs_decoder_forward.8} parent=43 // pred_check
        %p614 = pneg %p171
      $region46: #{demucs_decoder_forward.8} parent=43 // pred_check_branch
        %616 = sbr.rel (%p614) target = $region48
      $region47: #{demucs_decoder_forward.8} parent=43 // pred_region
        _
      $region48: #{demucs_decoder_forward.8} parent=43 // pred_fallthru
        _
    $region44: #{demucs_decoder_forward.8} parent=5 // pred_fallthru
      _
    %p617 = scmp.le.s32.totalorder 2, %s12
    // Predicated region
    $region49: #{demucs_decoder_forward.8} parent=5 // pred_check
      %p618 = pneg %p617
    $region50: #{demucs_decoder_forward.8} parent=5 // pred_check_branch
      %620 = sbr.rel (%p618) target = $region52
    $region51: #{demucs_decoder_forward.8} parent=5 // pred_region
      %s621 = ssub.s32 %s12, 2
      // Predicated region
      $region53: #{demucs_decoder_forward.8} parent=51 // pred_check
        %p622 = pneg %p177
      $region54: #{demucs_decoder_forward.8} parent=51 // pred_check_branch
        %624 = sbr.rel (%p622) target = $region56
      $region55: #{demucs_decoder_forward.8} parent=51 // pred_region
        %p625 = scmp.lt.s32.totalorder %s18, 1
        %s626 = scalar_select %p625, %s18, 1
        %s627 = smul.addr %s626, 2
        %s628 = smul.addr %s627, 2
        %s629 = scalar_lea.vmem %s6, %s628
      $region56: #{demucs_decoder_forward.8} parent=51 // pred_fallthru
        _
    $region52: #{demucs_decoder_forward.8} parent=5 // pred_fallthru
      _
  $region6: #{demucs_decoder_forward.8} parent=0 // loop_footer
    %s16 = sadd.s32 1, %s12
  $region7: #{demucs_decoder_forward.8} parent=0 // loop_footer_branch
    %11 = sbr.rel target = $region3
  $region8: #{demucs_decoder_forward.8} parent=0 // loop_exit
    _

// kernel: demucs_decoder_forward.10
$region0: #{demucs_decoder_forward.10}
  #allocation0 [shape = 'u32[]', space=smem, size = 0x4, offset = 0x4, fixed_abs, tag = 'smem constant byte address 0x4 - core index']
  #allocation1 [shape = 'u32[144,128]{1,0:T(1,128)}', space=vmem, size = 0x12000, scoped, tag = 'internal scratch']
  %s0 = inlined_call_operand.vmem [shape: f32[2,4,96], index: 0, kind: input, shape index: {}]
  %s1 = inlined_call_operand.vmem [shape: f32[2,4,96], index: 1, kind: input, shape index: {}]
  %s2 = inlined_call_operand.vmem [shape: f32[16,4], index: 2, kind: input, shape index: {}]
  %s3 = inlined_call_operand.vmem [shape: f32[4,1], index: 3, kind: input, shape index: {}]
  %s4 = inlined_call_operand.vmem [shape: f32[8,4], index: 4, kind: input, shape index: {}]
  %s5 = inlined_call_operand.vmem [shape: f32[8,1], index: 5, kind: input, shape index: {}]
  %s6 = inlined_call_operand.vmem [shape: f32[2,2,4,64], index: 6, kind: output, shape index: {}]
  %s7 = sld [smem:[#allocation0]]
  $region57: #{demucs_decoder_forward.10} parent=0
    _
  %s9 = ssub.s32 1, %s7
  %s10 = scalar_select 0, %s9, %s7
  loop: start=0, step=1, limit=4
  $region2: #{demucs_decoder_forward.10} parent=0 // loop_pre_header
    _
  $region3: #{demucs_decoder_forward.10} parent=0 // loop_header
    %s12 = sphi 0, %s16
    %p13 = scmp.ge.s32.totalorder %s12, 4
    %s22 = sphi 0, %s24
    %s25 = sphi 0, %s22
    %s26 = sphi 0, %s25
    %s42 = sphi 0, %s26
    %s48 = sphi 0, %s50
    %s51 = sphi 0, %s48
    %s52 = sphi 0, %s51
    %s68 = sphi 0, %s52
    %s72 = sphi 0, %s72
    %s74 = sphi 0, %s72
    %s75 = sphi 0, %s74
    %s89 = sphi 0, %s75
    %s93 = sphi 0, %s93
    %s95 = sphi 0, %s93
    %s96 = sphi 0, %s95
    %s110 = sphi 0, %s96
    %s114 = sphi 0, %s114
    %s116 = sphi 0, %s114
    %s117 = sphi 0, %s116
    %s131 = sphi 0, %s117
    %s135 = sphi 0, %s135
    %s137 = sphi 0, %s135
    %s138 = sphi 0, %s137
    %s152 = sphi 0, %s138
    %s158 = sphi 0, %s160
    %s161 = sphi 0, %s158
    %s162 = sphi 0, %s161
    %s178 = sphi 0, %s162
  $region4: #{demucs_decoder_forward.10} parent=0 // loop_header_branch
    %15 = sbr.rel (%p13) target = $region8
  $region5: #{demucs_decoder_forward.10} parent=0 // loop_body
    %s17 = ssub.s32 %s12, 1
    %s18 = ssub.s32 %s12, 2
    %s19 = sadd.s32 %s12, 1
    %s20 = ssub.s32 %s12, %s19
    %p21 = scmp.eq.s32.totalorder %s20, 0
    %s23 = sadd.s32 %s22, 1
    %s24 = scalar_select %p21, %s22, %s23
    %p27 = pneg %p21
    %p28 = scmp.eq.s32.totalorder %s12, 1
    %p29 = por %p27, %p28
    %p30 = scmp.ne.s32.totalorder %s22, %s25
    %p31 = scmp.eq.s32.totalorder %s12, 0
    %p32 = por %p30, %p31
    %p33 = scmp.ne.s32.totalorder %s22, %s25
    %p34 = scmp.eq.s32.totalorder %s17, 1
    %p35 = por %p33, %p34
    %p36 = scmp.ne.s32.totalorder %s25, %s26
    %p37 = scmp.eq.s32.totalorder %s17, 0
    %p38 = por %p36, %p37
    %p39 = scmp.ne.s32.totalorder %s25, %s26
    %p40 = scmp.eq.s32.totalorder %s18, 1
    %p41 = por %p39, %p40
    %p43 = scmp.ne.s32.totalorder %s26, %s42
    %p44 = scmp.eq.s32.totalorder %s18, 0
    %p45 = por %p43, %p44
    %s46 = ssub.s32 %s12, %s19
    %p47 = scmp.eq.s32.totalorder %s46, 0
    %s49 = sadd.s32 %s48, 1
    %s50 = scalar_select %p47, %s48, %s49
    %p53 = pneg %p47
    %p54 = scmp.eq.s32.totalorder %s12, 1
    %p55 = por %p53, %p54
    %p56 = scmp.ne.s32.totalorder %s48, %s51
    %p57 = scmp.eq.s32.totalorder %s12, 0
    %p58 = por %p56, %p57
    %p59 = scmp.ne.s32.totalorder %s48, %s51
    %p60 = scmp.eq.s32.totalorder %s17, 1
    %p61 = por %p59, %p60
    %p62 = scmp.ne.s32.totalorder %s51, %s52
    %p63 = scmp.eq.s32.totalorder %s17, 0
    %p64 = por %p62, %p63
    %p65 = scmp.ne.s32.totalorder %s51, %s52
    %p66 = scmp.eq.s32.totalorder %s18, 1
    %p67 = por %p65, %p66
    %p69 = scmp.ne.s32.totalorder %s52, %s68
    %p70 = scmp.eq.s32.totalorder %s18, 0
    %p71 = por %p69, %p70
    %s73 = sadd.s32 %s72, 1
    %p76 = scmp.eq.s32.totalorder %s12, 1
    %p77 = scmp.ne.s32.totalorder %s72, %s74
    %p78 = scmp.eq.s32.totalorder %s12, 0
    %p79 = por %p77, %p78
    %p80 = scmp.ne.s32.totalorder %s72, %s74
    %p81 = scmp.eq.s32.totalorder %s17, 1
    %p82 = por %p80, %p81
    %p83 = scmp.ne.s32.totalorder %s74, %s75
    %p84 = scmp.eq.s32.totalorder %s17, 0
    %p85 = por %p83, %p84
    %p86 = scmp.ne.s32.totalorder %s74, %s75
    %p87 = scmp.eq.s32.totalorder %s18, 1
    %p88 = por %p86, %p87
    %p90 = scmp.ne.s32.totalorder %s75, %s89
    %p91 = scmp.eq.s32.totalorder %s18, 0
    %p92 = por %p90, %p91
    %s94 = sadd.s32 %s93, 1
    %p97 = scmp.eq.s32.totalorder %s12, 1
    %p98 = scmp.ne.s32.totalorder %s93, %s95
    %p99 = scmp.eq.s32.totalorder %s12, 0
    %p100 = por %p98, %p99
    %p101 = scmp.ne.s32.totalorder %s93, %s95
    %p102 = scmp.eq.s32.totalorder %s17, 1
    %p103 = por %p101, %p102
    %p104 = scmp.ne.s32.totalorder %s95, %s96
    %p105 = scmp.eq.s32.totalorder %s17, 0
    %p106 = por %p104, %p105
    %p107 = scmp.ne.s32.totalorder %s95, %s96
    %p108 = scmp.eq.s32.totalorder %s18, 1
    %p109 = por %p107, %p108
    %p111 = scmp.ne.s32.totalorder %s96, %s110
    %p112 = scmp.eq.s32.totalorder %s18, 0
    %p113 = por %p111, %p112
    %s115 = sadd.s32 %s114, 1
    %p118 = scmp.eq.s32.totalorder %s12, 1
    %p119 = scmp.ne.s32.totalorder %s114, %s116
    %p120 = scmp.eq.s32.totalorder %s12, 0
    %p121 = por %p119, %p120
    %p122 = scmp.ne.s32.totalorder %s114, %s116
    %p123 = scmp.eq.s32.totalorder %s17, 1
    %p124 = por %p122, %p123
    %p125 = scmp.ne.s32.totalorder %s116, %s117
    %p126 = scmp.eq.s32.totalorder %s17, 0
    %p127 = por %p125, %p126
    %p128 = scmp.ne.s32.totalorder %s116, %s117
    %p129 = scmp.eq.s32.totalorder %s18, 1
    %p130 = por %p128, %p129
    %p132 = scmp.ne.s32.totalorder %s117, %s131
    %p133 = scmp.eq.s32.totalorder %s18, 0
    %p134 = por %p132, %p133
    %s136 = sadd.s32 %s135, 1
    %p139 = scmp.eq.s32.totalorder %s12, 1
    %p140 = scmp.ne.s32.totalorder %s135, %s137
    %p141 = scmp.eq.s32.totalorder %s12, 0
    %p142 = por %p140, %p141
    %p143 = scmp.ne.s32.totalorder %s135, %s137
    %p144 = scmp.eq.s32.totalorder %s17, 1
    %p145 = por %p143, %p144
    %p146 = scmp.ne.s32.totalorder %s137, %s138
    %p147 = scmp.eq.s32.totalorder %s17, 0
    %p148 = por %p146, %p147
    %p149 = scmp.ne.s32.totalorder %s137, %s138
    %p150 = scmp.eq.s32.totalorder %s18, 1
    %p151 = por %p149, %p150
    %p153 = scmp.ne.s32.totalorder %s138, %s152
    %p154 = scmp.eq.s32.totalorder %s18, 0
    %p155 = por %p153, %p154
    %s156 = ssub.s32 %s12, %s19
    %p157 = scmp.eq.s32.totalorder %s156, 0
    %s159 = sadd.s32 %s158, 1
    %s160 = scalar_select %p157, %s158, %s159
    %p163 = pneg %p157
    %p164 = scmp.eq.s32.totalorder %s12, 1
    %p165 = por %p163, %p164
    %p166 = scmp.ne.s32.totalorder %s158, %s161
    %p167 = scmp.eq.s32.totalorder %s12, 0
    %p168 = por %p166, %p167
    %p169 = scmp.ne.s32.totalorder %s158, %s161
    %p170 = scmp.eq.s32.totalorder %s17, 1
    %p171 = por %p169, %p170
    %p172 = scmp.ne.s32.totalorder %s161, %s162
    %p173 = scmp.eq.s32.totalorder %s17, 0
    %p174 = por %p172, %p173
    %p175 = scmp.ne.s32.totalorder %s161, %s162
    %p176 = scmp.eq.s32.totalorder %s18, 1
    %p177 = por %p175, %p176
    %p179 = scmp.ne.s32.totalorder %s162, %s178
    %p180 = scmp.eq.s32.totalorder %s18, 0
    %p181 = por %p179, %p180
    %p182 = scmp.le.s32.totalorder 1, %s12
    %p183 = scmp.lt.s32.totalorder %s12, 3
    %p184 = pnand %p182, %p183
    %p185 = pneg %p184
    // Predicated region
    $region9: #{demucs_decoder_forward.10} parent=5 // pred_check
      _
    $region10: #{demucs_decoder_forward.10} parent=5 // pred_check_branch
      %187 = sbr.rel (%p184) target = $region12
    $region11: #{demucs_decoder_forward.10} parent=5 // pred_region
      %s188 = ssub.s32 %s12, 1
      // Predicated region
      $region13: #{demucs_decoder_forward.10} parent=11 // pred_check
        %p189 = pneg %p85
      $region14: #{demucs_decoder_forward.10} parent=11 // pred_check_branch
        %191 = sbr.rel (%p189) target = $region16
      $region15: #{demucs_decoder_forward.10} parent=11 // pred_region
        _
      $region16: #{demucs_decoder_forward.10} parent=11 // pred_fallthru
        _
      // Predicated region
      $region17: #{demucs_decoder_forward.10} parent=11 // pred_check
        %p192 = pneg %p106
      $region18: #{demucs_decoder_forward.10} parent=11 // pred_check_branch
        %194 = sbr.rel (%p192) target = $region20
      $region19: #{demucs_decoder_forward.10} parent=11 // pred_region
        _
      $region20: #{demucs_decoder_forward.10} parent=11 // pred_fallthru
        _
      // Predicated region
      $region21: #{demucs_decoder_forward.10} parent=11 // pred_check
        %p195 = pneg %p127
      $region22: #{demucs_decoder_forward.10} parent=11 // pred_check_branch
        %197 = sbr.rel (%p195) target = $region24
      $region23: #{demucs_decoder_forward.10} parent=11 // pred_region
        _
      $region24: #{demucs_decoder_forward.10} parent=11 // pred_fallthru
        _
      // Predicated region
      $region25: #{demucs_decoder_forward.10} parent=11 // pred_check
        %p198 = pneg %p148
      $region26: #{demucs_decoder_forward.10} parent=11 // pred_check_branch
        %200 = sbr.rel (%p198) target = $region28
      $region27: #{demucs_decoder_forward.10} parent=11 // pred_region
        _
      $region28: #{demucs_decoder_forward.10} parent=11 // pred_fallthru
        _
    $region12: #{demucs_decoder_forward.10} parent=5 // pred_fallthru
      _
    %p201 = scmp.lt.s32.totalorder %s12, 2
    // Predicated region
    $region29: #{demucs_decoder_forward.10} parent=5 // pred_check
      %p202 = pneg %p201
    $region30: #{demucs_decoder_forward.10} parent=5 // pred_check_branch
      %204 = sbr.rel (%p202) target = $region32
    $region31: #{demucs_decoder_forward.10} parent=5 // pred_region
      // Predicated region
      $region33: #{demucs_decoder_forward.10} parent=31 // pred_check
        %p205 = pneg %p32
      $region34: #{demucs_decoder_forward.10} parent=31 // pred_check_branch
        %207 = sbr.rel (%p205) target = $region36
      $region35: #{demucs_decoder_forward.10} parent=31 // pred_region
        %p208 = scmp.lt.s32.totalorder %s12, 1
        %s209 = scalar_select %p208, %s12, 1
        %s210 = smul.addr %s209, 4
        %s211 = scalar_lea.vmem %s0, %s210
      $region36: #{demucs_decoder_forward.10} parent=31 // pred_fallthru
        _
      // Predicated region
      $region37: #{demucs_decoder_forward.10} parent=31 // pred_check
        %p212 = pneg %p58
      $region38: #{demucs_decoder_forward.10} parent=31 // pred_check_branch
        %214 = sbr.rel (%p212) target = $region40
      $region39: #{demucs_decoder_forward.10} parent=31 // pred_region
        %p215 = scmp.lt.s32.totalorder %s12, 1
        %s216 = scalar_select %p215, %s12, 1
        %s217 = smul.addr %s216, 4
        %s218 = scalar_lea.vmem %s1, %s217
      $region40: #{demucs_decoder_forward.10} parent=31 // pred_fallthru
        _
    $region32: #{demucs_decoder_forward.10} parent=5 // pred_fallthru
      _
    %p219 = scmp.le.s32.totalorder 1, %s12
    %p220 = scmp.lt.s32.totalorder %s12, 3
    %p221 = pnand %p219, %p220
    %p222 = pneg %p221
    // Predicated region
    $region41: #{demucs_decoder_forward.10} parent=5 // pred_check
      _
    $region42: #{demucs_decoder_forward.10} parent=5 // pred_check_branch
      %224 = sbr.rel (%p221) target = $region44
    $region43: #{demucs_decoder_forward.10} parent=5 // pred_region
      %s225 = ssub.s32 %s12, 1
      %p226 = scmp.lt.s32.totalorder %s17, 1
      %s227 = scalar_select %p226, %s17, 1
      %s228 = smul.addr %s227, 4
      %s229 = scalar_lea.vmem %s0, %s228
      %p230 = pneg %p38
      %p231 = pneg %p35
      %p232 = scmp.lt.s32.totalorder %s17, 1
      %s233 = scalar_select %p232, %s17, 1
      %s234 = smul.addr %s233, 4
      %s235 = scalar_lea.vmem %s1, %s234
      %p236 = pneg %p64
      %p237 = pneg %p61
      %p238 = pneg %p85
      %p239 = pneg %p82
      %p240 = pneg %p106
      %p241 = pneg %p103
      %p242 = pneg %p127
      %p243 = pneg %p124
      %p244 = pneg %p148
      %p245 = pneg %p145
      %p246 = pneg %p174
      %p247 = pneg %p171
      %p248 = scmp.lt.s32.totalorder %s17, 1
      %s249 = scalar_select %p248, %s17, 1
      %s250 = smul.addr %s249, 2
      %s251 = smul.addr %s250, 4
      %s252 = scalar_lea.vmem %s6, %s251
      %p253 = scmp.lt.s32.totalorder %s17, 1
      %s254 = scalar_select %p253, %s17, 1
      %s255 = smul.addr %s254, 4
      %s256 = scalar_lea.vmem %s0, %s255
      %p257 = scmp.lt.s32.totalorder %s17, 1
      %s258 = scalar_select %p257, %s17, 1
      %s259 = smul.addr %s258, 4
      %s260 = scalar_lea.vmem %s1, %s259
      %p261 = scmp.lt.s32.totalorder %s17, 1
      %s262 = scalar_select %p261, %s17, 1
      %s263 = smul.addr %s262, 2
      %s264 = smul.addr %s263, 4
      %s265 = scalar_lea.vmem %s6, %s264
      %v266 = vld [vmem:[%s256] sm:$0xf]
      %v267 = vld [vmem:[%s260] sm:$0xf]
      %v268 = vadd.f32 %v266, %v267
      %v269 = vld [vmem:[%s2] sm:$0xff]
      %v270 = vld [vmem:[%s2 + $0x8] sm:$0xff]
      %vm271 = vcmask 31744
      %v273 = vsel %vm271, %v269, 0
      %v276 = vsel %vm271, %v270, 0
      %vm278 = vcmask 1043456
      %v280 = vsel %vm278, %v268, 0
      %282 = vmatprep.subr.mxu0 0.0
      %283 = vmatpush1.msra.mxu0 %v280
      %284 = vmatprep.subr.mxu0 0.0
      %285 = vmatpush1.msra.mxu0 0.0
      %286 = vmatprep.subr.mxu0 0.0
      %287 = vmatpush1.msra.mxu0 0.0
      %288 = vmatprep.subr.mxu0 0.0
      %289 = vmatpush1.msra.mxu0 0.0
      %290 = vmatprep.subr.mxu0 0.0
      %291 = vmatpush1.msra.mxu0 0.0
      %292 = vmatprep.subr.mxu0 0.0
      %293 = vmatpush1.msra.mxu0 0.0
      %294 = vmatprep.subr.mxu0 0.0
      %295 = vmatpush1.msra.mxu0 0.0
      %296 = vmatprep.subr.mxu0 0.0
      %297 = vmatpush1.msra.mxu0 0.0
      %298 = vmatprep.subr.mxu0 0.0
      %299 = vmatpush1.msra.mxu0 0.0
      %300 = vmatprep.subr.mxu0 0.0
      %301 = vmatpush1.msra.mxu0 0.0
      %302 = vmatprep.subr.mxu0 0.0
      %303 = vmatpush1.msra.mxu0 0.0
      %304 = vmatprep.subr.mxu0 0.0
      %305 = vmatpush1.msra.mxu0 0.0
      %306 = vmatprep.subr.mxu0 0.0
      %307 = vmatpush1.msra.mxu0 0.0
      %308 = vmatprep.subr.mxu0 0.0
      %309 = vmatpush1.msra.mxu0 0.0
      %310 = vmatprep.subr.mxu0 0.0
      %311 = vmatpush1.msra.mxu0 0.0
      %312 = vmatprep.subr.mxu0 0.0
      %313 = vmatpush1.msra.mxu0 0.0
      %314 = vmatprep.subr.mxu0 0.0
      %315 = vmatpush1.msra.mxu0 0.0
      %316 = vmatprep.subr.mxu0 0.0
      %317 = vmatpush1.msra.mxu0 0.0
      %318 = vmatprep.subr.mxu0 0.0
      %319 = vmatpush1.msra.mxu0 0.0
      %320 = vmatprep.subr.mxu0 0.0
      %321 = vmatpush1.msra.mxu0 0.0
      %322 = vmatprep.subr.mxu0 0.0
      %323 = vmatpush1.msra.mxu0 0.0
      %324 = vmatprep.subr.mxu0 0.0
      %325 = vmatpush1.msra.mxu0 0.0
      %326 = vmatprep.subr.mxu0 0.0
      %327 = vmatpush1.msra.mxu0 0.0
      %328 = vmatprep.subr.mxu0 0.0
      %329 = vmatpush1.msra.mxu0 0.0
      %330 = vmatprep.subr.mxu0 0.0
      %331 = vmatpush1.msra.mxu0 0.0
      %332 = vmatprep.subr.mxu0 0.0
      %333 = vmatpush1.msra.mxu0 0.0
      %334 = vmatprep.subr.mxu0 0.0
      %335 = vmatpush1.msra.mxu0 0.0
      %336 = vmatprep.subr.mxu0 0.0
      %337 = vmatpush1.msra.mxu0 0.0
      %338 = vmatprep.subr.mxu0 0.0
      %339 = vmatpush1.msra.mxu0 0.0
      %340 = vmatprep.subr.mxu0 0.0
      %341 = vmatpush1.msra.mxu0 0.0
      %342 = vmatprep.subr.mxu0 0.0
      %343 = vmatpush1.msra.mxu0 0.0
      %344 = vmatprep.subr.mxu0 0.0
      %345 = vmatpush1.msra.mxu0 0.0
      %346 = vmatprep.mubr.f32.mxu0 0.0
      %347 = vmatmul.mubr.f32.gmra.mrb[0].mxu0 %v273
      %v348 = vpop.f32.mrb[0].mxu0
      %v349 = vadd.f32 0.0, %v348
      %v350 = vpop.f32.mrb[0].mxu0
      %351 = vmatprep.mubr.f32.mxu0 0.0
      %352 = vmatmul.mubr.f32.gmra.mrb[0].mxu0 %v276
      %v353 = vpop.f32.mrb[0].mxu0
      %v354 = vadd.f32 0.0, %v353
      %v355 = vpop.f32.mrb[0].mxu0
      %356 = vdwg.mxu0
      %v357 = vld [vmem:[%s3] sm:$0xf]
      %359 = vrot.lane.b32.xlu0 %v354, 16
      %v360 = vpop.permute.xlu0 %359
      %v362 = vadd.f32 %v349, %v360
      %364 = vset.pattern.permute.xlu0 0
      %365 = vperm.xlu0 %364, %v357
      %v366 = vpop.permute.xlu0 %365
      %v368 = vrot.slane %v366, 4
      %v370 = vadd.f32 %v362, %v368
      %v371 = vadd.f32 %v362, %v366
      %v372 = vmul.f32 %v370, 0.5
      %v373 = vmul.f32 %v370, 0.70710677
      %vm374 = vcmp.ge.f32.partialorder %v373, 0.0
      %v375 = vsel %vm374, 1.0, -1.0
      %v376 = vand.u32 2147483647, %v373
      %v377 = vmul.f32 %v376, 0.3275911
      %v378 = vadd.f32 %v377, 1.0
      %v379 = vrcp.pop %v378
      %v380 = vmul.f32 %v378, %v379
      %v381 = vsub.f32 2.0, %v380
      %v382 = vmul.f32 %v379, %v381
      %v383 = vmul.f32 %v382, 1.0614054
      %v384 = vadd.f32 %v383, -1.4531521
      %v385 = vmul.f32 %v384, %v382
      %v386 = vadd.f32 %v385, 1.4214138
      %v387 = vmul.f32 %v386, %v382
      %v388 = vadd.f32 %v387, -0.28449672
      %v389 = vmul.f32 %v388, %v382
      %v390 = vadd.f32 %v389, 0.2548296
      %v391 = vmul.f32 %v390, %v382
      %v392 = vsub.f32 0.0, %v376
      %v393 = vmul.f32 %v392, %v376
      %v394 = vmul.f32 %v393, 1.442695
      %v395 = vpow.pop %v394
      %v396 = vmul.f32 %v391, %v395
      %v397 = vsub.f32 1.0, %v396
      %v398 = vmul.f32 %v375, %v397
      %v399 = vadd.f32 %v398, 1.0
      %v400 = vmul.f32 %v372, %v399
      %v401 = vmul.f32 %v371, 0.5
      %v402 = vmul.f32 %v371, 0.70710677
      %vm403 = vcmp.ge.f32.partialorder %v402, 0.0
      %v404 = vsel %vm403, 1.0, -1.0
      %v405 = vand.u32 2147483647, %v402
      %v406 = vmul.f32 %v405, 0.3275911
      %v407 = vadd.f32 %v406, 1.0
      %v408 = vrcp.pop %v407
      %v409 = vmul.f32 %v407, %v408
      %v410 = vsub.f32 2.0, %v409
      %v411 = vmul.f32 %v408, %v410
      %v412 = vmul.f32 %v411, 1.0614054
      %v413 = vadd.f32 %v412, -1.4531521
      %v414 = vmul.f32 %v413, %v411
      %v415 = vadd.f32 %v414, 1.4214138
      %v416 = vmul.f32 %v415, %v411
      %v417 = vadd.f32 %v416, -0.28449672
      %v418 = vmul.f32 %v417, %v411
      %v419 = vadd.f32 %v418, 0.2548296
      %v420 = vmul.f32 %v419, %v411
      %v421 = vsub.f32 0.0, %v405
      %v422 = vmul.f32 %v421, %v405
      %v423 = vmul.f32 %v422, 1.442695
      %v424 = vpow.pop %v423
      %v425 = vmul.f32 %v420, %v424
      %v426 = vsub.f32 1.0, %v425
      %v427 = vmul.f32 %v404, %v426
      %v428 = vadd.f32 %v427, 1.0
      %v429 = vmul.f32 %v401, %v428
      %v430 = vld [vmem:[%s4] sm:$0xff]
      %v431 = vld [vmem:[%s5] sm:$0xff]
      %433 = vset.pattern.permute.xlu0 0
      %434 = vperm.xlu0 %433, %v431
      %v435 = vpop.permute.xlu0 %434
      %v438 = vrot.slane %v400, 4
      %439 = vrot.lane.b32.xlu0 %v438, 112
      %v440 = vpop.permute.xlu0 %439
      %v442 = vsel %vm271, %v430, 0
      %v444 = vsel %vm278, %v440, 0
      %446 = vmatprep.subr.mxu0 0.0
      %447 = vmatpush1.msra.mxu0 %v444
      %448 = vmatprep.subr.mxu0 0.0
      %449 = vmatpush1.msra.mxu0 0.0
      %450 = vmatprep.subr.mxu0 0.0
      %451 = vmatpush1.msra.mxu0 0.0
      %452 = vmatprep.subr.mxu0 0.0
      %453 = vmatpush1.msra.mxu0 0.0
      %454 = vmatprep.subr.mxu0 0.0
      %455 = vmatpush1.msra.mxu0 0.0
      %456 = vmatprep.subr.mxu0 0.0
      %457 = vmatpush1.msra.mxu0 0.0
      %458 = vmatprep.subr.mxu0 0.0
      %459 = vmatpush1.msra.mxu0 0.0
      %460 = vmatprep.subr.mxu0 0.0
      %461 = vmatpush1.msra.mxu0 0.0
      %462 = vmatprep.subr.mxu0 0.0
      %463 = vmatpush1.msra.mxu0 0.0
      %464 = vmatprep.subr.mxu0 0.0
      %465 = vmatpush1.msra.mxu0 0.0
      %466 = vmatprep.subr.mxu0 0.0
      %467 = vmatpush1.msra.mxu0 0.0
      %468 = vmatprep.subr.mxu0 0.0
      %469 = vmatpush1.msra.mxu0 0.0
      %470 = vmatprep.subr.mxu0 0.0
      %471 = vmatpush1.msra.mxu0 0.0
      %472 = vmatprep.subr.mxu0 0.0
      %473 = vmatpush1.msra.mxu0 0.0
      %474 = vmatprep.subr.mxu0 0.0
      %475 = vmatpush1.msra.mxu0 0.0
      %476 = vmatprep.subr.mxu0 0.0
      %477 = vmatpush1.msra.mxu0 0.0
      %478 = vmatprep.subr.mxu0 0.0
      %479 = vmatpush1.msra.mxu0 0.0
      %480 = vmatprep.subr.mxu0 0.0
      %481 = vmatpush1.msra.mxu0 0.0
      %482 = vmatprep.subr.mxu0 0.0
      %483 = vmatpush1.msra.mxu0 0.0
      %484 = vmatprep.subr.mxu0 0.0
      %485 = vmatpush1.msra.mxu0 0.0
      %486 = vmatprep.subr.mxu0 0.0
      %487 = vmatpush1.msra.mxu0 0.0
      %488 = vmatprep.subr.mxu0 0.0
      %489 = vmatpush1.msra.mxu0 0.0
      %490 = vmatprep.subr.mxu0 0.0
      %491 = vmatpush1.msra.mxu0 0.0
      %492 = vmatprep.subr.mxu0 0.0
      %493 = vmatpush1.msra.mxu0 0.0
      %494 = vmatprep.subr.mxu0 0.0
      %495 = vmatpush1.msra.mxu0 0.0
      %496 = vmatprep.subr.mxu0 0.0
      %497 = vmatpush1.msra.mxu0 0.0
      %498 = vmatprep.subr.mxu0 0.0
      %499 = vmatpush1.msra.mxu0 0.0
      %500 = vmatprep.subr.mxu0 0.0
      %501 = vmatpush1.msra.mxu0 0.0
      %502 = vmatprep.subr.mxu0 0.0
      %503 = vmatpush1.msra.mxu0 0.0
      %504 = vmatprep.subr.mxu0 0.0
      %505 = vmatpush1.msra.mxu0 0.0
      %506 = vmatprep.subr.mxu0 0.0
      %507 = vmatpush1.msra.mxu0 0.0
      %508 = vmatprep.subr.mxu0 0.0
      %509 = vmatpush1.msra.mxu0 0.0
      %510 = vmatprep.mubr.f32.mxu0 0.0
      %511 = vmatmul.mubr.f32.gmra.mrb[0].mxu0 %v442
      %v512 = vpop.f32.mrb[0].mxu0
      %v513 = vadd.f32 %v435, %v512
      %v514 = vpop.f32.mrb[0].mxu0
      %515 = vdwg.mxu0
      %517 = vrot.lane.b32.xlu0 %v429, 96
      %v518 = vpop.permute.xlu0 %517
      %v519 = vsel %vm278, %v518, 0
      %521 = vmatprep.subr.mxu0 0.0
      %522 = vmatpush1.msra.mxu0 %v519
      %523 = vmatprep.subr.mxu0 0.0
      %524 = vmatpush1.msra.mxu0 0.0
      %525 = vmatprep.subr.mxu0 0.0
      %526 = vmatpush1.msra.mxu0 0.0
      %527 = vmatprep.subr.mxu0 0.0
      %528 = vmatpush1.msra.mxu0 0.0
      %529 = vmatprep.subr.mxu0 0.0
      %530 = vmatpush1.msra.mxu0 0.0
      %531 = vmatprep.subr.mxu0 0.0
      %532 = vmatpush1.msra.mxu0 0.0
      %533 = vmatprep.subr.mxu0 0.0
      %534 = vmatpush1.msra.mxu0 0.0
      %535 = vmatprep.subr.mxu0 0.0
      %536 = vmatpush1.msra.mxu0 0.0
      %537 = vmatprep.subr.mxu0 0.0
      %538 = vmatpush1.msra.mxu0 0.0
      %539 = vmatprep.subr.mxu0 0.0
      %540 = vmatpush1.msra.mxu0 0.0
      %541 = vmatprep.subr.mxu0 0.0
      %542 = vmatpush1.msra.mxu0 0.0
      %543 = vmatprep.subr.mxu0 0.0
      %544 = vmatpush1.msra.mxu0 0.0
      %545 = vmatprep.subr.mxu0 0.0
      %546 = vmatpush1.msra.mxu0 0.0
      %547 = vmatprep.subr.mxu0 0.0
      %548 = vmatpush1.msra.mxu0 0.0
      %549 = vmatprep.subr.mxu0 0.0
      %550 = vmatpush1.msra.mxu0 0.0
      %551 = vmatprep.subr.mxu0 0.0
      %552 = vmatpush1.msra.mxu0 0.0
      %553 = vmatprep.subr.mxu0 0.0
      %554 = vmatpush1.msra.mxu0 0.0
      %555 = vmatprep.subr.mxu0 0.0
      %556 = vmatpush1.msra.mxu0 0.0
      %557 = vmatprep.subr.mxu0 0.0
      %558 = vmatpush1.msra.mxu0 0.0
      %559 = vmatprep.subr.mxu0 0.0
      %560 = vmatpush1.msra.mxu0 0.0
      %561 = vmatprep.subr.mxu0 0.0
      %562 = vmatpush1.msra.mxu0 0.0
      %563 = vmatprep.subr.mxu0 0.0
      %564 = vmatpush1.msra.mxu0 0.0
      %565 = vmatprep.subr.mxu0 0.0
      %566 = vmatpush1.msra.mxu0 0.0
      %567 = vmatprep.subr.mxu0 0.0
      %568 = vmatpush1.msra.mxu0 0.0
      %569 = vmatprep.subr.mxu0 0.0
      %570 = vmatpush1.msra.mxu0 0.0
      %571 = vmatprep.subr.mxu0 0.0
      %572 = vmatpush1.msra.mxu0 0.0
      %573 = vmatprep.subr.mxu0 0.0
      %574 = vmatpush1.msra.mxu0 0.0
      %575 = vmatprep.subr.mxu0 0.0
      %576 = vmatpush1.msra.mxu0 0.0
      %577 = vmatprep.subr.mxu0 0.0
      %578 = vmatpush1.msra.mxu0 0.0
      %579 = vmatprep.subr.mxu0 0.0
      %580 = vmatpush1.msra.mxu0 0.0
      %581 = vmatprep.subr.mxu0 0.0
      %582 = vmatpush1.msra.mxu0 0.0
      %583 = vmatprep.subr.mxu0 0.0
      %584 = vmatpush1.msra.mxu0 0.0
      %585 = vmatprep.mubr.f32.mxu0 0.0
      %586 = vmatmul.mubr.f32.gmra.mrb[0].mxu0 %v442
      %v587 = vpop.f32.mrb[0].mxu0
      %v588 = vadd.f32 %v435, %v587
      %v589 = vpop.f32.mrb[0].mxu0
      %590 = vdwg.mxu0
      %v591 = vxor.u32 %v513, 2147483648
      %v592 = vmul.f32 %v591, 1.442695
      %v593 = vpow.pop %v592
      %v594 = vadd.f32 %v593, 1.0
      %v595 = vrcp.pop %v594
      %v596 = vmul.f32 1.0, %v595
      %v598 = vrot.slane %v596, 4
      %v600 = vmul.f32 %v513, %v598
      %vm601 = vcmask 519168
      %602 = vst.msk [vmem:[%s265] sm:$0xf] %vm601, %v600
      %v603 = vxor.u32 %v588, 2147483648
      %v604 = vmul.f32 %v603, 1.442695
      %v605 = vpow.pop %v604
      %v606 = vadd.f32 %v605, 1.0
      %v607 = vrcp.pop %v606
      %v608 = vmul.f32 1.0, %v607
      %v610 = vrot.slane %v608, 4
      %v612 = vmul.f32 %v588, %v610
      %s613 = scalar_lea.vmem %s265, 4
      %614 = vst.msk [vmem:[%s613] sm:$0xf] %vm601, %v612
      %p615 = scmp.lt.s32.totalorder %s17, 1
      %s616 = scalar_select %p615, %s17, 1
      %s617 = smul.addr %s616, 2
      %s618 = smul.addr %s617, 4
      %s619 = scalar_lea.vmem %s6, %s618
      // Predicated region
      $region45: #{demucs_decoder_forward.10} parent=43 // pred_check
        %p620 = pneg %p171
      $region46: #{demucs_decoder_forward.10} parent=43 // pred_check_branch
        %622 = sbr.rel (%p620) target = $region48
      $region47: #{demucs_decoder_forward.10} parent=43 // pred_region
        _
      $region48: #{demucs_decoder_forward.10} parent=43 // pred_fallthru
        _
    $region44: #{demucs_decoder_forward.10} parent=5 // pred_fallthru
      _
    %p623 = scmp.le.s32.totalorder 2, %s12
    // Predicated region
    $region49: #{demucs_decoder_forward.10} parent=5 // pred_check
      %p624 = pneg %p623
    $region50: #{demucs_decoder_forward.10} parent=5 // pred_check_branch
      %626 = sbr.rel (%p624) target = $region52
    $region51: #{demucs_decoder_forward.10} parent=5 // pred_region
      %s627 = ssub.s32 %s12, 2
      // Predicated region
      $region53: #{demucs_decoder_forward.10} parent=51 // pred_check
        %p628 = pneg %p177
      $region54: #{demucs_decoder_forward.10} parent=51 // pred_check_branch
        %630 = sbr.rel (%p628) target = $region56
      $region55: #{demucs_decoder_forward.10} parent=51 // pred_region
        %p631 = scmp.lt.s32.totalorder %s18, 1
        %s632 = scalar_select %p631, %s18, 1
        %s633 = smul.addr %s632, 2
        %s634 = smul.addr %s633, 4
        %s635 = scalar_lea.vmem %s6, %s634
      $region56: #{demucs_decoder_forward.10} parent=51 // pred_fallthru
        _
    $region52: #{demucs_decoder_forward.10} parent=5 // pred_fallthru
      _
  $region6: #{demucs_decoder_forward.10} parent=0 // loop_footer
    %s16 = sadd.s32 1, %s12
  $region7: #{demucs_decoder_forward.10} parent=0 // loop_footer_branch
    %11 = sbr.rel target = $region3
  $region8: #{demucs_decoder_forward.10} parent=0 // loop_exit
    _

// kernel: demucs_decoder_forward.11
$region0: #{demucs_decoder_forward.11}
  #allocation0 [shape = 'u32[]', space=smem, size = 0x4, offset = 0x4, fixed_abs, tag = 'smem constant byte address 0x4 - core index']
  #allocation1 [shape = 'u32[144,128]{1,0:T(1,128)}', space=vmem, size = 0x12000, scoped, tag = 'internal scratch']
  %s0 = inlined_call_operand.vmem [shape: f32[4,16,22], index: 0, kind: input, shape index: {}]
  %s1 = inlined_call_operand.vmem [shape: f32[16,16], index: 1, kind: input, shape index: {}]
  %s2 = inlined_call_operand.vmem [shape: f32[4,19], index: 2, kind: input, shape index: {}]
  %s3 = inlined_call_operand.vmem [shape: f32[4,4,19], index: 3, kind: output, shape index: {}]
  %s4 = sld [smem:[#allocation0]]
  $region45: #{demucs_decoder_forward.11} parent=0
    _
  %s6 = ssub.s32 1, %s4
  %s7 = scalar_select 0, %s6, %s4
  loop: start=0, step=1, limit=6
  $region2: #{demucs_decoder_forward.11} parent=0 // loop_pre_header
    _
  $region3: #{demucs_decoder_forward.11} parent=0 // loop_header
    %s9 = sphi 0, %s13
    %p10 = scmp.ge.s32.totalorder %s9, 6
    %s19 = sphi 0, %s21
    %s22 = sphi 0, %s19
    %s23 = sphi 0, %s22
    %s39 = sphi 0, %s23
    %s43 = sphi 0, %s43
    %s45 = sphi 0, %s43
    %s46 = sphi 0, %s45
    %s60 = sphi 0, %s46
    %s64 = sphi 0, %s64
    %s66 = sphi 0, %s64
    %s67 = sphi 0, %s66
    %s81 = sphi 0, %s67
    %s87 = sphi 0, %s89
    %s90 = sphi 0, %s87
    %s91 = sphi 0, %s90
    %s107 = sphi 0, %s91
  $region4: #{demucs_decoder_forward.11} parent=0 // loop_header_branch
    %12 = sbr.rel (%p10) target = $region8
  $region5: #{demucs_decoder_forward.11} parent=0 // loop_body
    %s14 = ssub.s32 %s9, 1
    %s15 = ssub.s32 %s9, 2
    %s16 = sadd.s32 %s9, 1
    %s17 = ssub.s32 %s9, %s16
    %p18 = scmp.eq.s32.totalorder %s17, 0
    %s20 = sadd.s32 %s19, 1
    %s21 = scalar_select %p18, %s19, %s20
    %p24 = pneg %p18
    %p25 = scmp.eq.s32.totalorder %s9, 3
    %p26 = por %p24, %p25
    %p27 = scmp.ne.s32.totalorder %s19, %s22
    %p28 = scmp.eq.s32.totalorder %s9, 0
    %p29 = por %p27, %p28
    %p30 = scmp.ne.s32.totalorder %s19, %s22
    %p31 = scmp.eq.s32.totalorder %s14, 3
    %p32 = por %p30, %p31
    %p33 = scmp.ne.s32.totalorder %s22, %s23
    %p34 = scmp.eq.s32.totalorder %s14, 0
    %p35 = por %p33, %p34
    %p36 = scmp.ne.s32.totalorder %s22, %s23
    %p37 = scmp.eq.s32.totalorder %s15, 3
    %p38 = por %p36, %p37
    %p40 = scmp.ne.s32.totalorder %s23, %s39
    %p41 = scmp.eq.s32.totalorder %s15, 0
    %p42 = por %p40, %p41
    %s44 = sadd.s32 %s43, 1
    %p47 = scmp.eq.s32.totalorder %s9, 3
    %p48 = scmp.ne.s32.totalorder %s43, %s45
    %p49 = scmp.eq.s32.totalorder %s9, 0
    %p50 = por %p48, %p49
    %p51 = scmp.ne.s32.totalorder %s43, %s45
    %p52 = scmp.eq.s32.totalorder %s14, 3
    %p53 = por %p51, %p52
    %p54 = scmp.ne.s32.totalorder %s45, %s46
    %p55 = scmp.eq.s32.totalorder %s14, 0
    %p56 = por %p54, %p55
    %p57 = scmp.ne.s32.totalorder %s45, %s46
    %p58 = scmp.eq.s32.totalorder %s15, 3
    %p59 = por %p57, %p58
    %p61 = scmp.ne.s32.totalorder %s46, %s60
    %p62 = scmp.eq.s32.totalorder %s15, 0
    %p63 = por %p61, %p62
    %s65 = sadd.s32 %s64, 1
    %p68 = scmp.eq.s32.totalorder %s9, 3
    %p69 = scmp.ne.s32.totalorder %s64, %s66
    %p70 = scmp.eq.s32.totalorder %s9, 0
    %p71 = por %p69, %p70
    %p72 = scmp.ne.s32.totalorder %s64, %s66
    %p73 = scmp.eq.s32.totalorder %s14, 3
    %p74 = por %p72, %p73
    %p75 = scmp.ne.s32.totalorder %s66, %s67
    %p76 = scmp.eq.s32.totalorder %s14, 0
    %p77 = por %p75, %p76
    %p78 = scmp.ne.s32.totalorder %s66, %s67
    %p79 = scmp.eq.s32.totalorder %s15, 3
    %p80 = por %p78, %p79
    %p82 = scmp.ne.s32.totalorder %s67, %s81
    %p83 = scmp.eq.s32.totalorder %s15, 0
    %p84 = por %p82, %p83
    %s85 = ssub.s32 %s9, %s16
    %p86 = scmp.eq.s32.totalorder %s85, 0
    %s88 = sadd.s32 %s87, 1
    %s89 = scalar_select %p86, %s87, %s88
    %p92 = pneg %p86
    %p93 = scmp.eq.s32.totalorder %s9, 3
    %p94 = por %p92, %p93
    %p95 = scmp.ne.s32.totalorder %s87, %s90
    %p96 = scmp.eq.s32.totalorder %s9, 0
    %p97 = por %p95, %p96
    %p98 = scmp.ne.s32.totalorder %s87, %s90
    %p99 = scmp.eq.s32.totalorder %s14, 3
    %p100 = por %p98, %p99
    %p101 = scmp.ne.s32.totalorder %s90, %s91
    %p102 = scmp.eq.s32.totalorder %s14, 0
    %p103 = por %p101, %p102
    %p104 = scmp.ne.s32.totalorder %s90, %s91
    %p105 = scmp.eq.s32.totalorder %s15, 3
    %p106 = por %p104, %p105
    %p108 = scmp.ne.s32.totalorder %s91, %s107
    %p109 = scmp.eq.s32.totalorder %s15, 0
    %p110 = por %p108, %p109
    %p111 = scmp.le.s32.totalorder 1, %s9
    %p112 = scmp.lt.s32.totalorder %s9, 5
    %p113 = pnand %p111, %p112
    %p114 = pneg %p113
    // Predicated region
    $region9: #{demucs_decoder_forward.11} parent=5 // pred_check
      _
    $region10: #{demucs_decoder_forward.11} parent=5 // pred_check_branch
      %116 = sbr.rel (%p113) target = $region12
    $region11: #{demucs_decoder_forward.11} parent=5 // pred_region
      %s117 = ssub.s32 %s9, 1
      // Predicated region
      $region13: #{demucs_decoder_forward.11} parent=11 // pred_check
        %p118 = pneg %p56
      $region14: #{demucs_decoder_forward.11} parent=11 // pred_check_branch
        %120 = sbr.rel (%p118) target = $region16
      $region15: #{demucs_decoder_forward.11} parent=11 // pred_region
        _
      $region16: #{demucs_decoder_forward.11} parent=11 // pred_fallthru
        _
      // Predicated region
      $region17: #{demucs_decoder_forward.11} parent=11 // pred_check
        %p121 = pneg %p77
      $region18: #{demucs_decoder_forward.11} parent=11 // pred_check_branch
        %123 = sbr.rel (%p121) target = $region20
      $region19: #{demucs_decoder_forward.11} parent=11 // pred_region
        _
      $region20: #{demucs_decoder_forward.11} parent=11 // pred_fallthru
        _
    $region12: #{demucs_decoder_forward.11} parent=5 // pred_fallthru
      _
    %p124 = scmp.lt.s32.totalorder %s9, 4
    // Predicated region
    $region21: #{demucs_decoder_forward.11} parent=5 // pred_check
      %p125 = pneg %p124
    $region22: #{demucs_decoder_forward.11} parent=5 // pred_check_branch
      %127 = sbr.rel (%p125) target = $region24
    $region23: #{demucs_decoder_forward.11} parent=5 // pred_region
      // Predicated region
      $region25: #{demucs_decoder_forward.11} parent=23 // pred_check
        %p128 = pneg %p29
      $region26: #{demucs_decoder_forward.11} parent=23 // pred_check_branch
        %130 = sbr.rel (%p128) target = $region28
      $region27: #{demucs_decoder_forward.11} parent=23 // pred_region
        %p131 = scmp.lt.s32.totalorder %s9, 3
        %s132 = scalar_select %p131, %s9, 3
        %s133 = smul.addr %s132, 2
        %s134 = smul.addr %s133, 8
        %s135 = scalar_lea.vmem %s0, %s134
      $region28: #{demucs_decoder_forward.11} parent=23 // pred_fallthru
        _
    $region24: #{demucs_decoder_forward.11} parent=5 // pred_fallthru
      _
    %p136 = scmp.le.s32.totalorder 1, %s9
    %p137 = scmp.lt.s32.totalorder %s9, 5
    %p138 = pnand %p136, %p137
    %p139 = pneg %p138
    // Predicated region
    $region29: #{demucs_decoder_forward.11} parent=5 // pred_check
      _
    $region30: #{demucs_decoder_forward.11} parent=5 // pred_check_branch
      %141 = sbr.rel (%p138) target = $region32
    $region31: #{demucs_decoder_forward.11} parent=5 // pred_region
      %s142 = ssub.s32 %s9, 1
      %p143 = scmp.lt.s32.totalorder %s14, 3
      %s144 = scalar_select %p143, %s14, 3
      %s145 = smul.addr %s144, 2
      %s146 = smul.addr %s145, 8
      %s147 = scalar_lea.vmem %s0, %s146
      %p148 = pneg %p35
      %p149 = pneg %p32
      %p150 = pneg %p56
      %p151 = pneg %p53
      %p152 = pneg %p77
      %p153 = pneg %p74
      %p154 = pneg %p103
      %p155 = pneg %p100
      %p156 = scmp.lt.s32.totalorder %s14, 3
      %s157 = scalar_select %p156, %s14, 3
      %s158 = smul.addr %s157, 4
      %s159 = scalar_lea.vmem %s3, %s158
      %p160 = scmp.lt.s32.totalorder %s14, 3
      %s161 = scalar_select %p160, %s14, 3
      %s162 = smul.addr %s161, 2
      %s163 = smul.addr %s162, 8
      %s164 = scalar_lea.vmem %s0, %s163
      %p165 = scmp.lt.s32.totalorder %s14, 3
      %s166 = scalar_select %p165, %s14, 3
      %s167 = smul.addr %s166, 4
      %s168 = scalar_lea.vmem %s3, %s167
      %v169 = vld [vmem:[%s164] sm:$0xff]
      %v170 = vld [vmem:[%s164 + $0x8] sm:$0xff]
      %v171 = vld [vmem:[%s1] sm:$0xff]
      %v172 = vld [vmem:[%s1 + $0x8] sm:$0xff]
      %vm173 = vcmask 130048
      %v175 = vsel %vm173, %v171, 0
      %v178 = vsel %vm173, %v172, 0
      %180 = vmatprep.subr.mxu0 0.0
      %181 = vmatpush1.msra.mxu0 %v169
      %182 = vmatprep.subr.mxu0 0.0
      %183 = vmatpush1.msra.mxu0 %v170
      %184 = vmatprep.subr.mxu0 0.0
      %185 = vmatpush1.msra.mxu0 0.0
      %186 = vmatprep.subr.mxu0 0.0
      %187 = vmatpush1.msra.mxu0 0.0
      %188 = vmatprep.subr.mxu0 0.0
      %189 = vmatpush1.msra.mxu0 0.0
      %190 = vmatprep.subr.mxu0 0.0
      %191 = vmatpush1.msra.mxu0 0.0
      %192 = vmatprep.subr.mxu0 0.0
      %193 = vmatpush1.msra.mxu0 0.0
      %194 = vmatprep.subr.mxu0 0.0
      %195 = vmatpush1.msra.mxu0 0.0
      %196 = vmatprep.subr.mxu0 0.0
      %197 = vmatpush1.msra.mxu0 0.0
      %198 = vmatprep.subr.mxu0 0.0
      %199 = vmatpush1.msra.mxu0 0.0
      %200 = vmatprep.subr.mxu0 0.0
      %201 = vmatpush1.msra.mxu0 0.0
      %202 = vmatprep.subr.mxu0 0.0
      %203 = vmatpush1.msra.mxu0 0.0
      %204 = vmatprep.subr.mxu0 0.0
      %205 = vmatpush1.msra.mxu0 0.0
      %206 = vmatprep.subr.mxu0 0.0
      %207 = vmatpush1.msra.mxu0 0.0
      %208 = vmatprep.subr.mxu0 0.0
      %209 = vmatpush1.msra.mxu0 0.0
      %210 = vmatprep.subr.mxu0 0.0
      %211 = vmatpush1.msra.mxu0 0.0
      %212 = vmatprep.subr.mxu0 0.0
      %213 = vmatpush1.msra.mxu0 0.0
      %214 = vmatprep.subr.mxu0 0.0
      %215 = vmatpush1.msra.mxu0 0.0
      %216 = vmatprep.subr.mxu0 0.0
      %217 = vmatpush1.msra.mxu0 0.0
      %218 = vmatprep.subr.mxu0 0.0
      %219 = vmatpush1.msra.mxu0 0.0
      %220 = vmatprep.subr.mxu0 0.0
      %221 = vmatpush1.msra.mxu0 0.0
      %222 = vmatprep.subr.mxu0 0.0
      %223 = vmatpush1.msra.mxu0 0.0
      %224 = vmatprep.subr.mxu0 0.0
      %225 = vmatpush1.msra.mxu0 0.0
      %226 = vmatprep.subr.mxu0 0.0
      %227 = vmatpush1.msra.mxu0 0.0
      %228 = vmatprep.subr.mxu0 0.0
      %229 = vmatpush1.msra.mxu0 0.0
      %230 = vmatprep.subr.mxu0 0.0
      %231 = vmatpush1.msra.mxu0 0.0
      %232 = vmatprep.subr.mxu0 0.0
      %233 = vmatpush1.msra.mxu0 0.0
      %234 = vmatprep.subr.mxu0 0.0
      %235 = vmatpush1.msra.mxu0 0.0
      %236 = vmatprep.subr.mxu0 0.0
      %237 = vmatpush1.msra.mxu0 0.0
      %238 = vmatprep.subr.mxu0 0.0
      %239 = vmatpush1.msra.mxu0 0.0
      %240 = vmatprep.subr.mxu0 0.0
      %241 = vmatpush1.msra.mxu0 0.0
      %242 = vmatprep.subr.mxu0 0.0
      %243 = vmatpush1.msra.mxu0 0.0
      %244 = vmatprep.mubr.f32.mxu0 0.0
      %245 = vmatmul.mubr.f32.gmra.mrb[0].mxu0 %v175
      %v246 = vpop.f32.mrb[0].mxu0
      %v247 = vadd.f32 0.0, %v246
      %v248 = vpop.f32.mrb[0].mxu0
      %249 = vmatprep.mubr.f32.mxu0 0.0
      %250 = vmatmul.mubr.f32.gmra.mrb[0].mxu0 %v178
      %v251 = vpop.f32.mrb[0].mxu0
      %v252 = vadd.f32 0.0, %v251
      %v253 = vpop.f32.mrb[0].mxu0
      %254 = vdwg.mxu0
      %v256 = vrot.slane %v247, 4
      %257 = vrot.lane.b32.xlu0 %v256, 1
      %v258 = vpop.permute.xlu0 %257
      %v260 = vadd.f32 %v247, %v258
      %262 = vrot.lane.b32.xlu0 %v252, 2
      %v263 = vpop.permute.xlu0 %262
      %v265 = vadd.f32 %v260, %v263
      %v266 = vrot.slane %v252, 4
      %267 = vrot.lane.b32.xlu0 %v266, 3
      %v268 = vpop.permute.xlu0 %267
      %v270 = vadd.f32 %v265, %v268
      %v271 = vld [vmem:[%s2] sm:$0xf]
      %273 = vrot.lane.b32.xlu0 %v271, 3
      %v274 = vpop.permute.xlu0 %273
      %v276 = vmul.f32 %v270, %v274
      %278 = vrot.lane.b32.xlu0 %v276, 125
      %v279 = vpop.permute.xlu0 %278
      %vm281 = vcmask 150528
      %282 = vst.msk [vmem:[%s168] sm:$0xf] %vm281, %v279
      %p283 = scmp.lt.s32.totalorder %s14, 3
      %s284 = scalar_select %p283, %s14, 3
      %s285 = smul.addr %s284, 4
      %s286 = scalar_lea.vmem %s3, %s285
      // Predicated region
      $region33: #{demucs_decoder_forward.11} parent=31 // pred_check
        %p287 = pneg %p100
      $region34: #{demucs_decoder_forward.11} parent=31 // pred_check_branch
        %289 = sbr.rel (%p287) target = $region36
      $region35: #{demucs_decoder_forward.11} parent=31 // pred_region
        _
      $region36: #{demucs_decoder_forward.11} parent=31 // pred_fallthru
        _
    $region32: #{demucs_decoder_forward.11} parent=5 // pred_fallthru
      _
    %p290 = scmp.le.s32.totalorder 2, %s9
    // Predicated region
    $region37: #{demucs_decoder_forward.11} parent=5 // pred_check
      %p291 = pneg %p290
    $region38: #{demucs_decoder_forward.11} parent=5 // pred_check_branch
      %293 = sbr.rel (%p291) target = $region40
    $region39: #{demucs_decoder_forward.11} parent=5 // pred_region
      %s294 = ssub.s32 %s9, 2
      // Predicated region
      $region41: #{demucs_decoder_forward.11} parent=39 // pred_check
        %p295 = pneg %p106
      $region42: #{demucs_decoder_forward.11} parent=39 // pred_check_branch
        %297 = sbr.rel (%p295) target = $region44
      $region43: #{demucs_decoder_forward.11} parent=39 // pred_region
        %p298 = scmp.lt.s32.totalorder %s15, 3
        %s299 = scalar_select %p298, %s15, 3
        %s300 = smul.addr %s299, 4
        %s301 = scalar_lea.vmem %s3, %s300
      $region44: #{demucs_decoder_forward.11} parent=39 // pred_fallthru
        _
    $region40: #{demucs_decoder_forward.11} parent=5 // pred_fallthru
      _
  $region6: #{demucs_decoder_forward.11} parent=0 // loop_footer
    %s13 = sadd.s32 1, %s9
  $region7: #{demucs_decoder_forward.11} parent=0 // loop_footer_branch
    %8 = sbr.rel target = $region3
  $region8: #{demucs_decoder_forward.11} parent=0 // loop_exit
    _

</llo_original>
